<compile_context>
chip_gen: v5e
topology: v5e:2x2
jax: 0.10.0
libtpu: 0.0.40
codegen_flags: <defaults>
</compile_context>

<pallas_src>
import jax
import jax.numpy as jnp
import numpy as np
from jax.experimental import pallas as pl
from jax.experimental.pallas import tpu as pltpu

BN_EPS = 1e-5


def convlstm_kernel(gx_ref, wh_ref, gamma_ref, beta_ref, out_ref, hxp_ref, cx_ref):
    S, B, H, W, G = gx_ref.shape        # gates_x: (S, B, H, W, 4F), f32
    F = G // 4
    n = B * H * W
    inv_n = 1.0 / n

    # Zero-init recurrent state; the 1-pixel border of hxp stays zero forever.
    hxp_ref[...] = jnp.zeros_like(hxp_ref)
    cx_ref[...] = jnp.zeros_like(cx_ref)

    gamma = gamma_ref[...].reshape(1, 1, 1, G)
    beta = beta_ref[...].reshape(1, 1, 1, G)
    wh = wh_ref[...]                    # (9F, 4F), bf16

    @pl.loop(0, S)
    def _step(t):
        hpad = hxp_ref[...]             # (B, H+2, W+2, F) f32, zero border
        # im2col of the hidden state: 9 shifted taps concatenated on the channel axis
        # (dy-major, dx-minor ordering matches the (9F, 4F) weight reshape).
        taps = []
        for dy in range(3):
            for dx in range(3):
                taps.append(hpad[:, dy:dy + H, dx:dx + W, :])
        hcat = jnp.concatenate(taps, axis=-1)               # (B, H, W, 9F)
        hcat = hcat.reshape(n, 9 * F).astype(jnp.bfloat16)  # (BHW, 9F) bf16

        # Single large-K MXU dot (bf16 operands, f32 accumulation) for conv(h, Wh);
        # the x-side conv was precomputed outside the kernel.
        hgates = jnp.dot(hcat, wh, preferred_element_type=jnp.float32)   # (BHW, 4F)
        gates = gx_ref[t] + hgates.reshape(B, H, W, G)                   # (B, H, W, 4F)

        # BatchNorm2d, training mode (biased batch variance over B,H,W), eps=1e-5:
        # single-pass stats + fused per-channel affine.
        s1 = jnp.sum(gates, axis=(0, 1, 2), keepdims=True)               # (1,1,1,4F)
        s2 = jnp.sum(gates * gates, axis=(0, 1, 2), keepdims=True)       # (1,1,1,4F)
        mean = s1 * inv_n
        var = s2 * inv_n - mean * mean
        a = gamma * jax.lax.rsqrt(var + BN_EPS)
        b = beta - mean * a
        gates = gates * a + b

        # One full-width (128-lane) sigmoid; cellgate stays raw (matches the module).
        sg = jax.nn.sigmoid(gates)
        i_g = sg[..., 0:F]
        f_g = sg[..., F:2 * F]
        o_g = sg[..., 3 * F:4 * F]
        g_g = gates[..., 2 * F:3 * F]

        cx = cx_ref[...]
        cy = f_g * cx + i_g * g_g
        hy = o_g * jnp.tanh(cy)

        cx_ref[...] = cy
        hxp_ref[:, 1:H + 1, 1:W + 1, :] = hy                # interior write; border stays 0
        out_ref[t] = hy.reshape(B, H, W * F)                # lane-dense store (last dim W*F)


def conv_lstm_block(x, w_hwio, gamma, beta, num_features):
    """x: (B, S, C, H, W) f32; w_hwio: (3, 3, C+F, 4F); returns (B, S, F, H, W)."""
    B, S, C, H, W = x.shape
    F = num_features
    G = 4 * F

    # --- Hoisted input-side convolution: conv(x_t, Wx) for all timesteps at once ---
    wx = w_hwio[:, :, :C, :]                                           # (3, 3, C, 4F)
    x_nhwc = jnp.transpose(x, (0, 1, 3, 4, 2)).reshape(B * S, H, W, C)
    gx = jax.lax.conv_general_dilated(
        x_nhwc, wx, window_strides=(1, 1), padding="SAME",
        dimension_numbers=("NHWC", "HWIO", "NHWC"),
        precision=jax.lax.Precision.HIGHEST)                           # (B*S, H, W, 4F)
    gx = gx.reshape(B, S, H, W, G).transpose(1, 0, 2, 3, 4)            # (S, B, H, W, 4F)
    gx = gx.astype(jnp.float32)

    # --- Hidden-side weights: (3, 3, F, 4F) -> (9F, 4F), bf16 for the MXU ---
    wh = w_hwio[:, :, C:, :].reshape(9 * F, G).astype(jnp.bfloat16)
    gamma2 = gamma.reshape(1, G).astype(jnp.float32)
    beta2 = beta.reshape(1, G).astype(jnp.float32)

    vmem = lambda: pl.BlockSpec(memory_space=pltpu.MemorySpace.VMEM)
    out = pl.pallas_call(
        convlstm_kernel,
        out_shape=jax.ShapeDtypeStruct((S, B, H, W * F), jnp.float32),
        in_specs=[vmem(), vmem(), vmem(), vmem()],
        out_specs=vmem(),
        scratch_shapes=[
            pltpu.VMEM((B, H + 2, W + 2, F), jnp.float32),   # padded hx carry
            pltpu.VMEM((B, H, W, F), jnp.float32),           # cx carry
        ],
        # Whole problem (~5 MiB) is VMEM-resident; fits the default scoped limit on
        # v5e/v6e/v7x.
        # TODO(synk): if B*S*H*W*4F grows (esp. on v7x's 64 MiB VMEM), tile over S with
        # an explicit vmem_limit_bytes budget, and add a dual-TensorCore split with a
        # cross-core BN partial-sum exchange (CMEM/VMEM_SHARED + core_barrier).
    )(gx, wh, gamma2, beta2)

    out = out.reshape(S, B, H, W, F)
    return jnp.transpose(out, (1, 0, 4, 2, 3))               # (B, S, F, H, W)


conv_lstm_block_jit = jax.jit(conv_lstm_block, static_argnums=(4,))


def reference(x, w_hwio, gamma, beta, num_features):
    """Pure-JAX reference mirroring the PyTorch forward (training-mode BN)."""
    B, S, C, H, W = x.shape
    F = num_features
    hx = jnp.zeros((B, H, W, F), jnp.float32)
    cx = jnp.zeros((B, H, W, F), jnp.float32)
    outs = []
    for t in range(S):
        xt = jnp.transpose(x[:, t], (0, 2, 3, 1))            # (B,H,W,C)
        comb = jnp.concatenate([xt, hx], axis=-1)            # (B,H,W,C+F)
        gates = jax.lax.conv_general_dilated(
            comb, w_hwio, window_strides=(1, 1), padding="SAME",
            dimension_numbers=("NHWC", "HWIO", "NHWC"),
            precision=jax.lax.Precision.HIGHEST)
        mean = jnp.mean(gates, axis=(0, 1, 2), keepdims=True)
        var = jnp.mean(jnp.square(gates - mean), axis=(0, 1, 2), keepdims=True)
        gates = (gates - mean) / jnp.sqrt(var + BN_EPS) * gamma + beta
        i_g = jax.nn.sigmoid(gates[..., :F])
        f_g = jax.nn.sigmoid(gates[..., F:2 * F])
        g_g = gates[..., 2 * F:3 * F]
        o_g = jax.nn.sigmoid(gates[..., 3 * F:])
        cx = f_g * cx + i_g * g_g
        hx = o_g * jnp.tanh(cx)
        outs.append(hx)
    out = jnp.stack(outs, axis=1)                            # (B,S,H,W,F)
    return jnp.transpose(out, (0, 1, 4, 2, 3))               # (B,S,F,H,W)


if __name__ == "__main__":
    B, S, C, H, W, F = 2, 8, 4, 16, 16, 32

    key = jax.random.PRNGKey(0)
    k_x, k_w = jax.random.split(key)
    x = jax.random.normal(k_x, (B, S, C, H, W), dtype=jnp.float32)
    # Conv2d weight (no bias), stored HWIO: (kh, kw, C+F, 4F); deterministic init.
    w = 0.1 * jax.random.normal(k_w, (3, 3, C + F, 4 * F), dtype=jnp.float32)
    # BatchNorm2d default affine init: gamma = 1, beta = 0.
    gamma = jnp.ones((4 * F,), jnp.float32)
    beta = jnp.zeros((4 * F,), jnp.float32)

    out = conv_lstm_block_jit(x, w, gamma, beta, F)
    out = jax.block_until_ready(out)
    assert out.shape == (B, S, F, H, W)

    ref = jax.block_until_ready(reference(x, w, gamma, beta, F))
    # Tolerance accommodates bf16 MXU operands for the recurrent conv (f32 accumulate).
    np.testing.assert_allclose(np.asarray(out), np.asarray(ref), atol=5e-2, rtol=5e-2)

    print("KERNEL_OK")
</pallas_src>

<mosaic_0001>
module attributes {stable_mosaic.version = 11 : i64} {
  func.func @convlstm_kernel(%arg0: memref<8x2x16x16x128xf32, #tpu.memory_space<vmem>>, %arg1: memref<288x128xbf16, #tpu.memory_space<vmem>>, %arg2: memref<1x128xf32, #tpu.memory_space<vmem>>, %arg3: memref<1x128xf32, #tpu.memory_space<vmem>>, %arg4: memref<8x2x16x512xf32, #tpu.memory_space<vmem>>, %arg5: memref<2x18x18x32xf32, #tpu.memory_space<vmem>>, %arg6: memref<2x16x16x32xf32, #tpu.memory_space<vmem>>) attributes {dimension_semantics = [], scalar_prefetch = 0 : i64, scratch_operands = 2 : i64, tpu.core_type = #tpu.core_type<tc>} {
    %cst = arith.constant 0.000000e+00 : f32
    %0 = vector.broadcast %cst : f32 to vector<2x18x18x32xf32>
    %c0 = arith.constant 0 : index
    %c0_0 = arith.constant 0 : index
    %c0_1 = arith.constant 0 : index
    %c0_2 = arith.constant 0 : index
    %1 = vector.load %arg5[%c0, %c0_0, %c0_1, %c0_2] : memref<2x18x18x32xf32, #tpu.memory_space<vmem>>, vector<2x18x18x32xf32>
    tpu.vector_store %arg5[%c0, %c0_0, %c0_1, %c0_2], %0 {strides = array<i32>} : memref<2x18x18x32xf32, #tpu.memory_space<vmem>>, vector<2x18x18x32xf32>,
    %cst_3 = arith.constant 0.000000e+00 : f32
    %2 = vector.broadcast %cst_3 : f32 to vector<2x16x16x32xf32>
    %c0_4 = arith.constant 0 : index
    %c0_5 = arith.constant 0 : index
    %c0_6 = arith.constant 0 : index
    %c0_7 = arith.constant 0 : index
    %3 = vector.load %arg6[%c0_4, %c0_5, %c0_6, %c0_7] : memref<2x16x16x32xf32, #tpu.memory_space<vmem>>, vector<2x16x16x32xf32>
    tpu.vector_store %arg6[%c0_4, %c0_5, %c0_6, %c0_7], %2 {strides = array<i32>} : memref<2x16x16x32xf32, #tpu.memory_space<vmem>>, vector<2x16x16x32xf32>,
    %c0_8 = arith.constant 0 : index
    %c0_9 = arith.constant 0 : index
    %4 = vector.load %arg2[%c0_8, %c0_9] : memref<1x128xf32, #tpu.memory_space<vmem>>, vector<1x128xf32>
    %5 = vector.shape_cast %4 : vector<1x128xf32> to vector<1x1x1x128xf32>
    %c0_10 = arith.constant 0 : index
    %c0_11 = arith.constant 0 : index
    %6 = vector.load %arg3[%c0_10, %c0_11] : memref<1x128xf32, #tpu.memory_space<vmem>>, vector<1x128xf32>
    %7 = vector.shape_cast %6 : vector<1x128xf32> to vector<1x1x1x128xf32>
    %c0_12 = arith.constant 0 : index
    %c0_13 = arith.constant 0 : index
    %8 = vector.load %arg1[%c0_12, %c0_13] : memref<288x128xbf16, #tpu.memory_space<vmem>>, vector<288x128xbf16>
    %c0_i32 = arith.constant 0 : i32
    %c8_i32 = arith.constant 8 : i32
    %9 = arith.addi %c0_i32, %c8_i32 : i32
    %c1_i32 = arith.constant 1 : i32
    scf.for %arg7 = %c0_i32 to %9 step %c1_i32  : i32 {
      %c1_i32_15 = arith.constant 1 : i32
      %10 = arith.muli %arg7, %c1_i32_15 : i32
      %c0_i32_16 = arith.constant 0 : i32
      %11 = arith.addi %c0_i32_16, %10 : i32
      %c0_17 = arith.constant 0 : index
      %c0_18 = arith.constant 0 : index
      %c0_19 = arith.constant 0 : index
      %c0_20 = arith.constant 0 : index
      %12 = vector.load %arg5[%c0_17, %c0_18, %c0_19, %c0_20] : memref<2x18x18x32xf32, #tpu.memory_space<vmem>>, vector<2x18x18x32xf32>
      %13 = vector.extract_strided_slice %12 {offsets = [0, 0, 0, 0], sizes = [2, 16, 16, 32], strides = [1, 1, 1, 1]} : vector<2x18x18x32xf32> to vector<2x16x16x32xf32>
      %14 = vector.extract_strided_slice %12 {offsets = [0, 0, 1, 0], sizes = [2, 16, 16, 32], strides = [1, 1, 1, 1]} : vector<2x18x18x32xf32> to vector<2x16x16x32xf32>
      %15 = vector.extract_strided_slice %12 {offsets = [0, 0, 2, 0], sizes = [2, 16, 16, 32], strides = [1, 1, 1, 1]} : vector<2x18x18x32xf32> to vector<2x16x16x32xf32>
      %16 = vector.extract_strided_slice %12 {offsets = [0, 1, 0, 0], sizes = [2, 16, 16, 32], strides = [1, 1, 1, 1]} : vector<2x18x18x32xf32> to vector<2x16x16x32xf32>
      %17 = vector.extract_strided_slice %12 {offsets = [0, 1, 1, 0], sizes = [2, 16, 16, 32], strides = [1, 1, 1, 1]} : vector<2x18x18x32xf32> to vector<2x16x16x32xf32>
      %18 = vector.extract_strided_slice %12 {offsets = [0, 1, 2, 0], sizes = [2, 16, 16, 32], strides = [1, 1, 1, 1]} : vector<2x18x18x32xf32> to vector<2x16x16x32xf32>
      %19 = vector.extract_strided_slice %12 {offsets = [0, 2, 0, 0], sizes = [2, 16, 16, 32], strides = [1, 1, 1, 1]} : vector<2x18x18x32xf32> to vector<2x16x16x32xf32>
      %20 = vector.extract_strided_slice %12 {offsets = [0, 2, 1, 0], sizes = [2, 16, 16, 32], strides = [1, 1, 1, 1]} : vector<2x18x18x32xf32> to vector<2x16x16x32xf32>
      %21 = vector.extract_strided_slice %12 {offsets = [0, 2, 2, 0], sizes = [2, 16, 16, 32], strides = [1, 1, 1, 1]} : vector<2x18x18x32xf32> to vector<2x16x16x32xf32>
      %22 = tpu.concatenate %13, %14, %15, %16, %17, %18, %19, %20, %21 in 3 : vector<2x16x16x32xf32>, vector<2x16x16x32xf32>, vector<2x16x16x32xf32>, vector<2x16x16x32xf32>, vector<2x16x16x32xf32>, vector<2x16x16x32xf32>, vector<2x16x16x32xf32>, vector<2x16x16x32xf32>, vector<2x16x16x32xf32> -> vector<2x16x16x288xf32>
      %23 = vector.shape_cast %22 : vector<2x16x16x288xf32> to vector<512x288xf32>
      %24 = arith.truncf %23 : vector<512x288xf32> to vector<512x288xbf16>
      %cst_21 = arith.constant dense<0.000000e+00> : vector<512x128xf32>
      %25 = tpu.matmul %24, %8, %cst_21 {dimension_numbers = #tpu.dot_dimension_numbers<[1], [0], [0], [1], [0, 0, 1, 1], [], []>} : vector<512x288xbf16>, vector<288x128xbf16>, vector<512x128xf32> -> vector<512x128xf32>
      %26 = arith.index_cast %11 : i32 to index
      %c0_22 = arith.constant 0 : index
      %c0_23 = arith.constant 0 : index
      %c0_24 = arith.constant 0 : index
      %c0_25 = arith.constant 0 : index
      %27 = vector.load %arg0[%26, %c0_22, %c0_23, %c0_24, %c0_25] : memref<8x2x16x16x128xf32, #tpu.memory_space<vmem>>, vector<1x2x16x16x128xf32>
      %28 = vector.shape_cast %27 : vector<1x2x16x16x128xf32> to vector<2x16x16x128xf32>
      %29 = vector.shape_cast %25 : vector<512x128xf32> to vector<2x16x16x128xf32>
      %30 = arith.addf %28, %29 : vector<2x16x16x128xf32>
      %cst_26 = arith.constant dense<0.000000e+00> : vector<128xf32>
      %31 = vector.multi_reduction <add>, %30, %cst_26 [0, 1, 2] : vector<2x16x16x128xf32> to vector<128xf32>
      %32 = vector.shape_cast %31 : vector<128xf32> to vector<1x1x1x128xf32>
      %33 = arith.mulf %30, %30 : vector<2x16x16x128xf32>
      %cst_27 = arith.constant dense<0.000000e+00> : vector<128xf32>
      %34 = vector.multi_reduction <add>, %33, %cst_27 [0, 1, 2] : vector<2x16x16x128xf32> to vector<128xf32>
      %35 = vector.shape_cast %34 : vector<128xf32> to vector<1x1x1x128xf32>
      %cst_28 = arith.constant 0.001953125 : f32
      %36 = vector.broadcast %cst_28 : f32 to vector<1x1x1x128xf32>
      %37 = arith.mulf %32, %36 : vector<1x1x1x128xf32>
      %cst_29 = arith.constant 0.001953125 : f32
      %38 = vector.broadcast %cst_29 : f32 to vector<1x1x1x128xf32>
      %39 = arith.mulf %35, %38 : vector<1x1x1x128xf32>
      %40 = arith.mulf %37, %37 : vector<1x1x1x128xf32>
      %41 = arith.subf %39, %40 : vector<1x1x1x128xf32>
      %cst_30 = arith.constant 9.99999974E-6 : f32
      %42 = vector.broadcast %cst_30 : f32 to vector<1x1x1x128xf32>
      %43 = arith.addf %41, %42 : vector<1x1x1x128xf32>
      %44 = math.rsqrt %43 : vector<1x1x1x128xf32>
      %45 = arith.mulf %5, %44 : vector<1x1x1x128xf32>
      %46 = arith.mulf %37, %45 : vector<1x1x1x128xf32>
      %47 = arith.subf %7, %46 : vector<1x1x1x128xf32>
      %48 = vector.broadcast %45 : vector<1x1x1x128xf32> to vector<2x16x16x128xf32>
      %49 = arith.mulf %30, %48 : vector<2x16x16x128xf32>
      %50 = vector.broadcast %47 : vector<1x1x1x128xf32> to vector<2x16x16x128xf32>
      %51 = arith.addf %49, %50 : vector<2x16x16x128xf32>
      %52 = arith.negf %51 : vector<2x16x16x128xf32>
      %53 = math.exp %52 : vector<2x16x16x128xf32>
      %cst_31 = arith.constant 1.000000e+00 : f32
      %54 = vector.broadcast %cst_31 : f32 to vector<2x16x16x128xf32>
      %55 = arith.addf %54, %53 : vector<2x16x16x128xf32>
      %56 = arith.divf %54, %55 : vector<2x16x16x128xf32>
      %57 = vector.extract_strided_slice %56 {offsets = [0, 0, 0, 0], sizes = [2, 16, 16, 32], strides = [1, 1, 1, 1]} : vector<2x16x16x128xf32> to vector<2x16x16x32xf32>
      %58 = vector.extract_strided_slice %56 {offsets = [0, 0, 0, 32], sizes = [2, 16, 16, 32], strides = [1, 1, 1, 1]} : vector<2x16x16x128xf32> to vector<2x16x16x32xf32>
      %59 = vector.extract_strided_slice %56 {offsets = [0, 0, 0, 96], sizes = [2, 16, 16, 32], strides = [1, 1, 1, 1]} : vector<2x16x16x128xf32> to vector<2x16x16x32xf32>
      %60 = vector.extract_strided_slice %51 {offsets = [0, 0, 0, 64], sizes = [2, 16, 16, 32], strides = [1, 1, 1, 1]} : vector<2x16x16x128xf32> to vector<2x16x16x32xf32>
      %c0_32 = arith.constant 0 : index
      %c0_33 = arith.constant 0 : index
      %c0_34 = arith.constant 0 : index
      %c0_35 = arith.constant 0 : index
      %61 = vector.load %arg6[%c0_32, %c0_33, %c0_34, %c0_35] : memref<2x16x16x32xf32, #tpu.memory_space<vmem>>, vector<2x16x16x32xf32>
      %62 = arith.mulf %58, %61 : vector<2x16x16x32xf32>
      %63 = arith.mulf %57, %60 : vector<2x16x16x32xf32>
      %64 = arith.addf %62, %63 : vector<2x16x16x32xf32>
      %65 = math.tanh %64 : vector<2x16x16x32xf32>
      %66 = arith.mulf %59, %65 : vector<2x16x16x32xf32>
      %c0_36 = arith.constant 0 : index
      %c0_37 = arith.constant 0 : index
      %c0_38 = arith.constant 0 : index
      %c0_39 = arith.constant 0 : index
      %67 = vector.load %arg6[%c0_36, %c0_37, %c0_38, %c0_39] : memref<2x16x16x32xf32, #tpu.memory_space<vmem>>, vector<2x16x16x32xf32>
      tpu.vector_store %arg6[%c0_36, %c0_37, %c0_38, %c0_39], %64 {strides = array<i32>} : memref<2x16x16x32xf32, #tpu.memory_space<vmem>>, vector<2x16x16x32xf32>,
      %c0_40 = arith.constant 0 : index
      %c1 = arith.constant 1 : index
      %c1_41 = arith.constant 1 : index
      %c0_42 = arith.constant 0 : index
      %68 = vector.load %arg5[%c0_40, %c1, %c1_41, %c0_42] : memref<2x18x18x32xf32, #tpu.memory_space<vmem>>, vector<2x16x16x32xf32>
      tpu.vector_store %arg5[%c0_40, %c1, %c1_41, %c0_42], %66 {strides = array<i32>} : memref<2x18x18x32xf32, #tpu.memory_space<vmem>>, vector<2x16x16x32xf32>,
      %69 = vector.shape_cast %66 : vector<2x16x16x32xf32> to vector<2x16x512xf32>
      %70 = arith.index_cast %11 : i32 to index
      %c0_43 = arith.constant 0 : index
      %c0_44 = arith.constant 0 : index
      %c0_45 = arith.constant 0 : index
      %71 = vector.load %arg4[%70, %c0_43, %c0_44, %c0_45] : memref<8x2x16x512xf32, #tpu.memory_space<vmem>>, vector<1x2x16x512xf32>
      %72 = vector.shape_cast %71 : vector<1x2x16x512xf32> to vector<2x16x512xf32>
      %73 = vector.shape_cast %69 : vector<2x16x512xf32> to vector<1x2x16x512xf32>
      tpu.vector_store %arg4[%70, %c0_43, %c0_44, %c0_45], %73 {strides = array<i32>} : memref<8x2x16x512xf32, #tpu.memory_space<vmem>>, vector<1x2x16x512xf32>,
    }
    %c8_i32_14 = arith.constant 8 : i32
    return
  }
}

</mosaic_0001>

<llo_original>
// kernel: conv_lstm_block.1
$region0: #{conv_lstm_block.1}
  #allocation0 [shape = 'u32[]', space=smem, size = 0x4, offset = 0x4, fixed_abs, tag = 'smem constant byte address 0x4 - core index']
  #allocation1 [shape = 'u32[72,128]{1,0:T(1,128)}', space=vmem, size = 0x9000, scoped, tag = 'internal scratch']
  #allocation2 [shape = 'f32[2,18,18,32]{3,2,1,0:T(8,128)}', space=vmem, size = 0x6c000, scoped, tag = 'scratch operand']
  #allocation3 [shape = 'f32[2,16,16,32]{3,2,1,0:T(8,128)}', space=vmem, size = 0x40000, scoped, tag = 'scratch operand']
  %s0 = inlined_call_operand.vmem [shape: f32[8,2,16,16,128], index: 0, kind: input, shape index: {}]
  %s1 = inlined_call_operand.vmem [shape: bf16[288,128], index: 1, kind: input, shape index: {}]
  %s2 = inlined_call_operand.vmem [shape: f32[1,128], index: 2, kind: input, shape index: {}]
  %s3 = inlined_call_operand.vmem [shape: f32[1,128], index: 3, kind: input, shape index: {}]
  %s4 = inlined_call_operand.vmem [shape: f32[8,2,16,512], index: 4, kind: output, shape index: {}]
  %s5 = sld [smem:[#allocation0]]
  $region33: #{conv_lstm_block.1} parent=0
    _
  %s7 = ssub.s32 1, %s5
  %s8 = scalar_select 0, %s7, %s5
  // Predicated region
  $region2: #{conv_lstm_block.1} parent=0 // pred_check
    _
  $region3: #{conv_lstm_block.1} parent=0 // pred_check_branch
    %10 = sbr.rel (0) target = $region5
  $region4: #{conv_lstm_block.1} parent=0 // pred_region
    _
  $region5: #{conv_lstm_block.1} parent=0 // pred_fallthru
    _
  // Predicated region
  $region6: #{conv_lstm_block.1} parent=0 // pred_check
    _
  $region7: #{conv_lstm_block.1} parent=0 // pred_check_branch
    %12 = sbr.rel (0) target = $region9
  $region8: #{conv_lstm_block.1} parent=0 // pred_region
    _
  $region9: #{conv_lstm_block.1} parent=0 // pred_fallthru
    _
  // Predicated region
  $region10: #{conv_lstm_block.1} parent=0 // pred_check
    _
  $region11: #{conv_lstm_block.1} parent=0 // pred_check_branch
    %14 = sbr.rel (0) target = $region13
  $region12: #{conv_lstm_block.1} parent=0 // pred_region
    _
  $region13: #{conv_lstm_block.1} parent=0 // pred_fallthru
    _
  // Predicated region
  $region14: #{conv_lstm_block.1} parent=0 // pred_check
    _
  $region15: #{conv_lstm_block.1} parent=0 // pred_check_branch
    %16 = sbr.rel (0) target = $region17
  $region16: #{conv_lstm_block.1} parent=0 // pred_region
    _
  $region17: #{conv_lstm_block.1} parent=0 // pred_fallthru
    _
  %vm18 = vcmask 261120
  %19 = vst.msk [vmem:[#allocation2] sm:$0xff] %vm18, 0.0
  %20 = vst.msk [vmem:[#allocation2 + $0x8] sm:$0xff] %vm18, 0.0
  %vm21 = vcmask 254976
  %22 = vst.msk [vmem:[#allocation2 + $0x10] sm:$0x3] %vm21, 0.0
  %23 = vst.msk [vmem:[#allocation2 + $0x18] sm:$0xff] %vm18, 0.0
  %24 = vst.msk [vmem:[#allocation2 + $0x20] sm:$0xff] %vm18, 0.0
  %25 = vst.msk [vmem:[#allocation2 + $0x28] sm:$0x3] %vm21, 0.0
  %26 = vst.msk [vmem:[#allocation2 + $0x30] sm:$0xff] %vm18, 0.0
  %27 = vst.msk [vmem:[#allocation2 + $0x38] sm:$0xff] %vm18, 0.0
  %28 = vst.msk [vmem:[#allocation2 + $0x40] sm:$0x3] %vm21, 0.0
  %29 = vst.msk [vmem:[#allocation2 + $0x48] sm:$0xff] %vm18, 0.0
  %30 = vst.msk [vmem:[#allocation2 + $0x50] sm:$0xff] %vm18, 0.0
  %31 = vst.msk [vmem:[#allocation2 + $0x58] sm:$0x3] %vm21, 0.0
  %32 = vst.msk [vmem:[#allocation2 + $0x60] sm:$0xff] %vm18, 0.0
  %33 = vst.msk [vmem:[#allocation2 + $0x68] sm:$0xff] %vm18, 0.0
  %34 = vst.msk [vmem:[#allocation2 + $0x70] sm:$0x3] %vm21, 0.0
  %35 = vst.msk [vmem:[#allocation2 + $0x78] sm:$0xff] %vm18, 0.0
  %36 = vst.msk [vmem:[#allocation2 + $0x80] sm:$0xff] %vm18, 0.0
  %37 = vst.msk [vmem:[#allocation2 + $0x88] sm:$0x3] %vm21, 0.0
  %38 = vst.msk [vmem:[#allocation2 + $0x90] sm:$0xff] %vm18, 0.0
  %39 = vst.msk [vmem:[#allocation2 + $0x98] sm:$0xff] %vm18, 0.0
  %40 = vst.msk [vmem:[#allocation2 + $0xa0] sm:$0x3] %vm21, 0.0
  %41 = vst.msk [vmem:[#allocation2 + $0xa8] sm:$0xff] %vm18, 0.0
  %42 = vst.msk [vmem:[#allocation2 + $0xb0] sm:$0xff] %vm18, 0.0
  %43 = vst.msk [vmem:[#allocation2 + $0xb8] sm:$0x3] %vm21, 0.0
  %44 = vst.msk [vmem:[#allocation2 + $0xc0] sm:$0xff] %vm18, 0.0
  %45 = vst.msk [vmem:[#allocation2 + $0xc8] sm:$0xff] %vm18, 0.0
  %46 = vst.msk [vmem:[#allocation2 + $0xd0] sm:$0x3] %vm21, 0.0
  %47 = vst.msk [vmem:[#allocation2 + $0xd8] sm:$0xff] %vm18, 0.0
  %48 = vst.msk [vmem:[#allocation2 + $0xe0] sm:$0xff] %vm18, 0.0
  %49 = vst.msk [vmem:[#allocation2 + $0xe8] sm:$0x3] %vm21, 0.0
  %50 = vst.msk [vmem:[#allocation2 + $0xf0] sm:$0xff] %vm18, 0.0
  %51 = vst.msk [vmem:[#allocation2 + $0xf8] sm:$0xff] %vm18, 0.0
  %52 = vst.msk [vmem:[#allocation2 + $0x100] sm:$0x3] %vm21, 0.0
  %53 = vst.msk [vmem:[#allocation2 + $0x108] sm:$0xff] %vm18, 0.0
  %54 = vst.msk [vmem:[#allocation2 + $0x110] sm:$0xff] %vm18, 0.0
  %55 = vst.msk [vmem:[#allocation2 + $0x118] sm:$0x3] %vm21, 0.0
  %56 = vst.msk [vmem:[#allocation2 + $0x120] sm:$0xff] %vm18, 0.0
  %57 = vst.msk [vmem:[#allocation2 + $0x128] sm:$0xff] %vm18, 0.0
  %58 = vst.msk [vmem:[#allocation2 + $0x130] sm:$0x3] %vm21, 0.0
  %59 = vst.msk [vmem:[#allocation2 + $0x138] sm:$0xff] %vm18, 0.0
  %60 = vst.msk [vmem:[#allocation2 + $0x140] sm:$0xff] %vm18, 0.0
  %61 = vst.msk [vmem:[#allocation2 + $0x148] sm:$0x3] %vm21, 0.0
  %62 = vst.msk [vmem:[#allocation2 + $0x150] sm:$0xff] %vm18, 0.0
  %63 = vst.msk [vmem:[#allocation2 + $0x158] sm:$0xff] %vm18, 0.0
  %64 = vst.msk [vmem:[#allocation2 + $0x160] sm:$0x3] %vm21, 0.0
  %65 = vst.msk [vmem:[#allocation2 + $0x168] sm:$0xff] %vm18, 0.0
  %66 = vst.msk [vmem:[#allocation2 + $0x170] sm:$0xff] %vm18, 0.0
  %67 = vst.msk [vmem:[#allocation2 + $0x178] sm:$0x3] %vm21, 0.0
  %68 = vst.msk [vmem:[#allocation2 + $0x180] sm:$0xff] %vm18, 0.0
  %69 = vst.msk [vmem:[#allocation2 + $0x188] sm:$0xff] %vm18, 0.0
  %70 = vst.msk [vmem:[#allocation2 + $0x190] sm:$0x3] %vm21, 0.0
  %71 = vst.msk [vmem:[#allocation2 + $0x198] sm:$0xff] %vm18, 0.0
  %72 = vst.msk [vmem:[#allocation2 + $0x1a0] sm:$0xff] %vm18, 0.0
  %73 = vst.msk [vmem:[#allocation2 + $0x1a8] sm:$0x3] %vm21, 0.0
  %74 = vst.msk [vmem:[#allocation2 + $0x1b0] sm:$0xff] %vm18, 0.0
  %75 = vst.msk [vmem:[#allocation2 + $0x1b8] sm:$0xff] %vm18, 0.0
  %76 = vst.msk [vmem:[#allocation2 + $0x1c0] sm:$0x3] %vm21, 0.0
  %77 = vst.msk [vmem:[#allocation2 + $0x1c8] sm:$0xff] %vm18, 0.0
  %78 = vst.msk [vmem:[#allocation2 + $0x1d0] sm:$0xff] %vm18, 0.0
  %79 = vst.msk [vmem:[#allocation2 + $0x1d8] sm:$0x3] %vm21, 0.0
  %80 = vst.msk [vmem:[#allocation2 + $0x1e0] sm:$0xff] %vm18, 0.0
  %81 = vst.msk [vmem:[#allocation2 + $0x1e8] sm:$0xff] %vm18, 0.0
  %82 = vst.msk [vmem:[#allocation2 + $0x1f0] sm:$0x3] %vm21, 0.0
  %83 = vst.msk [vmem:[#allocation2 + $0x1f8] sm:$0xff] %vm18, 0.0
  %84 = vst.msk [vmem:[#allocation2 + $0x200] sm:$0xff] %vm18, 0.0
  %85 = vst.msk [vmem:[#allocation2 + $0x208] sm:$0x3] %vm21, 0.0
  %86 = vst.msk [vmem:[#allocation2 + $0x210] sm:$0xff] %vm18, 0.0
  %87 = vst.msk [vmem:[#allocation2 + $0x218] sm:$0xff] %vm18, 0.0
  %88 = vst.msk [vmem:[#allocation2 + $0x220] sm:$0x3] %vm21, 0.0
  %89 = vst.msk [vmem:[#allocation2 + $0x228] sm:$0xff] %vm18, 0.0
  %90 = vst.msk [vmem:[#allocation2 + $0x230] sm:$0xff] %vm18, 0.0
  %91 = vst.msk [vmem:[#allocation2 + $0x238] sm:$0x3] %vm21, 0.0
  %92 = vst.msk [vmem:[#allocation2 + $0x240] sm:$0xff] %vm18, 0.0
  %93 = vst.msk [vmem:[#allocation2 + $0x248] sm:$0xff] %vm18, 0.0
  %94 = vst.msk [vmem:[#allocation2 + $0x250] sm:$0x3] %vm21, 0.0
  %95 = vst.msk [vmem:[#allocation2 + $0x258] sm:$0xff] %vm18, 0.0
  %96 = vst.msk [vmem:[#allocation2 + $0x260] sm:$0xff] %vm18, 0.0
  %97 = vst.msk [vmem:[#allocation2 + $0x268] sm:$0x3] %vm21, 0.0
  %98 = vst.msk [vmem:[#allocation2 + $0x270] sm:$0xff] %vm18, 0.0
  %99 = vst.msk [vmem:[#allocation2 + $0x278] sm:$0xff] %vm18, 0.0
  %100 = vst.msk [vmem:[#allocation2 + $0x280] sm:$0x3] %vm21, 0.0
  %101 = vst.msk [vmem:[#allocation2 + $0x288] sm:$0xff] %vm18, 0.0
  %102 = vst.msk [vmem:[#allocation2 + $0x290] sm:$0xff] %vm18, 0.0
  %103 = vst.msk [vmem:[#allocation2 + $0x298] sm:$0x3] %vm21, 0.0
  %104 = vst.msk [vmem:[#allocation2 + $0x2a0] sm:$0xff] %vm18, 0.0
  %105 = vst.msk [vmem:[#allocation2 + $0x2a8] sm:$0xff] %vm18, 0.0
  %106 = vst.msk [vmem:[#allocation2 + $0x2b0] sm:$0x3] %vm21, 0.0
  %107 = vst.msk [vmem:[#allocation2 + $0x2b8] sm:$0xff] %vm18, 0.0
  %108 = vst.msk [vmem:[#allocation2 + $0x2c0] sm:$0xff] %vm18, 0.0
  %109 = vst.msk [vmem:[#allocation2 + $0x2c8] sm:$0x3] %vm21, 0.0
  %110 = vst.msk [vmem:[#allocation2 + $0x2d0] sm:$0xff] %vm18, 0.0
  %111 = vst.msk [vmem:[#allocation2 + $0x2d8] sm:$0xff] %vm18, 0.0
  %112 = vst.msk [vmem:[#allocation2 + $0x2e0] sm:$0x3] %vm21, 0.0
  %113 = vst.msk [vmem:[#allocation2 + $0x2e8] sm:$0xff] %vm18, 0.0
  %114 = vst.msk [vmem:[#allocation2 + $0x2f0] sm:$0xff] %vm18, 0.0
  %115 = vst.msk [vmem:[#allocation2 + $0x2f8] sm:$0x3] %vm21, 0.0
  %116 = vst.msk [vmem:[#allocation2 + $0x300] sm:$0xff] %vm18, 0.0
  %117 = vst.msk [vmem:[#allocation2 + $0x308] sm:$0xff] %vm18, 0.0
  %118 = vst.msk [vmem:[#allocation2 + $0x310] sm:$0x3] %vm21, 0.0
  %119 = vst.msk [vmem:[#allocation2 + $0x318] sm:$0xff] %vm18, 0.0
  %120 = vst.msk [vmem:[#allocation2 + $0x320] sm:$0xff] %vm18, 0.0
  %121 = vst.msk [vmem:[#allocation2 + $0x328] sm:$0x3] %vm21, 0.0
  %122 = vst.msk [vmem:[#allocation2 + $0x330] sm:$0xff] %vm18, 0.0
  %123 = vst.msk [vmem:[#allocation2 + $0x338] sm:$0xff] %vm18, 0.0
  %124 = vst.msk [vmem:[#allocation2 + $0x340] sm:$0x3] %vm21, 0.0
  %125 = vst.msk [vmem:[#allocation2 + $0x348] sm:$0xff] %vm18, 0.0
  %126 = vst.msk [vmem:[#allocation2 + $0x350] sm:$0xff] %vm18, 0.0
  %127 = vst.msk [vmem:[#allocation2 + $0x358] sm:$0x3] %vm21, 0.0
  %128 = vst.msk [vmem:[#allocation3] sm:$0xff] %vm18, 0.0
  %129 = vst.msk [vmem:[#allocation3 + $0x8] sm:$0xff] %vm18, 0.0
  %130 = vst.msk [vmem:[#allocation3 + $0x10] sm:$0xff] %vm18, 0.0
  %131 = vst.msk [vmem:[#allocation3 + $0x18] sm:$0xff] %vm18, 0.0
  %132 = vst.msk [vmem:[#allocation3 + $0x20] sm:$0xff] %vm18, 0.0
  %133 = vst.msk [vmem:[#allocation3 + $0x28] sm:$0xff] %vm18, 0.0
  %134 = vst.msk [vmem:[#allocation3 + $0x30] sm:$0xff] %vm18, 0.0
  %135 = vst.msk [vmem:[#allocation3 + $0x38] sm:$0xff] %vm18, 0.0
  %136 = vst.msk [vmem:[#allocation3 + $0x40] sm:$0xff] %vm18, 0.0
  %137 = vst.msk [vmem:[#allocation3 + $0x48] sm:$0xff] %vm18, 0.0
  %138 = vst.msk [vmem:[#allocation3 + $0x50] sm:$0xff] %vm18, 0.0
  %139 = vst.msk [vmem:[#allocation3 + $0x58] sm:$0xff] %vm18, 0.0
  %140 = vst.msk [vmem:[#allocation3 + $0x60] sm:$0xff] %vm18, 0.0
  %141 = vst.msk [vmem:[#allocation3 + $0x68] sm:$0xff] %vm18, 0.0
  %142 = vst.msk [vmem:[#allocation3 + $0x70] sm:$0xff] %vm18, 0.0
  %143 = vst.msk [vmem:[#allocation3 + $0x78] sm:$0xff] %vm18, 0.0
  %144 = vst.msk [vmem:[#allocation3 + $0x80] sm:$0xff] %vm18, 0.0
  %145 = vst.msk [vmem:[#allocation3 + $0x88] sm:$0xff] %vm18, 0.0
  %146 = vst.msk [vmem:[#allocation3 + $0x90] sm:$0xff] %vm18, 0.0
  %147 = vst.msk [vmem:[#allocation3 + $0x98] sm:$0xff] %vm18, 0.0
  %148 = vst.msk [vmem:[#allocation3 + $0xa0] sm:$0xff] %vm18, 0.0
  %149 = vst.msk [vmem:[#allocation3 + $0xa8] sm:$0xff] %vm18, 0.0
  %150 = vst.msk [vmem:[#allocation3 + $0xb0] sm:$0xff] %vm18, 0.0
  %151 = vst.msk [vmem:[#allocation3 + $0xb8] sm:$0xff] %vm18, 0.0
  %152 = vst.msk [vmem:[#allocation3 + $0xc0] sm:$0xff] %vm18, 0.0
  %153 = vst.msk [vmem:[#allocation3 + $0xc8] sm:$0xff] %vm18, 0.0
  %154 = vst.msk [vmem:[#allocation3 + $0xd0] sm:$0xff] %vm18, 0.0
  %155 = vst.msk [vmem:[#allocation3 + $0xd8] sm:$0xff] %vm18, 0.0
  %156 = vst.msk [vmem:[#allocation3 + $0xe0] sm:$0xff] %vm18, 0.0
  %157 = vst.msk [vmem:[#allocation3 + $0xe8] sm:$0xff] %vm18, 0.0
  %158 = vst.msk [vmem:[#allocation3 + $0xf0] sm:$0xff] %vm18, 0.0
  %159 = vst.msk [vmem:[#allocation3 + $0xf8] sm:$0xff] %vm18, 0.0
  %160 = vst.msk [vmem:[#allocation3 + $0x100] sm:$0xff] %vm18, 0.0
  %161 = vst.msk [vmem:[#allocation3 + $0x108] sm:$0xff] %vm18, 0.0
  %162 = vst.msk [vmem:[#allocation3 + $0x110] sm:$0xff] %vm18, 0.0
  %163 = vst.msk [vmem:[#allocation3 + $0x118] sm:$0xff] %vm18, 0.0
  %164 = vst.msk [vmem:[#allocation3 + $0x120] sm:$0xff] %vm18, 0.0
  %165 = vst.msk [vmem:[#allocation3 + $0x128] sm:$0xff] %vm18, 0.0
  %166 = vst.msk [vmem:[#allocation3 + $0x130] sm:$0xff] %vm18, 0.0
  %167 = vst.msk [vmem:[#allocation3 + $0x138] sm:$0xff] %vm18, 0.0
  %168 = vst.msk [vmem:[#allocation3 + $0x140] sm:$0xff] %vm18, 0.0
  %169 = vst.msk [vmem:[#allocation3 + $0x148] sm:$0xff] %vm18, 0.0
  %170 = vst.msk [vmem:[#allocation3 + $0x150] sm:$0xff] %vm18, 0.0
  %171 = vst.msk [vmem:[#allocation3 + $0x158] sm:$0xff] %vm18, 0.0
  %172 = vst.msk [vmem:[#allocation3 + $0x160] sm:$0xff] %vm18, 0.0
  %173 = vst.msk [vmem:[#allocation3 + $0x168] sm:$0xff] %vm18, 0.0
  %174 = vst.msk [vmem:[#allocation3 + $0x170] sm:$0xff] %vm18, 0.0
  %175 = vst.msk [vmem:[#allocation3 + $0x178] sm:$0xff] %vm18, 0.0
  %176 = vst.msk [vmem:[#allocation3 + $0x180] sm:$0xff] %vm18, 0.0
  %177 = vst.msk [vmem:[#allocation3 + $0x188] sm:$0xff] %vm18, 0.0
  %178 = vst.msk [vmem:[#allocation3 + $0x190] sm:$0xff] %vm18, 0.0
  %179 = vst.msk [vmem:[#allocation3 + $0x198] sm:$0xff] %vm18, 0.0
  %180 = vst.msk [vmem:[#allocation3 + $0x1a0] sm:$0xff] %vm18, 0.0
  %181 = vst.msk [vmem:[#allocation3 + $0x1a8] sm:$0xff] %vm18, 0.0
  %182 = vst.msk [vmem:[#allocation3 + $0x1b0] sm:$0xff] %vm18, 0.0
  %183 = vst.msk [vmem:[#allocation3 + $0x1b8] sm:$0xff] %vm18, 0.0
  %184 = vst.msk [vmem:[#allocation3 + $0x1c0] sm:$0xff] %vm18, 0.0
  %185 = vst.msk [vmem:[#allocation3 + $0x1c8] sm:$0xff] %vm18, 0.0
  %186 = vst.msk [vmem:[#allocation3 + $0x1d0] sm:$0xff] %vm18, 0.0
  %187 = vst.msk [vmem:[#allocation3 + $0x1d8] sm:$0xff] %vm18, 0.0
  %188 = vst.msk [vmem:[#allocation3 + $0x1e0] sm:$0xff] %vm18, 0.0
  %189 = vst.msk [vmem:[#allocation3 + $0x1e8] sm:$0xff] %vm18, 0.0
  %190 = vst.msk [vmem:[#allocation3 + $0x1f0] sm:$0xff] %vm18, 0.0
  %191 = vst.msk [vmem:[#allocation3 + $0x1f8] sm:$0xff] %vm18, 0.0
  %v192 = vld [vmem:[%s2] sm:$0x1]
  %v193 = vld [vmem:[%s3] sm:$0x1]
  %v194 = vld [vmem:[%s1] sm:$0xf]
  %v195 = vld [vmem:[%s1 + $0x4] sm:$0xf]
  %v196 = vld [vmem:[%s1 + $0x8] sm:$0xf]
  %v197 = vld [vmem:[%s1 + $0xc] sm:$0xf]
  %v198 = vld [vmem:[%s1 + $0x10] sm:$0xf]
  %v199 = vld [vmem:[%s1 + $0x14] sm:$0xf]
  %v200 = vld [vmem:[%s1 + $0x18] sm:$0xf]
  %v201 = vld [vmem:[%s1 + $0x1c] sm:$0xf]
  %v202 = vld [vmem:[%s1 + $0x20] sm:$0xf]
  %v203 = vld [vmem:[%s1 + $0x24] sm:$0xf]
  %v204 = vld [vmem:[%s1 + $0x28] sm:$0xf]
  %v205 = vld [vmem:[%s1 + $0x2c] sm:$0xf]
  %v206 = vld [vmem:[%s1 + $0x30] sm:$0xf]
  %v207 = vld [vmem:[%s1 + $0x34] sm:$0xf]
  %v208 = vld [vmem:[%s1 + $0x38] sm:$0xf]
  %v209 = vld [vmem:[%s1 + $0x3c] sm:$0xf]
  %v210 = vld [vmem:[%s1 + $0x40] sm:$0xf]
  %v211 = vld [vmem:[%s1 + $0x44] sm:$0xf]
  %v212 = vld [vmem:[%s1 + $0x48] sm:$0xf]
  %v213 = vld [vmem:[%s1 + $0x4c] sm:$0xf]
  %v214 = vld [vmem:[%s1 + $0x50] sm:$0xf]
  %v215 = vld [vmem:[%s1 + $0x54] sm:$0xf]
  %v216 = vld [vmem:[%s1 + $0x58] sm:$0xf]
  %v217 = vld [vmem:[%s1 + $0x5c] sm:$0xf]
  %v218 = vld [vmem:[%s1 + $0x60] sm:$0xf]
  %v219 = vld [vmem:[%s1 + $0x64] sm:$0xf]
  %v220 = vld [vmem:[%s1 + $0x68] sm:$0xf]
  %v221 = vld [vmem:[%s1 + $0x6c] sm:$0xf]
  %v222 = vld [vmem:[%s1 + $0x70] sm:$0xf]
  %v223 = vld [vmem:[%s1 + $0x74] sm:$0xf]
  %v224 = vld [vmem:[%s1 + $0x78] sm:$0xf]
  %v225 = vld [vmem:[%s1 + $0x7c] sm:$0xf]
  %v226 = vld [vmem:[%s1 + $0x80] sm:$0xf]
  %v227 = vld [vmem:[%s1 + $0x84] sm:$0xf]
  %v228 = vld [vmem:[%s1 + $0x88] sm:$0xf]
  %v229 = vld [vmem:[%s1 + $0x8c] sm:$0xf]
  loop: start=0, step=1, limit=8
  $region18: #{conv_lstm_block.1} parent=0 // loop_pre_header
    _
  $region19: #{conv_lstm_block.1} parent=0 // loop_header
    %s231 = sphi 0, %s235
    %p232 = scmp.ge.s32.totalorder %s231, 8
  $region20: #{conv_lstm_block.1} parent=0 // loop_header_branch
    %234 = sbr.rel (%p232) target = $region24
  $region21: #{conv_lstm_block.1} parent=0 // loop_body
    %v236 = vld [vmem:[#allocation2] sm:$0xff]
    %v237 = vld [vmem:[#allocation2 + $0x8] sm:$0xff]
    %v238 = vld [vmem:[#allocation2 + $0x10] sm:$0x3]
    %v239 = vld [vmem:[#allocation2 + $0x18] sm:$0xff]
    %v240 = vld [vmem:[#allocation2 + $0x20] sm:$0xff]
    %v241 = vld [vmem:[#allocation2 + $0x28] sm:$0x3]
    %v242 = vld [vmem:[#allocation2 + $0x30] sm:$0xff]
    %v243 = vld [vmem:[#allocation2 + $0x38] sm:$0xff]
    %v244 = vld [vmem:[#allocation2 + $0x40] sm:$0x3]
    %v245 = vld [vmem:[#allocation2 + $0x48] sm:$0xff]
    %v246 = vld [vmem:[#allocation2 + $0x50] sm:$0xff]
    %v247 = vld [vmem:[#allocation2 + $0x58] sm:$0x3]
    %v248 = vld [vmem:[#allocation2 + $0x60] sm:$0xff]
    %v249 = vld [vmem:[#allocation2 + $0x68] sm:$0xff]
    %v250 = vld [vmem:[#allocation2 + $0x70] sm:$0x3]
    %v251 = vld [vmem:[#allocation2 + $0x78] sm:$0xff]
    %v252 = vld [vmem:[#allocation2 + $0x80] sm:$0xff]
    %v253 = vld [vmem:[#allocation2 + $0x88] sm:$0x3]
    %v254 = vld [vmem:[#allocation2 + $0x90] sm:$0xff]
    %v255 = vld [vmem:[#allocation2 + $0x98] sm:$0xff]
    %v256 = vld [vmem:[#allocation2 + $0xa0] sm:$0x3]
    %v257 = vld [vmem:[#allocation2 + $0xa8] sm:$0xff]
    %v258 = vld [vmem:[#allocation2 + $0xb0] sm:$0xff]
    %v259 = vld [vmem:[#allocation2 + $0xb8] sm:$0x3]
    %v260 = vld [vmem:[#allocation2 + $0xc0] sm:$0xff]
    %v261 = vld [vmem:[#allocation2 + $0xc8] sm:$0xff]
    %v262 = vld [vmem:[#allocation2 + $0xd0] sm:$0x3]
    %v263 = vld [vmem:[#allocation2 + $0xd8] sm:$0xff]
    %v264 = vld [vmem:[#allocation2 + $0xe0] sm:$0xff]
    %v265 = vld [vmem:[#allocation2 + $0xe8] sm:$0x3]
    %v266 = vld [vmem:[#allocation2 + $0xf0] sm:$0xff]
    %v267 = vld [vmem:[#allocation2 + $0xf8] sm:$0xff]
    %v268 = vld [vmem:[#allocation2 + $0x100] sm:$0x3]
    %v269 = vld [vmem:[#allocation2 + $0x108] sm:$0xff]
    %v270 = vld [vmem:[#allocation2 + $0x110] sm:$0xff]
    %v271 = vld [vmem:[#allocation2 + $0x118] sm:$0x3]
    %v272 = vld [vmem:[#allocation2 + $0x120] sm:$0xff]
    %v273 = vld [vmem:[#allocation2 + $0x128] sm:$0xff]
    %v274 = vld [vmem:[#allocation2 + $0x130] sm:$0x3]
    %v275 = vld [vmem:[#allocation2 + $0x138] sm:$0xff]
    %v276 = vld [vmem:[#allocation2 + $0x140] sm:$0xff]
    %v277 = vld [vmem:[#allocation2 + $0x148] sm:$0x3]
    %v278 = vld [vmem:[#allocation2 + $0x150] sm:$0xff]
    %v279 = vld [vmem:[#allocation2 + $0x158] sm:$0xff]
    %v280 = vld [vmem:[#allocation2 + $0x160] sm:$0x3]
    %v281 = vld [vmem:[#allocation2 + $0x168] sm:$0xff]
    %v282 = vld [vmem:[#allocation2 + $0x170] sm:$0xff]
    %v283 = vld [vmem:[#allocation2 + $0x178] sm:$0x3]
    %v284 = vld [vmem:[#allocation2 + $0x180] sm:$0xff]
    %v285 = vld [vmem:[#allocation2 + $0x188] sm:$0xff]
    %v286 = vld [vmem:[#allocation2 + $0x190] sm:$0x3]
    %v287 = vld [vmem:[#allocation2 + $0x198] sm:$0xff]
    %v288 = vld [vmem:[#allocation2 + $0x1a0] sm:$0xff]
    %v289 = vld [vmem:[#allocation2 + $0x1a8] sm:$0x3]
    %v290 = vld [vmem:[#allocation2 + $0x1b0] sm:$0xff]
    %v291 = vld [vmem:[#allocation2 + $0x1b8] sm:$0xff]
    %v292 = vld [vmem:[#allocation2 + $0x1c0] sm:$0x3]
    %v293 = vld [vmem:[#allocation2 + $0x1c8] sm:$0xff]
    %v294 = vld [vmem:[#allocation2 + $0x1d0] sm:$0xff]
    %v295 = vld [vmem:[#allocation2 + $0x1d8] sm:$0x3]
    %v296 = vld [vmem:[#allocation2 + $0x1e0] sm:$0xff]
    %v297 = vld [vmem:[#allocation2 + $0x1e8] sm:$0xff]
    %v298 = vld [vmem:[#allocation2 + $0x1f0] sm:$0x3]
    %v299 = vld [vmem:[#allocation2 + $0x1f8] sm:$0xff]
    %v300 = vld [vmem:[#allocation2 + $0x200] sm:$0xff]
    %v301 = vld [vmem:[#allocation2 + $0x208] sm:$0x3]
    %v302 = vld [vmem:[#allocation2 + $0x210] sm:$0xff]
    %v303 = vld [vmem:[#allocation2 + $0x218] sm:$0xff]
    %v304 = vld [vmem:[#allocation2 + $0x220] sm:$0x3]
    %v305 = vld [vmem:[#allocation2 + $0x228] sm:$0xff]
    %v306 = vld [vmem:[#allocation2 + $0x230] sm:$0xff]
    %v307 = vld [vmem:[#allocation2 + $0x238] sm:$0x3]
    %v308 = vld [vmem:[#allocation2 + $0x240] sm:$0xff]
    %v309 = vld [vmem:[#allocation2 + $0x248] sm:$0xff]
    %v310 = vld [vmem:[#allocation2 + $0x250] sm:$0x3]
    %v311 = vld [vmem:[#allocation2 + $0x258] sm:$0xff]
    %v312 = vld [vmem:[#allocation2 + $0x260] sm:$0xff]
    %v313 = vld [vmem:[#allocation2 + $0x268] sm:$0x3]
    %v314 = vld [vmem:[#allocation2 + $0x270] sm:$0xff]
    %v315 = vld [vmem:[#allocation2 + $0x278] sm:$0xff]
    %v316 = vld [vmem:[#allocation2 + $0x280] sm:$0x3]
    %v317 = vld [vmem:[#allocation2 + $0x288] sm:$0xff]
    %v318 = vld [vmem:[#allocation2 + $0x290] sm:$0xff]
    %v319 = vld [vmem:[#allocation2 + $0x298] sm:$0x3]
    %v320 = vld [vmem:[#allocation2 + $0x2a0] sm:$0xff]
    %v321 = vld [vmem:[#allocation2 + $0x2a8] sm:$0xff]
    %v322 = vld [vmem:[#allocation2 + $0x2b0] sm:$0x3]
    %v323 = vld [vmem:[#allocation2 + $0x2b8] sm:$0xff]
    %v324 = vld [vmem:[#allocation2 + $0x2c0] sm:$0xff]
    %v325 = vld [vmem:[#allocation2 + $0x2c8] sm:$0x3]
    %v326 = vld [vmem:[#allocation2 + $0x2d0] sm:$0xff]
    %v327 = vld [vmem:[#allocation2 + $0x2d8] sm:$0xff]
    %v328 = vld [vmem:[#allocation2 + $0x2e0] sm:$0x3]
    %v329 = vld [vmem:[#allocation2 + $0x2e8] sm:$0xff]
    %v330 = vld [vmem:[#allocation2 + $0x2f0] sm:$0xff]
    %v331 = vld [vmem:[#allocation2 + $0x2f8] sm:$0x3]
    %v332 = vld [vmem:[#allocation2 + $0x300] sm:$0xff]
    %v333 = vld [vmem:[#allocation2 + $0x308] sm:$0xff]
    %v334 = vld [vmem:[#allocation2 + $0x310] sm:$0x3]
    %v335 = vld [vmem:[#allocation2 + $0x318] sm:$0xff]
    %v336 = vld [vmem:[#allocation2 + $0x320] sm:$0xff]
    %v337 = vld [vmem:[#allocation2 + $0x328] sm:$0x3]
    %v338 = vld [vmem:[#allocation2 + $0x330] sm:$0xff]
    %v339 = vld [vmem:[#allocation2 + $0x338] sm:$0xff]
    %v340 = vld [vmem:[#allocation2 + $0x340] sm:$0x3]
    %v341 = vld [vmem:[#allocation2 + $0x348] sm:$0xff]
    %v342 = vld [vmem:[#allocation2 + $0x350] sm:$0xff]
    %v343 = vld [vmem:[#allocation2 + $0x358] sm:$0x3]
    %vm440 = vcmask 1046528
    %v441 = vrot.slane %v236, 1
    %v442 = vrot.slane %v237, 1
    %v443 = vsel %vm440, %v441, %v442
    %v444 = vrot.slane %v238, 1
    %v445 = vsel %vm440, %v442, %v444
    %v446 = vrot.slane %v239, 1
    %v447 = vrot.slane %v240, 1
    %v448 = vsel %vm440, %v446, %v447
    %v449 = vrot.slane %v241, 1
    %v450 = vsel %vm440, %v447, %v449
    %v451 = vrot.slane %v242, 1
    %v452 = vrot.slane %v243, 1
    %v453 = vsel %vm440, %v451, %v452
    %v454 = vrot.slane %v244, 1
    %v455 = vsel %vm440, %v452, %v454
    %v456 = vrot.slane %v245, 1
    %v457 = vrot.slane %v246, 1
    %v458 = vsel %vm440, %v456, %v457
    %v459 = vrot.slane %v247, 1
    %v460 = vsel %vm440, %v457, %v459
    %v461 = vrot.slane %v248, 1
    %v462 = vrot.slane %v249, 1
    %v463 = vsel %vm440, %v461, %v462
    %v464 = vrot.slane %v250, 1
    %v465 = vsel %vm440, %v462, %v464
    %v466 = vrot.slane %v251, 1
    %v467 = vrot.slane %v252, 1
    %v468 = vsel %vm440, %v466, %v467
    %v469 = vrot.slane %v253, 1
    %v470 = vsel %vm440, %v467, %v469
    %v471 = vrot.slane %v254, 1
    %v472 = vrot.slane %v255, 1
    %v473 = vsel %vm440, %v471, %v472
    %v474 = vrot.slane %v256, 1
    %v475 = vsel %vm440, %v472, %v474
    %v476 = vrot.slane %v257, 1
    %v477 = vrot.slane %v258, 1
    %v478 = vsel %vm440, %v476, %v477
    %v479 = vrot.slane %v259, 1
    %v480 = vsel %vm440, %v477, %v479
    %v481 = vrot.slane %v260, 1
    %v482 = vrot.slane %v261, 1
    %v483 = vsel %vm440, %v481, %v482
    %v484 = vrot.slane %v262, 1
    %v485 = vsel %vm440, %v482, %v484
    %v486 = vrot.slane %v263, 1
    %v487 = vrot.slane %v264, 1
    %v488 = vsel %vm440, %v486, %v487
    %v489 = vrot.slane %v265, 1
    %v490 = vsel %vm440, %v487, %v489
    %v491 = vrot.slane %v266, 1
    %v492 = vrot.slane %v267, 1
    %v493 = vsel %vm440, %v491, %v492
    %v494 = vrot.slane %v268, 1
    %v495 = vsel %vm440, %v492, %v494
    %v496 = vrot.slane %v269, 1
    %v497 = vrot.slane %v270, 1
    %v498 = vsel %vm440, %v496, %v497
    %v499 = vrot.slane %v271, 1
    %v500 = vsel %vm440, %v497, %v499
    %v501 = vrot.slane %v272, 1
    %v502 = vrot.slane %v273, 1
    %v503 = vsel %vm440, %v501, %v502
    %v504 = vrot.slane %v274, 1
    %v505 = vsel %vm440, %v502, %v504
    %v506 = vrot.slane %v275, 1
    %v507 = vrot.slane %v276, 1
    %v508 = vsel %vm440, %v506, %v507
    %v509 = vrot.slane %v277, 1
    %v510 = vsel %vm440, %v507, %v509
    %v511 = vrot.slane %v278, 1
    %v512 = vrot.slane %v279, 1
    %v513 = vsel %vm440, %v511, %v512
    %v514 = vrot.slane %v280, 1
    %v515 = vsel %vm440, %v512, %v514
    %v516 = vrot.slane %v281, 1
    %v517 = vrot.slane %v282, 1
    %v518 = vsel %vm440, %v516, %v517
    %v519 = vrot.slane %v283, 1
    %v520 = vsel %vm440, %v517, %v519
    %v521 = vrot.slane %v290, 1
    %v522 = vrot.slane %v291, 1
    %v523 = vsel %vm440, %v521, %v522
    %v524 = vrot.slane %v292, 1
    %v525 = vsel %vm440, %v522, %v524
    %v526 = vrot.slane %v293, 1
    %v527 = vrot.slane %v294, 1
    %v528 = vsel %vm440, %v526, %v527
    %v529 = vrot.slane %v295, 1
    %v530 = vsel %vm440, %v527, %v529
    %v531 = vrot.slane %v296, 1
    %v532 = vrot.slane %v297, 1
    %v533 = vsel %vm440, %v531, %v532
    %v534 = vrot.slane %v298, 1
    %v535 = vsel %vm440, %v532, %v534
    %v536 = vrot.slane %v299, 1
    %v537 = vrot.slane %v300, 1
    %v538 = vsel %vm440, %v536, %v537
    %v539 = vrot.slane %v301, 1
    %v540 = vsel %vm440, %v537, %v539
    %v541 = vrot.slane %v302, 1
    %v542 = vrot.slane %v303, 1
    %v543 = vsel %vm440, %v541, %v542
    %v544 = vrot.slane %v304, 1
    %v545 = vsel %vm440, %v542, %v544
    %v546 = vrot.slane %v305, 1
    %v547 = vrot.slane %v306, 1
    %v548 = vsel %vm440, %v546, %v547
    %v549 = vrot.slane %v307, 1
    %v550 = vsel %vm440, %v547, %v549
    %v551 = vrot.slane %v308, 1
    %v552 = vrot.slane %v309, 1
    %v553 = vsel %vm440, %v551, %v552
    %v554 = vrot.slane %v310, 1
    %v555 = vsel %vm440, %v552, %v554
    %v556 = vrot.slane %v311, 1
    %v557 = vrot.slane %v312, 1
    %v558 = vsel %vm440, %v556, %v557
    %v559 = vrot.slane %v313, 1
    %v560 = vsel %vm440, %v557, %v559
    %v561 = vrot.slane %v314, 1
    %v562 = vrot.slane %v315, 1
    %v563 = vsel %vm440, %v561, %v562
    %v564 = vrot.slane %v316, 1
    %v565 = vsel %vm440, %v562, %v564
    %v566 = vrot.slane %v317, 1
    %v567 = vrot.slane %v318, 1
    %v568 = vsel %vm440, %v566, %v567
    %v569 = vrot.slane %v319, 1
    %v570 = vsel %vm440, %v567, %v569
    %v571 = vrot.slane %v320, 1
    %v572 = vrot.slane %v321, 1
    %v573 = vsel %vm440, %v571, %v572
    %v574 = vrot.slane %v322, 1
    %v575 = vsel %vm440, %v572, %v574
    %v576 = vrot.slane %v323, 1
    %v577 = vrot.slane %v324, 1
    %v578 = vsel %vm440, %v576, %v577
    %v579 = vrot.slane %v325, 1
    %v580 = vsel %vm440, %v577, %v579
    %v581 = vrot.slane %v326, 1
    %v582 = vrot.slane %v327, 1
    %v583 = vsel %vm440, %v581, %v582
    %v584 = vrot.slane %v328, 1
    %v585 = vsel %vm440, %v582, %v584
    %v586 = vrot.slane %v329, 1
    %v587 = vrot.slane %v330, 1
    %v588 = vsel %vm440, %v586, %v587
    %v589 = vrot.slane %v331, 1
    %v590 = vsel %vm440, %v587, %v589
    %v591 = vrot.slane %v332, 1
    %v592 = vrot.slane %v333, 1
    %v593 = vsel %vm440, %v591, %v592
    %v594 = vrot.slane %v334, 1
    %v595 = vsel %vm440, %v592, %v594
    %v596 = vrot.slane %v335, 1
    %v597 = vrot.slane %v336, 1
    %v598 = vsel %vm440, %v596, %v597
    %v599 = vrot.slane %v337, 1
    %v600 = vsel %vm440, %v597, %v599
    %601 = vrot.lane.b32.xlu0 %v443, 32
    %v602 = vpop.permute.xlu0 %601
    %603 = vrot.lane.b32.xlu0 %v445, 32
    %v604 = vpop.permute.xlu0 %603
    %605 = vrot.lane.b32.xlu0 %v448, 32
    %v606 = vpop.permute.xlu0 %605
    %607 = vrot.lane.b32.xlu0 %v450, 32
    %v608 = vpop.permute.xlu0 %607
    %609 = vrot.lane.b32.xlu0 %v453, 32
    %v610 = vpop.permute.xlu0 %609
    %611 = vrot.lane.b32.xlu0 %v455, 32
    %v612 = vpop.permute.xlu0 %611
    %613 = vrot.lane.b32.xlu0 %v458, 32
    %v614 = vpop.permute.xlu0 %613
    %615 = vrot.lane.b32.xlu0 %v460, 32
    %v616 = vpop.permute.xlu0 %615
    %617 = vrot.lane.b32.xlu0 %v463, 32
    %v618 = vpop.permute.xlu0 %617
    %619 = vrot.lane.b32.xlu0 %v465, 32
    %v620 = vpop.permute.xlu0 %619
    %621 = vrot.lane.b32.xlu0 %v468, 32
    %v622 = vpop.permute.xlu0 %621
    %623 = vrot.lane.b32.xlu0 %v470, 32
    %v624 = vpop.permute.xlu0 %623
    %625 = vrot.lane.b32.xlu0 %v473, 32
    %v626 = vpop.permute.xlu0 %625
    %627 = vrot.lane.b32.xlu0 %v475, 32
    %v628 = vpop.permute.xlu0 %627
    %629 = vrot.lane.b32.xlu0 %v478, 32
    %v630 = vpop.permute.xlu0 %629
    %631 = vrot.lane.b32.xlu0 %v480, 32
    %v632 = vpop.permute.xlu0 %631
    %633 = vrot.lane.b32.xlu0 %v483, 32
    %v634 = vpop.permute.xlu0 %633
    %635 = vrot.lane.b32.xlu0 %v485, 32
    %v636 = vpop.permute.xlu0 %635
    %637 = vrot.lane.b32.xlu0 %v488, 32
    %v638 = vpop.permute.xlu0 %637
    %639 = vrot.lane.b32.xlu0 %v490, 32
    %v640 = vpop.permute.xlu0 %639
    %641 = vrot.lane.b32.xlu0 %v493, 32
    %v642 = vpop.permute.xlu0 %641
    %643 = vrot.lane.b32.xlu0 %v495, 32
    %v644 = vpop.permute.xlu0 %643
    %645 = vrot.lane.b32.xlu0 %v498, 32
    %v646 = vpop.permute.xlu0 %645
    %647 = vrot.lane.b32.xlu0 %v500, 32
    %v648 = vpop.permute.xlu0 %647
    %649 = vrot.lane.b32.xlu0 %v503, 32
    %v650 = vpop.permute.xlu0 %649
    %651 = vrot.lane.b32.xlu0 %v505, 32
    %v652 = vpop.permute.xlu0 %651
    %653 = vrot.lane.b32.xlu0 %v508, 32
    %v654 = vpop.permute.xlu0 %653
    %655 = vrot.lane.b32.xlu0 %v510, 32
    %v656 = vpop.permute.xlu0 %655
    %657 = vrot.lane.b32.xlu0 %v513, 32
    %v658 = vpop.permute.xlu0 %657
    %659 = vrot.lane.b32.xlu0 %v515, 32
    %v660 = vpop.permute.xlu0 %659
    %661 = vrot.lane.b32.xlu0 %v518, 32
    %v662 = vpop.permute.xlu0 %661
    %663 = vrot.lane.b32.xlu0 %v520, 32
    %v664 = vpop.permute.xlu0 %663
    %665 = vrot.lane.b32.xlu0 %v523, 32
    %v666 = vpop.permute.xlu0 %665
    %667 = vrot.lane.b32.xlu0 %v525, 32
    %v668 = vpop.permute.xlu0 %667
    %669 = vrot.lane.b32.xlu0 %v528, 32
    %v670 = vpop.permute.xlu0 %669
    %671 = vrot.lane.b32.xlu0 %v530, 32
    %v672 = vpop.permute.xlu0 %671
    %673 = vrot.lane.b32.xlu0 %v533, 32
    %v674 = vpop.permute.xlu0 %673
    %675 = vrot.lane.b32.xlu0 %v535, 32
    %v676 = vpop.permute.xlu0 %675
    %677 = vrot.lane.b32.xlu0 %v538, 32
    %v678 = vpop.permute.xlu0 %677
    %679 = vrot.lane.b32.xlu0 %v540, 32
    %v680 = vpop.permute.xlu0 %679
    %681 = vrot.lane.b32.xlu0 %v543, 32
    %v682 = vpop.permute.xlu0 %681
    %683 = vrot.lane.b32.xlu0 %v545, 32
    %v684 = vpop.permute.xlu0 %683
    %685 = vrot.lane.b32.xlu0 %v548, 32
    %v686 = vpop.permute.xlu0 %685
    %687 = vrot.lane.b32.xlu0 %v550, 32
    %v688 = vpop.permute.xlu0 %687
    %689 = vrot.lane.b32.xlu0 %v553, 32
    %v690 = vpop.permute.xlu0 %689
    %691 = vrot.lane.b32.xlu0 %v555, 32
    %v692 = vpop.permute.xlu0 %691
    %693 = vrot.lane.b32.xlu0 %v558, 32
    %v694 = vpop.permute.xlu0 %693
    %695 = vrot.lane.b32.xlu0 %v560, 32
    %v696 = vpop.permute.xlu0 %695
    %697 = vrot.lane.b32.xlu0 %v563, 32
    %v698 = vpop.permute.xlu0 %697
    %699 = vrot.lane.b32.xlu0 %v565, 32
    %v700 = vpop.permute.xlu0 %699
    %701 = vrot.lane.b32.xlu0 %v568, 32
    %v702 = vpop.permute.xlu0 %701
    %703 = vrot.lane.b32.xlu0 %v570, 32
    %v704 = vpop.permute.xlu0 %703
    %705 = vrot.lane.b32.xlu0 %v573, 32
    %v706 = vpop.permute.xlu0 %705
    %707 = vrot.lane.b32.xlu0 %v575, 32
    %v708 = vpop.permute.xlu0 %707
    %709 = vrot.lane.b32.xlu0 %v578, 32
    %v710 = vpop.permute.xlu0 %709
    %711 = vrot.lane.b32.xlu0 %v580, 32
    %v712 = vpop.permute.xlu0 %711
    %713 = vrot.lane.b32.xlu0 %v583, 32
    %v714 = vpop.permute.xlu0 %713
    %715 = vrot.lane.b32.xlu0 %v585, 32
    %v716 = vpop.permute.xlu0 %715
    %717 = vrot.lane.b32.xlu0 %v588, 32
    %v718 = vpop.permute.xlu0 %717
    %719 = vrot.lane.b32.xlu0 %v590, 32
    %v720 = vpop.permute.xlu0 %719
    %721 = vrot.lane.b32.xlu0 %v593, 32
    %v722 = vpop.permute.xlu0 %721
    %723 = vrot.lane.b32.xlu0 %v595, 32
    %v724 = vpop.permute.xlu0 %723
    %725 = vrot.lane.b32.xlu0 %v598, 32
    %v726 = vpop.permute.xlu0 %725
    %727 = vrot.lane.b32.xlu0 %v600, 32
    %v728 = vpop.permute.xlu0 %727
    %vm793 = vcmask 1045504
    %v794 = vrot.slane %v236, 2
    %v795 = vrot.slane %v237, 2
    %v796 = vsel %vm793, %v794, %v795
    %v797 = vrot.slane %v238, 2
    %v798 = vsel %vm793, %v795, %v797
    %v799 = vrot.slane %v239, 2
    %v800 = vrot.slane %v240, 2
    %v801 = vsel %vm793, %v799, %v800
    %v802 = vrot.slane %v241, 2
    %v803 = vsel %vm793, %v800, %v802
    %v804 = vrot.slane %v242, 2
    %v805 = vrot.slane %v243, 2
    %v806 = vsel %vm793, %v804, %v805
    %v807 = vrot.slane %v244, 2
    %v808 = vsel %vm793, %v805, %v807
    %v809 = vrot.slane %v245, 2
    %v810 = vrot.slane %v246, 2
    %v811 = vsel %vm793, %v809, %v810
    %v812 = vrot.slane %v247, 2
    %v813 = vsel %vm793, %v810, %v812
    %v814 = vrot.slane %v248, 2
    %v815 = vrot.slane %v249, 2
    %v816 = vsel %vm793, %v814, %v815
    %v817 = vrot.slane %v250, 2
    %v818 = vsel %vm793, %v815, %v817
    %v819 = vrot.slane %v251, 2
    %v820 = vrot.slane %v252, 2
    %v821 = vsel %vm793, %v819, %v820
    %v822 = vrot.slane %v253, 2
    %v823 = vsel %vm793, %v820, %v822
    %v824 = vrot.slane %v254, 2
    %v825 = vrot.slane %v255, 2
    %v826 = vsel %vm793, %v824, %v825
    %v827 = vrot.slane %v256, 2
    %v828 = vsel %vm793, %v825, %v827
    %v829 = vrot.slane %v257, 2
    %v830 = vrot.slane %v258, 2
    %v831 = vsel %vm793, %v829, %v830
    %v832 = vrot.slane %v259, 2
    %v833 = vsel %vm793, %v830, %v832
    %v834 = vrot.slane %v260, 2
    %v835 = vrot.slane %v261, 2
    %v836 = vsel %vm793, %v834, %v835
    %v837 = vrot.slane %v262, 2
    %v838 = vsel %vm793, %v835, %v837
    %v839 = vrot.slane %v263, 2
    %v840 = vrot.slane %v264, 2
    %v841 = vsel %vm793, %v839, %v840
    %v842 = vrot.slane %v265, 2
    %v843 = vsel %vm793, %v840, %v842
    %v844 = vrot.slane %v266, 2
    %v845 = vrot.slane %v267, 2
    %v846 = vsel %vm793, %v844, %v845
    %v847 = vrot.slane %v268, 2
    %v848 = vsel %vm793, %v845, %v847
    %v849 = vrot.slane %v269, 2
    %v850 = vrot.slane %v270, 2
    %v851 = vsel %vm793, %v849, %v850
    %v852 = vrot.slane %v271, 2
    %v853 = vsel %vm793, %v850, %v852
    %v854 = vrot.slane %v272, 2
    %v855 = vrot.slane %v273, 2
    %v856 = vsel %vm793, %v854, %v855
    %v857 = vrot.slane %v274, 2
    %v858 = vsel %vm793, %v855, %v857
    %v859 = vrot.slane %v275, 2
    %v860 = vrot.slane %v276, 2
    %v861 = vsel %vm793, %v859, %v860
    %v862 = vrot.slane %v277, 2
    %v863 = vsel %vm793, %v860, %v862
    %v864 = vrot.slane %v278, 2
    %v865 = vrot.slane %v279, 2
    %v866 = vsel %vm793, %v864, %v865
    %v867 = vrot.slane %v280, 2
    %v868 = vsel %vm793, %v865, %v867
    %v869 = vrot.slane %v281, 2
    %v870 = vrot.slane %v282, 2
    %v871 = vsel %vm793, %v869, %v870
    %v872 = vrot.slane %v283, 2
    %v873 = vsel %vm793, %v870, %v872
    %v874 = vrot.slane %v290, 2
    %v875 = vrot.slane %v291, 2
    %v876 = vsel %vm793, %v874, %v875
    %v877 = vrot.slane %v292, 2
    %v878 = vsel %vm793, %v875, %v877
    %v879 = vrot.slane %v293, 2
    %v880 = vrot.slane %v294, 2
    %v881 = vsel %vm793, %v879, %v880
    %v882 = vrot.slane %v295, 2
    %v883 = vsel %vm793, %v880, %v882
    %v884 = vrot.slane %v296, 2
    %v885 = vrot.slane %v297, 2
    %v886 = vsel %vm793, %v884, %v885
    %v887 = vrot.slane %v298, 2
    %v888 = vsel %vm793, %v885, %v887
    %v889 = vrot.slane %v299, 2
    %v890 = vrot.slane %v300, 2
    %v891 = vsel %vm793, %v889, %v890
    %v892 = vrot.slane %v301, 2
    %v893 = vsel %vm793, %v890, %v892
    %v894 = vrot.slane %v302, 2
    %v895 = vrot.slane %v303, 2
    %v896 = vsel %vm793, %v894, %v895
    %v897 = vrot.slane %v304, 2
    %v898 = vsel %vm793, %v895, %v897
    %v899 = vrot.slane %v305, 2
    %v900 = vrot.slane %v306, 2
    %v901 = vsel %vm793, %v899, %v900
    %v902 = vrot.slane %v307, 2
    %v903 = vsel %vm793, %v900, %v902
    %v904 = vrot.slane %v308, 2
    %v905 = vrot.slane %v309, 2
    %v906 = vsel %vm793, %v904, %v905
    %v907 = vrot.slane %v310, 2
    %v908 = vsel %vm793, %v905, %v907
    %v909 = vrot.slane %v311, 2
    %v910 = vrot.slane %v312, 2
    %v911 = vsel %vm793, %v909, %v910
    %v912 = vrot.slane %v313, 2
    %v913 = vsel %vm793, %v910, %v912
    %v914 = vrot.slane %v314, 2
    %v915 = vrot.slane %v315, 2
    %v916 = vsel %vm793, %v914, %v915
    %v917 = vrot.slane %v316, 2
    %v918 = vsel %vm793, %v915, %v917
    %v919 = vrot.slane %v317, 2
    %v920 = vrot.slane %v318, 2
    %v921 = vsel %vm793, %v919, %v920
    %v922 = vrot.slane %v319, 2
    %v923 = vsel %vm793, %v920, %v922
    %v924 = vrot.slane %v320, 2
    %v925 = vrot.slane %v321, 2
    %v926 = vsel %vm793, %v924, %v925
    %v927 = vrot.slane %v322, 2
    %v928 = vsel %vm793, %v925, %v927
    %v929 = vrot.slane %v323, 2
    %v930 = vrot.slane %v324, 2
    %v931 = vsel %vm793, %v929, %v930
    %v932 = vrot.slane %v325, 2
    %v933 = vsel %vm793, %v930, %v932
    %v934 = vrot.slane %v326, 2
    %v935 = vrot.slane %v327, 2
    %v936 = vsel %vm793, %v934, %v935
    %v937 = vrot.slane %v328, 2
    %v938 = vsel %vm793, %v935, %v937
    %v939 = vrot.slane %v329, 2
    %v940 = vrot.slane %v330, 2
    %v941 = vsel %vm793, %v939, %v940
    %v942 = vrot.slane %v331, 2
    %v943 = vsel %vm793, %v940, %v942
    %v944 = vrot.slane %v332, 2
    %v945 = vrot.slane %v333, 2
    %v946 = vsel %vm793, %v944, %v945
    %v947 = vrot.slane %v334, 2
    %v948 = vsel %vm793, %v945, %v947
    %v949 = vrot.slane %v335, 2
    %v950 = vrot.slane %v336, 2
    %v951 = vsel %vm793, %v949, %v950
    %v952 = vrot.slane %v337, 2
    %v953 = vsel %vm793, %v950, %v952
    %954 = vrot.lane.b32.xlu0 %v796, 64
    %v955 = vpop.permute.xlu0 %954
    %956 = vrot.lane.b32.xlu0 %v798, 64
    %v957 = vpop.permute.xlu0 %956
    %958 = vrot.lane.b32.xlu0 %v801, 64
    %v959 = vpop.permute.xlu0 %958
    %960 = vrot.lane.b32.xlu0 %v803, 64
    %v961 = vpop.permute.xlu0 %960
    %962 = vrot.lane.b32.xlu0 %v806, 64
    %v963 = vpop.permute.xlu0 %962
    %964 = vrot.lane.b32.xlu0 %v808, 64
    %v965 = vpop.permute.xlu0 %964
    %966 = vrot.lane.b32.xlu0 %v811, 64
    %v967 = vpop.permute.xlu0 %966
    %968 = vrot.lane.b32.xlu0 %v813, 64
    %v969 = vpop.permute.xlu0 %968
    %970 = vrot.lane.b32.xlu0 %v816, 64
    %v971 = vpop.permute.xlu0 %970
    %972 = vrot.lane.b32.xlu0 %v818, 64
    %v973 = vpop.permute.xlu0 %972
    %974 = vrot.lane.b32.xlu0 %v821, 64
    %v975 = vpop.permute.xlu0 %974
    %976 = vrot.lane.b32.xlu0 %v823, 64
    %v977 = vpop.permute.xlu0 %976
    %978 = vrot.lane.b32.xlu0 %v826, 64
    %v979 = vpop.permute.xlu0 %978
    %980 = vrot.lane.b32.xlu0 %v828, 64
    %v981 = vpop.permute.xlu0 %980
    %982 = vrot.lane.b32.xlu0 %v831, 64
    %v983 = vpop.permute.xlu0 %982
    %984 = vrot.lane.b32.xlu0 %v833, 64
    %v985 = vpop.permute.xlu0 %984
    %986 = vrot.lane.b32.xlu0 %v836, 64
    %v987 = vpop.permute.xlu0 %986
    %988 = vrot.lane.b32.xlu0 %v838, 64
    %v989 = vpop.permute.xlu0 %988
    %990 = vrot.lane.b32.xlu0 %v841, 64
    %v991 = vpop.permute.xlu0 %990
    %992 = vrot.lane.b32.xlu0 %v843, 64
    %v993 = vpop.permute.xlu0 %992
    %994 = vrot.lane.b32.xlu0 %v846, 64
    %v995 = vpop.permute.xlu0 %994
    %996 = vrot.lane.b32.xlu0 %v848, 64
    %v997 = vpop.permute.xlu0 %996
    %998 = vrot.lane.b32.xlu0 %v851, 64
    %v999 = vpop.permute.xlu0 %998
    %1000 = vrot.lane.b32.xlu0 %v853, 64
    %v1001 = vpop.permute.xlu0 %1000
    %1002 = vrot.lane.b32.xlu0 %v856, 64
    %v1003 = vpop.permute.xlu0 %1002
    %1004 = vrot.lane.b32.xlu0 %v858, 64
    %v1005 = vpop.permute.xlu0 %1004
    %1006 = vrot.lane.b32.xlu0 %v861, 64
    %v1007 = vpop.permute.xlu0 %1006
    %1008 = vrot.lane.b32.xlu0 %v863, 64
    %v1009 = vpop.permute.xlu0 %1008
    %1010 = vrot.lane.b32.xlu0 %v866, 64
    %v1011 = vpop.permute.xlu0 %1010
    %1012 = vrot.lane.b32.xlu0 %v868, 64
    %v1013 = vpop.permute.xlu0 %1012
    %1014 = vrot.lane.b32.xlu0 %v871, 64
    %v1015 = vpop.permute.xlu0 %1014
    %1016 = vrot.lane.b32.xlu0 %v873, 64
    %v1017 = vpop.permute.xlu0 %1016
    %1018 = vrot.lane.b32.xlu0 %v876, 64
    %v1019 = vpop.permute.xlu0 %1018
    %1020 = vrot.lane.b32.xlu0 %v878, 64
    %v1021 = vpop.permute.xlu0 %1020
    %1022 = vrot.lane.b32.xlu0 %v881, 64
    %v1023 = vpop.permute.xlu0 %1022
    %1024 = vrot.lane.b32.xlu0 %v883, 64
    %v1025 = vpop.permute.xlu0 %1024
    %1026 = vrot.lane.b32.xlu0 %v886, 64
    %v1027 = vpop.permute.xlu0 %1026
    %1028 = vrot.lane.b32.xlu0 %v888, 64
    %v1029 = vpop.permute.xlu0 %1028
    %1030 = vrot.lane.b32.xlu0 %v891, 64
    %v1031 = vpop.permute.xlu0 %1030
    %1032 = vrot.lane.b32.xlu0 %v893, 64
    %v1033 = vpop.permute.xlu0 %1032
    %1034 = vrot.lane.b32.xlu0 %v896, 64
    %v1035 = vpop.permute.xlu0 %1034
    %1036 = vrot.lane.b32.xlu0 %v898, 64
    %v1037 = vpop.permute.xlu0 %1036
    %1038 = vrot.lane.b32.xlu0 %v901, 64
    %v1039 = vpop.permute.xlu0 %1038
    %1040 = vrot.lane.b32.xlu0 %v903, 64
    %v1041 = vpop.permute.xlu0 %1040
    %1042 = vrot.lane.b32.xlu0 %v906, 64
    %v1043 = vpop.permute.xlu0 %1042
    %1044 = vrot.lane.b32.xlu0 %v908, 64
    %v1045 = vpop.permute.xlu0 %1044
    %1046 = vrot.lane.b32.xlu0 %v911, 64
    %v1047 = vpop.permute.xlu0 %1046
    %1048 = vrot.lane.b32.xlu0 %v913, 64
    %v1049 = vpop.permute.xlu0 %1048
    %1050 = vrot.lane.b32.xlu0 %v916, 64
    %v1051 = vpop.permute.xlu0 %1050
    %1052 = vrot.lane.b32.xlu0 %v918, 64
    %v1053 = vpop.permute.xlu0 %1052
    %1054 = vrot.lane.b32.xlu0 %v921, 64
    %v1055 = vpop.permute.xlu0 %1054
    %1056 = vrot.lane.b32.xlu0 %v923, 64
    %v1057 = vpop.permute.xlu0 %1056
    %1058 = vrot.lane.b32.xlu0 %v926, 64
    %v1059 = vpop.permute.xlu0 %1058
    %1060 = vrot.lane.b32.xlu0 %v928, 64
    %v1061 = vpop.permute.xlu0 %1060
    %1062 = vrot.lane.b32.xlu0 %v931, 64
    %v1063 = vpop.permute.xlu0 %1062
    %1064 = vrot.lane.b32.xlu0 %v933, 64
    %v1065 = vpop.permute.xlu0 %1064
    %1066 = vrot.lane.b32.xlu0 %v936, 64
    %v1067 = vpop.permute.xlu0 %1066
    %1068 = vrot.lane.b32.xlu0 %v938, 64
    %v1069 = vpop.permute.xlu0 %1068
    %1070 = vrot.lane.b32.xlu0 %v941, 64
    %v1071 = vpop.permute.xlu0 %1070
    %1072 = vrot.lane.b32.xlu0 %v943, 64
    %v1073 = vpop.permute.xlu0 %1072
    %1074 = vrot.lane.b32.xlu0 %v946, 64
    %v1075 = vpop.permute.xlu0 %1074
    %1076 = vrot.lane.b32.xlu0 %v948, 64
    %v1077 = vpop.permute.xlu0 %1076
    %1078 = vrot.lane.b32.xlu0 %v951, 64
    %v1079 = vpop.permute.xlu0 %1078
    %1080 = vrot.lane.b32.xlu0 %v953, 64
    %v1081 = vpop.permute.xlu0 %1080
    %1150 = vrot.lane.b32.xlu0 %v239, 96
    %v1151 = vpop.permute.xlu0 %1150
    %1152 = vrot.lane.b32.xlu0 %v240, 96
    %v1153 = vpop.permute.xlu0 %1152
    %1154 = vrot.lane.b32.xlu0 %v242, 96
    %v1155 = vpop.permute.xlu0 %1154
    %1156 = vrot.lane.b32.xlu0 %v243, 96
    %v1157 = vpop.permute.xlu0 %1156
    %1158 = vrot.lane.b32.xlu0 %v245, 96
    %v1159 = vpop.permute.xlu0 %1158
    %1160 = vrot.lane.b32.xlu0 %v246, 96
    %v1161 = vpop.permute.xlu0 %1160
    %1162 = vrot.lane.b32.xlu0 %v248, 96
    %v1163 = vpop.permute.xlu0 %1162
    %1164 = vrot.lane.b32.xlu0 %v249, 96
    %v1165 = vpop.permute.xlu0 %1164
    %1166 = vrot.lane.b32.xlu0 %v251, 96
    %v1167 = vpop.permute.xlu0 %1166
    %1168 = vrot.lane.b32.xlu0 %v252, 96
    %v1169 = vpop.permute.xlu0 %1168
    %1170 = vrot.lane.b32.xlu0 %v254, 96
    %v1171 = vpop.permute.xlu0 %1170
    %1172 = vrot.lane.b32.xlu0 %v255, 96
    %v1173 = vpop.permute.xlu0 %1172
    %1174 = vrot.lane.b32.xlu0 %v257, 96
    %v1175 = vpop.permute.xlu0 %1174
    %1176 = vrot.lane.b32.xlu0 %v258, 96
    %v1177 = vpop.permute.xlu0 %1176
    %1178 = vrot.lane.b32.xlu0 %v260, 96
    %v1179 = vpop.permute.xlu0 %1178
    %1180 = vrot.lane.b32.xlu0 %v261, 96
    %v1181 = vpop.permute.xlu0 %1180
    %1182 = vrot.lane.b32.xlu0 %v263, 96
    %v1183 = vpop.permute.xlu0 %1182
    %1184 = vrot.lane.b32.xlu0 %v264, 96
    %v1185 = vpop.permute.xlu0 %1184
    %1186 = vrot.lane.b32.xlu0 %v266, 96
    %v1187 = vpop.permute.xlu0 %1186
    %1188 = vrot.lane.b32.xlu0 %v267, 96
    %v1189 = vpop.permute.xlu0 %1188
    %1190 = vrot.lane.b32.xlu0 %v269, 96
    %v1191 = vpop.permute.xlu0 %1190
    %1192 = vrot.lane.b32.xlu0 %v270, 96
    %v1193 = vpop.permute.xlu0 %1192
    %1194 = vrot.lane.b32.xlu0 %v272, 96
    %v1195 = vpop.permute.xlu0 %1194
    %1196 = vrot.lane.b32.xlu0 %v273, 96
    %v1197 = vpop.permute.xlu0 %1196
    %1198 = vrot.lane.b32.xlu0 %v275, 96
    %v1199 = vpop.permute.xlu0 %1198
    %1200 = vrot.lane.b32.xlu0 %v276, 96
    %v1201 = vpop.permute.xlu0 %1200
    %1202 = vrot.lane.b32.xlu0 %v278, 96
    %v1203 = vpop.permute.xlu0 %1202
    %1204 = vrot.lane.b32.xlu0 %v279, 96
    %v1205 = vpop.permute.xlu0 %1204
    %1206 = vrot.lane.b32.xlu0 %v281, 96
    %v1207 = vpop.permute.xlu0 %1206
    %1208 = vrot.lane.b32.xlu0 %v282, 96
    %v1209 = vpop.permute.xlu0 %1208
    %1210 = vrot.lane.b32.xlu0 %v284, 96
    %v1211 = vpop.permute.xlu0 %1210
    %1212 = vrot.lane.b32.xlu0 %v285, 96
    %v1213 = vpop.permute.xlu0 %1212
    %1214 = vrot.lane.b32.xlu0 %v293, 96
    %v1215 = vpop.permute.xlu0 %1214
    %1216 = vrot.lane.b32.xlu0 %v294, 96
    %v1217 = vpop.permute.xlu0 %1216
    %1218 = vrot.lane.b32.xlu0 %v296, 96
    %v1219 = vpop.permute.xlu0 %1218
    %1220 = vrot.lane.b32.xlu0 %v297, 96
    %v1221 = vpop.permute.xlu0 %1220
    %1222 = vrot.lane.b32.xlu0 %v299, 96
    %v1223 = vpop.permute.xlu0 %1222
    %1224 = vrot.lane.b32.xlu0 %v300, 96
    %v1225 = vpop.permute.xlu0 %1224
    %1226 = vrot.lane.b32.xlu0 %v302, 96
    %v1227 = vpop.permute.xlu0 %1226
    %1228 = vrot.lane.b32.xlu0 %v303, 96
    %v1229 = vpop.permute.xlu0 %1228
    %1230 = vrot.lane.b32.xlu0 %v305, 96
    %v1231 = vpop.permute.xlu0 %1230
    %1232 = vrot.lane.b32.xlu0 %v306, 96
    %v1233 = vpop.permute.xlu0 %1232
    %1234 = vrot.lane.b32.xlu0 %v308, 96
    %v1235 = vpop.permute.xlu0 %1234
    %1236 = vrot.lane.b32.xlu0 %v309, 96
    %v1237 = vpop.permute.xlu0 %1236
    %1238 = vrot.lane.b32.xlu0 %v311, 96
    %v1239 = vpop.permute.xlu0 %1238
    %1240 = vrot.lane.b32.xlu0 %v312, 96
    %v1241 = vpop.permute.xlu0 %1240
    %1242 = vrot.lane.b32.xlu0 %v314, 96
    %v1243 = vpop.permute.xlu0 %1242
    %1244 = vrot.lane.b32.xlu0 %v315, 96
    %v1245 = vpop.permute.xlu0 %1244
    %1246 = vrot.lane.b32.xlu0 %v317, 96
    %v1247 = vpop.permute.xlu0 %1246
    %1248 = vrot.lane.b32.xlu0 %v318, 96
    %v1249 = vpop.permute.xlu0 %1248
    %1250 = vrot.lane.b32.xlu0 %v320, 96
    %v1251 = vpop.permute.xlu0 %1250
    %1252 = vrot.lane.b32.xlu0 %v321, 96
    %v1253 = vpop.permute.xlu0 %1252
    %1254 = vrot.lane.b32.xlu0 %v323, 96
    %v1255 = vpop.permute.xlu0 %1254
    %1256 = vrot.lane.b32.xlu0 %v324, 96
    %v1257 = vpop.permute.xlu0 %1256
    %1258 = vrot.lane.b32.xlu0 %v326, 96
    %v1259 = vpop.permute.xlu0 %1258
    %1260 = vrot.lane.b32.xlu0 %v327, 96
    %v1261 = vpop.permute.xlu0 %1260
    %1262 = vrot.lane.b32.xlu0 %v329, 96
    %v1263 = vpop.permute.xlu0 %1262
    %1264 = vrot.lane.b32.xlu0 %v330, 96
    %v1265 = vpop.permute.xlu0 %1264
    %1266 = vrot.lane.b32.xlu0 %v332, 96
    %v1267 = vpop.permute.xlu0 %1266
    %1268 = vrot.lane.b32.xlu0 %v333, 96
    %v1269 = vpop.permute.xlu0 %1268
    %1270 = vrot.lane.b32.xlu0 %v335, 96
    %v1271 = vpop.permute.xlu0 %1270
    %1272 = vrot.lane.b32.xlu0 %v336, 96
    %v1273 = vpop.permute.xlu0 %1272
    %1274 = vrot.lane.b32.xlu0 %v338, 96
    %v1275 = vpop.permute.xlu0 %1274
    %1276 = vrot.lane.b32.xlu0 %v339, 96
    %v1277 = vpop.permute.xlu0 %1276
    %v1344 = vrot.slane %v284, 1
    %v1345 = vrot.slane %v285, 1
    %v1346 = vsel %vm440, %v1344, %v1345
    %v1347 = vrot.slane %v286, 1
    %v1348 = vsel %vm440, %v1345, %v1347
    %v1349 = vrot.slane %v338, 1
    %v1350 = vrot.slane %v339, 1
    %v1351 = vsel %vm440, %v1349, %v1350
    %v1352 = vrot.slane %v340, 1
    %v1353 = vsel %vm440, %v1350, %v1352
    %v1418 = vrot.slane %v284, 2
    %v1419 = vrot.slane %v285, 2
    %v1420 = vsel %vm793, %v1418, %v1419
    %v1421 = vrot.slane %v286, 2
    %v1422 = vsel %vm793, %v1419, %v1421
    %v1423 = vrot.slane %v338, 2
    %v1424 = vrot.slane %v339, 2
    %v1425 = vsel %vm793, %v1423, %v1424
    %v1426 = vrot.slane %v340, 2
    %v1427 = vsel %vm793, %v1424, %v1426
    %1428 = vrot.lane.b32.xlu0 %v801, 32
    %v1429 = vpop.permute.xlu0 %1428
    %1430 = vrot.lane.b32.xlu0 %v803, 32
    %v1431 = vpop.permute.xlu0 %1430
    %1432 = vrot.lane.b32.xlu0 %v806, 32
    %v1433 = vpop.permute.xlu0 %1432
    %1434 = vrot.lane.b32.xlu0 %v808, 32
    %v1435 = vpop.permute.xlu0 %1434
    %1436 = vrot.lane.b32.xlu0 %v811, 32
    %v1437 = vpop.permute.xlu0 %1436
    %1438 = vrot.lane.b32.xlu0 %v813, 32
    %v1439 = vpop.permute.xlu0 %1438
    %1440 = vrot.lane.b32.xlu0 %v816, 32
    %v1441 = vpop.permute.xlu0 %1440
    %1442 = vrot.lane.b32.xlu0 %v818, 32
    %v1443 = vpop.permute.xlu0 %1442
    %1444 = vrot.lane.b32.xlu0 %v821, 32
    %v1445 = vpop.permute.xlu0 %1444
    %1446 = vrot.lane.b32.xlu0 %v823, 32
    %v1447 = vpop.permute.xlu0 %1446
    %1448 = vrot.lane.b32.xlu0 %v826, 32
    %v1449 = vpop.permute.xlu0 %1448
    %1450 = vrot.lane.b32.xlu0 %v828, 32
    %v1451 = vpop.permute.xlu0 %1450
    %1452 = vrot.lane.b32.xlu0 %v831, 32
    %v1453 = vpop.permute.xlu0 %1452
    %1454 = vrot.lane.b32.xlu0 %v833, 32
    %v1455 = vpop.permute.xlu0 %1454
    %1456 = vrot.lane.b32.xlu0 %v836, 32
    %v1457 = vpop.permute.xlu0 %1456
    %1458 = vrot.lane.b32.xlu0 %v838, 32
    %v1459 = vpop.permute.xlu0 %1458
    %1460 = vrot.lane.b32.xlu0 %v841, 32
    %v1461 = vpop.permute.xlu0 %1460
    %1462 = vrot.lane.b32.xlu0 %v843, 32
    %v1463 = vpop.permute.xlu0 %1462
    %1464 = vrot.lane.b32.xlu0 %v846, 32
    %v1465 = vpop.permute.xlu0 %1464
    %1466 = vrot.lane.b32.xlu0 %v848, 32
    %v1467 = vpop.permute.xlu0 %1466
    %1468 = vrot.lane.b32.xlu0 %v851, 32
    %v1469 = vpop.permute.xlu0 %1468
    %1470 = vrot.lane.b32.xlu0 %v853, 32
    %v1471 = vpop.permute.xlu0 %1470
    %1472 = vrot.lane.b32.xlu0 %v856, 32
    %v1473 = vpop.permute.xlu0 %1472
    %1474 = vrot.lane.b32.xlu0 %v858, 32
    %v1475 = vpop.permute.xlu0 %1474
    %1476 = vrot.lane.b32.xlu0 %v861, 32
    %v1477 = vpop.permute.xlu0 %1476
    %1478 = vrot.lane.b32.xlu0 %v863, 32
    %v1479 = vpop.permute.xlu0 %1478
    %1480 = vrot.lane.b32.xlu0 %v866, 32
    %v1481 = vpop.permute.xlu0 %1480
    %1482 = vrot.lane.b32.xlu0 %v868, 32
    %v1483 = vpop.permute.xlu0 %1482
    %1484 = vrot.lane.b32.xlu0 %v871, 32
    %v1485 = vpop.permute.xlu0 %1484
    %1486 = vrot.lane.b32.xlu0 %v873, 32
    %v1487 = vpop.permute.xlu0 %1486
    %1488 = vrot.lane.b32.xlu0 %v1420, 32
    %v1489 = vpop.permute.xlu0 %1488
    %1490 = vrot.lane.b32.xlu0 %v1422, 32
    %v1491 = vpop.permute.xlu0 %1490
    %1492 = vrot.lane.b32.xlu0 %v881, 32
    %v1493 = vpop.permute.xlu0 %1492
    %1494 = vrot.lane.b32.xlu0 %v883, 32
    %v1495 = vpop.permute.xlu0 %1494
    %1496 = vrot.lane.b32.xlu0 %v886, 32
    %v1497 = vpop.permute.xlu0 %1496
    %1498 = vrot.lane.b32.xlu0 %v888, 32
    %v1499 = vpop.permute.xlu0 %1498
    %1500 = vrot.lane.b32.xlu0 %v891, 32
    %v1501 = vpop.permute.xlu0 %1500
    %1502 = vrot.lane.b32.xlu0 %v893, 32
    %v1503 = vpop.permute.xlu0 %1502
    %1504 = vrot.lane.b32.xlu0 %v896, 32
    %v1505 = vpop.permute.xlu0 %1504
    %1506 = vrot.lane.b32.xlu0 %v898, 32
    %v1507 = vpop.permute.xlu0 %1506
    %1508 = vrot.lane.b32.xlu0 %v901, 32
    %v1509 = vpop.permute.xlu0 %1508
    %1510 = vrot.lane.b32.xlu0 %v903, 32
    %v1511 = vpop.permute.xlu0 %1510
    %1512 = vrot.lane.b32.xlu0 %v906, 32
    %v1513 = vpop.permute.xlu0 %1512
    %1514 = vrot.lane.b32.xlu0 %v908, 32
    %v1515 = vpop.permute.xlu0 %1514
    %1516 = vrot.lane.b32.xlu0 %v911, 32
    %v1517 = vpop.permute.xlu0 %1516
    %1518 = vrot.lane.b32.xlu0 %v913, 32
    %v1519 = vpop.permute.xlu0 %1518
    %1520 = vrot.lane.b32.xlu0 %v916, 32
    %v1521 = vpop.permute.xlu0 %1520
    %1522 = vrot.lane.b32.xlu0 %v918, 32
    %v1523 = vpop.permute.xlu0 %1522
    %1524 = vrot.lane.b32.xlu0 %v921, 32
    %v1525 = vpop.permute.xlu0 %1524
    %1526 = vrot.lane.b32.xlu0 %v923, 32
    %v1527 = vpop.permute.xlu0 %1526
    %1528 = vrot.lane.b32.xlu0 %v926, 32
    %v1529 = vpop.permute.xlu0 %1528
    %1530 = vrot.lane.b32.xlu0 %v928, 32
    %v1531 = vpop.permute.xlu0 %1530
    %1532 = vrot.lane.b32.xlu0 %v931, 32
    %v1533 = vpop.permute.xlu0 %1532
    %1534 = vrot.lane.b32.xlu0 %v933, 32
    %v1535 = vpop.permute.xlu0 %1534
    %1536 = vrot.lane.b32.xlu0 %v936, 32
    %v1537 = vpop.permute.xlu0 %1536
    %1538 = vrot.lane.b32.xlu0 %v938, 32
    %v1539 = vpop.permute.xlu0 %1538
    %1540 = vrot.lane.b32.xlu0 %v941, 32
    %v1541 = vpop.permute.xlu0 %1540
    %1542 = vrot.lane.b32.xlu0 %v943, 32
    %v1543 = vpop.permute.xlu0 %1542
    %1544 = vrot.lane.b32.xlu0 %v946, 32
    %v1545 = vpop.permute.xlu0 %1544
    %1546 = vrot.lane.b32.xlu0 %v948, 32
    %v1547 = vpop.permute.xlu0 %1546
    %1548 = vrot.lane.b32.xlu0 %v951, 32
    %v1549 = vpop.permute.xlu0 %1548
    %1550 = vrot.lane.b32.xlu0 %v953, 32
    %v1551 = vpop.permute.xlu0 %1550
    %1552 = vrot.lane.b32.xlu0 %v1425, 32
    %v1553 = vpop.permute.xlu0 %1552
    %1554 = vrot.lane.b32.xlu0 %v1427, 32
    %v1555 = vpop.permute.xlu0 %1554
    %1624 = vrot.lane.b32.xlu0 %v242, 64
    %v1625 = vpop.permute.xlu0 %1624
    %1626 = vrot.lane.b32.xlu0 %v243, 64
    %v1627 = vpop.permute.xlu0 %1626
    %1628 = vrot.lane.b32.xlu0 %v245, 64
    %v1629 = vpop.permute.xlu0 %1628
    %1630 = vrot.lane.b32.xlu0 %v246, 64
    %v1631 = vpop.permute.xlu0 %1630
    %1632 = vrot.lane.b32.xlu0 %v248, 64
    %v1633 = vpop.permute.xlu0 %1632
    %1634 = vrot.lane.b32.xlu0 %v249, 64
    %v1635 = vpop.permute.xlu0 %1634
    %1636 = vrot.lane.b32.xlu0 %v251, 64
    %v1637 = vpop.permute.xlu0 %1636
    %1638 = vrot.lane.b32.xlu0 %v252, 64
    %v1639 = vpop.permute.xlu0 %1638
    %1640 = vrot.lane.b32.xlu0 %v254, 64
    %v1641 = vpop.permute.xlu0 %1640
    %1642 = vrot.lane.b32.xlu0 %v255, 64
    %v1643 = vpop.permute.xlu0 %1642
    %1644 = vrot.lane.b32.xlu0 %v257, 64
    %v1645 = vpop.permute.xlu0 %1644
    %1646 = vrot.lane.b32.xlu0 %v258, 64
    %v1647 = vpop.permute.xlu0 %1646
    %1648 = vrot.lane.b32.xlu0 %v260, 64
    %v1649 = vpop.permute.xlu0 %1648
    %1650 = vrot.lane.b32.xlu0 %v261, 64
    %v1651 = vpop.permute.xlu0 %1650
    %1652 = vrot.lane.b32.xlu0 %v263, 64
    %v1653 = vpop.permute.xlu0 %1652
    %1654 = vrot.lane.b32.xlu0 %v264, 64
    %v1655 = vpop.permute.xlu0 %1654
    %1656 = vrot.lane.b32.xlu0 %v266, 64
    %v1657 = vpop.permute.xlu0 %1656
    %1658 = vrot.lane.b32.xlu0 %v267, 64
    %v1659 = vpop.permute.xlu0 %1658
    %1660 = vrot.lane.b32.xlu0 %v269, 64
    %v1661 = vpop.permute.xlu0 %1660
    %1662 = vrot.lane.b32.xlu0 %v270, 64
    %v1663 = vpop.permute.xlu0 %1662
    %1664 = vrot.lane.b32.xlu0 %v272, 64
    %v1665 = vpop.permute.xlu0 %1664
    %1666 = vrot.lane.b32.xlu0 %v273, 64
    %v1667 = vpop.permute.xlu0 %1666
    %1668 = vrot.lane.b32.xlu0 %v275, 64
    %v1669 = vpop.permute.xlu0 %1668
    %1670 = vrot.lane.b32.xlu0 %v276, 64
    %v1671 = vpop.permute.xlu0 %1670
    %1672 = vrot.lane.b32.xlu0 %v278, 64
    %v1673 = vpop.permute.xlu0 %1672
    %1674 = vrot.lane.b32.xlu0 %v279, 64
    %v1675 = vpop.permute.xlu0 %1674
    %1676 = vrot.lane.b32.xlu0 %v281, 64
    %v1677 = vpop.permute.xlu0 %1676
    %1678 = vrot.lane.b32.xlu0 %v282, 64
    %v1679 = vpop.permute.xlu0 %1678
    %1680 = vrot.lane.b32.xlu0 %v284, 64
    %v1681 = vpop.permute.xlu0 %1680
    %1682 = vrot.lane.b32.xlu0 %v285, 64
    %v1683 = vpop.permute.xlu0 %1682
    %1684 = vrot.lane.b32.xlu0 %v287, 64
    %v1685 = vpop.permute.xlu0 %1684
    %1686 = vrot.lane.b32.xlu0 %v288, 64
    %v1687 = vpop.permute.xlu0 %1686
    %1688 = vrot.lane.b32.xlu0 %v296, 64
    %v1689 = vpop.permute.xlu0 %1688
    %1690 = vrot.lane.b32.xlu0 %v297, 64
    %v1691 = vpop.permute.xlu0 %1690
    %1692 = vrot.lane.b32.xlu0 %v299, 64
    %v1693 = vpop.permute.xlu0 %1692
    %1694 = vrot.lane.b32.xlu0 %v300, 64
    %v1695 = vpop.permute.xlu0 %1694
    %1696 = vrot.lane.b32.xlu0 %v302, 64
    %v1697 = vpop.permute.xlu0 %1696
    %1698 = vrot.lane.b32.xlu0 %v303, 64
    %v1699 = vpop.permute.xlu0 %1698
    %1700 = vrot.lane.b32.xlu0 %v305, 64
    %v1701 = vpop.permute.xlu0 %1700
    %1702 = vrot.lane.b32.xlu0 %v306, 64
    %v1703 = vpop.permute.xlu0 %1702
    %1704 = vrot.lane.b32.xlu0 %v308, 64
    %v1705 = vpop.permute.xlu0 %1704
    %1706 = vrot.lane.b32.xlu0 %v309, 64
    %v1707 = vpop.permute.xlu0 %1706
    %1708 = vrot.lane.b32.xlu0 %v311, 64
    %v1709 = vpop.permute.xlu0 %1708
    %1710 = vrot.lane.b32.xlu0 %v312, 64
    %v1711 = vpop.permute.xlu0 %1710
    %1712 = vrot.lane.b32.xlu0 %v314, 64
    %v1713 = vpop.permute.xlu0 %1712
    %1714 = vrot.lane.b32.xlu0 %v315, 64
    %v1715 = vpop.permute.xlu0 %1714
    %1716 = vrot.lane.b32.xlu0 %v317, 64
    %v1717 = vpop.permute.xlu0 %1716
    %1718 = vrot.lane.b32.xlu0 %v318, 64
    %v1719 = vpop.permute.xlu0 %1718
    %1720 = vrot.lane.b32.xlu0 %v320, 64
    %v1721 = vpop.permute.xlu0 %1720
    %1722 = vrot.lane.b32.xlu0 %v321, 64
    %v1723 = vpop.permute.xlu0 %1722
    %1724 = vrot.lane.b32.xlu0 %v323, 64
    %v1725 = vpop.permute.xlu0 %1724
    %1726 = vrot.lane.b32.xlu0 %v324, 64
    %v1727 = vpop.permute.xlu0 %1726
    %1728 = vrot.lane.b32.xlu0 %v326, 64
    %v1729 = vpop.permute.xlu0 %1728
    %1730 = vrot.lane.b32.xlu0 %v327, 64
    %v1731 = vpop.permute.xlu0 %1730
    %1732 = vrot.lane.b32.xlu0 %v329, 64
    %v1733 = vpop.permute.xlu0 %1732
    %1734 = vrot.lane.b32.xlu0 %v330, 64
    %v1735 = vpop.permute.xlu0 %1734
    %1736 = vrot.lane.b32.xlu0 %v332, 64
    %v1737 = vpop.permute.xlu0 %1736
    %1738 = vrot.lane.b32.xlu0 %v333, 64
    %v1739 = vpop.permute.xlu0 %1738
    %1740 = vrot.lane.b32.xlu0 %v335, 64
    %v1741 = vpop.permute.xlu0 %1740
    %1742 = vrot.lane.b32.xlu0 %v336, 64
    %v1743 = vpop.permute.xlu0 %1742
    %1744 = vrot.lane.b32.xlu0 %v338, 64
    %v1745 = vpop.permute.xlu0 %1744
    %1746 = vrot.lane.b32.xlu0 %v339, 64
    %v1747 = vpop.permute.xlu0 %1746
    %1748 = vrot.lane.b32.xlu0 %v341, 64
    %v1749 = vpop.permute.xlu0 %1748
    %1750 = vrot.lane.b32.xlu0 %v342, 64
    %v1751 = vpop.permute.xlu0 %1750
    %v1818 = vrot.slane %v287, 1
    %v1819 = vrot.slane %v288, 1
    %v1820 = vsel %vm440, %v1818, %v1819
    %v1821 = vrot.slane %v289, 1
    %v1822 = vsel %vm440, %v1819, %v1821
    %v1823 = vrot.slane %v341, 1
    %v1824 = vrot.slane %v342, 1
    %v1825 = vsel %vm440, %v1823, %v1824
    %v1826 = vrot.slane %v343, 1
    %v1827 = vsel %vm440, %v1824, %v1826
    %1828 = vrot.lane.b32.xlu0 %v453, 96
    %v1829 = vpop.permute.xlu0 %1828
    %1830 = vrot.lane.b32.xlu0 %v455, 96
    %v1831 = vpop.permute.xlu0 %1830
    %1832 = vrot.lane.b32.xlu0 %v458, 96
    %v1833 = vpop.permute.xlu0 %1832
    %1834 = vrot.lane.b32.xlu0 %v460, 96
    %v1835 = vpop.permute.xlu0 %1834
    %1836 = vrot.lane.b32.xlu0 %v463, 96
    %v1837 = vpop.permute.xlu0 %1836
    %1838 = vrot.lane.b32.xlu0 %v465, 96
    %v1839 = vpop.permute.xlu0 %1838
    %1840 = vrot.lane.b32.xlu0 %v468, 96
    %v1841 = vpop.permute.xlu0 %1840
    %1842 = vrot.lane.b32.xlu0 %v470, 96
    %v1843 = vpop.permute.xlu0 %1842
    %1844 = vrot.lane.b32.xlu0 %v473, 96
    %v1845 = vpop.permute.xlu0 %1844
    %1846 = vrot.lane.b32.xlu0 %v475, 96
    %v1847 = vpop.permute.xlu0 %1846
    %1848 = vrot.lane.b32.xlu0 %v478, 96
    %v1849 = vpop.permute.xlu0 %1848
    %1850 = vrot.lane.b32.xlu0 %v480, 96
    %v1851 = vpop.permute.xlu0 %1850
    %1852 = vrot.lane.b32.xlu0 %v483, 96
    %v1853 = vpop.permute.xlu0 %1852
    %1854 = vrot.lane.b32.xlu0 %v485, 96
    %v1855 = vpop.permute.xlu0 %1854
    %1856 = vrot.lane.b32.xlu0 %v488, 96
    %v1857 = vpop.permute.xlu0 %1856
    %1858 = vrot.lane.b32.xlu0 %v490, 96
    %v1859 = vpop.permute.xlu0 %1858
    %1860 = vrot.lane.b32.xlu0 %v493, 96
    %v1861 = vpop.permute.xlu0 %1860
    %1862 = vrot.lane.b32.xlu0 %v495, 96
    %v1863 = vpop.permute.xlu0 %1862
    %1864 = vrot.lane.b32.xlu0 %v498, 96
    %v1865 = vpop.permute.xlu0 %1864
    %1866 = vrot.lane.b32.xlu0 %v500, 96
    %v1867 = vpop.permute.xlu0 %1866
    %1868 = vrot.lane.b32.xlu0 %v503, 96
    %v1869 = vpop.permute.xlu0 %1868
    %1870 = vrot.lane.b32.xlu0 %v505, 96
    %v1871 = vpop.permute.xlu0 %1870
    %1872 = vrot.lane.b32.xlu0 %v508, 96
    %v1873 = vpop.permute.xlu0 %1872
    %1874 = vrot.lane.b32.xlu0 %v510, 96
    %v1875 = vpop.permute.xlu0 %1874
    %1876 = vrot.lane.b32.xlu0 %v513, 96
    %v1877 = vpop.permute.xlu0 %1876
    %1878 = vrot.lane.b32.xlu0 %v515, 96
    %v1879 = vpop.permute.xlu0 %1878
    %1880 = vrot.lane.b32.xlu0 %v518, 96
    %v1881 = vpop.permute.xlu0 %1880
    %1882 = vrot.lane.b32.xlu0 %v520, 96
    %v1883 = vpop.permute.xlu0 %1882
    %1884 = vrot.lane.b32.xlu0 %v1346, 96
    %v1885 = vpop.permute.xlu0 %1884
    %1886 = vrot.lane.b32.xlu0 %v1348, 96
    %v1887 = vpop.permute.xlu0 %1886
    %1888 = vrot.lane.b32.xlu0 %v1820, 96
    %v1889 = vpop.permute.xlu0 %1888
    %1890 = vrot.lane.b32.xlu0 %v1822, 96
    %v1891 = vpop.permute.xlu0 %1890
    %1892 = vrot.lane.b32.xlu0 %v533, 96
    %v1893 = vpop.permute.xlu0 %1892
    %1894 = vrot.lane.b32.xlu0 %v535, 96
    %v1895 = vpop.permute.xlu0 %1894
    %1896 = vrot.lane.b32.xlu0 %v538, 96
    %v1897 = vpop.permute.xlu0 %1896
    %1898 = vrot.lane.b32.xlu0 %v540, 96
    %v1899 = vpop.permute.xlu0 %1898
    %1900 = vrot.lane.b32.xlu0 %v543, 96
    %v1901 = vpop.permute.xlu0 %1900
    %1902 = vrot.lane.b32.xlu0 %v545, 96
    %v1903 = vpop.permute.xlu0 %1902
    %1904 = vrot.lane.b32.xlu0 %v548, 96
    %v1905 = vpop.permute.xlu0 %1904
    %1906 = vrot.lane.b32.xlu0 %v550, 96
    %v1907 = vpop.permute.xlu0 %1906
    %1908 = vrot.lane.b32.xlu0 %v553, 96
    %v1909 = vpop.permute.xlu0 %1908
    %1910 = vrot.lane.b32.xlu0 %v555, 96
    %v1911 = vpop.permute.xlu0 %1910
    %1912 = vrot.lane.b32.xlu0 %v558, 96
    %v1913 = vpop.permute.xlu0 %1912
    %1914 = vrot.lane.b32.xlu0 %v560, 96
    %v1915 = vpop.permute.xlu0 %1914
    %1916 = vrot.lane.b32.xlu0 %v563, 96
    %v1917 = vpop.permute.xlu0 %1916
    %1918 = vrot.lane.b32.xlu0 %v565, 96
    %v1919 = vpop.permute.xlu0 %1918
    %1920 = vrot.lane.b32.xlu0 %v568, 96
    %v1921 = vpop.permute.xlu0 %1920
    %1922 = vrot.lane.b32.xlu0 %v570, 96
    %v1923 = vpop.permute.xlu0 %1922
    %1924 = vrot.lane.b32.xlu0 %v573, 96
    %v1925 = vpop.permute.xlu0 %1924
    %1926 = vrot.lane.b32.xlu0 %v575, 96
    %v1927 = vpop.permute.xlu0 %1926
    %1928 = vrot.lane.b32.xlu0 %v578, 96
    %v1929 = vpop.permute.xlu0 %1928
    %1930 = vrot.lane.b32.xlu0 %v580, 96
    %v1931 = vpop.permute.xlu0 %1930
    %1932 = vrot.lane.b32.xlu0 %v583, 96
    %v1933 = vpop.permute.xlu0 %1932
    %1934 = vrot.lane.b32.xlu0 %v585, 96
    %v1935 = vpop.permute.xlu0 %1934
    %1936 = vrot.lane.b32.xlu0 %v588, 96
    %v1937 = vpop.permute.xlu0 %1936
    %1938 = vrot.lane.b32.xlu0 %v590, 96
    %v1939 = vpop.permute.xlu0 %1938
    %1940 = vrot.lane.b32.xlu0 %v593, 96
    %v1941 = vpop.permute.xlu0 %1940
    %1942 = vrot.lane.b32.xlu0 %v595, 96
    %v1943 = vpop.permute.xlu0 %1942
    %1944 = vrot.lane.b32.xlu0 %v598, 96
    %v1945 = vpop.permute.xlu0 %1944
    %1946 = vrot.lane.b32.xlu0 %v600, 96
    %v1947 = vpop.permute.xlu0 %1946
    %1948 = vrot.lane.b32.xlu0 %v1351, 96
    %v1949 = vpop.permute.xlu0 %1948
    %1950 = vrot.lane.b32.xlu0 %v1353, 96
    %v1951 = vpop.permute.xlu0 %1950
    %1952 = vrot.lane.b32.xlu0 %v1825, 96
    %v1953 = vpop.permute.xlu0 %1952
    %1954 = vrot.lane.b32.xlu0 %v1827, 96
    %v1955 = vpop.permute.xlu0 %1954
    %v2020 = vrot.slane %v287, 2
    %v2021 = vrot.slane %v288, 2
    %v2022 = vsel %vm793, %v2020, %v2021
    %v2023 = vrot.slane %v289, 2
    %v2024 = vsel %vm793, %v2021, %v2023
    %v2025 = vrot.slane %v341, 2
    %v2026 = vrot.slane %v342, 2
    %v2027 = vsel %vm793, %v2025, %v2026
    %v2028 = vrot.slane %v343, 2
    %v2029 = vsel %vm793, %v2026, %v2028
    %v2094 = vsel %vm18, %v236, %v602
    %v2095 = vsel %vm18, %v237, %v604
    %v2096 = vsel %vm18, %v239, %v606
    %v2097 = vsel %vm18, %v240, %v608
    %v2098 = vsel %vm18, %v242, %v610
    %v2099 = vsel %vm18, %v243, %v612
    %v2100 = vsel %vm18, %v245, %v614
    %v2101 = vsel %vm18, %v246, %v616
    %v2102 = vsel %vm18, %v248, %v618
    %v2103 = vsel %vm18, %v249, %v620
    %v2104 = vsel %vm18, %v251, %v622
    %v2105 = vsel %vm18, %v252, %v624
    %v2106 = vsel %vm18, %v254, %v626
    %v2107 = vsel %vm18, %v255, %v628
    %v2108 = vsel %vm18, %v257, %v630
    %v2109 = vsel %vm18, %v258, %v632
    %v2110 = vsel %vm18, %v260, %v634
    %v2111 = vsel %vm18, %v261, %v636
    %v2112 = vsel %vm18, %v263, %v638
    %v2113 = vsel %vm18, %v264, %v640
    %v2114 = vsel %vm18, %v266, %v642
    %v2115 = vsel %vm18, %v267, %v644
    %v2116 = vsel %vm18, %v269, %v646
    %v2117 = vsel %vm18, %v270, %v648
    %v2118 = vsel %vm18, %v272, %v650
    %v2119 = vsel %vm18, %v273, %v652
    %v2120 = vsel %vm18, %v275, %v654
    %v2121 = vsel %vm18, %v276, %v656
    %v2122 = vsel %vm18, %v278, %v658
    %v2123 = vsel %vm18, %v279, %v660
    %v2124 = vsel %vm18, %v281, %v662
    %v2125 = vsel %vm18, %v282, %v664
    %v2126 = vsel %vm18, %v290, %v666
    %v2127 = vsel %vm18, %v291, %v668
    %v2128 = vsel %vm18, %v293, %v670
    %v2129 = vsel %vm18, %v294, %v672
    %v2130 = vsel %vm18, %v296, %v674
    %v2131 = vsel %vm18, %v297, %v676
    %v2132 = vsel %vm18, %v299, %v678
    %v2133 = vsel %vm18, %v300, %v680
    %v2134 = vsel %vm18, %v302, %v682
    %v2135 = vsel %vm18, %v303, %v684
    %v2136 = vsel %vm18, %v305, %v686
    %v2137 = vsel %vm18, %v306, %v688
    %v2138 = vsel %vm18, %v308, %v690
    %v2139 = vsel %vm18, %v309, %v692
    %v2140 = vsel %vm18, %v311, %v694
    %v2141 = vsel %vm18, %v312, %v696
    %v2142 = vsel %vm18, %v314, %v698
    %v2143 = vsel %vm18, %v315, %v700
    %v2144 = vsel %vm18, %v317, %v702
    %v2145 = vsel %vm18, %v318, %v704
    %v2146 = vsel %vm18, %v320, %v706
    %v2147 = vsel %vm18, %v321, %v708
    %v2148 = vsel %vm18, %v323, %v710
    %v2149 = vsel %vm18, %v324, %v712
    %v2150 = vsel %vm18, %v326, %v714
    %v2151 = vsel %vm18, %v327, %v716
    %v2152 = vsel %vm18, %v329, %v718
    %v2153 = vsel %vm18, %v330, %v720
    %v2154 = vsel %vm18, %v332, %v722
    %v2155 = vsel %vm18, %v333, %v724
    %v2156 = vsel %vm18, %v335, %v726
    %v2157 = vsel %vm18, %v336, %v728
    %vm2158 = vcmask 523264
    %v2159 = vsel %vm2158, %v2094, %v955
    %v2160 = vsel %vm2158, %v2095, %v957
    %v2161 = vsel %vm2158, %v2096, %v959
    %v2162 = vsel %vm2158, %v2097, %v961
    %v2163 = vsel %vm2158, %v2098, %v963
    %v2164 = vsel %vm2158, %v2099, %v965
    %v2165 = vsel %vm2158, %v2100, %v967
    %v2166 = vsel %vm2158, %v2101, %v969
    %v2167 = vsel %vm2158, %v2102, %v971
    %v2168 = vsel %vm2158, %v2103, %v973
    %v2169 = vsel %vm2158, %v2104, %v975
    %v2170 = vsel %vm2158, %v2105, %v977
    %v2171 = vsel %vm2158, %v2106, %v979
    %v2172 = vsel %vm2158, %v2107, %v981
    %v2173 = vsel %vm2158, %v2108, %v983
    %v2174 = vsel %vm2158, %v2109, %v985
    %v2175 = vsel %vm2158, %v2110, %v987
    %v2176 = vsel %vm2158, %v2111, %v989
    %v2177 = vsel %vm2158, %v2112, %v991
    %v2178 = vsel %vm2158, %v2113, %v993
    %v2179 = vsel %vm2158, %v2114, %v995
    %v2180 = vsel %vm2158, %v2115, %v997
    %v2181 = vsel %vm2158, %v2116, %v999
    %v2182 = vsel %vm2158, %v2117, %v1001
    %v2183 = vsel %vm2158, %v2118, %v1003
    %v2184 = vsel %vm2158, %v2119, %v1005
    %v2185 = vsel %vm2158, %v2120, %v1007
    %v2186 = vsel %vm2158, %v2121, %v1009
    %v2187 = vsel %vm2158, %v2122, %v1011
    %v2188 = vsel %vm2158, %v2123, %v1013
    %v2189 = vsel %vm2158, %v2124, %v1015
    %v2190 = vsel %vm2158, %v2125, %v1017
    %v2191 = vsel %vm2158, %v2126, %v1019
    %v2192 = vsel %vm2158, %v2127, %v1021
    %v2193 = vsel %vm2158, %v2128, %v1023
    %v2194 = vsel %vm2158, %v2129, %v1025
    %v2195 = vsel %vm2158, %v2130, %v1027
    %v2196 = vsel %vm2158, %v2131, %v1029
    %v2197 = vsel %vm2158, %v2132, %v1031
    %v2198 = vsel %vm2158, %v2133, %v1033
    %v2199 = vsel %vm2158, %v2134, %v1035
    %v2200 = vsel %vm2158, %v2135, %v1037
    %v2201 = vsel %vm2158, %v2136, %v1039
    %v2202 = vsel %vm2158, %v2137, %v1041
    %v2203 = vsel %vm2158, %v2138, %v1043
    %v2204 = vsel %vm2158, %v2139, %v1045
    %v2205 = vsel %vm2158, %v2140, %v1047
    %v2206 = vsel %vm2158, %v2141, %v1049
    %v2207 = vsel %vm2158, %v2142, %v1051
    %v2208 = vsel %vm2158, %v2143, %v1053
    %v2209 = vsel %vm2158, %v2144, %v1055
    %v2210 = vsel %vm2158, %v2145, %v1057
    %v2211 = vsel %vm2158, %v2146, %v1059
    %v2212 = vsel %vm2158, %v2147, %v1061
    %v2213 = vsel %vm2158, %v2148, %v1063
    %v2214 = vsel %vm2158, %v2149, %v1065
    %v2215 = vsel %vm2158, %v2150, %v1067
    %v2216 = vsel %vm2158, %v2151, %v1069
    %v2217 = vsel %vm2158, %v2152, %v1071
    %v2218 = vsel %vm2158, %v2153, %v1073
    %v2219 = vsel %vm2158, %v2154, %v1075
    %v2220 = vsel %vm2158, %v2155, %v1077
    %v2221 = vsel %vm2158, %v2156, %v1079
    %v2222 = vsel %vm2158, %v2157, %v1081
    %vm2223 = vcmask 785408
    %v2224 = vsel %vm2223, %v2159, %v1151
    %v2225 = vsel %vm2223, %v2160, %v1153
    %v2226 = vsel %vm2223, %v2161, %v1155
    %v2227 = vsel %vm2223, %v2162, %v1157
    %v2228 = vsel %vm2223, %v2163, %v1159
    %v2229 = vsel %vm2223, %v2164, %v1161
    %v2230 = vsel %vm2223, %v2165, %v1163
    %v2231 = vsel %vm2223, %v2166, %v1165
    %v2232 = vsel %vm2223, %v2167, %v1167
    %v2233 = vsel %vm2223, %v2168, %v1169
    %v2234 = vsel %vm2223, %v2169, %v1171
    %v2235 = vsel %vm2223, %v2170, %v1173
    %v2236 = vsel %vm2223, %v2171, %v1175
    %v2237 = vsel %vm2223, %v2172, %v1177
    %v2238 = vsel %vm2223, %v2173, %v1179
    %v2239 = vsel %vm2223, %v2174, %v1181
    %v2240 = vsel %vm2223, %v2175, %v1183
    %v2241 = vsel %vm2223, %v2176, %v1185
    %v2242 = vsel %vm2223, %v2177, %v1187
    %v2243 = vsel %vm2223, %v2178, %v1189
    %v2244 = vsel %vm2223, %v2179, %v1191
    %v2245 = vsel %vm2223, %v2180, %v1193
    %v2246 = vsel %vm2223, %v2181, %v1195
    %v2247 = vsel %vm2223, %v2182, %v1197
    %v2248 = vsel %vm2223, %v2183, %v1199
    %v2249 = vsel %vm2223, %v2184, %v1201
    %v2250 = vsel %vm2223, %v2185, %v1203
    %v2251 = vsel %vm2223, %v2186, %v1205
    %v2252 = vsel %vm2223, %v2187, %v1207
    %v2253 = vsel %vm2223, %v2188, %v1209
    %v2254 = vsel %vm2223, %v2189, %v1211
    %v2255 = vsel %vm2223, %v2190, %v1213
    %v2256 = vsel %vm2223, %v2191, %v1215
    %v2257 = vsel %vm2223, %v2192, %v1217
    %v2258 = vsel %vm2223, %v2193, %v1219
    %v2259 = vsel %vm2223, %v2194, %v1221
    %v2260 = vsel %vm2223, %v2195, %v1223
    %v2261 = vsel %vm2223, %v2196, %v1225
    %v2262 = vsel %vm2223, %v2197, %v1227
    %v2263 = vsel %vm2223, %v2198, %v1229
    %v2264 = vsel %vm2223, %v2199, %v1231
    %v2265 = vsel %vm2223, %v2200, %v1233
    %v2266 = vsel %vm2223, %v2201, %v1235
    %v2267 = vsel %vm2223, %v2202, %v1237
    %v2268 = vsel %vm2223, %v2203, %v1239
    %v2269 = vsel %vm2223, %v2204, %v1241
    %v2270 = vsel %vm2223, %v2205, %v1243
    %v2271 = vsel %vm2223, %v2206, %v1245
    %v2272 = vsel %vm2223, %v2207, %v1247
    %v2273 = vsel %vm2223, %v2208, %v1249
    %v2274 = vsel %vm2223, %v2209, %v1251
    %v2275 = vsel %vm2223, %v2210, %v1253
    %v2276 = vsel %vm2223, %v2211, %v1255
    %v2277 = vsel %vm2223, %v2212, %v1257
    %v2278 = vsel %vm2223, %v2213, %v1259
    %v2279 = vsel %vm2223, %v2214, %v1261
    %v2280 = vsel %vm2223, %v2215, %v1263
    %v2281 = vsel %vm2223, %v2216, %v1265
    %v2282 = vsel %vm2223, %v2217, %v1267
    %v2283 = vsel %vm2223, %v2218, %v1269
    %v2284 = vsel %vm2223, %v2219, %v1271
    %v2285 = vsel %vm2223, %v2220, %v1273
    %v2286 = vsel %vm2223, %v2221, %v1275
    %v2287 = vsel %vm2223, %v2222, %v1277
    %v2288 = vsel %vm18, %v448, %v1429
    %v2289 = vsel %vm18, %v450, %v1431
    %v2290 = vsel %vm18, %v453, %v1433
    %v2291 = vsel %vm18, %v455, %v1435
    %v2292 = vsel %vm18, %v458, %v1437
    %v2293 = vsel %vm18, %v460, %v1439
    %v2294 = vsel %vm18, %v463, %v1441
    %v2295 = vsel %vm18, %v465, %v1443
    %v2296 = vsel %vm18, %v468, %v1445
    %v2297 = vsel %vm18, %v470, %v1447
    %v2298 = vsel %vm18, %v473, %v1449
    %v2299 = vsel %vm18, %v475, %v1451
    %v2300 = vsel %vm18, %v478, %v1453
    %v2301 = vsel %vm18, %v480, %v1455
    %v2302 = vsel %vm18, %v483, %v1457
    %v2303 = vsel %vm18, %v485, %v1459
    %v2304 = vsel %vm18, %v488, %v1461
    %v2305 = vsel %vm18, %v490, %v1463
    %v2306 = vsel %vm18, %v493, %v1465
    %v2307 = vsel %vm18, %v495, %v1467
    %v2308 = vsel %vm18, %v498, %v1469
    %v2309 = vsel %vm18, %v500, %v1471
    %v2310 = vsel %vm18, %v503, %v1473
    %v2311 = vsel %vm18, %v505, %v1475
    %v2312 = vsel %vm18, %v508, %v1477
    %v2313 = vsel %vm18, %v510, %v1479
    %v2314 = vsel %vm18, %v513, %v1481
    %v2315 = vsel %vm18, %v515, %v1483
    %v2316 = vsel %vm18, %v518, %v1485
    %v2317 = vsel %vm18, %v520, %v1487
    %v2318 = vsel %vm18, %v1346, %v1489
    %v2319 = vsel %vm18, %v1348, %v1491
    %v2320 = vsel %vm18, %v528, %v1493
    %v2321 = vsel %vm18, %v530, %v1495
    %v2322 = vsel %vm18, %v533, %v1497
    %v2323 = vsel %vm18, %v535, %v1499
    %v2324 = vsel %vm18, %v538, %v1501
    %v2325 = vsel %vm18, %v540, %v1503
    %v2326 = vsel %vm18, %v543, %v1505
    %v2327 = vsel %vm18, %v545, %v1507
    %v2328 = vsel %vm18, %v548, %v1509
    %v2329 = vsel %vm18, %v550, %v1511
    %v2330 = vsel %vm18, %v553, %v1513
    %v2331 = vsel %vm18, %v555, %v1515
    %v2332 = vsel %vm18, %v558, %v1517
    %v2333 = vsel %vm18, %v560, %v1519
    %v2334 = vsel %vm18, %v563, %v1521
    %v2335 = vsel %vm18, %v565, %v1523
    %v2336 = vsel %vm18, %v568, %v1525
    %v2337 = vsel %vm18, %v570, %v1527
    %v2338 = vsel %vm18, %v573, %v1529
    %v2339 = vsel %vm18, %v575, %v1531
    %v2340 = vsel %vm18, %v578, %v1533
    %v2341 = vsel %vm18, %v580, %v1535
    %v2342 = vsel %vm18, %v583, %v1537
    %v2343 = vsel %vm18, %v585, %v1539
    %v2344 = vsel %vm18, %v588, %v1541
    %v2345 = vsel %vm18, %v590, %v1543
    %v2346 = vsel %vm18, %v593, %v1545
    %v2347 = vsel %vm18, %v595, %v1547
    %v2348 = vsel %vm18, %v598, %v1549
    %v2349 = vsel %vm18, %v600, %v1551
    %v2350 = vsel %vm18, %v1351, %v1553
    %v2351 = vsel %vm18, %v1353, %v1555
    %v2352 = vsel %vm2158, %v2288, %v1625
    %v2353 = vsel %vm2158, %v2289, %v1627
    %v2354 = vsel %vm2158, %v2290, %v1629
    %v2355 = vsel %vm2158, %v2291, %v1631
    %v2356 = vsel %vm2158, %v2292, %v1633
    %v2357 = vsel %vm2158, %v2293, %v1635
    %v2358 = vsel %vm2158, %v2294, %v1637
    %v2359 = vsel %vm2158, %v2295, %v1639
    %v2360 = vsel %vm2158, %v2296, %v1641
    %v2361 = vsel %vm2158, %v2297, %v1643
    %v2362 = vsel %vm2158, %v2298, %v1645
    %v2363 = vsel %vm2158, %v2299, %v1647
    %v2364 = vsel %vm2158, %v2300, %v1649
    %v2365 = vsel %vm2158, %v2301, %v1651
    %v2366 = vsel %vm2158, %v2302, %v1653
    %v2367 = vsel %vm2158, %v2303, %v1655
    %v2368 = vsel %vm2158, %v2304, %v1657
    %v2369 = vsel %vm2158, %v2305, %v1659
    %v2370 = vsel %vm2158, %v2306, %v1661
    %v2371 = vsel %vm2158, %v2307, %v1663
    %v2372 = vsel %vm2158, %v2308, %v1665
    %v2373 = vsel %vm2158, %v2309, %v1667
    %v2374 = vsel %vm2158, %v2310, %v1669
    %v2375 = vsel %vm2158, %v2311, %v1671
    %v2376 = vsel %vm2158, %v2312, %v1673
    %v2377 = vsel %vm2158, %v2313, %v1675
    %v2378 = vsel %vm2158, %v2314, %v1677
    %v2379 = vsel %vm2158, %v2315, %v1679
    %v2380 = vsel %vm2158, %v2316, %v1681
    %v2381 = vsel %vm2158, %v2317, %v1683
    %v2382 = vsel %vm2158, %v2318, %v1685
    %v2383 = vsel %vm2158, %v2319, %v1687
    %v2384 = vsel %vm2158, %v2320, %v1689
    %v2385 = vsel %vm2158, %v2321, %v1691
    %v2386 = vsel %vm2158, %v2322, %v1693
    %v2387 = vsel %vm2158, %v2323, %v1695
    %v2388 = vsel %vm2158, %v2324, %v1697
    %v2389 = vsel %vm2158, %v2325, %v1699
    %v2390 = vsel %vm2158, %v2326, %v1701
    %v2391 = vsel %vm2158, %v2327, %v1703
    %v2392 = vsel %vm2158, %v2328, %v1705
    %v2393 = vsel %vm2158, %v2329, %v1707
    %v2394 = vsel %vm2158, %v2330, %v1709
    %v2395 = vsel %vm2158, %v2331, %v1711
    %v2396 = vsel %vm2158, %v2332, %v1713
    %v2397 = vsel %vm2158, %v2333, %v1715
    %v2398 = vsel %vm2158, %v2334, %v1717
    %v2399 = vsel %vm2158, %v2335, %v1719
    %v2400 = vsel %vm2158, %v2336, %v1721
    %v2401 = vsel %vm2158, %v2337, %v1723
    %v2402 = vsel %vm2158, %v2338, %v1725
    %v2403 = vsel %vm2158, %v2339, %v1727
    %v2404 = vsel %vm2158, %v2340, %v1729
    %v2405 = vsel %vm2158, %v2341, %v1731
    %v2406 = vsel %vm2158, %v2342, %v1733
    %v2407 = vsel %vm2158, %v2343, %v1735
    %v2408 = vsel %vm2158, %v2344, %v1737
    %v2409 = vsel %vm2158, %v2345, %v1739
    %v2410 = vsel %vm2158, %v2346, %v1741
    %v2411 = vsel %vm2158, %v2347, %v1743
    %v2412 = vsel %vm2158, %v2348, %v1745
    %v2413 = vsel %vm2158, %v2349, %v1747
    %v2414 = vsel %vm2158, %v2350, %v1749
    %v2415 = vsel %vm2158, %v2351, %v1751
    %v2416 = vsel %vm2223, %v2352, %v1829
    %v2417 = vsel %vm2223, %v2353, %v1831
    %v2418 = vsel %vm2223, %v2354, %v1833
    %v2419 = vsel %vm2223, %v2355, %v1835
    %v2420 = vsel %vm2223, %v2356, %v1837
    %v2421 = vsel %vm2223, %v2357, %v1839
    %v2422 = vsel %vm2223, %v2358, %v1841
    %v2423 = vsel %vm2223, %v2359, %v1843
    %v2424 = vsel %vm2223, %v2360, %v1845
    %v2425 = vsel %vm2223, %v2361, %v1847
    %v2426 = vsel %vm2223, %v2362, %v1849
    %v2427 = vsel %vm2223, %v2363, %v1851
    %v2428 = vsel %vm2223, %v2364, %v1853
    %v2429 = vsel %vm2223, %v2365, %v1855
    %v2430 = vsel %vm2223, %v2366, %v1857
    %v2431 = vsel %vm2223, %v2367, %v1859
    %v2432 = vsel %vm2223, %v2368, %v1861
    %v2433 = vsel %vm2223, %v2369, %v1863
    %v2434 = vsel %vm2223, %v2370, %v1865
    %v2435 = vsel %vm2223, %v2371, %v1867
    %v2436 = vsel %vm2223, %v2372, %v1869
    %v2437 = vsel %vm2223, %v2373, %v1871
    %v2438 = vsel %vm2223, %v2374, %v1873
    %v2439 = vsel %vm2223, %v2375, %v1875
    %v2440 = vsel %vm2223, %v2376, %v1877
    %v2441 = vsel %vm2223, %v2377, %v1879
    %v2442 = vsel %vm2223, %v2378, %v1881
    %v2443 = vsel %vm2223, %v2379, %v1883
    %v2444 = vsel %vm2223, %v2380, %v1885
    %v2445 = vsel %vm2223, %v2381, %v1887
    %v2446 = vsel %vm2223, %v2382, %v1889
    %v2447 = vsel %vm2223, %v2383, %v1891
    %v2448 = vsel %vm2223, %v2384, %v1893
    %v2449 = vsel %vm2223, %v2385, %v1895
    %v2450 = vsel %vm2223, %v2386, %v1897
    %v2451 = vsel %vm2223, %v2387, %v1899
    %v2452 = vsel %vm2223, %v2388, %v1901
    %v2453 = vsel %vm2223, %v2389, %v1903
    %v2454 = vsel %vm2223, %v2390, %v1905
    %v2455 = vsel %vm2223, %v2391, %v1907
    %v2456 = vsel %vm2223, %v2392, %v1909
    %v2457 = vsel %vm2223, %v2393, %v1911
    %v2458 = vsel %vm2223, %v2394, %v1913
    %v2459 = vsel %vm2223, %v2395, %v1915
    %v2460 = vsel %vm2223, %v2396, %v1917
    %v2461 = vsel %vm2223, %v2397, %v1919
    %v2462 = vsel %vm2223, %v2398, %v1921
    %v2463 = vsel %vm2223, %v2399, %v1923
    %v2464 = vsel %vm2223, %v2400, %v1925
    %v2465 = vsel %vm2223, %v2401, %v1927
    %v2466 = vsel %vm2223, %v2402, %v1929
    %v2467 = vsel %vm2223, %v2403, %v1931
    %v2468 = vsel %vm2223, %v2404, %v1933
    %v2469 = vsel %vm2223, %v2405, %v1935
    %v2470 = vsel %vm2223, %v2406, %v1937
    %v2471 = vsel %vm2223, %v2407, %v1939
    %v2472 = vsel %vm2223, %v2408, %v1941
    %v2473 = vsel %vm2223, %v2409, %v1943
    %v2474 = vsel %vm2223, %v2410, %v1945
    %v2475 = vsel %vm2223, %v2411, %v1947
    %v2476 = vsel %vm2223, %v2412, %v1949
    %v2477 = vsel %vm2223, %v2413, %v1951
    %v2478 = vsel %vm2223, %v2414, %v1953
    %v2479 = vsel %vm2223, %v2415, %v1955
    %v2480 = vpack.c.bf16 %v2225, %v2224
    %v2481 = vpack.c.bf16 %v2417, %v2416
    %v2482 = vpack.c.bf16 %v808, %v806
    %v2483 = vpack.c.bf16 %v2227, %v2226
    %v2484 = vpack.c.bf16 %v2419, %v2418
    %v2485 = vpack.c.bf16 %v813, %v811
    %v2486 = vpack.c.bf16 %v2229, %v2228
    %v2487 = vpack.c.bf16 %v2421, %v2420
    %v2488 = vpack.c.bf16 %v818, %v816
    %v2489 = vpack.c.bf16 %v2231, %v2230
    %v2490 = vpack.c.bf16 %v2423, %v2422
    %v2491 = vpack.c.bf16 %v823, %v821
    %v2492 = vpack.c.bf16 %v2233, %v2232
    %v2493 = vpack.c.bf16 %v2425, %v2424
    %v2494 = vpack.c.bf16 %v828, %v826
    %v2495 = vpack.c.bf16 %v2235, %v2234
    %v2496 = vpack.c.bf16 %v2427, %v2426
    %v2497 = vpack.c.bf16 %v833, %v831
    %v2498 = vpack.c.bf16 %v2237, %v2236
    %v2499 = vpack.c.bf16 %v2429, %v2428
    %v2500 = vpack.c.bf16 %v838, %v836
    %v2501 = vpack.c.bf16 %v2239, %v2238
    %v2502 = vpack.c.bf16 %v2431, %v2430
    %v2503 = vpack.c.bf16 %v843, %v841
    %v2504 = vpack.c.bf16 %v2241, %v2240
    %v2505 = vpack.c.bf16 %v2433, %v2432
    %v2506 = vpack.c.bf16 %v848, %v846
    %v2507 = vpack.c.bf16 %v2243, %v2242
    %v2508 = vpack.c.bf16 %v2435, %v2434
    %v2509 = vpack.c.bf16 %v853, %v851
    %v2510 = vpack.c.bf16 %v2245, %v2244
    %v2511 = vpack.c.bf16 %v2437, %v2436
    %v2512 = vpack.c.bf16 %v858, %v856
    %v2513 = vpack.c.bf16 %v2247, %v2246
    %v2514 = vpack.c.bf16 %v2439, %v2438
    %v2515 = vpack.c.bf16 %v863, %v861
    %v2516 = vpack.c.bf16 %v2249, %v2248
    %v2517 = vpack.c.bf16 %v2441, %v2440
    %v2518 = vpack.c.bf16 %v868, %v866
    %v2519 = vpack.c.bf16 %v2251, %v2250
    %v2520 = vpack.c.bf16 %v2443, %v2442
    %v2521 = vpack.c.bf16 %v873, %v871
    %v2522 = vpack.c.bf16 %v2253, %v2252
    %v2523 = vpack.c.bf16 %v2445, %v2444
    %v2524 = vpack.c.bf16 %v1422, %v1420
    %v2525 = vpack.c.bf16 %v2255, %v2254
    %v2526 = vpack.c.bf16 %v2447, %v2446
    %v2527 = vpack.c.bf16 %v2024, %v2022
    %v2528 = vpack.c.bf16 %v2257, %v2256
    %v2529 = vpack.c.bf16 %v2449, %v2448
    %v2530 = vpack.c.bf16 %v888, %v886
    %v2531 = vpack.c.bf16 %v2259, %v2258
    %v2532 = vpack.c.bf16 %v2451, %v2450
    %v2533 = vpack.c.bf16 %v893, %v891
    %v2534 = vpack.c.bf16 %v2261, %v2260
    %v2535 = vpack.c.bf16 %v2453, %v2452
    %v2536 = vpack.c.bf16 %v898, %v896
    %v2537 = vpack.c.bf16 %v2263, %v2262
    %v2538 = vpack.c.bf16 %v2455, %v2454
    %v2539 = vpack.c.bf16 %v903, %v901
    %v2540 = vpack.c.bf16 %v2265, %v2264
    %v2541 = vpack.c.bf16 %v2457, %v2456
    %v2542 = vpack.c.bf16 %v908, %v906
    %v2543 = vpack.c.bf16 %v2267, %v2266
    %v2544 = vpack.c.bf16 %v2459, %v2458
    %v2545 = vpack.c.bf16 %v913, %v911
    %v2546 = vpack.c.bf16 %v2269, %v2268
    %v2547 = vpack.c.bf16 %v2461, %v2460
    %v2548 = vpack.c.bf16 %v918, %v916
    %v2549 = vpack.c.bf16 %v2271, %v2270
    %v2550 = vpack.c.bf16 %v2463, %v2462
    %v2551 = vpack.c.bf16 %v923, %v921
    %v2552 = vpack.c.bf16 %v2273, %v2272
    %v2553 = vpack.c.bf16 %v2465, %v2464
    %v2554 = vpack.c.bf16 %v928, %v926
    %v2555 = vpack.c.bf16 %v2275, %v2274
    %v2556 = vpack.c.bf16 %v2467, %v2466
    %v2557 = vpack.c.bf16 %v933, %v931
    %v2558 = vpack.c.bf16 %v2277, %v2276
    %v2559 = vpack.c.bf16 %v2469, %v2468
    %v2560 = vpack.c.bf16 %v938, %v936
    %v2561 = vpack.c.bf16 %v2279, %v2278
    %v2562 = vpack.c.bf16 %v2471, %v2470
    %v2563 = vpack.c.bf16 %v943, %v941
    %v2564 = vpack.c.bf16 %v2281, %v2280
    %v2565 = vpack.c.bf16 %v2473, %v2472
    %v2566 = vpack.c.bf16 %v948, %v946
    %v2567 = vpack.c.bf16 %v2283, %v2282
    %v2568 = vpack.c.bf16 %v2475, %v2474
    %v2569 = vpack.c.bf16 %v953, %v951
    %v2570 = vpack.c.bf16 %v2285, %v2284
    %v2571 = vpack.c.bf16 %v2477, %v2476
    %v2572 = vpack.c.bf16 %v1427, %v1425
    %v2573 = vpack.c.bf16 %v2287, %v2286
    %v2574 = vpack.c.bf16 %v2479, %v2478
    %v2575 = vpack.c.bf16 %v2029, %v2027
    %v2612 = vunpack.c.l.b16 %v194
    %v2613 = vunpack.c.l.b16 %v195
    %v2614 = vunpack.c.l.b16 %v196
    %v2615 = vunpack.c.l.b16 %v197
    %v2616 = vunpack.c.l.b16 %v198
    %v2617 = vunpack.c.l.b16 %v199
    %v2618 = vunpack.c.l.b16 %v200
    %v2619 = vunpack.c.l.b16 %v201
    %v2620 = vunpack.c.l.b16 %v202
    %v2621 = vunpack.c.l.b16 %v203
    %v2622 = vunpack.c.l.b16 %v204
    %v2623 = vunpack.c.l.b16 %v205
    %v2624 = vunpack.c.l.b16 %v206
    %v2625 = vunpack.c.l.b16 %v207
    %v2626 = vunpack.c.l.b16 %v208
    %v2627 = vunpack.c.l.b16 %v209
    %v2628 = vunpack.c.l.b16 %v210
    %v2629 = vunpack.c.l.b16 %v211
    %v2630 = vunpack.c.l.b16 %v212
    %v2631 = vunpack.c.l.b16 %v213
    %v2632 = vunpack.c.l.b16 %v214
    %v2633 = vunpack.c.l.b16 %v215
    %v2634 = vunpack.c.l.b16 %v216
    %v2635 = vunpack.c.l.b16 %v217
    %v2636 = vunpack.c.l.b16 %v218
    %v2637 = vunpack.c.l.b16 %v219
    %v2638 = vunpack.c.l.b16 %v220
    %v2639 = vunpack.c.l.b16 %v221
    %v2640 = vunpack.c.l.b16 %v222
    %v2641 = vunpack.c.l.b16 %v223
    %v2642 = vunpack.c.l.b16 %v224
    %v2643 = vunpack.c.l.b16 %v225
    %v2644 = vunpack.c.l.b16 %v226
    %v2645 = vunpack.c.l.b16 %v227
    %v2646 = vunpack.c.l.b16 %v228
    %v2647 = vunpack.c.l.b16 %v229
    %v2648 = vpack.c.b16 %v2613, %v2612
    %v2649 = vpack.c.b16 %v2615, %v2614
    %v2650 = vpack.c.b16 %v2617, %v2616
    %v2651 = vpack.c.b16 %v2619, %v2618
    %v2652 = vpack.c.b16 %v2621, %v2620
    %v2653 = vpack.c.b16 %v2623, %v2622
    %v2654 = vpack.c.b16 %v2625, %v2624
    %v2655 = vpack.c.b16 %v2627, %v2626
    %v2656 = vpack.c.b16 %v2629, %v2628
    %v2657 = vpack.c.b16 %v2631, %v2630
    %v2658 = vpack.c.b16 %v2633, %v2632
    %v2659 = vpack.c.b16 %v2635, %v2634
    %v2660 = vpack.c.b16 %v2637, %v2636
    %v2661 = vpack.c.b16 %v2639, %v2638
    %v2662 = vpack.c.b16 %v2641, %v2640
    %v2663 = vpack.c.b16 %v2643, %v2642
    %v2664 = vpack.c.b16 %v2645, %v2644
    %v2665 = vpack.c.b16 %v2647, %v2646
    %v2685 = vsel %vm18, %v2482, 0
    %v2688 = vsel %vm18, %v2485, 0
    %v2691 = vsel %vm18, %v2488, 0
    %v2694 = vsel %vm18, %v2491, 0
    %v2697 = vsel %vm18, %v2494, 0
    %v2700 = vsel %vm18, %v2497, 0
    %v2703 = vsel %vm18, %v2500, 0
    %v2706 = vsel %vm18, %v2503, 0
    %v2709 = vsel %vm18, %v2506, 0
    %v2712 = vsel %vm18, %v2509, 0
    %v2715 = vsel %vm18, %v2512, 0
    %v2718 = vsel %vm18, %v2515, 0
    %v2721 = vsel %vm18, %v2518, 0
    %v2724 = vsel %vm18, %v2521, 0
    %v2727 = vsel %vm18, %v2524, 0
    %v2730 = vsel %vm18, %v2527, 0
    %v2733 = vsel %vm18, %v2530, 0
    %v2736 = vsel %vm18, %v2533, 0
    %v2739 = vsel %vm18, %v2536, 0
    %v2742 = vsel %vm18, %v2539, 0
    %v2745 = vsel %vm18, %v2542, 0
    %v2748 = vsel %vm18, %v2545, 0
    %v2751 = vsel %vm18, %v2548, 0
    %v2754 = vsel %vm18, %v2551, 0
    %v2757 = vsel %vm18, %v2554, 0
    %v2760 = vsel %vm18, %v2557, 0
    %v2763 = vsel %vm18, %v2560, 0
    %v2766 = vsel %vm18, %v2563, 0
    %v2769 = vsel %vm18, %v2566, 0
    %v2772 = vsel %vm18, %v2569, 0
    %v2775 = vsel %vm18, %v2572, 0
    %v2778 = vsel %vm18, %v2575, 0
    %2780 = vmatpush.bf16.msra.mxu0 %v2655
    %2781 = vmatpush.bf16.msra.mxu0 %v2654
    %2782 = vmatpush.bf16.msra.mxu0 %v2653
    %2783 = vmatpush.bf16.msra.mxu0 %v2652
    %2784 = vmatpush.bf16.msra.mxu0 %v2651
    %2785 = vmatpush.bf16.msra.mxu0 %v2650
    %2786 = vmatpush.bf16.msra.mxu0 %v2649
    %2787 = vmatpush.bf16.msra.mxu0 %v2648
    %2788 = vmatmul.bf16.gmra.mxu0 %v2480
    %v2789 = vpop.f32.mrf.mxu0
    %v2790 = vadd.f32 0.0, %v2789
    %v2791 = vpop.f32.mrf.mxu0
    %v2792 = vadd.f32 0.0, %v2791
    %2793 = vmatmul.bf16.gmra.mxu0 %v2483
    %v2794 = vpop.f32.mrf.mxu0
    %v2795 = vadd.f32 0.0, %v2794
    %v2796 = vpop.f32.mrf.mxu0
    %v2797 = vadd.f32 0.0, %v2796
    %2798 = vmatmul.bf16.gmra.mxu0 %v2486
    %v2799 = vpop.f32.mrf.mxu0
    %v2800 = vadd.f32 0.0, %v2799
    %v2801 = vpop.f32.mrf.mxu0
    %v2802 = vadd.f32 0.0, %v2801
    %2803 = vmatmul.bf16.gmra.mxu0 %v2489
    %v2804 = vpop.f32.mrf.mxu0
    %v2805 = vadd.f32 0.0, %v2804
    %v2806 = vpop.f32.mrf.mxu0
    %v2807 = vadd.f32 0.0, %v2806
    %2808 = vmatmul.bf16.gmra.mxu0 %v2492
    %v2809 = vpop.f32.mrf.mxu0
    %v2810 = vadd.f32 0.0, %v2809
    %v2811 = vpop.f32.mrf.mxu0
    %v2812 = vadd.f32 0.0, %v2811
    %2813 = vmatmul.bf16.gmra.mxu0 %v2495
    %v2814 = vpop.f32.mrf.mxu0
    %v2815 = vadd.f32 0.0, %v2814
    %v2816 = vpop.f32.mrf.mxu0
    %v2817 = vadd.f32 0.0, %v2816
    %2818 = vmatmul.bf16.gmra.mxu0 %v2498
    %v2819 = vpop.f32.mrf.mxu0
    %v2820 = vadd.f32 0.0, %v2819
    %v2821 = vpop.f32.mrf.mxu0
    %v2822 = vadd.f32 0.0, %v2821
    %2823 = vmatmul.bf16.gmra.mxu0 %v2501
    %v2824 = vpop.f32.mrf.mxu0
    %v2825 = vadd.f32 0.0, %v2824
    %v2826 = vpop.f32.mrf.mxu0
    %v2827 = vadd.f32 0.0, %v2826
    %2828 = vmatmul.bf16.gmra.mxu0 %v2504
    %v2829 = vpop.f32.mrf.mxu0
    %v2830 = vadd.f32 0.0, %v2829
    %v2831 = vpop.f32.mrf.mxu0
    %v2832 = vadd.f32 0.0, %v2831
    %2833 = vmatmul.bf16.gmra.mxu0 %v2507
    %v2834 = vpop.f32.mrf.mxu0
    %v2835 = vadd.f32 0.0, %v2834
    %v2836 = vpop.f32.mrf.mxu0
    %v2837 = vadd.f32 0.0, %v2836
    %2838 = vmatmul.bf16.gmra.mxu0 %v2510
    %v2839 = vpop.f32.mrf.mxu0
    %v2840 = vadd.f32 0.0, %v2839
    %v2841 = vpop.f32.mrf.mxu0
    %v2842 = vadd.f32 0.0, %v2841
    %2843 = vmatmul.bf16.gmra.mxu0 %v2513
    %v2844 = vpop.f32.mrf.mxu0
    %v2845 = vadd.f32 0.0, %v2844
    %v2846 = vpop.f32.mrf.mxu0
    %v2847 = vadd.f32 0.0, %v2846
    %2848 = vmatmul.bf16.gmra.mxu0 %v2516
    %v2849 = vpop.f32.mrf.mxu0
    %v2850 = vadd.f32 0.0, %v2849
    %v2851 = vpop.f32.mrf.mxu0
    %v2852 = vadd.f32 0.0, %v2851
    %2853 = vmatmul.bf16.gmra.mxu0 %v2519
    %v2854 = vpop.f32.mrf.mxu0
    %v2855 = vadd.f32 0.0, %v2854
    %v2856 = vpop.f32.mrf.mxu0
    %v2857 = vadd.f32 0.0, %v2856
    %2858 = vmatmul.bf16.gmra.mxu0 %v2522
    %v2859 = vpop.f32.mrf.mxu0
    %v2860 = vadd.f32 0.0, %v2859
    %v2861 = vpop.f32.mrf.mxu0
    %v2862 = vadd.f32 0.0, %v2861
    %2863 = vmatmul.bf16.gmra.mxu0 %v2525
    %v2864 = vpop.f32.mrf.mxu0
    %v2865 = vadd.f32 0.0, %v2864
    %v2866 = vpop.f32.mrf.mxu0
    %v2867 = vadd.f32 0.0, %v2866
    %2868 = vmatmul.bf16.gmra.mxu0 %v2528
    %v2869 = vpop.f32.mrf.mxu0
    %v2870 = vadd.f32 0.0, %v2869
    %v2871 = vpop.f32.mrf.mxu0
    %v2872 = vadd.f32 0.0, %v2871
    %2873 = vmatmul.bf16.gmra.mxu0 %v2531
    %v2874 = vpop.f32.mrf.mxu0
    %v2875 = vadd.f32 0.0, %v2874
    %v2876 = vpop.f32.mrf.mxu0
    %v2877 = vadd.f32 0.0, %v2876
    %2878 = vmatmul.bf16.gmra.mxu0 %v2534
    %v2879 = vpop.f32.mrf.mxu0
    %v2880 = vadd.f32 0.0, %v2879
    %v2881 = vpop.f32.mrf.mxu0
    %v2882 = vadd.f32 0.0, %v2881
    %2883 = vmatmul.bf16.gmra.mxu0 %v2537
    %v2884 = vpop.f32.mrf.mxu0
    %v2885 = vadd.f32 0.0, %v2884
    %v2886 = vpop.f32.mrf.mxu0
    %v2887 = vadd.f32 0.0, %v2886
    %2888 = vmatmul.bf16.gmra.mxu0 %v2540
    %v2889 = vpop.f32.mrf.mxu0
    %v2890 = vadd.f32 0.0, %v2889
    %v2891 = vpop.f32.mrf.mxu0
    %v2892 = vadd.f32 0.0, %v2891
    %2893 = vmatmul.bf16.gmra.mxu0 %v2543
    %v2894 = vpop.f32.mrf.mxu0
    %v2895 = vadd.f32 0.0, %v2894
    %v2896 = vpop.f32.mrf.mxu0
    %v2897 = vadd.f32 0.0, %v2896
    %2898 = vmatmul.bf16.gmra.mxu0 %v2546
    %v2899 = vpop.f32.mrf.mxu0
    %v2900 = vadd.f32 0.0, %v2899
    %v2901 = vpop.f32.mrf.mxu0
    %v2902 = vadd.f32 0.0, %v2901
    %2903 = vmatmul.bf16.gmra.mxu0 %v2549
    %v2904 = vpop.f32.mrf.mxu0
    %v2905 = vadd.f32 0.0, %v2904
    %v2906 = vpop.f32.mrf.mxu0
    %v2907 = vadd.f32 0.0, %v2906
    %2908 = vmatmul.bf16.gmra.mxu0 %v2552
    %v2909 = vpop.f32.mrf.mxu0
    %v2910 = vadd.f32 0.0, %v2909
    %v2911 = vpop.f32.mrf.mxu0
    %v2912 = vadd.f32 0.0, %v2911
    %2913 = vmatmul.bf16.gmra.mxu0 %v2555
    %v2914 = vpop.f32.mrf.mxu0
    %v2915 = vadd.f32 0.0, %v2914
    %v2916 = vpop.f32.mrf.mxu0
    %v2917 = vadd.f32 0.0, %v2916
    %2918 = vmatmul.bf16.gmra.mxu0 %v2558
    %v2919 = vpop.f32.mrf.mxu0
    %v2920 = vadd.f32 0.0, %v2919
    %v2921 = vpop.f32.mrf.mxu0
    %v2922 = vadd.f32 0.0, %v2921
    %2923 = vmatmul.bf16.gmra.mxu0 %v2561
    %v2924 = vpop.f32.mrf.mxu0
    %v2925 = vadd.f32 0.0, %v2924
    %v2926 = vpop.f32.mrf.mxu0
    %v2927 = vadd.f32 0.0, %v2926
    %2928 = vmatmul.bf16.gmra.mxu0 %v2564
    %v2929 = vpop.f32.mrf.mxu0
    %v2930 = vadd.f32 0.0, %v2929
    %v2931 = vpop.f32.mrf.mxu0
    %v2932 = vadd.f32 0.0, %v2931
    %2933 = vmatmul.bf16.gmra.mxu0 %v2567
    %v2934 = vpop.f32.mrf.mxu0
    %v2935 = vadd.f32 0.0, %v2934
    %v2936 = vpop.f32.mrf.mxu0
    %v2937 = vadd.f32 0.0, %v2936
    %2938 = vmatmul.bf16.gmra.mxu0 %v2570
    %v2939 = vpop.f32.mrf.mxu0
    %v2940 = vadd.f32 0.0, %v2939
    %v2941 = vpop.f32.mrf.mxu0
    %v2942 = vadd.f32 0.0, %v2941
    %2943 = vmatmul.bf16.gmra.mxu0 %v2573
    %v2944 = vpop.f32.mrf.mxu0
    %v2945 = vadd.f32 0.0, %v2944
    %v2946 = vpop.f32.mrf.mxu0
    %v2947 = vadd.f32 0.0, %v2946
    %2948 = vdwg.mxu0
    %2949 = vmatpush.bf16.msra.mxu0 %v2663
    %2950 = vmatpush.bf16.msra.mxu0 %v2662
    %2951 = vmatpush.bf16.msra.mxu0 %v2661
    %2952 = vmatpush.bf16.msra.mxu0 %v2660
    %2953 = vmatpush.bf16.msra.mxu0 %v2659
    %2954 = vmatpush.bf16.msra.mxu0 %v2658
    %2955 = vmatpush.bf16.msra.mxu0 %v2657
    %2956 = vmatpush.bf16.msra.mxu0 %v2656
    %2957 = vmatmul.bf16.gmra.mxu0 %v2481
    %v2958 = vpop.f32.mrf.mxu0
    %v2959 = vadd.f32 %v2790, %v2958
    %v2960 = vpop.f32.mrf.mxu0
    %v2961 = vadd.f32 %v2792, %v2960
    %2962 = vmatmul.bf16.gmra.mxu0 %v2484
    %v2963 = vpop.f32.mrf.mxu0
    %v2964 = vadd.f32 %v2795, %v2963
    %v2965 = vpop.f32.mrf.mxu0
    %v2966 = vadd.f32 %v2797, %v2965
    %2967 = vmatmul.bf16.gmra.mxu0 %v2487
    %v2968 = vpop.f32.mrf.mxu0
    %v2969 = vadd.f32 %v2800, %v2968
    %v2970 = vpop.f32.mrf.mxu0
    %v2971 = vadd.f32 %v2802, %v2970
    %2972 = vmatmul.bf16.gmra.mxu0 %v2490
    %v2973 = vpop.f32.mrf.mxu0
    %v2974 = vadd.f32 %v2805, %v2973
    %v2975 = vpop.f32.mrf.mxu0
    %v2976 = vadd.f32 %v2807, %v2975
    %2977 = vmatmul.bf16.gmra.mxu0 %v2493
    %v2978 = vpop.f32.mrf.mxu0
    %v2979 = vadd.f32 %v2810, %v2978
    %v2980 = vpop.f32.mrf.mxu0
    %v2981 = vadd.f32 %v2812, %v2980
    %2982 = vmatmul.bf16.gmra.mxu0 %v2496
    %v2983 = vpop.f32.mrf.mxu0
    %v2984 = vadd.f32 %v2815, %v2983
    %v2985 = vpop.f32.mrf.mxu0
    %v2986 = vadd.f32 %v2817, %v2985
    %2987 = vmatmul.bf16.gmra.mxu0 %v2499
    %v2988 = vpop.f32.mrf.mxu0
    %v2989 = vadd.f32 %v2820, %v2988
    %v2990 = vpop.f32.mrf.mxu0
    %v2991 = vadd.f32 %v2822, %v2990
    %2992 = vmatmul.bf16.gmra.mxu0 %v2502
    %v2993 = vpop.f32.mrf.mxu0
    %v2994 = vadd.f32 %v2825, %v2993
    %v2995 = vpop.f32.mrf.mxu0
    %v2996 = vadd.f32 %v2827, %v2995
    %2997 = vmatmul.bf16.gmra.mxu0 %v2505
    %v2998 = vpop.f32.mrf.mxu0
    %v2999 = vadd.f32 %v2830, %v2998
    %v3000 = vpop.f32.mrf.mxu0
    %v3001 = vadd.f32 %v2832, %v3000
    %3002 = vmatmul.bf16.gmra.mxu0 %v2508
    %v3003 = vpop.f32.mrf.mxu0
    %v3004 = vadd.f32 %v2835, %v3003
    %v3005 = vpop.f32.mrf.mxu0
    %v3006 = vadd.f32 %v2837, %v3005
    %3007 = vmatmul.bf16.gmra.mxu0 %v2511
    %v3008 = vpop.f32.mrf.mxu0
    %v3009 = vadd.f32 %v2840, %v3008
    %v3010 = vpop.f32.mrf.mxu0
    %v3011 = vadd.f32 %v2842, %v3010
    %3012 = vmatmul.bf16.gmra.mxu0 %v2514
    %v3013 = vpop.f32.mrf.mxu0
    %v3014 = vadd.f32 %v2845, %v3013
    %v3015 = vpop.f32.mrf.mxu0
    %v3016 = vadd.f32 %v2847, %v3015
    %3017 = vmatmul.bf16.gmra.mxu0 %v2517
    %v3018 = vpop.f32.mrf.mxu0
    %v3019 = vadd.f32 %v2850, %v3018
    %v3020 = vpop.f32.mrf.mxu0
    %v3021 = vadd.f32 %v2852, %v3020
    %3022 = vmatmul.bf16.gmra.mxu0 %v2520
    %v3023 = vpop.f32.mrf.mxu0
    %v3024 = vadd.f32 %v2855, %v3023
    %v3025 = vpop.f32.mrf.mxu0
    %v3026 = vadd.f32 %v2857, %v3025
    %3027 = vmatmul.bf16.gmra.mxu0 %v2523
    %v3028 = vpop.f32.mrf.mxu0
    %v3029 = vadd.f32 %v2860, %v3028
    %v3030 = vpop.f32.mrf.mxu0
    %v3031 = vadd.f32 %v2862, %v3030
    %3032 = vmatmul.bf16.gmra.mxu0 %v2526
    %v3033 = vpop.f32.mrf.mxu0
    %v3034 = vadd.f32 %v2865, %v3033
    %v3035 = vpop.f32.mrf.mxu0
    %v3036 = vadd.f32 %v2867, %v3035
    %3037 = vmatmul.bf16.gmra.mxu0 %v2529
    %v3038 = vpop.f32.mrf.mxu0
    %v3039 = vadd.f32 %v2870, %v3038
    %v3040 = vpop.f32.mrf.mxu0
    %v3041 = vadd.f32 %v2872, %v3040
    %3042 = vmatmul.bf16.gmra.mxu0 %v2532
    %v3043 = vpop.f32.mrf.mxu0
    %v3044 = vadd.f32 %v2875, %v3043
    %v3045 = vpop.f32.mrf.mxu0
    %v3046 = vadd.f32 %v2877, %v3045
    %3047 = vmatmul.bf16.gmra.mxu0 %v2535
    %v3048 = vpop.f32.mrf.mxu0
    %v3049 = vadd.f32 %v2880, %v3048
    %v3050 = vpop.f32.mrf.mxu0
    %v3051 = vadd.f32 %v2882, %v3050
    %3052 = vmatmul.bf16.gmra.mxu0 %v2538
    %v3053 = vpop.f32.mrf.mxu0
    %v3054 = vadd.f32 %v2885, %v3053
    %v3055 = vpop.f32.mrf.mxu0
    %v3056 = vadd.f32 %v2887, %v3055
    %3057 = vmatmul.bf16.gmra.mxu0 %v2541
    %v3058 = vpop.f32.mrf.mxu0
    %v3059 = vadd.f32 %v2890, %v3058
    %v3060 = vpop.f32.mrf.mxu0
    %v3061 = vadd.f32 %v2892, %v3060
    %3062 = vmatmul.bf16.gmra.mxu0 %v2544
    %v3063 = vpop.f32.mrf.mxu0
    %v3064 = vadd.f32 %v2895, %v3063
    %v3065 = vpop.f32.mrf.mxu0
    %v3066 = vadd.f32 %v2897, %v3065
    %3067 = vmatmul.bf16.gmra.mxu0 %v2547
    %v3068 = vpop.f32.mrf.mxu0
    %v3069 = vadd.f32 %v2900, %v3068
    %v3070 = vpop.f32.mrf.mxu0
    %v3071 = vadd.f32 %v2902, %v3070
    %3072 = vmatmul.bf16.gmra.mxu0 %v2550
    %v3073 = vpop.f32.mrf.mxu0
    %v3074 = vadd.f32 %v2905, %v3073
    %v3075 = vpop.f32.mrf.mxu0
    %v3076 = vadd.f32 %v2907, %v3075
    %3077 = vmatmul.bf16.gmra.mxu0 %v2553
    %v3078 = vpop.f32.mrf.mxu0
    %v3079 = vadd.f32 %v2910, %v3078
    %v3080 = vpop.f32.mrf.mxu0
    %v3081 = vadd.f32 %v2912, %v3080
    %3082 = vmatmul.bf16.gmra.mxu0 %v2556
    %v3083 = vpop.f32.mrf.mxu0
    %v3084 = vadd.f32 %v2915, %v3083
    %v3085 = vpop.f32.mrf.mxu0
    %v3086 = vadd.f32 %v2917, %v3085
    %3087 = vmatmul.bf16.gmra.mxu0 %v2559
    %v3088 = vpop.f32.mrf.mxu0
    %v3089 = vadd.f32 %v2920, %v3088
    %v3090 = vpop.f32.mrf.mxu0
    %v3091 = vadd.f32 %v2922, %v3090
    %3092 = vmatmul.bf16.gmra.mxu0 %v2562
    %v3093 = vpop.f32.mrf.mxu0
    %v3094 = vadd.f32 %v2925, %v3093
    %v3095 = vpop.f32.mrf.mxu0
    %v3096 = vadd.f32 %v2927, %v3095
    %3097 = vmatmul.bf16.gmra.mxu0 %v2565
    %v3098 = vpop.f32.mrf.mxu0
    %v3099 = vadd.f32 %v2930, %v3098
    %v3100 = vpop.f32.mrf.mxu0
    %v3101 = vadd.f32 %v2932, %v3100
    %3102 = vmatmul.bf16.gmra.mxu0 %v2568
    %v3103 = vpop.f32.mrf.mxu0
    %v3104 = vadd.f32 %v2935, %v3103
    %v3105 = vpop.f32.mrf.mxu0
    %v3106 = vadd.f32 %v2937, %v3105
    %3107 = vmatmul.bf16.gmra.mxu0 %v2571
    %v3108 = vpop.f32.mrf.mxu0
    %v3109 = vadd.f32 %v2940, %v3108
    %v3110 = vpop.f32.mrf.mxu0
    %v3111 = vadd.f32 %v2942, %v3110
    %3112 = vmatmul.bf16.gmra.mxu0 %v2574
    %v3113 = vpop.f32.mrf.mxu0
    %v3114 = vadd.f32 %v2945, %v3113
    %v3115 = vpop.f32.mrf.mxu0
    %v3116 = vadd.f32 %v2947, %v3115
    %3117 = vdwg.mxu0
    %3118 = vmatpush.bf16.msra.mxu0 0
    %3119 = vmatpush.bf16.msra.mxu0 0
    %3120 = vmatpush.bf16.msra.mxu0 0
    %3121 = vmatpush.bf16.msra.mxu0 0
    %3122 = vmatpush.bf16.msra.mxu0 0
    %3123 = vmatpush.bf16.msra.mxu0 0
    %3124 = vmatpush.bf16.msra.mxu0 %v2665
    %3125 = vmatpush.bf16.msra.mxu0 %v2664
    %3126 = vmatmul.bf16.gmra.mxu0 %v2685
    %v3127 = vpop.f32.mrf.mxu0
    %v3128 = vadd.f32 %v2959, %v3127
    %v3129 = vpop.f32.mrf.mxu0
    %v3130 = vadd.f32 %v2961, %v3129
    %3131 = vmatmul.bf16.gmra.mxu0 %v2688
    %v3132 = vpop.f32.mrf.mxu0
    %v3133 = vadd.f32 %v2964, %v3132
    %v3134 = vpop.f32.mrf.mxu0
    %v3135 = vadd.f32 %v2966, %v3134
    %3136 = vmatmul.bf16.gmra.mxu0 %v2691
    %v3137 = vpop.f32.mrf.mxu0
    %v3138 = vadd.f32 %v2969, %v3137
    %v3139 = vpop.f32.mrf.mxu0
    %v3140 = vadd.f32 %v2971, %v3139
    %3141 = vmatmul.bf16.gmra.mxu0 %v2694
    %v3142 = vpop.f32.mrf.mxu0
    %v3143 = vadd.f32 %v2974, %v3142
    %v3144 = vpop.f32.mrf.mxu0
    %v3145 = vadd.f32 %v2976, %v3144
    %3146 = vmatmul.bf16.gmra.mxu0 %v2697
    %v3147 = vpop.f32.mrf.mxu0
    %v3148 = vadd.f32 %v2979, %v3147
    %v3149 = vpop.f32.mrf.mxu0
    %v3150 = vadd.f32 %v2981, %v3149
    %3151 = vmatmul.bf16.gmra.mxu0 %v2700
    %v3152 = vpop.f32.mrf.mxu0
    %v3153 = vadd.f32 %v2984, %v3152
    %v3154 = vpop.f32.mrf.mxu0
    %v3155 = vadd.f32 %v2986, %v3154
    %3156 = vmatmul.bf16.gmra.mxu0 %v2703
    %v3157 = vpop.f32.mrf.mxu0
    %v3158 = vadd.f32 %v2989, %v3157
    %v3159 = vpop.f32.mrf.mxu0
    %v3160 = vadd.f32 %v2991, %v3159
    %3161 = vmatmul.bf16.gmra.mxu0 %v2706
    %v3162 = vpop.f32.mrf.mxu0
    %v3163 = vadd.f32 %v2994, %v3162
    %v3164 = vpop.f32.mrf.mxu0
    %v3165 = vadd.f32 %v2996, %v3164
    %3166 = vmatmul.bf16.gmra.mxu0 %v2709
    %v3167 = vpop.f32.mrf.mxu0
    %v3168 = vadd.f32 %v2999, %v3167
    %v3169 = vpop.f32.mrf.mxu0
    %v3170 = vadd.f32 %v3001, %v3169
    %3171 = vmatmul.bf16.gmra.mxu0 %v2712
    %v3172 = vpop.f32.mrf.mxu0
    %v3173 = vadd.f32 %v3004, %v3172
    %v3174 = vpop.f32.mrf.mxu0
    %v3175 = vadd.f32 %v3006, %v3174
    %3176 = vmatmul.bf16.gmra.mxu0 %v2715
    %v3177 = vpop.f32.mrf.mxu0
    %v3178 = vadd.f32 %v3009, %v3177
    %v3179 = vpop.f32.mrf.mxu0
    %v3180 = vadd.f32 %v3011, %v3179
    %3181 = vmatmul.bf16.gmra.mxu0 %v2718
    %v3182 = vpop.f32.mrf.mxu0
    %v3183 = vadd.f32 %v3014, %v3182
    %v3184 = vpop.f32.mrf.mxu0
    %v3185 = vadd.f32 %v3016, %v3184
    %3186 = vmatmul.bf16.gmra.mxu0 %v2721
    %v3187 = vpop.f32.mrf.mxu0
    %v3188 = vadd.f32 %v3019, %v3187
    %v3189 = vpop.f32.mrf.mxu0
    %v3190 = vadd.f32 %v3021, %v3189
    %3191 = vmatmul.bf16.gmra.mxu0 %v2724
    %v3192 = vpop.f32.mrf.mxu0
    %v3193 = vadd.f32 %v3024, %v3192
    %v3194 = vpop.f32.mrf.mxu0
    %v3195 = vadd.f32 %v3026, %v3194
    %3196 = vmatmul.bf16.gmra.mxu0 %v2727
    %v3197 = vpop.f32.mrf.mxu0
    %v3198 = vadd.f32 %v3029, %v3197
    %v3199 = vpop.f32.mrf.mxu0
    %v3200 = vadd.f32 %v3031, %v3199
    %3201 = vmatmul.bf16.gmra.mxu0 %v2730
    %v3202 = vpop.f32.mrf.mxu0
    %v3203 = vadd.f32 %v3034, %v3202
    %v3204 = vpop.f32.mrf.mxu0
    %v3205 = vadd.f32 %v3036, %v3204
    %3206 = vmatmul.bf16.gmra.mxu0 %v2733
    %v3207 = vpop.f32.mrf.mxu0
    %v3208 = vadd.f32 %v3039, %v3207
    %v3209 = vpop.f32.mrf.mxu0
    %v3210 = vadd.f32 %v3041, %v3209
    %3211 = vmatmul.bf16.gmra.mxu0 %v2736
    %v3212 = vpop.f32.mrf.mxu0
    %v3213 = vadd.f32 %v3044, %v3212
    %v3214 = vpop.f32.mrf.mxu0
    %v3215 = vadd.f32 %v3046, %v3214
    %3216 = vmatmul.bf16.gmra.mxu0 %v2739
    %v3217 = vpop.f32.mrf.mxu0
    %v3218 = vadd.f32 %v3049, %v3217
    %v3219 = vpop.f32.mrf.mxu0
    %v3220 = vadd.f32 %v3051, %v3219
    %3221 = vmatmul.bf16.gmra.mxu0 %v2742
    %v3222 = vpop.f32.mrf.mxu0
    %v3223 = vadd.f32 %v3054, %v3222
    %v3224 = vpop.f32.mrf.mxu0
    %v3225 = vadd.f32 %v3056, %v3224
    %3226 = vmatmul.bf16.gmra.mxu0 %v2745
    %v3227 = vpop.f32.mrf.mxu0
    %v3228 = vadd.f32 %v3059, %v3227
    %v3229 = vpop.f32.mrf.mxu0
    %v3230 = vadd.f32 %v3061, %v3229
    %3231 = vmatmul.bf16.gmra.mxu0 %v2748
    %v3232 = vpop.f32.mrf.mxu0
    %v3233 = vadd.f32 %v3064, %v3232
    %v3234 = vpop.f32.mrf.mxu0
    %v3235 = vadd.f32 %v3066, %v3234
    %3236 = vmatmul.bf16.gmra.mxu0 %v2751
    %v3237 = vpop.f32.mrf.mxu0
    %v3238 = vadd.f32 %v3069, %v3237
    %v3239 = vpop.f32.mrf.mxu0
    %v3240 = vadd.f32 %v3071, %v3239
    %3241 = vmatmul.bf16.gmra.mxu0 %v2754
    %v3242 = vpop.f32.mrf.mxu0
    %v3243 = vadd.f32 %v3074, %v3242
    %v3244 = vpop.f32.mrf.mxu0
    %v3245 = vadd.f32 %v3076, %v3244
    %3246 = vmatmul.bf16.gmra.mxu0 %v2757
    %v3247 = vpop.f32.mrf.mxu0
    %v3248 = vadd.f32 %v3079, %v3247
    %v3249 = vpop.f32.mrf.mxu0
    %v3250 = vadd.f32 %v3081, %v3249
    %3251 = vmatmul.bf16.gmra.mxu0 %v2760
    %v3252 = vpop.f32.mrf.mxu0
    %v3253 = vadd.f32 %v3084, %v3252
    %v3254 = vpop.f32.mrf.mxu0
    %v3255 = vadd.f32 %v3086, %v3254
    %3256 = vmatmul.bf16.gmra.mxu0 %v2763
    %v3257 = vpop.f32.mrf.mxu0
    %v3258 = vadd.f32 %v3089, %v3257
    %v3259 = vpop.f32.mrf.mxu0
    %v3260 = vadd.f32 %v3091, %v3259
    %3261 = vmatmul.bf16.gmra.mxu0 %v2766
    %v3262 = vpop.f32.mrf.mxu0
    %v3263 = vadd.f32 %v3094, %v3262
    %v3264 = vpop.f32.mrf.mxu0
    %v3265 = vadd.f32 %v3096, %v3264
    %3266 = vmatmul.bf16.gmra.mxu0 %v2769
    %v3267 = vpop.f32.mrf.mxu0
    %v3268 = vadd.f32 %v3099, %v3267
    %v3269 = vpop.f32.mrf.mxu0
    %v3270 = vadd.f32 %v3101, %v3269
    %3271 = vmatmul.bf16.gmra.mxu0 %v2772
    %v3272 = vpop.f32.mrf.mxu0
    %v3273 = vadd.f32 %v3104, %v3272
    %v3274 = vpop.f32.mrf.mxu0
    %v3275 = vadd.f32 %v3106, %v3274
    %3276 = vmatmul.bf16.gmra.mxu0 %v2775
    %v3277 = vpop.f32.mrf.mxu0
    %v3278 = vadd.f32 %v3109, %v3277
    %v3279 = vpop.f32.mrf.mxu0
    %v3280 = vadd.f32 %v3111, %v3279
    %3281 = vmatmul.bf16.gmra.mxu0 %v2778
    %v3282 = vpop.f32.mrf.mxu0
    %v3283 = vadd.f32 %v3114, %v3282
    %v3284 = vpop.f32.mrf.mxu0
    %v3285 = vadd.f32 %v3116, %v3284
    %3286 = vdwg.mxu0
    %s3287 = smul.u32 %s231, 512
    %s3288 = scalar_lea.vmem %s0, %s3287
    %v3289 = vld [vmem:[%s3288] sm:$0xff]
    %v3290 = vld [vmem:[%s3288 + $0x8] sm:$0xff]
    %v3291 = vld [vmem:[%s3288 + $0x10] sm:$0xff]
    %v3292 = vld [vmem:[%s3288 + $0x18] sm:$0xff]
    %v3293 = vld [vmem:[%s3288 + $0x20] sm:$0xff]
    %v3294 = vld [vmem:[%s3288 + $0x28] sm:$0xff]
    %v3295 = vld [vmem:[%s3288 + $0x30] sm:$0xff]
    %v3296 = vld [vmem:[%s3288 + $0x38] sm:$0xff]
    %v3297 = vld [vmem:[%s3288 + $0x40] sm:$0xff]
    %v3298 = vld [vmem:[%s3288 + $0x48] sm:$0xff]
    %v3299 = vld [vmem:[%s3288 + $0x50] sm:$0xff]
    %v3300 = vld [vmem:[%s3288 + $0x58] sm:$0xff]
    %v3301 = vld [vmem:[%s3288 + $0x60] sm:$0xff]
    %v3302 = vld [vmem:[%s3288 + $0x68] sm:$0xff]
    %v3303 = vld [vmem:[%s3288 + $0x70] sm:$0xff]
    %v3304 = vld [vmem:[%s3288 + $0x78] sm:$0xff]
    %v3305 = vld [vmem:[%s3288 + $0x80] sm:$0xff]
    %v3306 = vld [vmem:[%s3288 + $0x88] sm:$0xff]
    %v3307 = vld [vmem:[%s3288 + $0x90] sm:$0xff]
    %v3308 = vld [vmem:[%s3288 + $0x98] sm:$0xff]
    %v3309 = vld [vmem:[%s3288 + $0xa0] sm:$0xff]
    %v3310 = vld [vmem:[%s3288 + $0xa8] sm:$0xff]
    %v3311 = vld [vmem:[%s3288 + $0xb0] sm:$0xff]
    %v3312 = vld [vmem:[%s3288 + $0xb8] sm:$0xff]
    %v3313 = vld [vmem:[%s3288 + $0xc0] sm:$0xff]
    %v3314 = vld [vmem:[%s3288 + $0xc8] sm:$0xff]
    %v3315 = vld [vmem:[%s3288 + $0xd0] sm:$0xff]
    %v3316 = vld [vmem:[%s3288 + $0xd8] sm:$0xff]
    %v3317 = vld [vmem:[%s3288 + $0xe0] sm:$0xff]
    %v3318 = vld [vmem:[%s3288 + $0xe8] sm:$0xff]
    %v3319 = vld [vmem:[%s3288 + $0xf0] sm:$0xff]
    %v3320 = vld [vmem:[%s3288 + $0xf8] sm:$0xff]
    %v3321 = vld [vmem:[%s3288 + $0x100] sm:$0xff]
    %v3322 = vld [vmem:[%s3288 + $0x108] sm:$0xff]
    %v3323 = vld [vmem:[%s3288 + $0x110] sm:$0xff]
    %v3324 = vld [vmem:[%s3288 + $0x118] sm:$0xff]
    %v3325 = vld [vmem:[%s3288 + $0x120] sm:$0xff]
    %v3326 = vld [vmem:[%s3288 + $0x128] sm:$0xff]
    %v3327 = vld [vmem:[%s3288 + $0x130] sm:$0xff]
    %v3328 = vld [vmem:[%s3288 + $0x138] sm:$0xff]
    %v3329 = vld [vmem:[%s3288 + $0x140] sm:$0xff]
    %v3330 = vld [vmem:[%s3288 + $0x148] sm:$0xff]
    %v3331 = vld [vmem:[%s3288 + $0x150] sm:$0xff]
    %v3332 = vld [vmem:[%s3288 + $0x158] sm:$0xff]
    %v3333 = vld [vmem:[%s3288 + $0x160] sm:$0xff]
    %v3334 = vld [vmem:[%s3288 + $0x168] sm:$0xff]
    %v3335 = vld [vmem:[%s3288 + $0x170] sm:$0xff]
    %v3336 = vld [vmem:[%s3288 + $0x178] sm:$0xff]
    %v3337 = vld [vmem:[%s3288 + $0x180] sm:$0xff]
    %v3338 = vld [vmem:[%s3288 + $0x188] sm:$0xff]
    %v3339 = vld [vmem:[%s3288 + $0x190] sm:$0xff]
    %v3340 = vld [vmem:[%s3288 + $0x198] sm:$0xff]
    %v3341 = vld [vmem:[%s3288 + $0x1a0] sm:$0xff]
    %v3342 = vld [vmem:[%s3288 + $0x1a8] sm:$0xff]
    %v3343 = vld [vmem:[%s3288 + $0x1b0] sm:$0xff]
    %v3344 = vld [vmem:[%s3288 + $0x1b8] sm:$0xff]
    %v3345 = vld [vmem:[%s3288 + $0x1c0] sm:$0xff]
    %v3346 = vld [vmem:[%s3288 + $0x1c8] sm:$0xff]
    %v3347 = vld [vmem:[%s3288 + $0x1d0] sm:$0xff]
    %v3348 = vld [vmem:[%s3288 + $0x1d8] sm:$0xff]
    %v3349 = vld [vmem:[%s3288 + $0x1e0] sm:$0xff]
    %v3350 = vld [vmem:[%s3288 + $0x1e8] sm:$0xff]
    %v3351 = vld [vmem:[%s3288 + $0x1f0] sm:$0xff]
    %v3352 = vld [vmem:[%s3288 + $0x1f8] sm:$0xff]
    %v3353 = vadd.f32 %v3289, %v3128
    %v3354 = vadd.f32 %v3290, %v3130
    %v3355 = vadd.f32 %v3291, %v3133
    %v3356 = vadd.f32 %v3292, %v3135
    %v3357 = vadd.f32 %v3293, %v3138
    %v3358 = vadd.f32 %v3294, %v3140
    %v3359 = vadd.f32 %v3295, %v3143
    %v3360 = vadd.f32 %v3296, %v3145
    %v3361 = vadd.f32 %v3297, %v3148
    %v3362 = vadd.f32 %v3298, %v3150
    %v3363 = vadd.f32 %v3299, %v3153
    %v3364 = vadd.f32 %v3300, %v3155
    %v3365 = vadd.f32 %v3301, %v3158
    %v3366 = vadd.f32 %v3302, %v3160
    %v3367 = vadd.f32 %v3303, %v3163
    %v3368 = vadd.f32 %v3304, %v3165
    %v3369 = vadd.f32 %v3305, %v3168
    %v3370 = vadd.f32 %v3306, %v3170
    %v3371 = vadd.f32 %v3307, %v3173
    %v3372 = vadd.f32 %v3308, %v3175
    %v3373 = vadd.f32 %v3309, %v3178
    %v3374 = vadd.f32 %v3310, %v3180
    %v3375 = vadd.f32 %v3311, %v3183
    %v3376 = vadd.f32 %v3312, %v3185
    %v3377 = vadd.f32 %v3313, %v3188
    %v3378 = vadd.f32 %v3314, %v3190
    %v3379 = vadd.f32 %v3315, %v3193
    %v3380 = vadd.f32 %v3316, %v3195
    %v3381 = vadd.f32 %v3317, %v3198
    %v3382 = vadd.f32 %v3318, %v3200
    %v3383 = vadd.f32 %v3319, %v3203
    %v3384 = vadd.f32 %v3320, %v3205
    %v3385 = vadd.f32 %v3321, %v3208
    %v3386 = vadd.f32 %v3322, %v3210
    %v3387 = vadd.f32 %v3323, %v3213
    %v3388 = vadd.f32 %v3324, %v3215
    %v3389 = vadd.f32 %v3325, %v3218
    %v3390 = vadd.f32 %v3326, %v3220
    %v3391 = vadd.f32 %v3327, %v3223
    %v3392 = vadd.f32 %v3328, %v3225
    %v3393 = vadd.f32 %v3329, %v3228
    %v3394 = vadd.f32 %v3330, %v3230
    %v3395 = vadd.f32 %v3331, %v3233
    %v3396 = vadd.f32 %v3332, %v3235
    %v3397 = vadd.f32 %v3333, %v3238
    %v3398 = vadd.f32 %v3334, %v3240
    %v3399 = vadd.f32 %v3335, %v3243
    %v3400 = vadd.f32 %v3336, %v3245
    %v3401 = vadd.f32 %v3337, %v3248
    %v3402 = vadd.f32 %v3338, %v3250
    %v3403 = vadd.f32 %v3339, %v3253
    %v3404 = vadd.f32 %v3340, %v3255
    %v3405 = vadd.f32 %v3341, %v3258
    %v3406 = vadd.f32 %v3342, %v3260
    %v3407 = vadd.f32 %v3343, %v3263
    %v3408 = vadd.f32 %v3344, %v3265
    %v3409 = vadd.f32 %v3345, %v3268
    %v3410 = vadd.f32 %v3346, %v3270
    %v3411 = vadd.f32 %v3347, %v3273
    %v3412 = vadd.f32 %v3348, %v3275
    %v3413 = vadd.f32 %v3349, %v3278
    %v3414 = vadd.f32 %v3350, %v3280
    %v3415 = vadd.f32 %v3351, %v3283
    %v3416 = vadd.f32 %v3352, %v3285
    %v3417 = vadd.f32 %v3353, %v3354
    %v3418 = vadd.f32 %v3417, %v3355
    %v3419 = vadd.f32 %v3418, %v3356
    %v3420 = vadd.f32 %v3419, %v3357
    %v3421 = vadd.f32 %v3420, %v3358
    %v3422 = vadd.f32 %v3421, %v3359
    %v3423 = vadd.f32 %v3422, %v3360
    %v3424 = vadd.f32 %v3423, %v3361
    %v3425 = vadd.f32 %v3424, %v3362
    %v3426 = vadd.f32 %v3425, %v3363
    %v3427 = vadd.f32 %v3426, %v3364
    %v3428 = vadd.f32 %v3427, %v3365
    %v3429 = vadd.f32 %v3428, %v3366
    %v3430 = vadd.f32 %v3429, %v3367
    %v3431 = vadd.f32 %v3430, %v3368
    %v3432 = vadd.f32 %v3431, %v3369
    %v3433 = vadd.f32 %v3432, %v3370
    %v3434 = vadd.f32 %v3433, %v3371
    %v3435 = vadd.f32 %v3434, %v3372
    %v3436 = vadd.f32 %v3435, %v3373
    %v3437 = vadd.f32 %v3436, %v3374
    %v3438 = vadd.f32 %v3437, %v3375
    %v3439 = vadd.f32 %v3438, %v3376
    %v3440 = vadd.f32 %v3439, %v3377
    %v3441 = vadd.f32 %v3440, %v3378
    %v3442 = vadd.f32 %v3441, %v3379
    %v3443 = vadd.f32 %v3442, %v3380
    %v3444 = vadd.f32 %v3443, %v3381
    %v3445 = vadd.f32 %v3444, %v3382
    %v3446 = vadd.f32 %v3445, %v3383
    %v3447 = vadd.f32 %v3446, %v3384
    %v3448 = vadd.f32 %v3447, %v3385
    %v3449 = vadd.f32 %v3448, %v3386
    %v3450 = vadd.f32 %v3449, %v3387
    %v3451 = vadd.f32 %v3450, %v3388
    %v3452 = vadd.f32 %v3451, %v3389
    %v3453 = vadd.f32 %v3452, %v3390
    %v3454 = vadd.f32 %v3453, %v3391
    %v3455 = vadd.f32 %v3454, %v3392
    %v3456 = vadd.f32 %v3455, %v3393
    %v3457 = vadd.f32 %v3456, %v3394
    %v3458 = vadd.f32 %v3457, %v3395
    %v3459 = vadd.f32 %v3458, %v3396
    %v3460 = vadd.f32 %v3459, %v3397
    %v3461 = vadd.f32 %v3460, %v3398
    %v3462 = vadd.f32 %v3461, %v3399
    %v3463 = vadd.f32 %v3462, %v3400
    %v3464 = vadd.f32 %v3463, %v3401
    %v3465 = vadd.f32 %v3464, %v3402
    %v3466 = vadd.f32 %v3465, %v3403
    %v3467 = vadd.f32 %v3466, %v3404
    %v3468 = vadd.f32 %v3467, %v3405
    %v3469 = vadd.f32 %v3468, %v3406
    %v3470 = vadd.f32 %v3469, %v3407
    %v3471 = vadd.f32 %v3470, %v3408
    %v3472 = vadd.f32 %v3471, %v3409
    %v3473 = vadd.f32 %v3472, %v3410
    %v3474 = vadd.f32 %v3473, %v3411
    %v3475 = vadd.f32 %v3474, %v3412
    %v3476 = vadd.f32 %v3475, %v3413
    %v3477 = vadd.f32 %v3476, %v3414
    %v3478 = vadd.f32 %v3477, %v3415
    %v3479 = vadd.f32 %v3478, %v3416
    %v3480 = vrot.slane %v3479, 4
    %v3481 = vadd.f32 %v3479, %v3480
    %v3482 = vrot.slane %v3481, 2
    %v3483 = vadd.f32 %v3481, %v3482
    %v3484 = vrot.slane %v3483, 1
    %v3485 = vadd.f32 %v3483, %v3484
    %v3486 = vmul.f32 %v3353, %v3353
    %v3487 = vmul.f32 %v3354, %v3354
    %v3488 = vmul.f32 %v3355, %v3355
    %v3489 = vmul.f32 %v3356, %v3356
    %v3490 = vmul.f32 %v3357, %v3357
    %v3491 = vmul.f32 %v3358, %v3358
    %v3492 = vmul.f32 %v3359, %v3359
    %v3493 = vmul.f32 %v3360, %v3360
    %v3494 = vmul.f32 %v3361, %v3361
    %v3495 = vmul.f32 %v3362, %v3362
    %v3496 = vmul.f32 %v3363, %v3363
    %v3497 = vmul.f32 %v3364, %v3364
    %v3498 = vmul.f32 %v3365, %v3365
    %v3499 = vmul.f32 %v3366, %v3366
    %v3500 = vmul.f32 %v3367, %v3367
    %v3501 = vmul.f32 %v3368, %v3368
    %v3502 = vmul.f32 %v3369, %v3369
    %v3503 = vmul.f32 %v3370, %v3370
    %v3504 = vmul.f32 %v3371, %v3371
    %v3505 = vmul.f32 %v3372, %v3372
    %v3506 = vmul.f32 %v3373, %v3373
    %v3507 = vmul.f32 %v3374, %v3374
    %v3508 = vmul.f32 %v3375, %v3375
    %v3509 = vmul.f32 %v3376, %v3376
    %v3510 = vmul.f32 %v3377, %v3377
    %v3511 = vmul.f32 %v3378, %v3378
    %v3512 = vmul.f32 %v3379, %v3379
    %v3513 = vmul.f32 %v3380, %v3380
    %v3514 = vmul.f32 %v3381, %v3381
    %v3515 = vmul.f32 %v3382, %v3382
    %v3516 = vmul.f32 %v3383, %v3383
    %v3517 = vmul.f32 %v3384, %v3384
    %v3518 = vmul.f32 %v3385, %v3385
    %v3519 = vmul.f32 %v3386, %v3386
    %v3520 = vmul.f32 %v3387, %v3387
    %v3521 = vmul.f32 %v3388, %v3388
    %v3522 = vmul.f32 %v3389, %v3389
    %v3523 = vmul.f32 %v3390, %v3390
    %v3524 = vmul.f32 %v3391, %v3391
    %v3525 = vmul.f32 %v3392, %v3392
    %v3526 = vmul.f32 %v3393, %v3393
    %v3527 = vmul.f32 %v3394, %v3394
    %v3528 = vmul.f32 %v3395, %v3395
    %v3529 = vmul.f32 %v3396, %v3396
    %v3530 = vmul.f32 %v3397, %v3397
    %v3531 = vmul.f32 %v3398, %v3398
    %v3532 = vmul.f32 %v3399, %v3399
    %v3533 = vmul.f32 %v3400, %v3400
    %v3534 = vmul.f32 %v3401, %v3401
    %v3535 = vmul.f32 %v3402, %v3402
    %v3536 = vmul.f32 %v3403, %v3403
    %v3537 = vmul.f32 %v3404, %v3404
    %v3538 = vmul.f32 %v3405, %v3405
    %v3539 = vmul.f32 %v3406, %v3406
    %v3540 = vmul.f32 %v3407, %v3407
    %v3541 = vmul.f32 %v3408, %v3408
    %v3542 = vmul.f32 %v3409, %v3409
    %v3543 = vmul.f32 %v3410, %v3410
    %v3544 = vmul.f32 %v3411, %v3411
    %v3545 = vmul.f32 %v3412, %v3412
    %v3546 = vmul.f32 %v3413, %v3413
    %v3547 = vmul.f32 %v3414, %v3414
    %v3548 = vmul.f32 %v3415, %v3415
    %v3549 = vmul.f32 %v3416, %v3416
    %v3550 = vadd.f32 %v3486, %v3487
    %v3551 = vadd.f32 %v3550, %v3488
    %v3552 = vadd.f32 %v3551, %v3489
    %v3553 = vadd.f32 %v3552, %v3490
    %v3554 = vadd.f32 %v3553, %v3491
    %v3555 = vadd.f32 %v3554, %v3492
    %v3556 = vadd.f32 %v3555, %v3493
    %v3557 = vadd.f32 %v3556, %v3494
    %v3558 = vadd.f32 %v3557, %v3495
    %v3559 = vadd.f32 %v3558, %v3496
    %v3560 = vadd.f32 %v3559, %v3497
    %v3561 = vadd.f32 %v3560, %v3498
    %v3562 = vadd.f32 %v3561, %v3499
    %v3563 = vadd.f32 %v3562, %v3500
    %v3564 = vadd.f32 %v3563, %v3501
    %v3565 = vadd.f32 %v3564, %v3502
    %v3566 = vadd.f32 %v3565, %v3503
    %v3567 = vadd.f32 %v3566, %v3504
    %v3568 = vadd.f32 %v3567, %v3505
    %v3569 = vadd.f32 %v3568, %v3506
    %v3570 = vadd.f32 %v3569, %v3507
    %v3571 = vadd.f32 %v3570, %v3508
    %v3572 = vadd.f32 %v3571, %v3509
    %v3573 = vadd.f32 %v3572, %v3510
    %v3574 = vadd.f32 %v3573, %v3511
    %v3575 = vadd.f32 %v3574, %v3512
    %v3576 = vadd.f32 %v3575, %v3513
    %v3577 = vadd.f32 %v3576, %v3514
    %v3578 = vadd.f32 %v3577, %v3515
    %v3579 = vadd.f32 %v3578, %v3516
    %v3580 = vadd.f32 %v3579, %v3517
    %v3581 = vadd.f32 %v3580, %v3518
    %v3582 = vadd.f32 %v3581, %v3519
    %v3583 = vadd.f32 %v3582, %v3520
    %v3584 = vadd.f32 %v3583, %v3521
    %v3585 = vadd.f32 %v3584, %v3522
    %v3586 = vadd.f32 %v3585, %v3523
    %v3587 = vadd.f32 %v3586, %v3524
    %v3588 = vadd.f32 %v3587, %v3525
    %v3589 = vadd.f32 %v3588, %v3526
    %v3590 = vadd.f32 %v3589, %v3527
    %v3591 = vadd.f32 %v3590, %v3528
    %v3592 = vadd.f32 %v3591, %v3529
    %v3593 = vadd.f32 %v3592, %v3530
    %v3594 = vadd.f32 %v3593, %v3531
    %v3595 = vadd.f32 %v3594, %v3532
    %v3596 = vadd.f32 %v3595, %v3533
    %v3597 = vadd.f32 %v3596, %v3534
    %v3598 = vadd.f32 %v3597, %v3535
    %v3599 = vadd.f32 %v3598, %v3536
    %v3600 = vadd.f32 %v3599, %v3537
    %v3601 = vadd.f32 %v3600, %v3538
    %v3602 = vadd.f32 %v3601, %v3539
    %v3603 = vadd.f32 %v3602, %v3540
    %v3604 = vadd.f32 %v3603, %v3541
    %v3605 = vadd.f32 %v3604, %v3542
    %v3606 = vadd.f32 %v3605, %v3543
    %v3607 = vadd.f32 %v3606, %v3544
    %v3608 = vadd.f32 %v3607, %v3545
    %v3609 = vadd.f32 %v3608, %v3546
    %v3610 = vadd.f32 %v3609, %v3547
    %v3611 = vadd.f32 %v3610, %v3548
    %v3612 = vadd.f32 %v3611, %v3549
    %v3613 = vrot.slane %v3612, 4
    %v3614 = vadd.f32 %v3612, %v3613
    %v3615 = vrot.slane %v3614, 2
    %v3616 = vadd.f32 %v3614, %v3615
    %v3617 = vrot.slane %v3616, 1
    %v3618 = vadd.f32 %v3616, %v3617
    %v3619 = vmul.f32 %v3485, 0.001953125
    %v3620 = vmul.f32 %v3618, 0.001953125
    %v3621 = vmul.f32 %v3619, %v3619
    %v3622 = vsub.f32 %v3620, %v3621
    %v3623 = vadd.f32 %v3622, 1e-05
    %v3624 = vrsqrt.pop %v3623
    %v3625 = vmul.f32 %v3624, %v3623
    %v3626 = vmul.f32 %v3625, %v3624
    %v3627 = vmul.f32 0.5, %v3626
    %v3628 = vsub.f32 1.5, %v3627
    %v3629 = vmul.f32 %v3624, %v3628
    %vm3630 = vweird.f32 %v3623
    %vm3631 = vweird.f32 %v3624
    %vm3632 = vmor %vm3630, %vm3631
    %v3633 = vsel %vm3632, %v3624, %v3629
    %v3634 = vmul.f32 %v192, %v3633
    %v3635 = vmul.f32 %v3619, %v3634
    %v3636 = vsub.f32 %v193, %v3635
    %v3638 = vperm.slane %v3634, 0
    %v3640 = vmul.f32 %v3353, %v3638
    %v3641 = vmul.f32 %v3354, %v3638
    %v3642 = vmul.f32 %v3355, %v3638
    %v3643 = vmul.f32 %v3356, %v3638
    %v3644 = vmul.f32 %v3357, %v3638
    %v3645 = vmul.f32 %v3358, %v3638
    %v3646 = vmul.f32 %v3359, %v3638
    %v3647 = vmul.f32 %v3360, %v3638
    %v3648 = vmul.f32 %v3361, %v3638
    %v3649 = vmul.f32 %v3362, %v3638
    %v3650 = vmul.f32 %v3363, %v3638
    %v3651 = vmul.f32 %v3364, %v3638
    %v3652 = vmul.f32 %v3365, %v3638
    %v3653 = vmul.f32 %v3366, %v3638
    %v3654 = vmul.f32 %v3367, %v3638
    %v3655 = vmul.f32 %v3368, %v3638
    %v3656 = vmul.f32 %v3369, %v3638
    %v3657 = vmul.f32 %v3370, %v3638
    %v3658 = vmul.f32 %v3371, %v3638
    %v3659 = vmul.f32 %v3372, %v3638
    %v3660 = vmul.f32 %v3373, %v3638
    %v3661 = vmul.f32 %v3374, %v3638
    %v3662 = vmul.f32 %v3375, %v3638
    %v3663 = vmul.f32 %v3376, %v3638
    %v3664 = vmul.f32 %v3377, %v3638
    %v3665 = vmul.f32 %v3378, %v3638
    %v3666 = vmul.f32 %v3379, %v3638
    %v3667 = vmul.f32 %v3380, %v3638
    %v3668 = vmul.f32 %v3381, %v3638
    %v3669 = vmul.f32 %v3382, %v3638
    %v3670 = vmul.f32 %v3383, %v3638
    %v3671 = vmul.f32 %v3384, %v3638
    %v3672 = vmul.f32 %v3385, %v3638
    %v3673 = vmul.f32 %v3386, %v3638
    %v3674 = vmul.f32 %v3387, %v3638
    %v3675 = vmul.f32 %v3388, %v3638
    %v3676 = vmul.f32 %v3389, %v3638
    %v3677 = vmul.f32 %v3390, %v3638
    %v3678 = vmul.f32 %v3391, %v3638
    %v3679 = vmul.f32 %v3392, %v3638
    %v3680 = vmul.f32 %v3393, %v3638
    %v3681 = vmul.f32 %v3394, %v3638
    %v3682 = vmul.f32 %v3395, %v3638
    %v3683 = vmul.f32 %v3396, %v3638
    %v3684 = vmul.f32 %v3397, %v3638
    %v3685 = vmul.f32 %v3398, %v3638
    %v3686 = vmul.f32 %v3399, %v3638
    %v3687 = vmul.f32 %v3400, %v3638
    %v3688 = vmul.f32 %v3401, %v3638
    %v3689 = vmul.f32 %v3402, %v3638
    %v3690 = vmul.f32 %v3403, %v3638
    %v3691 = vmul.f32 %v3404, %v3638
    %v3692 = vmul.f32 %v3405, %v3638
    %v3693 = vmul.f32 %v3406, %v3638
    %v3694 = vmul.f32 %v3407, %v3638
    %v3695 = vmul.f32 %v3408, %v3638
    %v3696 = vmul.f32 %v3409, %v3638
    %v3697 = vmul.f32 %v3410, %v3638
    %v3698 = vmul.f32 %v3411, %v3638
    %v3699 = vmul.f32 %v3412, %v3638
    %v3700 = vmul.f32 %v3413, %v3638
    %v3701 = vmul.f32 %v3414, %v3638
    %v3702 = vmul.f32 %v3415, %v3638
    %v3703 = vmul.f32 %v3416, %v3638
    %v3705 = vperm.slane %v3636, 0
    %v3707 = vadd.f32 %v3640, %v3705
    %v3708 = vadd.f32 %v3641, %v3705
    %v3709 = vadd.f32 %v3642, %v3705
    %v3710 = vadd.f32 %v3643, %v3705
    %v3711 = vadd.f32 %v3644, %v3705
    %v3712 = vadd.f32 %v3645, %v3705
    %v3713 = vadd.f32 %v3646, %v3705
    %v3714 = vadd.f32 %v3647, %v3705
    %v3715 = vadd.f32 %v3648, %v3705
    %v3716 = vadd.f32 %v3649, %v3705
    %v3717 = vadd.f32 %v3650, %v3705
    %v3718 = vadd.f32 %v3651, %v3705
    %v3719 = vadd.f32 %v3652, %v3705
    %v3720 = vadd.f32 %v3653, %v3705
    %v3721 = vadd.f32 %v3654, %v3705
    %v3722 = vadd.f32 %v3655, %v3705
    %v3723 = vadd.f32 %v3656, %v3705
    %v3724 = vadd.f32 %v3657, %v3705
    %v3725 = vadd.f32 %v3658, %v3705
    %v3726 = vadd.f32 %v3659, %v3705
    %v3727 = vadd.f32 %v3660, %v3705
    %v3728 = vadd.f32 %v3661, %v3705
    %v3729 = vadd.f32 %v3662, %v3705
    %v3730 = vadd.f32 %v3663, %v3705
    %v3731 = vadd.f32 %v3664, %v3705
    %v3732 = vadd.f32 %v3665, %v3705
    %v3733 = vadd.f32 %v3666, %v3705
    %v3734 = vadd.f32 %v3667, %v3705
    %v3735 = vadd.f32 %v3668, %v3705
    %v3736 = vadd.f32 %v3669, %v3705
    %v3737 = vadd.f32 %v3670, %v3705
    %v3738 = vadd.f32 %v3671, %v3705
    %v3739 = vadd.f32 %v3672, %v3705
    %v3740 = vadd.f32 %v3673, %v3705
    %v3741 = vadd.f32 %v3674, %v3705
    %v3742 = vadd.f32 %v3675, %v3705
    %v3743 = vadd.f32 %v3676, %v3705
    %v3744 = vadd.f32 %v3677, %v3705
    %v3745 = vadd.f32 %v3678, %v3705
    %v3746 = vadd.f32 %v3679, %v3705
    %v3747 = vadd.f32 %v3680, %v3705
    %v3748 = vadd.f32 %v3681, %v3705
    %v3749 = vadd.f32 %v3682, %v3705
    %v3750 = vadd.f32 %v3683, %v3705
    %v3751 = vadd.f32 %v3684, %v3705
    %v3752 = vadd.f32 %v3685, %v3705
    %v3753 = vadd.f32 %v3686, %v3705
    %v3754 = vadd.f32 %v3687, %v3705
    %v3755 = vadd.f32 %v3688, %v3705
    %v3756 = vadd.f32 %v3689, %v3705
    %v3757 = vadd.f32 %v3690, %v3705
    %v3758 = vadd.f32 %v3691, %v3705
    %v3759 = vadd.f32 %v3692, %v3705
    %v3760 = vadd.f32 %v3693, %v3705
    %v3761 = vadd.f32 %v3694, %v3705
    %v3762 = vadd.f32 %v3695, %v3705
    %v3763 = vadd.f32 %v3696, %v3705
    %v3764 = vadd.f32 %v3697, %v3705
    %v3765 = vadd.f32 %v3698, %v3705
    %v3766 = vadd.f32 %v3699, %v3705
    %v3767 = vadd.f32 %v3700, %v3705
    %v3768 = vadd.f32 %v3701, %v3705
    %v3769 = vadd.f32 %v3702, %v3705
    %v3770 = vadd.f32 %v3703, %v3705
    %v3771 = vxor.u32 %v3707, 2147483648
    %v3772 = vxor.u32 %v3708, 2147483648
    %v3773 = vxor.u32 %v3709, 2147483648
    %v3774 = vxor.u32 %v3710, 2147483648
    %v3775 = vxor.u32 %v3711, 2147483648
    %v3776 = vxor.u32 %v3712, 2147483648
    %v3777 = vxor.u32 %v3713, 2147483648
    %v3778 = vxor.u32 %v3714, 2147483648
    %v3779 = vxor.u32 %v3715, 2147483648
    %v3780 = vxor.u32 %v3716, 2147483648
    %v3781 = vxor.u32 %v3717, 2147483648
    %v3782 = vxor.u32 %v3718, 2147483648
    %v3783 = vxor.u32 %v3719, 2147483648
    %v3784 = vxor.u32 %v3720, 2147483648
    %v3785 = vxor.u32 %v3721, 2147483648
    %v3786 = vxor.u32 %v3722, 2147483648
    %v3787 = vxor.u32 %v3723, 2147483648
    %v3788 = vxor.u32 %v3724, 2147483648
    %v3789 = vxor.u32 %v3725, 2147483648
    %v3790 = vxor.u32 %v3726, 2147483648
    %v3791 = vxor.u32 %v3727, 2147483648
    %v3792 = vxor.u32 %v3728, 2147483648
    %v3793 = vxor.u32 %v3729, 2147483648
    %v3794 = vxor.u32 %v3730, 2147483648
    %v3795 = vxor.u32 %v3731, 2147483648
    %v3796 = vxor.u32 %v3732, 2147483648
    %v3797 = vxor.u32 %v3733, 2147483648
    %v3798 = vxor.u32 %v3734, 2147483648
    %v3799 = vxor.u32 %v3735, 2147483648
    %v3800 = vxor.u32 %v3736, 2147483648
    %v3801 = vxor.u32 %v3737, 2147483648
    %v3802 = vxor.u32 %v3738, 2147483648
    %v3803 = vxor.u32 %v3739, 2147483648
    %v3804 = vxor.u32 %v3740, 2147483648
    %v3805 = vxor.u32 %v3741, 2147483648
    %v3806 = vxor.u32 %v3742, 2147483648
    %v3807 = vxor.u32 %v3743, 2147483648
    %v3808 = vxor.u32 %v3744, 2147483648
    %v3809 = vxor.u32 %v3745, 2147483648
    %v3810 = vxor.u32 %v3746, 2147483648
    %v3811 = vxor.u32 %v3747, 2147483648
    %v3812 = vxor.u32 %v3748, 2147483648
    %v3813 = vxor.u32 %v3749, 2147483648
    %v3814 = vxor.u32 %v3750, 2147483648
    %v3815 = vxor.u32 %v3751, 2147483648
    %v3816 = vxor.u32 %v3752, 2147483648
    %v3817 = vxor.u32 %v3753, 2147483648
    %v3818 = vxor.u32 %v3754, 2147483648
    %v3819 = vxor.u32 %v3755, 2147483648
    %v3820 = vxor.u32 %v3756, 2147483648
    %v3821 = vxor.u32 %v3757, 2147483648
    %v3822 = vxor.u32 %v3758, 2147483648
    %v3823 = vxor.u32 %v3759, 2147483648
    %v3824 = vxor.u32 %v3760, 2147483648
    %v3825 = vxor.u32 %v3761, 2147483648
    %v3826 = vxor.u32 %v3762, 2147483648
    %v3827 = vxor.u32 %v3763, 2147483648
    %v3828 = vxor.u32 %v3764, 2147483648
    %v3829 = vxor.u32 %v3765, 2147483648
    %v3830 = vxor.u32 %v3766, 2147483648
    %v3831 = vxor.u32 %v3767, 2147483648
    %v3832 = vxor.u32 %v3768, 2147483648
    %v3833 = vxor.u32 %v3769, 2147483648
    %v3834 = vxor.u32 %v3770, 2147483648
    %v3835 = vmul.f32 %v3771, 1.442695
    %v3836 = vpow.pop %v3835
    %v3837 = vmul.f32 %v3772, 1.442695
    %v3838 = vpow.pop %v3837
    %v3839 = vmul.f32 %v3773, 1.442695
    %v3840 = vpow.pop %v3839
    %v3841 = vmul.f32 %v3774, 1.442695
    %v3842 = vpow.pop %v3841
    %v3843 = vmul.f32 %v3775, 1.442695
    %v3844 = vpow.pop %v3843
    %v3845 = vmul.f32 %v3776, 1.442695
    %v3846 = vpow.pop %v3845
    %v3847 = vmul.f32 %v3777, 1.442695
    %v3848 = vpow.pop %v3847
    %v3849 = vmul.f32 %v3778, 1.442695
    %v3850 = vpow.pop %v3849
    %v3851 = vmul.f32 %v3779, 1.442695
    %v3852 = vpow.pop %v3851
    %v3853 = vmul.f32 %v3780, 1.442695
    %v3854 = vpow.pop %v3853
    %v3855 = vmul.f32 %v3781, 1.442695
    %v3856 = vpow.pop %v3855
    %v3857 = vmul.f32 %v3782, 1.442695
    %v3858 = vpow.pop %v3857
    %v3859 = vmul.f32 %v3783, 1.442695
    %v3860 = vpow.pop %v3859
    %v3861 = vmul.f32 %v3784, 1.442695
    %v3862 = vpow.pop %v3861
    %v3863 = vmul.f32 %v3785, 1.442695
    %v3864 = vpow.pop %v3863
    %v3865 = vmul.f32 %v3786, 1.442695
    %v3866 = vpow.pop %v3865
    %v3867 = vmul.f32 %v3787, 1.442695
    %v3868 = vpow.pop %v3867
    %v3869 = vmul.f32 %v3788, 1.442695
    %v3870 = vpow.pop %v3869
    %v3871 = vmul.f32 %v3789, 1.442695
    %v3872 = vpow.pop %v3871
    %v3873 = vmul.f32 %v3790, 1.442695
    %v3874 = vpow.pop %v3873
    %v3875 = vmul.f32 %v3791, 1.442695
    %v3876 = vpow.pop %v3875
    %v3877 = vmul.f32 %v3792, 1.442695
    %v3878 = vpow.pop %v3877
    %v3879 = vmul.f32 %v3793, 1.442695
    %v3880 = vpow.pop %v3879
    %v3881 = vmul.f32 %v3794, 1.442695
    %v3882 = vpow.pop %v3881
    %v3883 = vmul.f32 %v3795, 1.442695
    %v3884 = vpow.pop %v3883
    %v3885 = vmul.f32 %v3796, 1.442695
    %v3886 = vpow.pop %v3885
    %v3887 = vmul.f32 %v3797, 1.442695
    %v3888 = vpow.pop %v3887
    %v3889 = vmul.f32 %v3798, 1.442695
    %v3890 = vpow.pop %v3889
    %v3891 = vmul.f32 %v3799, 1.442695
    %v3892 = vpow.pop %v3891
    %v3893 = vmul.f32 %v3800, 1.442695
    %v3894 = vpow.pop %v3893
    %v3895 = vmul.f32 %v3801, 1.442695
    %v3896 = vpow.pop %v3895
    %v3897 = vmul.f32 %v3802, 1.442695
    %v3898 = vpow.pop %v3897
    %v3899 = vmul.f32 %v3803, 1.442695
    %v3900 = vpow.pop %v3899
    %v3901 = vmul.f32 %v3804, 1.442695
    %v3902 = vpow.pop %v3901
    %v3903 = vmul.f32 %v3805, 1.442695
    %v3904 = vpow.pop %v3903
    %v3905 = vmul.f32 %v3806, 1.442695
    %v3906 = vpow.pop %v3905
    %v3907 = vmul.f32 %v3807, 1.442695
    %v3908 = vpow.pop %v3907
    %v3909 = vmul.f32 %v3808, 1.442695
    %v3910 = vpow.pop %v3909
    %v3911 = vmul.f32 %v3809, 1.442695
    %v3912 = vpow.pop %v3911
    %v3913 = vmul.f32 %v3810, 1.442695
    %v3914 = vpow.pop %v3913
    %v3915 = vmul.f32 %v3811, 1.442695
    %v3916 = vpow.pop %v3915
    %v3917 = vmul.f32 %v3812, 1.442695
    %v3918 = vpow.pop %v3917
    %v3919 = vmul.f32 %v3813, 1.442695
    %v3920 = vpow.pop %v3919
    %v3921 = vmul.f32 %v3814, 1.442695
    %v3922 = vpow.pop %v3921
    %v3923 = vmul.f32 %v3815, 1.442695
    %v3924 = vpow.pop %v3923
    %v3925 = vmul.f32 %v3816, 1.442695
    %v3926 = vpow.pop %v3925
    %v3927 = vmul.f32 %v3817, 1.442695
    %v3928 = vpow.pop %v3927
    %v3929 = vmul.f32 %v3818, 1.442695
    %v3930 = vpow.pop %v3929
    %v3931 = vmul.f32 %v3819, 1.442695
    %v3932 = vpow.pop %v3931
    %v3933 = vmul.f32 %v3820, 1.442695
    %v3934 = vpow.pop %v3933
    %v3935 = vmul.f32 %v3821, 1.442695
    %v3936 = vpow.pop %v3935
    %v3937 = vmul.f32 %v3822, 1.442695
    %v3938 = vpow.pop %v3937
    %v3939 = vmul.f32 %v3823, 1.442695
    %v3940 = vpow.pop %v3939
    %v3941 = vmul.f32 %v3824, 1.442695
    %v3942 = vpow.pop %v3941
    %v3943 = vmul.f32 %v3825, 1.442695
    %v3944 = vpow.pop %v3943
    %v3945 = vmul.f32 %v3826, 1.442695
    %v3946 = vpow.pop %v3945
    %v3947 = vmul.f32 %v3827, 1.442695
    %v3948 = vpow.pop %v3947
    %v3949 = vmul.f32 %v3828, 1.442695
    %v3950 = vpow.pop %v3949
    %v3951 = vmul.f32 %v3829, 1.442695
    %v3952 = vpow.pop %v3951
    %v3953 = vmul.f32 %v3830, 1.442695
    %v3954 = vpow.pop %v3953
    %v3955 = vmul.f32 %v3831, 1.442695
    %v3956 = vpow.pop %v3955
    %v3957 = vmul.f32 %v3832, 1.442695
    %v3958 = vpow.pop %v3957
    %v3959 = vmul.f32 %v3833, 1.442695
    %v3960 = vpow.pop %v3959
    %v3961 = vmul.f32 %v3834, 1.442695
    %v3962 = vpow.pop %v3961
    %v3963 = vadd.f32 %v3836, 1.0
    %v3964 = vadd.f32 %v3838, 1.0
    %v3965 = vadd.f32 %v3840, 1.0
    %v3966 = vadd.f32 %v3842, 1.0
    %v3967 = vadd.f32 %v3844, 1.0
    %v3968 = vadd.f32 %v3846, 1.0
    %v3969 = vadd.f32 %v3848, 1.0
    %v3970 = vadd.f32 %v3850, 1.0
    %v3971 = vadd.f32 %v3852, 1.0
    %v3972 = vadd.f32 %v3854, 1.0
    %v3973 = vadd.f32 %v3856, 1.0
    %v3974 = vadd.f32 %v3858, 1.0
    %v3975 = vadd.f32 %v3860, 1.0
    %v3976 = vadd.f32 %v3862, 1.0
    %v3977 = vadd.f32 %v3864, 1.0
    %v3978 = vadd.f32 %v3866, 1.0
    %v3979 = vadd.f32 %v3868, 1.0
    %v3980 = vadd.f32 %v3870, 1.0
    %v3981 = vadd.f32 %v3872, 1.0
    %v3982 = vadd.f32 %v3874, 1.0
    %v3983 = vadd.f32 %v3876, 1.0
    %v3984 = vadd.f32 %v3878, 1.0
    %v3985 = vadd.f32 %v3880, 1.0
    %v3986 = vadd.f32 %v3882, 1.0
    %v3987 = vadd.f32 %v3884, 1.0
    %v3988 = vadd.f32 %v3886, 1.0
    %v3989 = vadd.f32 %v3888, 1.0
    %v3990 = vadd.f32 %v3890, 1.0
    %v3991 = vadd.f32 %v3892, 1.0
    %v3992 = vadd.f32 %v3894, 1.0
    %v3993 = vadd.f32 %v3896, 1.0
    %v3994 = vadd.f32 %v3898, 1.0
    %v3995 = vadd.f32 %v3900, 1.0
    %v3996 = vadd.f32 %v3902, 1.0
    %v3997 = vadd.f32 %v3904, 1.0
    %v3998 = vadd.f32 %v3906, 1.0
    %v3999 = vadd.f32 %v3908, 1.0
    %v4000 = vadd.f32 %v3910, 1.0
    %v4001 = vadd.f32 %v3912, 1.0
    %v4002 = vadd.f32 %v3914, 1.0
    %v4003 = vadd.f32 %v3916, 1.0
    %v4004 = vadd.f32 %v3918, 1.0
    %v4005 = vadd.f32 %v3920, 1.0
    %v4006 = vadd.f32 %v3922, 1.0
    %v4007 = vadd.f32 %v3924, 1.0
    %v4008 = vadd.f32 %v3926, 1.0
    %v4009 = vadd.f32 %v3928, 1.0
    %v4010 = vadd.f32 %v3930, 1.0
    %v4011 = vadd.f32 %v3932, 1.0
    %v4012 = vadd.f32 %v3934, 1.0
    %v4013 = vadd.f32 %v3936, 1.0
    %v4014 = vadd.f32 %v3938, 1.0
    %v4015 = vadd.f32 %v3940, 1.0
    %v4016 = vadd.f32 %v3942, 1.0
    %v4017 = vadd.f32 %v3944, 1.0
    %v4018 = vadd.f32 %v3946, 1.0
    %v4019 = vadd.f32 %v3948, 1.0
    %v4020 = vadd.f32 %v3950, 1.0
    %v4021 = vadd.f32 %v3952, 1.0
    %v4022 = vadd.f32 %v3954, 1.0
    %v4023 = vadd.f32 %v3956, 1.0
    %v4024 = vadd.f32 %v3958, 1.0
    %v4025 = vadd.f32 %v3960, 1.0
    %v4026 = vadd.f32 %v3962, 1.0
    %v4027 = vrcp.pop %v3963
    %v4028 = vmul.f32 %v3963, %v4027
    %v4029 = vsub.f32 1.0, %v4028
    %v4030 = vmul.f32 %v4027, %v4029
    %v4031 = vadd.f32 %v4027, %v4030
    %vm4032 = vweird.f32 %v3963
    %vm4033 = vweird.f32 %v4027
    %vm4034 = vmor %vm4032, %vm4033
    %v4035 = vsel %vm4034, %v4027, %v4031
    %v4036 = vand.u32 2147483647, %v3963
    %vm4037 = vcmp.eq.f32.partialorder %v4036, 8.507059e+37
    %v4038 = vand.u32 %v3963, 2147483648
    %v4039 = vor.u32 1.1754944e-38, %v4038
    %v4040 = vsel %vm4037, %v4039, %v4035
    %v4041 = vmul.f32 1.0, %v4040
    %v4042 = vrcp.pop %v3964
    %v4043 = vmul.f32 %v3964, %v4042
    %v4044 = vsub.f32 1.0, %v4043
    %v4045 = vmul.f32 %v4042, %v4044
    %v4046 = vadd.f32 %v4042, %v4045
    %vm4047 = vweird.f32 %v3964
    %vm4048 = vweird.f32 %v4042
    %vm4049 = vmor %vm4047, %vm4048
    %v4050 = vsel %vm4049, %v4042, %v4046
    %v4051 = vand.u32 2147483647, %v3964
    %vm4052 = vcmp.eq.f32.partialorder %v4051, 8.507059e+37
    %v4053 = vand.u32 %v3964, 2147483648
    %v4054 = vor.u32 1.1754944e-38, %v4053
    %v4055 = vsel %vm4052, %v4054, %v4050
    %v4056 = vmul.f32 1.0, %v4055
    %v4057 = vrcp.pop %v3965
    %v4058 = vmul.f32 %v3965, %v4057
    %v4059 = vsub.f32 1.0, %v4058
    %v4060 = vmul.f32 %v4057, %v4059
    %v4061 = vadd.f32 %v4057, %v4060
    %vm4062 = vweird.f32 %v3965
    %vm4063 = vweird.f32 %v4057
    %vm4064 = vmor %vm4062, %vm4063
    %v4065 = vsel %vm4064, %v4057, %v4061
    %v4066 = vand.u32 2147483647, %v3965
    %vm4067 = vcmp.eq.f32.partialorder %v4066, 8.507059e+37
    %v4068 = vand.u32 %v3965, 2147483648
    %v4069 = vor.u32 1.1754944e-38, %v4068
    %v4070 = vsel %vm4067, %v4069, %v4065
    %v4071 = vmul.f32 1.0, %v4070
    %v4072 = vrcp.pop %v3966
    %v4073 = vmul.f32 %v3966, %v4072
    %v4074 = vsub.f32 1.0, %v4073
    %v4075 = vmul.f32 %v4072, %v4074
    %v4076 = vadd.f32 %v4072, %v4075
    %vm4077 = vweird.f32 %v3966
    %vm4078 = vweird.f32 %v4072
    %vm4079 = vmor %vm4077, %vm4078
    %v4080 = vsel %vm4079, %v4072, %v4076
    %v4081 = vand.u32 2147483647, %v3966
    %vm4082 = vcmp.eq.f32.partialorder %v4081, 8.507059e+37
    %v4083 = vand.u32 %v3966, 2147483648
    %v4084 = vor.u32 1.1754944e-38, %v4083
    %v4085 = vsel %vm4082, %v4084, %v4080
    %v4086 = vmul.f32 1.0, %v4085
    %v4087 = vrcp.pop %v3967
    %v4088 = vmul.f32 %v3967, %v4087
    %v4089 = vsub.f32 1.0, %v4088
    %v4090 = vmul.f32 %v4087, %v4089
    %v4091 = vadd.f32 %v4087, %v4090
    %vm4092 = vweird.f32 %v3967
    %vm4093 = vweird.f32 %v4087
    %vm4094 = vmor %vm4092, %vm4093
    %v4095 = vsel %vm4094, %v4087, %v4091
    %v4096 = vand.u32 2147483647, %v3967
    %vm4097 = vcmp.eq.f32.partialorder %v4096, 8.507059e+37
    %v4098 = vand.u32 %v3967, 2147483648
    %v4099 = vor.u32 1.1754944e-38, %v4098
    %v4100 = vsel %vm4097, %v4099, %v4095
    %v4101 = vmul.f32 1.0, %v4100
    %v4102 = vrcp.pop %v3968
    %v4103 = vmul.f32 %v3968, %v4102
    %v4104 = vsub.f32 1.0, %v4103
    %v4105 = vmul.f32 %v4102, %v4104
    %v4106 = vadd.f32 %v4102, %v4105
    %vm4107 = vweird.f32 %v3968
    %vm4108 = vweird.f32 %v4102
    %vm4109 = vmor %vm4107, %vm4108
    %v4110 = vsel %vm4109, %v4102, %v4106
    %v4111 = vand.u32 2147483647, %v3968
    %vm4112 = vcmp.eq.f32.partialorder %v4111, 8.507059e+37
    %v4113 = vand.u32 %v3968, 2147483648
    %v4114 = vor.u32 1.1754944e-38, %v4113
    %v4115 = vsel %vm4112, %v4114, %v4110
    %v4116 = vmul.f32 1.0, %v4115
    %v4117 = vrcp.pop %v3969
    %v4118 = vmul.f32 %v3969, %v4117
    %v4119 = vsub.f32 1.0, %v4118
    %v4120 = vmul.f32 %v4117, %v4119
    %v4121 = vadd.f32 %v4117, %v4120
    %vm4122 = vweird.f32 %v3969
    %vm4123 = vweird.f32 %v4117
    %vm4124 = vmor %vm4122, %vm4123
    %v4125 = vsel %vm4124, %v4117, %v4121
    %v4126 = vand.u32 2147483647, %v3969
    %vm4127 = vcmp.eq.f32.partialorder %v4126, 8.507059e+37
    %v4128 = vand.u32 %v3969, 2147483648
    %v4129 = vor.u32 1.1754944e-38, %v4128
    %v4130 = vsel %vm4127, %v4129, %v4125
    %v4131 = vmul.f32 1.0, %v4130
    %v4132 = vrcp.pop %v3970
    %v4133 = vmul.f32 %v3970, %v4132
    %v4134 = vsub.f32 1.0, %v4133
    %v4135 = vmul.f32 %v4132, %v4134
    %v4136 = vadd.f32 %v4132, %v4135
    %vm4137 = vweird.f32 %v3970
    %vm4138 = vweird.f32 %v4132
    %vm4139 = vmor %vm4137, %vm4138
    %v4140 = vsel %vm4139, %v4132, %v4136
    %v4141 = vand.u32 2147483647, %v3970
    %vm4142 = vcmp.eq.f32.partialorder %v4141, 8.507059e+37
    %v4143 = vand.u32 %v3970, 2147483648
    %v4144 = vor.u32 1.1754944e-38, %v4143
    %v4145 = vsel %vm4142, %v4144, %v4140
    %v4146 = vmul.f32 1.0, %v4145
    %v4147 = vrcp.pop %v3971
    %v4148 = vmul.f32 %v3971, %v4147
    %v4149 = vsub.f32 1.0, %v4148
    %v4150 = vmul.f32 %v4147, %v4149
    %v4151 = vadd.f32 %v4147, %v4150
    %vm4152 = vweird.f32 %v3971
    %vm4153 = vweird.f32 %v4147
    %vm4154 = vmor %vm4152, %vm4153
    %v4155 = vsel %vm4154, %v4147, %v4151
    %v4156 = vand.u32 2147483647, %v3971
    %vm4157 = vcmp.eq.f32.partialorder %v4156, 8.507059e+37
    %v4158 = vand.u32 %v3971, 2147483648
    %v4159 = vor.u32 1.1754944e-38, %v4158
    %v4160 = vsel %vm4157, %v4159, %v4155
    %v4161 = vmul.f32 1.0, %v4160
    %v4162 = vrcp.pop %v3972
    %v4163 = vmul.f32 %v3972, %v4162
    %v4164 = vsub.f32 1.0, %v4163
    %v4165 = vmul.f32 %v4162, %v4164
    %v4166 = vadd.f32 %v4162, %v4165
    %vm4167 = vweird.f32 %v3972
    %vm4168 = vweird.f32 %v4162
    %vm4169 = vmor %vm4167, %vm4168
    %v4170 = vsel %vm4169, %v4162, %v4166
    %v4171 = vand.u32 2147483647, %v3972
    %vm4172 = vcmp.eq.f32.partialorder %v4171, 8.507059e+37
    %v4173 = vand.u32 %v3972, 2147483648
    %v4174 = vor.u32 1.1754944e-38, %v4173
    %v4175 = vsel %vm4172, %v4174, %v4170
    %v4176 = vmul.f32 1.0, %v4175
    %v4177 = vrcp.pop %v3973
    %v4178 = vmul.f32 %v3973, %v4177
    %v4179 = vsub.f32 1.0, %v4178
    %v4180 = vmul.f32 %v4177, %v4179
    %v4181 = vadd.f32 %v4177, %v4180
    %vm4182 = vweird.f32 %v3973
    %vm4183 = vweird.f32 %v4177
    %vm4184 = vmor %vm4182, %vm4183
    %v4185 = vsel %vm4184, %v4177, %v4181
    %v4186 = vand.u32 2147483647, %v3973
    %vm4187 = vcmp.eq.f32.partialorder %v4186, 8.507059e+37
    %v4188 = vand.u32 %v3973, 2147483648
    %v4189 = vor.u32 1.1754944e-38, %v4188
    %v4190 = vsel %vm4187, %v4189, %v4185
    %v4191 = vmul.f32 1.0, %v4190
    %v4192 = vrcp.pop %v3974
    %v4193 = vmul.f32 %v3974, %v4192
    %v4194 = vsub.f32 1.0, %v4193
    %v4195 = vmul.f32 %v4192, %v4194
    %v4196 = vadd.f32 %v4192, %v4195
    %vm4197 = vweird.f32 %v3974
    %vm4198 = vweird.f32 %v4192
    %vm4199 = vmor %vm4197, %vm4198
    %v4200 = vsel %vm4199, %v4192, %v4196
    %v4201 = vand.u32 2147483647, %v3974
    %vm4202 = vcmp.eq.f32.partialorder %v4201, 8.507059e+37
    %v4203 = vand.u32 %v3974, 2147483648
    %v4204 = vor.u32 1.1754944e-38, %v4203
    %v4205 = vsel %vm4202, %v4204, %v4200
    %v4206 = vmul.f32 1.0, %v4205
    %v4207 = vrcp.pop %v3975
    %v4208 = vmul.f32 %v3975, %v4207
    %v4209 = vsub.f32 1.0, %v4208
    %v4210 = vmul.f32 %v4207, %v4209
    %v4211 = vadd.f32 %v4207, %v4210
    %vm4212 = vweird.f32 %v3975
    %vm4213 = vweird.f32 %v4207
    %vm4214 = vmor %vm4212, %vm4213
    %v4215 = vsel %vm4214, %v4207, %v4211
    %v4216 = vand.u32 2147483647, %v3975
    %vm4217 = vcmp.eq.f32.partialorder %v4216, 8.507059e+37
    %v4218 = vand.u32 %v3975, 2147483648
    %v4219 = vor.u32 1.1754944e-38, %v4218
    %v4220 = vsel %vm4217, %v4219, %v4215
    %v4221 = vmul.f32 1.0, %v4220
    %v4222 = vrcp.pop %v3976
    %v4223 = vmul.f32 %v3976, %v4222
    %v4224 = vsub.f32 1.0, %v4223
    %v4225 = vmul.f32 %v4222, %v4224
    %v4226 = vadd.f32 %v4222, %v4225
    %vm4227 = vweird.f32 %v3976
    %vm4228 = vweird.f32 %v4222
    %vm4229 = vmor %vm4227, %vm4228
    %v4230 = vsel %vm4229, %v4222, %v4226
    %v4231 = vand.u32 2147483647, %v3976
    %vm4232 = vcmp.eq.f32.partialorder %v4231, 8.507059e+37
    %v4233 = vand.u32 %v3976, 2147483648
    %v4234 = vor.u32 1.1754944e-38, %v4233
    %v4235 = vsel %vm4232, %v4234, %v4230
    %v4236 = vmul.f32 1.0, %v4235
    %v4237 = vrcp.pop %v3977
    %v4238 = vmul.f32 %v3977, %v4237
    %v4239 = vsub.f32 1.0, %v4238
    %v4240 = vmul.f32 %v4237, %v4239
    %v4241 = vadd.f32 %v4237, %v4240
    %vm4242 = vweird.f32 %v3977
    %vm4243 = vweird.f32 %v4237
    %vm4244 = vmor %vm4242, %vm4243
    %v4245 = vsel %vm4244, %v4237, %v4241
    %v4246 = vand.u32 2147483647, %v3977
    %vm4247 = vcmp.eq.f32.partialorder %v4246, 8.507059e+37
    %v4248 = vand.u32 %v3977, 2147483648
    %v4249 = vor.u32 1.1754944e-38, %v4248
    %v4250 = vsel %vm4247, %v4249, %v4245
    %v4251 = vmul.f32 1.0, %v4250
    %v4252 = vrcp.pop %v3978
    %v4253 = vmul.f32 %v3978, %v4252
    %v4254 = vsub.f32 1.0, %v4253
    %v4255 = vmul.f32 %v4252, %v4254
    %v4256 = vadd.f32 %v4252, %v4255
    %vm4257 = vweird.f32 %v3978
    %vm4258 = vweird.f32 %v4252
    %vm4259 = vmor %vm4257, %vm4258
    %v4260 = vsel %vm4259, %v4252, %v4256
    %v4261 = vand.u32 2147483647, %v3978
    %vm4262 = vcmp.eq.f32.partialorder %v4261, 8.507059e+37
    %v4263 = vand.u32 %v3978, 2147483648
    %v4264 = vor.u32 1.1754944e-38, %v4263
    %v4265 = vsel %vm4262, %v4264, %v4260
    %v4266 = vmul.f32 1.0, %v4265
    %v4267 = vrcp.pop %v3979
    %v4268 = vmul.f32 %v3979, %v4267
    %v4269 = vsub.f32 1.0, %v4268
    %v4270 = vmul.f32 %v4267, %v4269
    %v4271 = vadd.f32 %v4267, %v4270
    %vm4272 = vweird.f32 %v3979
    %vm4273 = vweird.f32 %v4267
    %vm4274 = vmor %vm4272, %vm4273
    %v4275 = vsel %vm4274, %v4267, %v4271
    %v4276 = vand.u32 2147483647, %v3979
    %vm4277 = vcmp.eq.f32.partialorder %v4276, 8.507059e+37
    %v4278 = vand.u32 %v3979, 2147483648
    %v4279 = vor.u32 1.1754944e-38, %v4278
    %v4280 = vsel %vm4277, %v4279, %v4275
    %v4281 = vmul.f32 1.0, %v4280
    %v4282 = vrcp.pop %v3980
    %v4283 = vmul.f32 %v3980, %v4282
    %v4284 = vsub.f32 1.0, %v4283
    %v4285 = vmul.f32 %v4282, %v4284
    %v4286 = vadd.f32 %v4282, %v4285
    %vm4287 = vweird.f32 %v3980
    %vm4288 = vweird.f32 %v4282
    %vm4289 = vmor %vm4287, %vm4288
    %v4290 = vsel %vm4289, %v4282, %v4286
    %v4291 = vand.u32 2147483647, %v3980
    %vm4292 = vcmp.eq.f32.partialorder %v4291, 8.507059e+37
    %v4293 = vand.u32 %v3980, 2147483648
    %v4294 = vor.u32 1.1754944e-38, %v4293
    %v4295 = vsel %vm4292, %v4294, %v4290
    %v4296 = vmul.f32 1.0, %v4295
    %v4297 = vrcp.pop %v3981
    %v4298 = vmul.f32 %v3981, %v4297
    %v4299 = vsub.f32 1.0, %v4298
    %v4300 = vmul.f32 %v4297, %v4299
    %v4301 = vadd.f32 %v4297, %v4300
    %vm4302 = vweird.f32 %v3981
    %vm4303 = vweird.f32 %v4297
    %vm4304 = vmor %vm4302, %vm4303
    %v4305 = vsel %vm4304, %v4297, %v4301
    %v4306 = vand.u32 2147483647, %v3981
    %vm4307 = vcmp.eq.f32.partialorder %v4306, 8.507059e+37
    %v4308 = vand.u32 %v3981, 2147483648
    %v4309 = vor.u32 1.1754944e-38, %v4308
    %v4310 = vsel %vm4307, %v4309, %v4305
    %v4311 = vmul.f32 1.0, %v4310
    %v4312 = vrcp.pop %v3982
    %v4313 = vmul.f32 %v3982, %v4312
    %v4314 = vsub.f32 1.0, %v4313
    %v4315 = vmul.f32 %v4312, %v4314
    %v4316 = vadd.f32 %v4312, %v4315
    %vm4317 = vweird.f32 %v3982
    %vm4318 = vweird.f32 %v4312
    %vm4319 = vmor %vm4317, %vm4318
    %v4320 = vsel %vm4319, %v4312, %v4316
    %v4321 = vand.u32 2147483647, %v3982
    %vm4322 = vcmp.eq.f32.partialorder %v4321, 8.507059e+37
    %v4323 = vand.u32 %v3982, 2147483648
    %v4324 = vor.u32 1.1754944e-38, %v4323
    %v4325 = vsel %vm4322, %v4324, %v4320
    %v4326 = vmul.f32 1.0, %v4325
    %v4327 = vrcp.pop %v3983
    %v4328 = vmul.f32 %v3983, %v4327
    %v4329 = vsub.f32 1.0, %v4328
    %v4330 = vmul.f32 %v4327, %v4329
    %v4331 = vadd.f32 %v4327, %v4330
    %vm4332 = vweird.f32 %v3983
    %vm4333 = vweird.f32 %v4327
    %vm4334 = vmor %vm4332, %vm4333
    %v4335 = vsel %vm4334, %v4327, %v4331
    %v4336 = vand.u32 2147483647, %v3983
    %vm4337 = vcmp.eq.f32.partialorder %v4336, 8.507059e+37
    %v4338 = vand.u32 %v3983, 2147483648
    %v4339 = vor.u32 1.1754944e-38, %v4338
    %v4340 = vsel %vm4337, %v4339, %v4335
    %v4341 = vmul.f32 1.0, %v4340
    %v4342 = vrcp.pop %v3984
    %v4343 = vmul.f32 %v3984, %v4342
    %v4344 = vsub.f32 1.0, %v4343
    %v4345 = vmul.f32 %v4342, %v4344
    %v4346 = vadd.f32 %v4342, %v4345
    %vm4347 = vweird.f32 %v3984
    %vm4348 = vweird.f32 %v4342
    %vm4349 = vmor %vm4347, %vm4348
    %v4350 = vsel %vm4349, %v4342, %v4346
    %v4351 = vand.u32 2147483647, %v3984
    %vm4352 = vcmp.eq.f32.partialorder %v4351, 8.507059e+37
    %v4353 = vand.u32 %v3984, 2147483648
    %v4354 = vor.u32 1.1754944e-38, %v4353
    %v4355 = vsel %vm4352, %v4354, %v4350
    %v4356 = vmul.f32 1.0, %v4355
    %v4357 = vrcp.pop %v3985
    %v4358 = vmul.f32 %v3985, %v4357
    %v4359 = vsub.f32 1.0, %v4358
    %v4360 = vmul.f32 %v4357, %v4359
    %v4361 = vadd.f32 %v4357, %v4360
    %vm4362 = vweird.f32 %v3985
    %vm4363 = vweird.f32 %v4357
    %vm4364 = vmor %vm4362, %vm4363
    %v4365 = vsel %vm4364, %v4357, %v4361
    %v4366 = vand.u32 2147483647, %v3985
    %vm4367 = vcmp.eq.f32.partialorder %v4366, 8.507059e+37
    %v4368 = vand.u32 %v3985, 2147483648
    %v4369 = vor.u32 1.1754944e-38, %v4368
    %v4370 = vsel %vm4367, %v4369, %v4365
    %v4371 = vmul.f32 1.0, %v4370
    %v4372 = vrcp.pop %v3986
    %v4373 = vmul.f32 %v3986, %v4372
    %v4374 = vsub.f32 1.0, %v4373
    %v4375 = vmul.f32 %v4372, %v4374
    %v4376 = vadd.f32 %v4372, %v4375
    %vm4377 = vweird.f32 %v3986
    %vm4378 = vweird.f32 %v4372
    %vm4379 = vmor %vm4377, %vm4378
    %v4380 = vsel %vm4379, %v4372, %v4376
    %v4381 = vand.u32 2147483647, %v3986
    %vm4382 = vcmp.eq.f32.partialorder %v4381, 8.507059e+37
    %v4383 = vand.u32 %v3986, 2147483648
    %v4384 = vor.u32 1.1754944e-38, %v4383
    %v4385 = vsel %vm4382, %v4384, %v4380
    %v4386 = vmul.f32 1.0, %v4385
    %v4387 = vrcp.pop %v3987
    %v4388 = vmul.f32 %v3987, %v4387
    %v4389 = vsub.f32 1.0, %v4388
    %v4390 = vmul.f32 %v4387, %v4389
    %v4391 = vadd.f32 %v4387, %v4390
    %vm4392 = vweird.f32 %v3987
    %vm4393 = vweird.f32 %v4387
    %vm4394 = vmor %vm4392, %vm4393
    %v4395 = vsel %vm4394, %v4387, %v4391
    %v4396 = vand.u32 2147483647, %v3987
    %vm4397 = vcmp.eq.f32.partialorder %v4396, 8.507059e+37
    %v4398 = vand.u32 %v3987, 2147483648
    %v4399 = vor.u32 1.1754944e-38, %v4398
    %v4400 = vsel %vm4397, %v4399, %v4395
    %v4401 = vmul.f32 1.0, %v4400
    %v4402 = vrcp.pop %v3988
    %v4403 = vmul.f32 %v3988, %v4402
    %v4404 = vsub.f32 1.0, %v4403
    %v4405 = vmul.f32 %v4402, %v4404
    %v4406 = vadd.f32 %v4402, %v4405
    %vm4407 = vweird.f32 %v3988
    %vm4408 = vweird.f32 %v4402
    %vm4409 = vmor %vm4407, %vm4408
    %v4410 = vsel %vm4409, %v4402, %v4406
    %v4411 = vand.u32 2147483647, %v3988
    %vm4412 = vcmp.eq.f32.partialorder %v4411, 8.507059e+37
    %v4413 = vand.u32 %v3988, 2147483648
    %v4414 = vor.u32 1.1754944e-38, %v4413
    %v4415 = vsel %vm4412, %v4414, %v4410
    %v4416 = vmul.f32 1.0, %v4415
    %v4417 = vrcp.pop %v3989
    %v4418 = vmul.f32 %v3989, %v4417
    %v4419 = vsub.f32 1.0, %v4418
    %v4420 = vmul.f32 %v4417, %v4419
    %v4421 = vadd.f32 %v4417, %v4420
    %vm4422 = vweird.f32 %v3989
    %vm4423 = vweird.f32 %v4417
    %vm4424 = vmor %vm4422, %vm4423
    %v4425 = vsel %vm4424, %v4417, %v4421
    %v4426 = vand.u32 2147483647, %v3989
    %vm4427 = vcmp.eq.f32.partialorder %v4426, 8.507059e+37
    %v4428 = vand.u32 %v3989, 2147483648
    %v4429 = vor.u32 1.1754944e-38, %v4428
    %v4430 = vsel %vm4427, %v4429, %v4425
    %v4431 = vmul.f32 1.0, %v4430
    %v4432 = vrcp.pop %v3990
    %v4433 = vmul.f32 %v3990, %v4432
    %v4434 = vsub.f32 1.0, %v4433
    %v4435 = vmul.f32 %v4432, %v4434
    %v4436 = vadd.f32 %v4432, %v4435
    %vm4437 = vweird.f32 %v3990
    %vm4438 = vweird.f32 %v4432
    %vm4439 = vmor %vm4437, %vm4438
    %v4440 = vsel %vm4439, %v4432, %v4436
    %v4441 = vand.u32 2147483647, %v3990
    %vm4442 = vcmp.eq.f32.partialorder %v4441, 8.507059e+37
    %v4443 = vand.u32 %v3990, 2147483648
    %v4444 = vor.u32 1.1754944e-38, %v4443
    %v4445 = vsel %vm4442, %v4444, %v4440
    %v4446 = vmul.f32 1.0, %v4445
    %v4447 = vrcp.pop %v3991
    %v4448 = vmul.f32 %v3991, %v4447
    %v4449 = vsub.f32 1.0, %v4448
    %v4450 = vmul.f32 %v4447, %v4449
    %v4451 = vadd.f32 %v4447, %v4450
    %vm4452 = vweird.f32 %v3991
    %vm4453 = vweird.f32 %v4447
    %vm4454 = vmor %vm4452, %vm4453
    %v4455 = vsel %vm4454, %v4447, %v4451
    %v4456 = vand.u32 2147483647, %v3991
    %vm4457 = vcmp.eq.f32.partialorder %v4456, 8.507059e+37
    %v4458 = vand.u32 %v3991, 2147483648
    %v4459 = vor.u32 1.1754944e-38, %v4458
    %v4460 = vsel %vm4457, %v4459, %v4455
    %v4461 = vmul.f32 1.0, %v4460
    %v4462 = vrcp.pop %v3992
    %v4463 = vmul.f32 %v3992, %v4462
    %v4464 = vsub.f32 1.0, %v4463
    %v4465 = vmul.f32 %v4462, %v4464
    %v4466 = vadd.f32 %v4462, %v4465
    %vm4467 = vweird.f32 %v3992
    %vm4468 = vweird.f32 %v4462
    %vm4469 = vmor %vm4467, %vm4468
    %v4470 = vsel %vm4469, %v4462, %v4466
    %v4471 = vand.u32 2147483647, %v3992
    %vm4472 = vcmp.eq.f32.partialorder %v4471, 8.507059e+37
    %v4473 = vand.u32 %v3992, 2147483648
    %v4474 = vor.u32 1.1754944e-38, %v4473
    %v4475 = vsel %vm4472, %v4474, %v4470
    %v4476 = vmul.f32 1.0, %v4475
    %v4477 = vrcp.pop %v3993
    %v4478 = vmul.f32 %v3993, %v4477
    %v4479 = vsub.f32 1.0, %v4478
    %v4480 = vmul.f32 %v4477, %v4479
    %v4481 = vadd.f32 %v4477, %v4480
    %vm4482 = vweird.f32 %v3993
    %vm4483 = vweird.f32 %v4477
    %vm4484 = vmor %vm4482, %vm4483
    %v4485 = vsel %vm4484, %v4477, %v4481
    %v4486 = vand.u32 2147483647, %v3993
    %vm4487 = vcmp.eq.f32.partialorder %v4486, 8.507059e+37
    %v4488 = vand.u32 %v3993, 2147483648
    %v4489 = vor.u32 1.1754944e-38, %v4488
    %v4490 = vsel %vm4487, %v4489, %v4485
    %v4491 = vmul.f32 1.0, %v4490
    %v4492 = vrcp.pop %v3994
    %v4493 = vmul.f32 %v3994, %v4492
    %v4494 = vsub.f32 1.0, %v4493
    %v4495 = vmul.f32 %v4492, %v4494
    %v4496 = vadd.f32 %v4492, %v4495
    %vm4497 = vweird.f32 %v3994
    %vm4498 = vweird.f32 %v4492
    %vm4499 = vmor %vm4497, %vm4498
    %v4500 = vsel %vm4499, %v4492, %v4496
    %v4501 = vand.u32 2147483647, %v3994
    %vm4502 = vcmp.eq.f32.partialorder %v4501, 8.507059e+37
    %v4503 = vand.u32 %v3994, 2147483648
    %v4504 = vor.u32 1.1754944e-38, %v4503
    %v4505 = vsel %vm4502, %v4504, %v4500
    %v4506 = vmul.f32 1.0, %v4505
    %v4507 = vrcp.pop %v3995
    %v4508 = vmul.f32 %v3995, %v4507
    %v4509 = vsub.f32 1.0, %v4508
    %v4510 = vmul.f32 %v4507, %v4509
    %v4511 = vadd.f32 %v4507, %v4510
    %vm4512 = vweird.f32 %v3995
    %vm4513 = vweird.f32 %v4507
    %vm4514 = vmor %vm4512, %vm4513
    %v4515 = vsel %vm4514, %v4507, %v4511
    %v4516 = vand.u32 2147483647, %v3995
    %vm4517 = vcmp.eq.f32.partialorder %v4516, 8.507059e+37
    %v4518 = vand.u32 %v3995, 2147483648
    %v4519 = vor.u32 1.1754944e-38, %v4518
    %v4520 = vsel %vm4517, %v4519, %v4515
    %v4521 = vmul.f32 1.0, %v4520
    %v4522 = vrcp.pop %v3996
    %v4523 = vmul.f32 %v3996, %v4522
    %v4524 = vsub.f32 1.0, %v4523
    %v4525 = vmul.f32 %v4522, %v4524
    %v4526 = vadd.f32 %v4522, %v4525
    %vm4527 = vweird.f32 %v3996
    %vm4528 = vweird.f32 %v4522
    %vm4529 = vmor %vm4527, %vm4528
    %v4530 = vsel %vm4529, %v4522, %v4526
    %v4531 = vand.u32 2147483647, %v3996
    %vm4532 = vcmp.eq.f32.partialorder %v4531, 8.507059e+37
    %v4533 = vand.u32 %v3996, 2147483648
    %v4534 = vor.u32 1.1754944e-38, %v4533
    %v4535 = vsel %vm4532, %v4534, %v4530
    %v4536 = vmul.f32 1.0, %v4535
    %v4537 = vrcp.pop %v3997
    %v4538 = vmul.f32 %v3997, %v4537
    %v4539 = vsub.f32 1.0, %v4538
    %v4540 = vmul.f32 %v4537, %v4539
    %v4541 = vadd.f32 %v4537, %v4540
    %vm4542 = vweird.f32 %v3997
    %vm4543 = vweird.f32 %v4537
    %vm4544 = vmor %vm4542, %vm4543
    %v4545 = vsel %vm4544, %v4537, %v4541
    %v4546 = vand.u32 2147483647, %v3997
    %vm4547 = vcmp.eq.f32.partialorder %v4546, 8.507059e+37
    %v4548 = vand.u32 %v3997, 2147483648
    %v4549 = vor.u32 1.1754944e-38, %v4548
    %v4550 = vsel %vm4547, %v4549, %v4545
    %v4551 = vmul.f32 1.0, %v4550
    %v4552 = vrcp.pop %v3998
    %v4553 = vmul.f32 %v3998, %v4552
    %v4554 = vsub.f32 1.0, %v4553
    %v4555 = vmul.f32 %v4552, %v4554
    %v4556 = vadd.f32 %v4552, %v4555
    %vm4557 = vweird.f32 %v3998
    %vm4558 = vweird.f32 %v4552
    %vm4559 = vmor %vm4557, %vm4558
    %v4560 = vsel %vm4559, %v4552, %v4556
    %v4561 = vand.u32 2147483647, %v3998
    %vm4562 = vcmp.eq.f32.partialorder %v4561, 8.507059e+37
    %v4563 = vand.u32 %v3998, 2147483648
    %v4564 = vor.u32 1.1754944e-38, %v4563
    %v4565 = vsel %vm4562, %v4564, %v4560
    %v4566 = vmul.f32 1.0, %v4565
    %v4567 = vrcp.pop %v3999
    %v4568 = vmul.f32 %v3999, %v4567
    %v4569 = vsub.f32 1.0, %v4568
    %v4570 = vmul.f32 %v4567, %v4569
    %v4571 = vadd.f32 %v4567, %v4570
    %vm4572 = vweird.f32 %v3999
    %vm4573 = vweird.f32 %v4567
    %vm4574 = vmor %vm4572, %vm4573
    %v4575 = vsel %vm4574, %v4567, %v4571
    %v4576 = vand.u32 2147483647, %v3999
    %vm4577 = vcmp.eq.f32.partialorder %v4576, 8.507059e+37
    %v4578 = vand.u32 %v3999, 2147483648
    %v4579 = vor.u32 1.1754944e-38, %v4578
    %v4580 = vsel %vm4577, %v4579, %v4575
    %v4581 = vmul.f32 1.0, %v4580
    %v4582 = vrcp.pop %v4000
    %v4583 = vmul.f32 %v4000, %v4582
    %v4584 = vsub.f32 1.0, %v4583
    %v4585 = vmul.f32 %v4582, %v4584
    %v4586 = vadd.f32 %v4582, %v4585
    %vm4587 = vweird.f32 %v4000
    %vm4588 = vweird.f32 %v4582
    %vm4589 = vmor %vm4587, %vm4588
    %v4590 = vsel %vm4589, %v4582, %v4586
    %v4591 = vand.u32 2147483647, %v4000
    %vm4592 = vcmp.eq.f32.partialorder %v4591, 8.507059e+37
    %v4593 = vand.u32 %v4000, 2147483648
    %v4594 = vor.u32 1.1754944e-38, %v4593
    %v4595 = vsel %vm4592, %v4594, %v4590
    %v4596 = vmul.f32 1.0, %v4595
    %v4597 = vrcp.pop %v4001
    %v4598 = vmul.f32 %v4001, %v4597
    %v4599 = vsub.f32 1.0, %v4598
    %v4600 = vmul.f32 %v4597, %v4599
    %v4601 = vadd.f32 %v4597, %v4600
    %vm4602 = vweird.f32 %v4001
    %vm4603 = vweird.f32 %v4597
    %vm4604 = vmor %vm4602, %vm4603
    %v4605 = vsel %vm4604, %v4597, %v4601
    %v4606 = vand.u32 2147483647, %v4001
    %vm4607 = vcmp.eq.f32.partialorder %v4606, 8.507059e+37
    %v4608 = vand.u32 %v4001, 2147483648
    %v4609 = vor.u32 1.1754944e-38, %v4608
    %v4610 = vsel %vm4607, %v4609, %v4605
    %v4611 = vmul.f32 1.0, %v4610
    %v4612 = vrcp.pop %v4002
    %v4613 = vmul.f32 %v4002, %v4612
    %v4614 = vsub.f32 1.0, %v4613
    %v4615 = vmul.f32 %v4612, %v4614
    %v4616 = vadd.f32 %v4612, %v4615
    %vm4617 = vweird.f32 %v4002
    %vm4618 = vweird.f32 %v4612
    %vm4619 = vmor %vm4617, %vm4618
    %v4620 = vsel %vm4619, %v4612, %v4616
    %v4621 = vand.u32 2147483647, %v4002
    %vm4622 = vcmp.eq.f32.partialorder %v4621, 8.507059e+37
    %v4623 = vand.u32 %v4002, 2147483648
    %v4624 = vor.u32 1.1754944e-38, %v4623
    %v4625 = vsel %vm4622, %v4624, %v4620
    %v4626 = vmul.f32 1.0, %v4625
    %v4627 = vrcp.pop %v4003
    %v4628 = vmul.f32 %v4003, %v4627
    %v4629 = vsub.f32 1.0, %v4628
    %v4630 = vmul.f32 %v4627, %v4629
    %v4631 = vadd.f32 %v4627, %v4630
    %vm4632 = vweird.f32 %v4003
    %vm4633 = vweird.f32 %v4627
    %vm4634 = vmor %vm4632, %vm4633
    %v4635 = vsel %vm4634, %v4627, %v4631
    %v4636 = vand.u32 2147483647, %v4003
    %vm4637 = vcmp.eq.f32.partialorder %v4636, 8.507059e+37
    %v4638 = vand.u32 %v4003, 2147483648
    %v4639 = vor.u32 1.1754944e-38, %v4638
    %v4640 = vsel %vm4637, %v4639, %v4635
    %v4641 = vmul.f32 1.0, %v4640
    %v4642 = vrcp.pop %v4004
    %v4643 = vmul.f32 %v4004, %v4642
    %v4644 = vsub.f32 1.0, %v4643
    %v4645 = vmul.f32 %v4642, %v4644
    %v4646 = vadd.f32 %v4642, %v4645
    %vm4647 = vweird.f32 %v4004
    %vm4648 = vweird.f32 %v4642
    %vm4649 = vmor %vm4647, %vm4648
    %v4650 = vsel %vm4649, %v4642, %v4646
    %v4651 = vand.u32 2147483647, %v4004
    %vm4652 = vcmp.eq.f32.partialorder %v4651, 8.507059e+37
    %v4653 = vand.u32 %v4004, 2147483648
    %v4654 = vor.u32 1.1754944e-38, %v4653
    %v4655 = vsel %vm4652, %v4654, %v4650
    %v4656 = vmul.f32 1.0, %v4655
    %v4657 = vrcp.pop %v4005
    %v4658 = vmul.f32 %v4005, %v4657
    %v4659 = vsub.f32 1.0, %v4658
    %v4660 = vmul.f32 %v4657, %v4659
    %v4661 = vadd.f32 %v4657, %v4660
    %vm4662 = vweird.f32 %v4005
    %vm4663 = vweird.f32 %v4657
    %vm4664 = vmor %vm4662, %vm4663
    %v4665 = vsel %vm4664, %v4657, %v4661
    %v4666 = vand.u32 2147483647, %v4005
    %vm4667 = vcmp.eq.f32.partialorder %v4666, 8.507059e+37
    %v4668 = vand.u32 %v4005, 2147483648
    %v4669 = vor.u32 1.1754944e-38, %v4668
    %v4670 = vsel %vm4667, %v4669, %v4665
    %v4671 = vmul.f32 1.0, %v4670
    %v4672 = vrcp.pop %v4006
    %v4673 = vmul.f32 %v4006, %v4672
    %v4674 = vsub.f32 1.0, %v4673
    %v4675 = vmul.f32 %v4672, %v4674
    %v4676 = vadd.f32 %v4672, %v4675
    %vm4677 = vweird.f32 %v4006
    %vm4678 = vweird.f32 %v4672
    %vm4679 = vmor %vm4677, %vm4678
    %v4680 = vsel %vm4679, %v4672, %v4676
    %v4681 = vand.u32 2147483647, %v4006
    %vm4682 = vcmp.eq.f32.partialorder %v4681, 8.507059e+37
    %v4683 = vand.u32 %v4006, 2147483648
    %v4684 = vor.u32 1.1754944e-38, %v4683
    %v4685 = vsel %vm4682, %v4684, %v4680
    %v4686 = vmul.f32 1.0, %v4685
    %v4687 = vrcp.pop %v4007
    %v4688 = vmul.f32 %v4007, %v4687
    %v4689 = vsub.f32 1.0, %v4688
    %v4690 = vmul.f32 %v4687, %v4689
    %v4691 = vadd.f32 %v4687, %v4690
    %vm4692 = vweird.f32 %v4007
    %vm4693 = vweird.f32 %v4687
    %vm4694 = vmor %vm4692, %vm4693
    %v4695 = vsel %vm4694, %v4687, %v4691
    %v4696 = vand.u32 2147483647, %v4007
    %vm4697 = vcmp.eq.f32.partialorder %v4696, 8.507059e+37
    %v4698 = vand.u32 %v4007, 2147483648
    %v4699 = vor.u32 1.1754944e-38, %v4698
    %v4700 = vsel %vm4697, %v4699, %v4695
    %v4701 = vmul.f32 1.0, %v4700
    %v4702 = vrcp.pop %v4008
    %v4703 = vmul.f32 %v4008, %v4702
    %v4704 = vsub.f32 1.0, %v4703
    %v4705 = vmul.f32 %v4702, %v4704
    %v4706 = vadd.f32 %v4702, %v4705
    %vm4707 = vweird.f32 %v4008
    %vm4708 = vweird.f32 %v4702
    %vm4709 = vmor %vm4707, %vm4708
    %v4710 = vsel %vm4709, %v4702, %v4706
    %v4711 = vand.u32 2147483647, %v4008
    %vm4712 = vcmp.eq.f32.partialorder %v4711, 8.507059e+37
    %v4713 = vand.u32 %v4008, 2147483648
    %v4714 = vor.u32 1.1754944e-38, %v4713
    %v4715 = vsel %vm4712, %v4714, %v4710
    %v4716 = vmul.f32 1.0, %v4715
    %v4717 = vrcp.pop %v4009
    %v4718 = vmul.f32 %v4009, %v4717
    %v4719 = vsub.f32 1.0, %v4718
    %v4720 = vmul.f32 %v4717, %v4719
    %v4721 = vadd.f32 %v4717, %v4720
    %vm4722 = vweird.f32 %v4009
    %vm4723 = vweird.f32 %v4717
    %vm4724 = vmor %vm4722, %vm4723
    %v4725 = vsel %vm4724, %v4717, %v4721
    %v4726 = vand.u32 2147483647, %v4009
    %vm4727 = vcmp.eq.f32.partialorder %v4726, 8.507059e+37
    %v4728 = vand.u32 %v4009, 2147483648
    %v4729 = vor.u32 1.1754944e-38, %v4728
    %v4730 = vsel %vm4727, %v4729, %v4725
    %v4731 = vmul.f32 1.0, %v4730
    %v4732 = vrcp.pop %v4010
    %v4733 = vmul.f32 %v4010, %v4732
    %v4734 = vsub.f32 1.0, %v4733
    %v4735 = vmul.f32 %v4732, %v4734
    %v4736 = vadd.f32 %v4732, %v4735
    %vm4737 = vweird.f32 %v4010
    %vm4738 = vweird.f32 %v4732
    %vm4739 = vmor %vm4737, %vm4738
    %v4740 = vsel %vm4739, %v4732, %v4736
    %v4741 = vand.u32 2147483647, %v4010
    %vm4742 = vcmp.eq.f32.partialorder %v4741, 8.507059e+37
    %v4743 = vand.u32 %v4010, 2147483648
    %v4744 = vor.u32 1.1754944e-38, %v4743
    %v4745 = vsel %vm4742, %v4744, %v4740
    %v4746 = vmul.f32 1.0, %v4745
    %v4747 = vrcp.pop %v4011
    %v4748 = vmul.f32 %v4011, %v4747
    %v4749 = vsub.f32 1.0, %v4748
    %v4750 = vmul.f32 %v4747, %v4749
    %v4751 = vadd.f32 %v4747, %v4750
    %vm4752 = vweird.f32 %v4011
    %vm4753 = vweird.f32 %v4747
    %vm4754 = vmor %vm4752, %vm4753
    %v4755 = vsel %vm4754, %v4747, %v4751
    %v4756 = vand.u32 2147483647, %v4011
    %vm4757 = vcmp.eq.f32.partialorder %v4756, 8.507059e+37
    %v4758 = vand.u32 %v4011, 2147483648
    %v4759 = vor.u32 1.1754944e-38, %v4758
    %v4760 = vsel %vm4757, %v4759, %v4755
    %v4761 = vmul.f32 1.0, %v4760
    %v4762 = vrcp.pop %v4012
    %v4763 = vmul.f32 %v4012, %v4762
    %v4764 = vsub.f32 1.0, %v4763
    %v4765 = vmul.f32 %v4762, %v4764
    %v4766 = vadd.f32 %v4762, %v4765
    %vm4767 = vweird.f32 %v4012
    %vm4768 = vweird.f32 %v4762
    %vm4769 = vmor %vm4767, %vm4768
    %v4770 = vsel %vm4769, %v4762, %v4766
    %v4771 = vand.u32 2147483647, %v4012
    %vm4772 = vcmp.eq.f32.partialorder %v4771, 8.507059e+37
    %v4773 = vand.u32 %v4012, 2147483648
    %v4774 = vor.u32 1.1754944e-38, %v4773
    %v4775 = vsel %vm4772, %v4774, %v4770
    %v4776 = vmul.f32 1.0, %v4775
    %v4777 = vrcp.pop %v4013
    %v4778 = vmul.f32 %v4013, %v4777
    %v4779 = vsub.f32 1.0, %v4778
    %v4780 = vmul.f32 %v4777, %v4779
    %v4781 = vadd.f32 %v4777, %v4780
    %vm4782 = vweird.f32 %v4013
    %vm4783 = vweird.f32 %v4777
    %vm4784 = vmor %vm4782, %vm4783
    %v4785 = vsel %vm4784, %v4777, %v4781
    %v4786 = vand.u32 2147483647, %v4013
    %vm4787 = vcmp.eq.f32.partialorder %v4786, 8.507059e+37
    %v4788 = vand.u32 %v4013, 2147483648
    %v4789 = vor.u32 1.1754944e-38, %v4788
    %v4790 = vsel %vm4787, %v4789, %v4785
    %v4791 = vmul.f32 1.0, %v4790
    %v4792 = vrcp.pop %v4014
    %v4793 = vmul.f32 %v4014, %v4792
    %v4794 = vsub.f32 1.0, %v4793
    %v4795 = vmul.f32 %v4792, %v4794
    %v4796 = vadd.f32 %v4792, %v4795
    %vm4797 = vweird.f32 %v4014
    %vm4798 = vweird.f32 %v4792
    %vm4799 = vmor %vm4797, %vm4798
    %v4800 = vsel %vm4799, %v4792, %v4796
    %v4801 = vand.u32 2147483647, %v4014
    %vm4802 = vcmp.eq.f32.partialorder %v4801, 8.507059e+37
    %v4803 = vand.u32 %v4014, 2147483648
    %v4804 = vor.u32 1.1754944e-38, %v4803
    %v4805 = vsel %vm4802, %v4804, %v4800
    %v4806 = vmul.f32 1.0, %v4805
    %v4807 = vrcp.pop %v4015
    %v4808 = vmul.f32 %v4015, %v4807
    %v4809 = vsub.f32 1.0, %v4808
    %v4810 = vmul.f32 %v4807, %v4809
    %v4811 = vadd.f32 %v4807, %v4810
    %vm4812 = vweird.f32 %v4015
    %vm4813 = vweird.f32 %v4807
    %vm4814 = vmor %vm4812, %vm4813
    %v4815 = vsel %vm4814, %v4807, %v4811
    %v4816 = vand.u32 2147483647, %v4015
    %vm4817 = vcmp.eq.f32.partialorder %v4816, 8.507059e+37
    %v4818 = vand.u32 %v4015, 2147483648
    %v4819 = vor.u32 1.1754944e-38, %v4818
    %v4820 = vsel %vm4817, %v4819, %v4815
    %v4821 = vmul.f32 1.0, %v4820
    %v4822 = vrcp.pop %v4016
    %v4823 = vmul.f32 %v4016, %v4822
    %v4824 = vsub.f32 1.0, %v4823
    %v4825 = vmul.f32 %v4822, %v4824
    %v4826 = vadd.f32 %v4822, %v4825
    %vm4827 = vweird.f32 %v4016
    %vm4828 = vweird.f32 %v4822
    %vm4829 = vmor %vm4827, %vm4828
    %v4830 = vsel %vm4829, %v4822, %v4826
    %v4831 = vand.u32 2147483647, %v4016
    %vm4832 = vcmp.eq.f32.partialorder %v4831, 8.507059e+37
    %v4833 = vand.u32 %v4016, 2147483648
    %v4834 = vor.u32 1.1754944e-38, %v4833
    %v4835 = vsel %vm4832, %v4834, %v4830
    %v4836 = vmul.f32 1.0, %v4835
    %v4837 = vrcp.pop %v4017
    %v4838 = vmul.f32 %v4017, %v4837
    %v4839 = vsub.f32 1.0, %v4838
    %v4840 = vmul.f32 %v4837, %v4839
    %v4841 = vadd.f32 %v4837, %v4840
    %vm4842 = vweird.f32 %v4017
    %vm4843 = vweird.f32 %v4837
    %vm4844 = vmor %vm4842, %vm4843
    %v4845 = vsel %vm4844, %v4837, %v4841
    %v4846 = vand.u32 2147483647, %v4017
    %vm4847 = vcmp.eq.f32.partialorder %v4846, 8.507059e+37
    %v4848 = vand.u32 %v4017, 2147483648
    %v4849 = vor.u32 1.1754944e-38, %v4848
    %v4850 = vsel %vm4847, %v4849, %v4845
    %v4851 = vmul.f32 1.0, %v4850
    %v4852 = vrcp.pop %v4018
    %v4853 = vmul.f32 %v4018, %v4852
    %v4854 = vsub.f32 1.0, %v4853
    %v4855 = vmul.f32 %v4852, %v4854
    %v4856 = vadd.f32 %v4852, %v4855
    %vm4857 = vweird.f32 %v4018
    %vm4858 = vweird.f32 %v4852
    %vm4859 = vmor %vm4857, %vm4858
    %v4860 = vsel %vm4859, %v4852, %v4856
    %v4861 = vand.u32 2147483647, %v4018
    %vm4862 = vcmp.eq.f32.partialorder %v4861, 8.507059e+37
    %v4863 = vand.u32 %v4018, 2147483648
    %v4864 = vor.u32 1.1754944e-38, %v4863
    %v4865 = vsel %vm4862, %v4864, %v4860
    %v4866 = vmul.f32 1.0, %v4865
    %v4867 = vrcp.pop %v4019
    %v4868 = vmul.f32 %v4019, %v4867
    %v4869 = vsub.f32 1.0, %v4868
    %v4870 = vmul.f32 %v4867, %v4869
    %v4871 = vadd.f32 %v4867, %v4870
    %vm4872 = vweird.f32 %v4019
    %vm4873 = vweird.f32 %v4867
    %vm4874 = vmor %vm4872, %vm4873
    %v4875 = vsel %vm4874, %v4867, %v4871
    %v4876 = vand.u32 2147483647, %v4019
    %vm4877 = vcmp.eq.f32.partialorder %v4876, 8.507059e+37
    %v4878 = vand.u32 %v4019, 2147483648
    %v4879 = vor.u32 1.1754944e-38, %v4878
    %v4880 = vsel %vm4877, %v4879, %v4875
    %v4881 = vmul.f32 1.0, %v4880
    %v4882 = vrcp.pop %v4020
    %v4883 = vmul.f32 %v4020, %v4882
    %v4884 = vsub.f32 1.0, %v4883
    %v4885 = vmul.f32 %v4882, %v4884
    %v4886 = vadd.f32 %v4882, %v4885
    %vm4887 = vweird.f32 %v4020
    %vm4888 = vweird.f32 %v4882
    %vm4889 = vmor %vm4887, %vm4888
    %v4890 = vsel %vm4889, %v4882, %v4886
    %v4891 = vand.u32 2147483647, %v4020
    %vm4892 = vcmp.eq.f32.partialorder %v4891, 8.507059e+37
    %v4893 = vand.u32 %v4020, 2147483648
    %v4894 = vor.u32 1.1754944e-38, %v4893
    %v4895 = vsel %vm4892, %v4894, %v4890
    %v4896 = vmul.f32 1.0, %v4895
    %v4897 = vrcp.pop %v4021
    %v4898 = vmul.f32 %v4021, %v4897
    %v4899 = vsub.f32 1.0, %v4898
    %v4900 = vmul.f32 %v4897, %v4899
    %v4901 = vadd.f32 %v4897, %v4900
    %vm4902 = vweird.f32 %v4021
    %vm4903 = vweird.f32 %v4897
    %vm4904 = vmor %vm4902, %vm4903
    %v4905 = vsel %vm4904, %v4897, %v4901
    %v4906 = vand.u32 2147483647, %v4021
    %vm4907 = vcmp.eq.f32.partialorder %v4906, 8.507059e+37
    %v4908 = vand.u32 %v4021, 2147483648
    %v4909 = vor.u32 1.1754944e-38, %v4908
    %v4910 = vsel %vm4907, %v4909, %v4905
    %v4911 = vmul.f32 1.0, %v4910
    %v4912 = vrcp.pop %v4022
    %v4913 = vmul.f32 %v4022, %v4912
    %v4914 = vsub.f32 1.0, %v4913
    %v4915 = vmul.f32 %v4912, %v4914
    %v4916 = vadd.f32 %v4912, %v4915
    %vm4917 = vweird.f32 %v4022
    %vm4918 = vweird.f32 %v4912
    %vm4919 = vmor %vm4917, %vm4918
    %v4920 = vsel %vm4919, %v4912, %v4916
    %v4921 = vand.u32 2147483647, %v4022
    %vm4922 = vcmp.eq.f32.partialorder %v4921, 8.507059e+37
    %v4923 = vand.u32 %v4022, 2147483648
    %v4924 = vor.u32 1.1754944e-38, %v4923
    %v4925 = vsel %vm4922, %v4924, %v4920
    %v4926 = vmul.f32 1.0, %v4925
    %v4927 = vrcp.pop %v4023
    %v4928 = vmul.f32 %v4023, %v4927
    %v4929 = vsub.f32 1.0, %v4928
    %v4930 = vmul.f32 %v4927, %v4929
    %v4931 = vadd.f32 %v4927, %v4930
    %vm4932 = vweird.f32 %v4023
    %vm4933 = vweird.f32 %v4927
    %vm4934 = vmor %vm4932, %vm4933
    %v4935 = vsel %vm4934, %v4927, %v4931
    %v4936 = vand.u32 2147483647, %v4023
    %vm4937 = vcmp.eq.f32.partialorder %v4936, 8.507059e+37
    %v4938 = vand.u32 %v4023, 2147483648
    %v4939 = vor.u32 1.1754944e-38, %v4938
    %v4940 = vsel %vm4937, %v4939, %v4935
    %v4941 = vmul.f32 1.0, %v4940
    %v4942 = vrcp.pop %v4024
    %v4943 = vmul.f32 %v4024, %v4942
    %v4944 = vsub.f32 1.0, %v4943
    %v4945 = vmul.f32 %v4942, %v4944
    %v4946 = vadd.f32 %v4942, %v4945
    %vm4947 = vweird.f32 %v4024
    %vm4948 = vweird.f32 %v4942
    %vm4949 = vmor %vm4947, %vm4948
    %v4950 = vsel %vm4949, %v4942, %v4946
    %v4951 = vand.u32 2147483647, %v4024
    %vm4952 = vcmp.eq.f32.partialorder %v4951, 8.507059e+37
    %v4953 = vand.u32 %v4024, 2147483648
    %v4954 = vor.u32 1.1754944e-38, %v4953
    %v4955 = vsel %vm4952, %v4954, %v4950
    %v4956 = vmul.f32 1.0, %v4955
    %v4957 = vrcp.pop %v4025
    %v4958 = vmul.f32 %v4025, %v4957
    %v4959 = vsub.f32 1.0, %v4958
    %v4960 = vmul.f32 %v4957, %v4959
    %v4961 = vadd.f32 %v4957, %v4960
    %vm4962 = vweird.f32 %v4025
    %vm4963 = vweird.f32 %v4957
    %vm4964 = vmor %vm4962, %vm4963
    %v4965 = vsel %vm4964, %v4957, %v4961
    %v4966 = vand.u32 2147483647, %v4025
    %vm4967 = vcmp.eq.f32.partialorder %v4966, 8.507059e+37
    %v4968 = vand.u32 %v4025, 2147483648
    %v4969 = vor.u32 1.1754944e-38, %v4968
    %v4970 = vsel %vm4967, %v4969, %v4965
    %v4971 = vmul.f32 1.0, %v4970
    %v4972 = vrcp.pop %v4026
    %v4973 = vmul.f32 %v4026, %v4972
    %v4974 = vsub.f32 1.0, %v4973
    %v4975 = vmul.f32 %v4972, %v4974
    %v4976 = vadd.f32 %v4972, %v4975
    %vm4977 = vweird.f32 %v4026
    %vm4978 = vweird.f32 %v4972
    %vm4979 = vmor %vm4977, %vm4978
    %v4980 = vsel %vm4979, %v4972, %v4976
    %v4981 = vand.u32 2147483647, %v4026
    %vm4982 = vcmp.eq.f32.partialorder %v4981, 8.507059e+37
    %v4983 = vand.u32 %v4026, 2147483648
    %v4984 = vor.u32 1.1754944e-38, %v4983
    %v4985 = vsel %vm4982, %v4984, %v4980
    %v4986 = vmul.f32 1.0, %v4985
    %v4987 = vld [vmem:[#allocation3] sm:$0xff]
    %v4988 = vld [vmem:[#allocation3 + $0x8] sm:$0xff]
    %v4989 = vld [vmem:[#allocation3 + $0x10] sm:$0xff]
    %v4990 = vld [vmem:[#allocation3 + $0x18] sm:$0xff]
    %v4991 = vld [vmem:[#allocation3 + $0x20] sm:$0xff]
    %v4992 = vld [vmem:[#allocation3 + $0x28] sm:$0xff]
    %v4993 = vld [vmem:[#allocation3 + $0x30] sm:$0xff]
    %v4994 = vld [vmem:[#allocation3 + $0x38] sm:$0xff]
    %v4995 = vld [vmem:[#allocation3 + $0x40] sm:$0xff]
    %v4996 = vld [vmem:[#allocation3 + $0x48] sm:$0xff]
    %v4997 = vld [vmem:[#allocation3 + $0x50] sm:$0xff]
    %v4998 = vld [vmem:[#allocation3 + $0x58] sm:$0xff]
    %v4999 = vld [vmem:[#allocation3 + $0x60] sm:$0xff]
    %v5000 = vld [vmem:[#allocation3 + $0x68] sm:$0xff]
    %v5001 = vld [vmem:[#allocation3 + $0x70] sm:$0xff]
    %v5002 = vld [vmem:[#allocation3 + $0x78] sm:$0xff]
    %v5003 = vld [vmem:[#allocation3 + $0x80] sm:$0xff]
    %v5004 = vld [vmem:[#allocation3 + $0x88] sm:$0xff]
    %v5005 = vld [vmem:[#allocation3 + $0x90] sm:$0xff]
    %v5006 = vld [vmem:[#allocation3 + $0x98] sm:$0xff]
    %v5007 = vld [vmem:[#allocation3 + $0xa0] sm:$0xff]
    %v5008 = vld [vmem:[#allocation3 + $0xa8] sm:$0xff]
    %v5009 = vld [vmem:[#allocation3 + $0xb0] sm:$0xff]
    %v5010 = vld [vmem:[#allocation3 + $0xb8] sm:$0xff]
    %v5011 = vld [vmem:[#allocation3 + $0xc0] sm:$0xff]
    %v5012 = vld [vmem:[#allocation3 + $0xc8] sm:$0xff]
    %v5013 = vld [vmem:[#allocation3 + $0xd0] sm:$0xff]
    %v5014 = vld [vmem:[#allocation3 + $0xd8] sm:$0xff]
    %v5015 = vld [vmem:[#allocation3 + $0xe0] sm:$0xff]
    %v5016 = vld [vmem:[#allocation3 + $0xe8] sm:$0xff]
    %v5017 = vld [vmem:[#allocation3 + $0xf0] sm:$0xff]
    %v5018 = vld [vmem:[#allocation3 + $0xf8] sm:$0xff]
    %v5019 = vld [vmem:[#allocation3 + $0x100] sm:$0xff]
    %v5020 = vld [vmem:[#allocation3 + $0x108] sm:$0xff]
    %v5021 = vld [vmem:[#allocation3 + $0x110] sm:$0xff]
    %v5022 = vld [vmem:[#allocation3 + $0x118] sm:$0xff]
    %v5023 = vld [vmem:[#allocation3 + $0x120] sm:$0xff]
    %v5024 = vld [vmem:[#allocation3 + $0x128] sm:$0xff]
    %v5025 = vld [vmem:[#allocation3 + $0x130] sm:$0xff]
    %v5026 = vld [vmem:[#allocation3 + $0x138] sm:$0xff]
    %v5027 = vld [vmem:[#allocation3 + $0x140] sm:$0xff]
    %v5028 = vld [vmem:[#allocation3 + $0x148] sm:$0xff]
    %v5029 = vld [vmem:[#allocation3 + $0x150] sm:$0xff]
    %v5030 = vld [vmem:[#allocation3 + $0x158] sm:$0xff]
    %v5031 = vld [vmem:[#allocation3 + $0x160] sm:$0xff]
    %v5032 = vld [vmem:[#allocation3 + $0x168] sm:$0xff]
    %v5033 = vld [vmem:[#allocation3 + $0x170] sm:$0xff]
    %v5034 = vld [vmem:[#allocation3 + $0x178] sm:$0xff]
    %v5035 = vld [vmem:[#allocation3 + $0x180] sm:$0xff]
    %v5036 = vld [vmem:[#allocation3 + $0x188] sm:$0xff]
    %v5037 = vld [vmem:[#allocation3 + $0x190] sm:$0xff]
    %v5038 = vld [vmem:[#allocation3 + $0x198] sm:$0xff]
    %v5039 = vld [vmem:[#allocation3 + $0x1a0] sm:$0xff]
    %v5040 = vld [vmem:[#allocation3 + $0x1a8] sm:$0xff]
    %v5041 = vld [vmem:[#allocation3 + $0x1b0] sm:$0xff]
    %v5042 = vld [vmem:[#allocation3 + $0x1b8] sm:$0xff]
    %v5043 = vld [vmem:[#allocation3 + $0x1c0] sm:$0xff]
    %v5044 = vld [vmem:[#allocation3 + $0x1c8] sm:$0xff]
    %v5045 = vld [vmem:[#allocation3 + $0x1d0] sm:$0xff]
    %v5046 = vld [vmem:[#allocation3 + $0x1d8] sm:$0xff]
    %v5047 = vld [vmem:[#allocation3 + $0x1e0] sm:$0xff]
    %v5048 = vld [vmem:[#allocation3 + $0x1e8] sm:$0xff]
    %v5049 = vld [vmem:[#allocation3 + $0x1f0] sm:$0xff]
    %v5050 = vld [vmem:[#allocation3 + $0x1f8] sm:$0xff]
    %5115 = vrot.lane.b32.xlu0 %v4987, 32
    %v5116 = vpop.permute.xlu0 %5115
    %5117 = vrot.lane.b32.xlu0 %v4988, 32
    %v5118 = vpop.permute.xlu0 %5117
    %5119 = vrot.lane.b32.xlu0 %v4989, 32
    %v5120 = vpop.permute.xlu0 %5119
    %5121 = vrot.lane.b32.xlu0 %v4990, 32
    %v5122 = vpop.permute.xlu0 %5121
    %5123 = vrot.lane.b32.xlu0 %v4991, 32
    %v5124 = vpop.permute.xlu0 %5123
    %5125 = vrot.lane.b32.xlu0 %v4992, 32
    %v5126 = vpop.permute.xlu0 %5125
    %5127 = vrot.lane.b32.xlu0 %v4993, 32
    %v5128 = vpop.permute.xlu0 %5127
    %5129 = vrot.lane.b32.xlu0 %v4994, 32
    %v5130 = vpop.permute.xlu0 %5129
    %5131 = vrot.lane.b32.xlu0 %v4995, 32
    %v5132 = vpop.permute.xlu0 %5131
    %5133 = vrot.lane.b32.xlu0 %v4996, 32
    %v5134 = vpop.permute.xlu0 %5133
    %5135 = vrot.lane.b32.xlu0 %v4997, 32
    %v5136 = vpop.permute.xlu0 %5135
    %5137 = vrot.lane.b32.xlu0 %v4998, 32
    %v5138 = vpop.permute.xlu0 %5137
    %5139 = vrot.lane.b32.xlu0 %v4999, 32
    %v5140 = vpop.permute.xlu0 %5139
    %5141 = vrot.lane.b32.xlu0 %v5000, 32
    %v5142 = vpop.permute.xlu0 %5141
    %5143 = vrot.lane.b32.xlu0 %v5001, 32
    %v5144 = vpop.permute.xlu0 %5143
    %5145 = vrot.lane.b32.xlu0 %v5002, 32
    %v5146 = vpop.permute.xlu0 %5145
    %5147 = vrot.lane.b32.xlu0 %v5003, 32
    %v5148 = vpop.permute.xlu0 %5147
    %5149 = vrot.lane.b32.xlu0 %v5004, 32
    %v5150 = vpop.permute.xlu0 %5149
    %5151 = vrot.lane.b32.xlu0 %v5005, 32
    %v5152 = vpop.permute.xlu0 %5151
    %5153 = vrot.lane.b32.xlu0 %v5006, 32
    %v5154 = vpop.permute.xlu0 %5153
    %5155 = vrot.lane.b32.xlu0 %v5007, 32
    %v5156 = vpop.permute.xlu0 %5155
    %5157 = vrot.lane.b32.xlu0 %v5008, 32
    %v5158 = vpop.permute.xlu0 %5157
    %5159 = vrot.lane.b32.xlu0 %v5009, 32
    %v5160 = vpop.permute.xlu0 %5159
    %5161 = vrot.lane.b32.xlu0 %v5010, 32
    %v5162 = vpop.permute.xlu0 %5161
    %5163 = vrot.lane.b32.xlu0 %v5011, 32
    %v5164 = vpop.permute.xlu0 %5163
    %5165 = vrot.lane.b32.xlu0 %v5012, 32
    %v5166 = vpop.permute.xlu0 %5165
    %5167 = vrot.lane.b32.xlu0 %v5013, 32
    %v5168 = vpop.permute.xlu0 %5167
    %5169 = vrot.lane.b32.xlu0 %v5014, 32
    %v5170 = vpop.permute.xlu0 %5169
    %5171 = vrot.lane.b32.xlu0 %v5015, 32
    %v5172 = vpop.permute.xlu0 %5171
    %5173 = vrot.lane.b32.xlu0 %v5016, 32
    %v5174 = vpop.permute.xlu0 %5173
    %5175 = vrot.lane.b32.xlu0 %v5017, 32
    %v5176 = vpop.permute.xlu0 %5175
    %5177 = vrot.lane.b32.xlu0 %v5018, 32
    %v5178 = vpop.permute.xlu0 %5177
    %5179 = vrot.lane.b32.xlu0 %v5019, 32
    %v5180 = vpop.permute.xlu0 %5179
    %5181 = vrot.lane.b32.xlu0 %v5020, 32
    %v5182 = vpop.permute.xlu0 %5181
    %5183 = vrot.lane.b32.xlu0 %v5021, 32
    %v5184 = vpop.permute.xlu0 %5183
    %5185 = vrot.lane.b32.xlu0 %v5022, 32
    %v5186 = vpop.permute.xlu0 %5185
    %5187 = vrot.lane.b32.xlu0 %v5023, 32
    %v5188 = vpop.permute.xlu0 %5187
    %5189 = vrot.lane.b32.xlu0 %v5024, 32
    %v5190 = vpop.permute.xlu0 %5189
    %5191 = vrot.lane.b32.xlu0 %v5025, 32
    %v5192 = vpop.permute.xlu0 %5191
    %5193 = vrot.lane.b32.xlu0 %v5026, 32
    %v5194 = vpop.permute.xlu0 %5193
    %5195 = vrot.lane.b32.xlu0 %v5027, 32
    %v5196 = vpop.permute.xlu0 %5195
    %5197 = vrot.lane.b32.xlu0 %v5028, 32
    %v5198 = vpop.permute.xlu0 %5197
    %5199 = vrot.lane.b32.xlu0 %v5029, 32
    %v5200 = vpop.permute.xlu0 %5199
    %5201 = vrot.lane.b32.xlu0 %v5030, 32
    %v5202 = vpop.permute.xlu0 %5201
    %5203 = vrot.lane.b32.xlu0 %v5031, 32
    %v5204 = vpop.permute.xlu0 %5203
    %5205 = vrot.lane.b32.xlu0 %v5032, 32
    %v5206 = vpop.permute.xlu0 %5205
    %5207 = vrot.lane.b32.xlu0 %v5033, 32
    %v5208 = vpop.permute.xlu0 %5207
    %5209 = vrot.lane.b32.xlu0 %v5034, 32
    %v5210 = vpop.permute.xlu0 %5209
    %5211 = vrot.lane.b32.xlu0 %v5035, 32
    %v5212 = vpop.permute.xlu0 %5211
    %5213 = vrot.lane.b32.xlu0 %v5036, 32
    %v5214 = vpop.permute.xlu0 %5213
    %5215 = vrot.lane.b32.xlu0 %v5037, 32
    %v5216 = vpop.permute.xlu0 %5215
    %5217 = vrot.lane.b32.xlu0 %v5038, 32
    %v5218 = vpop.permute.xlu0 %5217
    %5219 = vrot.lane.b32.xlu0 %v5039, 32
    %v5220 = vpop.permute.xlu0 %5219
    %5221 = vrot.lane.b32.xlu0 %v5040, 32
    %v5222 = vpop.permute.xlu0 %5221
    %5223 = vrot.lane.b32.xlu0 %v5041, 32
    %v5224 = vpop.permute.xlu0 %5223
    %5225 = vrot.lane.b32.xlu0 %v5042, 32
    %v5226 = vpop.permute.xlu0 %5225
    %5227 = vrot.lane.b32.xlu0 %v5043, 32
    %v5228 = vpop.permute.xlu0 %5227
    %5229 = vrot.lane.b32.xlu0 %v5044, 32
    %v5230 = vpop.permute.xlu0 %5229
    %5231 = vrot.lane.b32.xlu0 %v5045, 32
    %v5232 = vpop.permute.xlu0 %5231
    %5233 = vrot.lane.b32.xlu0 %v5046, 32
    %v5234 = vpop.permute.xlu0 %5233
    %5235 = vrot.lane.b32.xlu0 %v5047, 32
    %v5236 = vpop.permute.xlu0 %5235
    %5237 = vrot.lane.b32.xlu0 %v5048, 32
    %v5238 = vpop.permute.xlu0 %5237
    %5239 = vrot.lane.b32.xlu0 %v5049, 32
    %v5240 = vpop.permute.xlu0 %5239
    %5241 = vrot.lane.b32.xlu0 %v5050, 32
    %v5242 = vpop.permute.xlu0 %5241
    %v5307 = vmul.f32 %v4041, %v5116
    %v5308 = vmul.f32 %v4056, %v5118
    %v5309 = vmul.f32 %v4071, %v5120
    %v5310 = vmul.f32 %v4086, %v5122
    %v5311 = vmul.f32 %v4101, %v5124
    %v5312 = vmul.f32 %v4116, %v5126
    %v5313 = vmul.f32 %v4131, %v5128
    %v5314 = vmul.f32 %v4146, %v5130
    %v5315 = vmul.f32 %v4161, %v5132
    %v5316 = vmul.f32 %v4176, %v5134
    %v5317 = vmul.f32 %v4191, %v5136
    %v5318 = vmul.f32 %v4206, %v5138
    %v5319 = vmul.f32 %v4221, %v5140
    %v5320 = vmul.f32 %v4236, %v5142
    %v5321 = vmul.f32 %v4251, %v5144
    %v5322 = vmul.f32 %v4266, %v5146
    %v5323 = vmul.f32 %v4281, %v5148
    %v5324 = vmul.f32 %v4296, %v5150
    %v5325 = vmul.f32 %v4311, %v5152
    %v5326 = vmul.f32 %v4326, %v5154
    %v5327 = vmul.f32 %v4341, %v5156
    %v5328 = vmul.f32 %v4356, %v5158
    %v5329 = vmul.f32 %v4371, %v5160
    %v5330 = vmul.f32 %v4386, %v5162
    %v5331 = vmul.f32 %v4401, %v5164
    %v5332 = vmul.f32 %v4416, %v5166
    %v5333 = vmul.f32 %v4431, %v5168
    %v5334 = vmul.f32 %v4446, %v5170
    %v5335 = vmul.f32 %v4461, %v5172
    %v5336 = vmul.f32 %v4476, %v5174
    %v5337 = vmul.f32 %v4491, %v5176
    %v5338 = vmul.f32 %v4506, %v5178
    %v5339 = vmul.f32 %v4521, %v5180
    %v5340 = vmul.f32 %v4536, %v5182
    %v5341 = vmul.f32 %v4551, %v5184
    %v5342 = vmul.f32 %v4566, %v5186
    %v5343 = vmul.f32 %v4581, %v5188
    %v5344 = vmul.f32 %v4596, %v5190
    %v5345 = vmul.f32 %v4611, %v5192
    %v5346 = vmul.f32 %v4626, %v5194
    %v5347 = vmul.f32 %v4641, %v5196
    %v5348 = vmul.f32 %v4656, %v5198
    %v5349 = vmul.f32 %v4671, %v5200
    %v5350 = vmul.f32 %v4686, %v5202
    %v5351 = vmul.f32 %v4701, %v5204
    %v5352 = vmul.f32 %v4716, %v5206
    %v5353 = vmul.f32 %v4731, %v5208
    %v5354 = vmul.f32 %v4746, %v5210
    %v5355 = vmul.f32 %v4761, %v5212
    %v5356 = vmul.f32 %v4776, %v5214
    %v5357 = vmul.f32 %v4791, %v5216
    %v5358 = vmul.f32 %v4806, %v5218
    %v5359 = vmul.f32 %v4821, %v5220
    %v5360 = vmul.f32 %v4836, %v5222
    %v5361 = vmul.f32 %v4851, %v5224
    %v5362 = vmul.f32 %v4866, %v5226
    %v5363 = vmul.f32 %v4881, %v5228
    %v5364 = vmul.f32 %v4896, %v5230
    %v5365 = vmul.f32 %v4911, %v5232
    %v5366 = vmul.f32 %v4926, %v5234
    %v5367 = vmul.f32 %v4941, %v5236
    %v5368 = vmul.f32 %v4956, %v5238
    %v5369 = vmul.f32 %v4971, %v5240
    %v5370 = vmul.f32 %v4986, %v5242
    %5435 = vrot.lane.b32.xlu0 %v3707, 64
    %v5436 = vpop.permute.xlu0 %5435
    %5437 = vrot.lane.b32.xlu0 %v3708, 64
    %v5438 = vpop.permute.xlu0 %5437
    %5439 = vrot.lane.b32.xlu0 %v3709, 64
    %v5440 = vpop.permute.xlu0 %5439
    %5441 = vrot.lane.b32.xlu0 %v3710, 64
    %v5442 = vpop.permute.xlu0 %5441
    %5443 = vrot.lane.b32.xlu0 %v3711, 64
    %v5444 = vpop.permute.xlu0 %5443
    %5445 = vrot.lane.b32.xlu0 %v3712, 64
    %v5446 = vpop.permute.xlu0 %5445
    %5447 = vrot.lane.b32.xlu0 %v3713, 64
    %v5448 = vpop.permute.xlu0 %5447
    %5449 = vrot.lane.b32.xlu0 %v3714, 64
    %v5450 = vpop.permute.xlu0 %5449
    %5451 = vrot.lane.b32.xlu0 %v3715, 64
    %v5452 = vpop.permute.xlu0 %5451
    %5453 = vrot.lane.b32.xlu0 %v3716, 64
    %v5454 = vpop.permute.xlu0 %5453
    %5455 = vrot.lane.b32.xlu0 %v3717, 64
    %v5456 = vpop.permute.xlu0 %5455
    %5457 = vrot.lane.b32.xlu0 %v3718, 64
    %v5458 = vpop.permute.xlu0 %5457
    %5459 = vrot.lane.b32.xlu0 %v3719, 64
    %v5460 = vpop.permute.xlu0 %5459
    %5461 = vrot.lane.b32.xlu0 %v3720, 64
    %v5462 = vpop.permute.xlu0 %5461
    %5463 = vrot.lane.b32.xlu0 %v3721, 64
    %v5464 = vpop.permute.xlu0 %5463
    %5465 = vrot.lane.b32.xlu0 %v3722, 64
    %v5466 = vpop.permute.xlu0 %5465
    %5467 = vrot.lane.b32.xlu0 %v3723, 64
    %v5468 = vpop.permute.xlu0 %5467
    %5469 = vrot.lane.b32.xlu0 %v3724, 64
    %v5470 = vpop.permute.xlu0 %5469
    %5471 = vrot.lane.b32.xlu0 %v3725, 64
    %v5472 = vpop.permute.xlu0 %5471
    %5473 = vrot.lane.b32.xlu0 %v3726, 64
    %v5474 = vpop.permute.xlu0 %5473
    %5475 = vrot.lane.b32.xlu0 %v3727, 64
    %v5476 = vpop.permute.xlu0 %5475
    %5477 = vrot.lane.b32.xlu0 %v3728, 64
    %v5478 = vpop.permute.xlu0 %5477
    %5479 = vrot.lane.b32.xlu0 %v3729, 64
    %v5480 = vpop.permute.xlu0 %5479
    %5481 = vrot.lane.b32.xlu0 %v3730, 64
    %v5482 = vpop.permute.xlu0 %5481
    %5483 = vrot.lane.b32.xlu0 %v3731, 64
    %v5484 = vpop.permute.xlu0 %5483
    %5485 = vrot.lane.b32.xlu0 %v3732, 64
    %v5486 = vpop.permute.xlu0 %5485
    %5487 = vrot.lane.b32.xlu0 %v3733, 64
    %v5488 = vpop.permute.xlu0 %5487
    %5489 = vrot.lane.b32.xlu0 %v3734, 64
    %v5490 = vpop.permute.xlu0 %5489
    %5491 = vrot.lane.b32.xlu0 %v3735, 64
    %v5492 = vpop.permute.xlu0 %5491
    %5493 = vrot.lane.b32.xlu0 %v3736, 64
    %v5494 = vpop.permute.xlu0 %5493
    %5495 = vrot.lane.b32.xlu0 %v3737, 64
    %v5496 = vpop.permute.xlu0 %5495
    %5497 = vrot.lane.b32.xlu0 %v3738, 64
    %v5498 = vpop.permute.xlu0 %5497
    %5499 = vrot.lane.b32.xlu0 %v3739, 64
    %v5500 = vpop.permute.xlu0 %5499
    %5501 = vrot.lane.b32.xlu0 %v3740, 64
    %v5502 = vpop.permute.xlu0 %5501
    %5503 = vrot.lane.b32.xlu0 %v3741, 64
    %v5504 = vpop.permute.xlu0 %5503
    %5505 = vrot.lane.b32.xlu0 %v3742, 64
    %v5506 = vpop.permute.xlu0 %5505
    %5507 = vrot.lane.b32.xlu0 %v3743, 64
    %v5508 = vpop.permute.xlu0 %5507
    %5509 = vrot.lane.b32.xlu0 %v3744, 64
    %v5510 = vpop.permute.xlu0 %5509
    %5511 = vrot.lane.b32.xlu0 %v3745, 64
    %v5512 = vpop.permute.xlu0 %5511
    %5513 = vrot.lane.b32.xlu0 %v3746, 64
    %v5514 = vpop.permute.xlu0 %5513
    %5515 = vrot.lane.b32.xlu0 %v3747, 64
    %v5516 = vpop.permute.xlu0 %5515
    %5517 = vrot.lane.b32.xlu0 %v3748, 64
    %v5518 = vpop.permute.xlu0 %5517
    %5519 = vrot.lane.b32.xlu0 %v3749, 64
    %v5520 = vpop.permute.xlu0 %5519
    %5521 = vrot.lane.b32.xlu0 %v3750, 64
    %v5522 = vpop.permute.xlu0 %5521
    %5523 = vrot.lane.b32.xlu0 %v3751, 64
    %v5524 = vpop.permute.xlu0 %5523
    %5525 = vrot.lane.b32.xlu0 %v3752, 64
    %v5526 = vpop.permute.xlu0 %5525
    %5527 = vrot.lane.b32.xlu0 %v3753, 64
    %v5528 = vpop.permute.xlu0 %5527
    %5529 = vrot.lane.b32.xlu0 %v3754, 64
    %v5530 = vpop.permute.xlu0 %5529
    %5531 = vrot.lane.b32.xlu0 %v3755, 64
    %v5532 = vpop.permute.xlu0 %5531
    %5533 = vrot.lane.b32.xlu0 %v3756, 64
    %v5534 = vpop.permute.xlu0 %5533
    %5535 = vrot.lane.b32.xlu0 %v3757, 64
    %v5536 = vpop.permute.xlu0 %5535
    %5537 = vrot.lane.b32.xlu0 %v3758, 64
    %v5538 = vpop.permute.xlu0 %5537
    %5539 = vrot.lane.b32.xlu0 %v3759, 64
    %v5540 = vpop.permute.xlu0 %5539
    %5541 = vrot.lane.b32.xlu0 %v3760, 64
    %v5542 = vpop.permute.xlu0 %5541
    %5543 = vrot.lane.b32.xlu0 %v3761, 64
    %v5544 = vpop.permute.xlu0 %5543
    %5545 = vrot.lane.b32.xlu0 %v3762, 64
    %v5546 = vpop.permute.xlu0 %5545
    %5547 = vrot.lane.b32.xlu0 %v3763, 64
    %v5548 = vpop.permute.xlu0 %5547
    %5549 = vrot.lane.b32.xlu0 %v3764, 64
    %v5550 = vpop.permute.xlu0 %5549
    %5551 = vrot.lane.b32.xlu0 %v3765, 64
    %v5552 = vpop.permute.xlu0 %5551
    %5553 = vrot.lane.b32.xlu0 %v3766, 64
    %v5554 = vpop.permute.xlu0 %5553
    %5555 = vrot.lane.b32.xlu0 %v3767, 64
    %v5556 = vpop.permute.xlu0 %5555
    %5557 = vrot.lane.b32.xlu0 %v3768, 64
    %v5558 = vpop.permute.xlu0 %5557
    %5559 = vrot.lane.b32.xlu0 %v3769, 64
    %v5560 = vpop.permute.xlu0 %5559
    %5561 = vrot.lane.b32.xlu0 %v3770, 64
    %v5562 = vpop.permute.xlu0 %5561
    %v5627 = vmul.f32 %v4041, %v5436
    %v5628 = vmul.f32 %v4056, %v5438
    %v5629 = vmul.f32 %v4071, %v5440
    %v5630 = vmul.f32 %v4086, %v5442
    %v5631 = vmul.f32 %v4101, %v5444
    %v5632 = vmul.f32 %v4116, %v5446
    %v5633 = vmul.f32 %v4131, %v5448
    %v5634 = vmul.f32 %v4146, %v5450
    %v5635 = vmul.f32 %v4161, %v5452
    %v5636 = vmul.f32 %v4176, %v5454
    %v5637 = vmul.f32 %v4191, %v5456
    %v5638 = vmul.f32 %v4206, %v5458
    %v5639 = vmul.f32 %v4221, %v5460
    %v5640 = vmul.f32 %v4236, %v5462
    %v5641 = vmul.f32 %v4251, %v5464
    %v5642 = vmul.f32 %v4266, %v5466
    %v5643 = vmul.f32 %v4281, %v5468
    %v5644 = vmul.f32 %v4296, %v5470
    %v5645 = vmul.f32 %v4311, %v5472
    %v5646 = vmul.f32 %v4326, %v5474
    %v5647 = vmul.f32 %v4341, %v5476
    %v5648 = vmul.f32 %v4356, %v5478
    %v5649 = vmul.f32 %v4371, %v5480
    %v5650 = vmul.f32 %v4386, %v5482
    %v5651 = vmul.f32 %v4401, %v5484
    %v5652 = vmul.f32 %v4416, %v5486
    %v5653 = vmul.f32 %v4431, %v5488
    %v5654 = vmul.f32 %v4446, %v5490
    %v5655 = vmul.f32 %v4461, %v5492
    %v5656 = vmul.f32 %v4476, %v5494
    %v5657 = vmul.f32 %v4491, %v5496
    %v5658 = vmul.f32 %v4506, %v5498
    %v5659 = vmul.f32 %v4521, %v5500
    %v5660 = vmul.f32 %v4536, %v5502
    %v5661 = vmul.f32 %v4551, %v5504
    %v5662 = vmul.f32 %v4566, %v5506
    %v5663 = vmul.f32 %v4581, %v5508
    %v5664 = vmul.f32 %v4596, %v5510
    %v5665 = vmul.f32 %v4611, %v5512
    %v5666 = vmul.f32 %v4626, %v5514
    %v5667 = vmul.f32 %v4641, %v5516
    %v5668 = vmul.f32 %v4656, %v5518
    %v5669 = vmul.f32 %v4671, %v5520
    %v5670 = vmul.f32 %v4686, %v5522
    %v5671 = vmul.f32 %v4701, %v5524
    %v5672 = vmul.f32 %v4716, %v5526
    %v5673 = vmul.f32 %v4731, %v5528
    %v5674 = vmul.f32 %v4746, %v5530
    %v5675 = vmul.f32 %v4761, %v5532
    %v5676 = vmul.f32 %v4776, %v5534
    %v5677 = vmul.f32 %v4791, %v5536
    %v5678 = vmul.f32 %v4806, %v5538
    %v5679 = vmul.f32 %v4821, %v5540
    %v5680 = vmul.f32 %v4836, %v5542
    %v5681 = vmul.f32 %v4851, %v5544
    %v5682 = vmul.f32 %v4866, %v5546
    %v5683 = vmul.f32 %v4881, %v5548
    %v5684 = vmul.f32 %v4896, %v5550
    %v5685 = vmul.f32 %v4911, %v5552
    %v5686 = vmul.f32 %v4926, %v5554
    %v5687 = vmul.f32 %v4941, %v5556
    %v5688 = vmul.f32 %v4956, %v5558
    %v5689 = vmul.f32 %v4971, %v5560
    %v5690 = vmul.f32 %v4986, %v5562
    %5755 = vrot.lane.b32.xlu0 %v5627, 32
    %v5756 = vpop.permute.xlu0 %5755
    %5757 = vrot.lane.b32.xlu0 %v5628, 32
    %v5758 = vpop.permute.xlu0 %5757
    %5759 = vrot.lane.b32.xlu0 %v5629, 32
    %v5760 = vpop.permute.xlu0 %5759
    %5761 = vrot.lane.b32.xlu0 %v5630, 32
    %v5762 = vpop.permute.xlu0 %5761
    %5763 = vrot.lane.b32.xlu0 %v5631, 32
    %v5764 = vpop.permute.xlu0 %5763
    %5765 = vrot.lane.b32.xlu0 %v5632, 32
    %v5766 = vpop.permute.xlu0 %5765
    %5767 = vrot.lane.b32.xlu0 %v5633, 32
    %v5768 = vpop.permute.xlu0 %5767
    %5769 = vrot.lane.b32.xlu0 %v5634, 32
    %v5770 = vpop.permute.xlu0 %5769
    %5771 = vrot.lane.b32.xlu0 %v5635, 32
    %v5772 = vpop.permute.xlu0 %5771
    %5773 = vrot.lane.b32.xlu0 %v5636, 32
    %v5774 = vpop.permute.xlu0 %5773
    %5775 = vrot.lane.b32.xlu0 %v5637, 32
    %v5776 = vpop.permute.xlu0 %5775
    %5777 = vrot.lane.b32.xlu0 %v5638, 32
    %v5778 = vpop.permute.xlu0 %5777
    %5779 = vrot.lane.b32.xlu0 %v5639, 32
    %v5780 = vpop.permute.xlu0 %5779
    %5781 = vrot.lane.b32.xlu0 %v5640, 32
    %v5782 = vpop.permute.xlu0 %5781
    %5783 = vrot.lane.b32.xlu0 %v5641, 32
    %v5784 = vpop.permute.xlu0 %5783
    %5785 = vrot.lane.b32.xlu0 %v5642, 32
    %v5786 = vpop.permute.xlu0 %5785
    %5787 = vrot.lane.b32.xlu0 %v5643, 32
    %v5788 = vpop.permute.xlu0 %5787
    %5789 = vrot.lane.b32.xlu0 %v5644, 32
    %v5790 = vpop.permute.xlu0 %5789
    %5791 = vrot.lane.b32.xlu0 %v5645, 32
    %v5792 = vpop.permute.xlu0 %5791
    %5793 = vrot.lane.b32.xlu0 %v5646, 32
    %v5794 = vpop.permute.xlu0 %5793
    %5795 = vrot.lane.b32.xlu0 %v5647, 32
    %v5796 = vpop.permute.xlu0 %5795
    %5797 = vrot.lane.b32.xlu0 %v5648, 32
    %v5798 = vpop.permute.xlu0 %5797
    %5799 = vrot.lane.b32.xlu0 %v5649, 32
    %v5800 = vpop.permute.xlu0 %5799
    %5801 = vrot.lane.b32.xlu0 %v5650, 32
    %v5802 = vpop.permute.xlu0 %5801
    %5803 = vrot.lane.b32.xlu0 %v5651, 32
    %v5804 = vpop.permute.xlu0 %5803
    %5805 = vrot.lane.b32.xlu0 %v5652, 32
    %v5806 = vpop.permute.xlu0 %5805
    %5807 = vrot.lane.b32.xlu0 %v5653, 32
    %v5808 = vpop.permute.xlu0 %5807
    %5809 = vrot.lane.b32.xlu0 %v5654, 32
    %v5810 = vpop.permute.xlu0 %5809
    %5811 = vrot.lane.b32.xlu0 %v5655, 32
    %v5812 = vpop.permute.xlu0 %5811
    %5813 = vrot.lane.b32.xlu0 %v5656, 32
    %v5814 = vpop.permute.xlu0 %5813
    %5815 = vrot.lane.b32.xlu0 %v5657, 32
    %v5816 = vpop.permute.xlu0 %5815
    %5817 = vrot.lane.b32.xlu0 %v5658, 32
    %v5818 = vpop.permute.xlu0 %5817
    %5819 = vrot.lane.b32.xlu0 %v5659, 32
    %v5820 = vpop.permute.xlu0 %5819
    %5821 = vrot.lane.b32.xlu0 %v5660, 32
    %v5822 = vpop.permute.xlu0 %5821
    %5823 = vrot.lane.b32.xlu0 %v5661, 32
    %v5824 = vpop.permute.xlu0 %5823
    %5825 = vrot.lane.b32.xlu0 %v5662, 32
    %v5826 = vpop.permute.xlu0 %5825
    %5827 = vrot.lane.b32.xlu0 %v5663, 32
    %v5828 = vpop.permute.xlu0 %5827
    %5829 = vrot.lane.b32.xlu0 %v5664, 32
    %v5830 = vpop.permute.xlu0 %5829
    %5831 = vrot.lane.b32.xlu0 %v5665, 32
    %v5832 = vpop.permute.xlu0 %5831
    %5833 = vrot.lane.b32.xlu0 %v5666, 32
    %v5834 = vpop.permute.xlu0 %5833
    %5835 = vrot.lane.b32.xlu0 %v5667, 32
    %v5836 = vpop.permute.xlu0 %5835
    %5837 = vrot.lane.b32.xlu0 %v5668, 32
    %v5838 = vpop.permute.xlu0 %5837
    %5839 = vrot.lane.b32.xlu0 %v5669, 32
    %v5840 = vpop.permute.xlu0 %5839
    %5841 = vrot.lane.b32.xlu0 %v5670, 32
    %v5842 = vpop.permute.xlu0 %5841
    %5843 = vrot.lane.b32.xlu0 %v5671, 32
    %v5844 = vpop.permute.xlu0 %5843
    %5845 = vrot.lane.b32.xlu0 %v5672, 32
    %v5846 = vpop.permute.xlu0 %5845
    %5847 = vrot.lane.b32.xlu0 %v5673, 32
    %v5848 = vpop.permute.xlu0 %5847
    %5849 = vrot.lane.b32.xlu0 %v5674, 32
    %v5850 = vpop.permute.xlu0 %5849
    %5851 = vrot.lane.b32.xlu0 %v5675, 32
    %v5852 = vpop.permute.xlu0 %5851
    %5853 = vrot.lane.b32.xlu0 %v5676, 32
    %v5854 = vpop.permute.xlu0 %5853
    %5855 = vrot.lane.b32.xlu0 %v5677, 32
    %v5856 = vpop.permute.xlu0 %5855
    %5857 = vrot.lane.b32.xlu0 %v5678, 32
    %v5858 = vpop.permute.xlu0 %5857
    %5859 = vrot.lane.b32.xlu0 %v5679, 32
    %v5860 = vpop.permute.xlu0 %5859
    %5861 = vrot.lane.b32.xlu0 %v5680, 32
    %v5862 = vpop.permute.xlu0 %5861
    %5863 = vrot.lane.b32.xlu0 %v5681, 32
    %v5864 = vpop.permute.xlu0 %5863
    %5865 = vrot.lane.b32.xlu0 %v5682, 32
    %v5866 = vpop.permute.xlu0 %5865
    %5867 = vrot.lane.b32.xlu0 %v5683, 32
    %v5868 = vpop.permute.xlu0 %5867
    %5869 = vrot.lane.b32.xlu0 %v5684, 32
    %v5870 = vpop.permute.xlu0 %5869
    %5871 = vrot.lane.b32.xlu0 %v5685, 32
    %v5872 = vpop.permute.xlu0 %5871
    %5873 = vrot.lane.b32.xlu0 %v5686, 32
    %v5874 = vpop.permute.xlu0 %5873
    %5875 = vrot.lane.b32.xlu0 %v5687, 32
    %v5876 = vpop.permute.xlu0 %5875
    %5877 = vrot.lane.b32.xlu0 %v5688, 32
    %v5878 = vpop.permute.xlu0 %5877
    %5879 = vrot.lane.b32.xlu0 %v5689, 32
    %v5880 = vpop.permute.xlu0 %5879
    %5881 = vrot.lane.b32.xlu0 %v5690, 32
    %v5882 = vpop.permute.xlu0 %5881
    %v5947 = vadd.f32 %v5307, %v5756
    %v5948 = vadd.f32 %v5308, %v5758
    %v5949 = vadd.f32 %v5309, %v5760
    %v5950 = vadd.f32 %v5310, %v5762
    %v5951 = vadd.f32 %v5311, %v5764
    %v5952 = vadd.f32 %v5312, %v5766
    %v5953 = vadd.f32 %v5313, %v5768
    %v5954 = vadd.f32 %v5314, %v5770
    %v5955 = vadd.f32 %v5315, %v5772
    %v5956 = vadd.f32 %v5316, %v5774
    %v5957 = vadd.f32 %v5317, %v5776
    %v5958 = vadd.f32 %v5318, %v5778
    %v5959 = vadd.f32 %v5319, %v5780
    %v5960 = vadd.f32 %v5320, %v5782
    %v5961 = vadd.f32 %v5321, %v5784
    %v5962 = vadd.f32 %v5322, %v5786
    %v5963 = vadd.f32 %v5323, %v5788
    %v5964 = vadd.f32 %v5324, %v5790
    %v5965 = vadd.f32 %v5325, %v5792
    %v5966 = vadd.f32 %v5326, %v5794
    %v5967 = vadd.f32 %v5327, %v5796
    %v5968 = vadd.f32 %v5328, %v5798
    %v5969 = vadd.f32 %v5329, %v5800
    %v5970 = vadd.f32 %v5330, %v5802
    %v5971 = vadd.f32 %v5331, %v5804
    %v5972 = vadd.f32 %v5332, %v5806
    %v5973 = vadd.f32 %v5333, %v5808
    %v5974 = vadd.f32 %v5334, %v5810
    %v5975 = vadd.f32 %v5335, %v5812
    %v5976 = vadd.f32 %v5336, %v5814
    %v5977 = vadd.f32 %v5337, %v5816
    %v5978 = vadd.f32 %v5338, %v5818
    %v5979 = vadd.f32 %v5339, %v5820
    %v5980 = vadd.f32 %v5340, %v5822
    %v5981 = vadd.f32 %v5341, %v5824
    %v5982 = vadd.f32 %v5342, %v5826
    %v5983 = vadd.f32 %v5343, %v5828
    %v5984 = vadd.f32 %v5344, %v5830
    %v5985 = vadd.f32 %v5345, %v5832
    %v5986 = vadd.f32 %v5346, %v5834
    %v5987 = vadd.f32 %v5347, %v5836
    %v5988 = vadd.f32 %v5348, %v5838
    %v5989 = vadd.f32 %v5349, %v5840
    %v5990 = vadd.f32 %v5350, %v5842
    %v5991 = vadd.f32 %v5351, %v5844
    %v5992 = vadd.f32 %v5352, %v5846
    %v5993 = vadd.f32 %v5353, %v5848
    %v5994 = vadd.f32 %v5354, %v5850
    %v5995 = vadd.f32 %v5355, %v5852
    %v5996 = vadd.f32 %v5356, %v5854
    %v5997 = vadd.f32 %v5357, %v5856
    %v5998 = vadd.f32 %v5358, %v5858
    %v5999 = vadd.f32 %v5359, %v5860
    %v6000 = vadd.f32 %v5360, %v5862
    %v6001 = vadd.f32 %v5361, %v5864
    %v6002 = vadd.f32 %v5362, %v5866
    %v6003 = vadd.f32 %v5363, %v5868
    %v6004 = vadd.f32 %v5364, %v5870
    %v6005 = vadd.f32 %v5365, %v5872
    %v6006 = vadd.f32 %v5366, %v5874
    %v6007 = vadd.f32 %v5367, %v5876
    %v6008 = vadd.f32 %v5368, %v5878
    %v6009 = vadd.f32 %v5369, %v5880
    %v6010 = vadd.f32 %v5370, %v5882
    %v6011 = vtanh.pop %v5947
    %v6012 = vtanh.pop %v5948
    %v6013 = vtanh.pop %v5949
    %v6014 = vtanh.pop %v5950
    %v6015 = vtanh.pop %v5951
    %v6016 = vtanh.pop %v5952
    %v6017 = vtanh.pop %v5953
    %v6018 = vtanh.pop %v5954
    %v6019 = vtanh.pop %v5955
    %v6020 = vtanh.pop %v5956
    %v6021 = vtanh.pop %v5957
    %v6022 = vtanh.pop %v5958
    %v6023 = vtanh.pop %v5959
    %v6024 = vtanh.pop %v5960
    %v6025 = vtanh.pop %v5961
    %v6026 = vtanh.pop %v5962
    %v6027 = vtanh.pop %v5963
    %v6028 = vtanh.pop %v5964
    %v6029 = vtanh.pop %v5965
    %v6030 = vtanh.pop %v5966
    %v6031 = vtanh.pop %v5967
    %v6032 = vtanh.pop %v5968
    %v6033 = vtanh.pop %v5969
    %v6034 = vtanh.pop %v5970
    %v6035 = vtanh.pop %v5971
    %v6036 = vtanh.pop %v5972
    %v6037 = vtanh.pop %v5973
    %v6038 = vtanh.pop %v5974
    %v6039 = vtanh.pop %v5975
    %v6040 = vtanh.pop %v5976
    %v6041 = vtanh.pop %v5977
    %v6042 = vtanh.pop %v5978
    %v6043 = vtanh.pop %v5979
    %v6044 = vtanh.pop %v5980
    %v6045 = vtanh.pop %v5981
    %v6046 = vtanh.pop %v5982
    %v6047 = vtanh.pop %v5983
    %v6048 = vtanh.pop %v5984
    %v6049 = vtanh.pop %v5985
    %v6050 = vtanh.pop %v5986
    %v6051 = vtanh.pop %v5987
    %v6052 = vtanh.pop %v5988
    %v6053 = vtanh.pop %v5989
    %v6054 = vtanh.pop %v5990
    %v6055 = vtanh.pop %v5991
    %v6056 = vtanh.pop %v5992
    %v6057 = vtanh.pop %v5993
    %v6058 = vtanh.pop %v5994
    %v6059 = vtanh.pop %v5995
    %v6060 = vtanh.pop %v5996
    %v6061 = vtanh.pop %v5997
    %v6062 = vtanh.pop %v5998
    %v6063 = vtanh.pop %v5999
    %v6064 = vtanh.pop %v6000
    %v6065 = vtanh.pop %v6001
    %v6066 = vtanh.pop %v6002
    %v6067 = vtanh.pop %v6003
    %v6068 = vtanh.pop %v6004
    %v6069 = vtanh.pop %v6005
    %v6070 = vtanh.pop %v6006
    %v6071 = vtanh.pop %v6007
    %v6072 = vtanh.pop %v6008
    %v6073 = vtanh.pop %v6009
    %v6074 = vtanh.pop %v6010
    %6139 = vrot.lane.b32.xlu0 %v6011, 64
    %v6140 = vpop.permute.xlu0 %6139
    %6141 = vrot.lane.b32.xlu0 %v6012, 64
    %v6142 = vpop.permute.xlu0 %6141
    %6143 = vrot.lane.b32.xlu0 %v6013, 64
    %v6144 = vpop.permute.xlu0 %6143
    %6145 = vrot.lane.b32.xlu0 %v6014, 64
    %v6146 = vpop.permute.xlu0 %6145
    %6147 = vrot.lane.b32.xlu0 %v6015, 64
    %v6148 = vpop.permute.xlu0 %6147
    %6149 = vrot.lane.b32.xlu0 %v6016, 64
    %v6150 = vpop.permute.xlu0 %6149
    %6151 = vrot.lane.b32.xlu0 %v6017, 64
    %v6152 = vpop.permute.xlu0 %6151
    %6153 = vrot.lane.b32.xlu0 %v6018, 64
    %v6154 = vpop.permute.xlu0 %6153
    %6155 = vrot.lane.b32.xlu0 %v6019, 64
    %v6156 = vpop.permute.xlu0 %6155
    %6157 = vrot.lane.b32.xlu0 %v6020, 64
    %v6158 = vpop.permute.xlu0 %6157
    %6159 = vrot.lane.b32.xlu0 %v6021, 64
    %v6160 = vpop.permute.xlu0 %6159
    %6161 = vrot.lane.b32.xlu0 %v6022, 64
    %v6162 = vpop.permute.xlu0 %6161
    %6163 = vrot.lane.b32.xlu0 %v6023, 64
    %v6164 = vpop.permute.xlu0 %6163
    %6165 = vrot.lane.b32.xlu0 %v6024, 64
    %v6166 = vpop.permute.xlu0 %6165
    %6167 = vrot.lane.b32.xlu0 %v6025, 64
    %v6168 = vpop.permute.xlu0 %6167
    %6169 = vrot.lane.b32.xlu0 %v6026, 64
    %v6170 = vpop.permute.xlu0 %6169
    %6171 = vrot.lane.b32.xlu0 %v6027, 64
    %v6172 = vpop.permute.xlu0 %6171
    %6173 = vrot.lane.b32.xlu0 %v6028, 64
    %v6174 = vpop.permute.xlu0 %6173
    %6175 = vrot.lane.b32.xlu0 %v6029, 64
    %v6176 = vpop.permute.xlu0 %6175
    %6177 = vrot.lane.b32.xlu0 %v6030, 64
    %v6178 = vpop.permute.xlu0 %6177
    %6179 = vrot.lane.b32.xlu0 %v6031, 64
    %v6180 = vpop.permute.xlu0 %6179
    %6181 = vrot.lane.b32.xlu0 %v6032, 64
    %v6182 = vpop.permute.xlu0 %6181
    %6183 = vrot.lane.b32.xlu0 %v6033, 64
    %v6184 = vpop.permute.xlu0 %6183
    %6185 = vrot.lane.b32.xlu0 %v6034, 64
    %v6186 = vpop.permute.xlu0 %6185
    %6187 = vrot.lane.b32.xlu0 %v6035, 64
    %v6188 = vpop.permute.xlu0 %6187
    %6189 = vrot.lane.b32.xlu0 %v6036, 64
    %v6190 = vpop.permute.xlu0 %6189
    %6191 = vrot.lane.b32.xlu0 %v6037, 64
    %v6192 = vpop.permute.xlu0 %6191
    %6193 = vrot.lane.b32.xlu0 %v6038, 64
    %v6194 = vpop.permute.xlu0 %6193
    %6195 = vrot.lane.b32.xlu0 %v6039, 64
    %v6196 = vpop.permute.xlu0 %6195
    %6197 = vrot.lane.b32.xlu0 %v6040, 64
    %v6198 = vpop.permute.xlu0 %6197
    %6199 = vrot.lane.b32.xlu0 %v6041, 64
    %v6200 = vpop.permute.xlu0 %6199
    %6201 = vrot.lane.b32.xlu0 %v6042, 64
    %v6202 = vpop.permute.xlu0 %6201
    %6203 = vrot.lane.b32.xlu0 %v6043, 64
    %v6204 = vpop.permute.xlu0 %6203
    %6205 = vrot.lane.b32.xlu0 %v6044, 64
    %v6206 = vpop.permute.xlu0 %6205
    %6207 = vrot.lane.b32.xlu0 %v6045, 64
    %v6208 = vpop.permute.xlu0 %6207
    %6209 = vrot.lane.b32.xlu0 %v6046, 64
    %v6210 = vpop.permute.xlu0 %6209
    %6211 = vrot.lane.b32.xlu0 %v6047, 64
    %v6212 = vpop.permute.xlu0 %6211
    %6213 = vrot.lane.b32.xlu0 %v6048, 64
    %v6214 = vpop.permute.xlu0 %6213
    %6215 = vrot.lane.b32.xlu0 %v6049, 64
    %v6216 = vpop.permute.xlu0 %6215
    %6217 = vrot.lane.b32.xlu0 %v6050, 64
    %v6218 = vpop.permute.xlu0 %6217
    %6219 = vrot.lane.b32.xlu0 %v6051, 64
    %v6220 = vpop.permute.xlu0 %6219
    %6221 = vrot.lane.b32.xlu0 %v6052, 64
    %v6222 = vpop.permute.xlu0 %6221
    %6223 = vrot.lane.b32.xlu0 %v6053, 64
    %v6224 = vpop.permute.xlu0 %6223
    %6225 = vrot.lane.b32.xlu0 %v6054, 64
    %v6226 = vpop.permute.xlu0 %6225
    %6227 = vrot.lane.b32.xlu0 %v6055, 64
    %v6228 = vpop.permute.xlu0 %6227
    %6229 = vrot.lane.b32.xlu0 %v6056, 64
    %v6230 = vpop.permute.xlu0 %6229
    %6231 = vrot.lane.b32.xlu0 %v6057, 64
    %v6232 = vpop.permute.xlu0 %6231
    %6233 = vrot.lane.b32.xlu0 %v6058, 64
    %v6234 = vpop.permute.xlu0 %6233
    %6235 = vrot.lane.b32.xlu0 %v6059, 64
    %v6236 = vpop.permute.xlu0 %6235
    %6237 = vrot.lane.b32.xlu0 %v6060, 64
    %v6238 = vpop.permute.xlu0 %6237
    %6239 = vrot.lane.b32.xlu0 %v6061, 64
    %v6240 = vpop.permute.xlu0 %6239
    %6241 = vrot.lane.b32.xlu0 %v6062, 64
    %v6242 = vpop.permute.xlu0 %6241
    %6243 = vrot.lane.b32.xlu0 %v6063, 64
    %v6244 = vpop.permute.xlu0 %6243
    %6245 = vrot.lane.b32.xlu0 %v6064, 64
    %v6246 = vpop.permute.xlu0 %6245
    %6247 = vrot.lane.b32.xlu0 %v6065, 64
    %v6248 = vpop.permute.xlu0 %6247
    %6249 = vrot.lane.b32.xlu0 %v6066, 64
    %v6250 = vpop.permute.xlu0 %6249
    %6251 = vrot.lane.b32.xlu0 %v6067, 64
    %v6252 = vpop.permute.xlu0 %6251
    %6253 = vrot.lane.b32.xlu0 %v6068, 64
    %v6254 = vpop.permute.xlu0 %6253
    %6255 = vrot.lane.b32.xlu0 %v6069, 64
    %v6256 = vpop.permute.xlu0 %6255
    %6257 = vrot.lane.b32.xlu0 %v6070, 64
    %v6258 = vpop.permute.xlu0 %6257
    %6259 = vrot.lane.b32.xlu0 %v6071, 64
    %v6260 = vpop.permute.xlu0 %6259
    %6261 = vrot.lane.b32.xlu0 %v6072, 64
    %v6262 = vpop.permute.xlu0 %6261
    %6263 = vrot.lane.b32.xlu0 %v6073, 64
    %v6264 = vpop.permute.xlu0 %6263
    %6265 = vrot.lane.b32.xlu0 %v6074, 64
    %v6266 = vpop.permute.xlu0 %6265
    %v6331 = vmul.f32 %v4041, %v6140
    %v6332 = vmul.f32 %v4056, %v6142
    %v6333 = vmul.f32 %v4071, %v6144
    %v6334 = vmul.f32 %v4086, %v6146
    %v6335 = vmul.f32 %v4101, %v6148
    %v6336 = vmul.f32 %v4116, %v6150
    %v6337 = vmul.f32 %v4131, %v6152
    %v6338 = vmul.f32 %v4146, %v6154
    %v6339 = vmul.f32 %v4161, %v6156
    %v6340 = vmul.f32 %v4176, %v6158
    %v6341 = vmul.f32 %v4191, %v6160
    %v6342 = vmul.f32 %v4206, %v6162
    %v6343 = vmul.f32 %v4221, %v6164
    %v6344 = vmul.f32 %v4236, %v6166
    %v6345 = vmul.f32 %v4251, %v6168
    %v6346 = vmul.f32 %v4266, %v6170
    %v6347 = vmul.f32 %v4281, %v6172
    %v6348 = vmul.f32 %v4296, %v6174
    %v6349 = vmul.f32 %v4311, %v6176
    %v6350 = vmul.f32 %v4326, %v6178
    %v6351 = vmul.f32 %v4341, %v6180
    %v6352 = vmul.f32 %v4356, %v6182
    %v6353 = vmul.f32 %v4371, %v6184
    %v6354 = vmul.f32 %v4386, %v6186
    %v6355 = vmul.f32 %v4401, %v6188
    %v6356 = vmul.f32 %v4416, %v6190
    %v6357 = vmul.f32 %v4431, %v6192
    %v6358 = vmul.f32 %v4446, %v6194
    %v6359 = vmul.f32 %v4461, %v6196
    %v6360 = vmul.f32 %v4476, %v6198
    %v6361 = vmul.f32 %v4491, %v6200
    %v6362 = vmul.f32 %v4506, %v6202
    %v6363 = vmul.f32 %v4521, %v6204
    %v6364 = vmul.f32 %v4536, %v6206
    %v6365 = vmul.f32 %v4551, %v6208
    %v6366 = vmul.f32 %v4566, %v6210
    %v6367 = vmul.f32 %v4581, %v6212
    %v6368 = vmul.f32 %v4596, %v6214
    %v6369 = vmul.f32 %v4611, %v6216
    %v6370 = vmul.f32 %v4626, %v6218
    %v6371 = vmul.f32 %v4641, %v6220
    %v6372 = vmul.f32 %v4656, %v6222
    %v6373 = vmul.f32 %v4671, %v6224
    %v6374 = vmul.f32 %v4686, %v6226
    %v6375 = vmul.f32 %v4701, %v6228
    %v6376 = vmul.f32 %v4716, %v6230
    %v6377 = vmul.f32 %v4731, %v6232
    %v6378 = vmul.f32 %v4746, %v6234
    %v6379 = vmul.f32 %v4761, %v6236
    %v6380 = vmul.f32 %v4776, %v6238
    %v6381 = vmul.f32 %v4791, %v6240
    %v6382 = vmul.f32 %v4806, %v6242
    %v6383 = vmul.f32 %v4821, %v6244
    %v6384 = vmul.f32 %v4836, %v6246
    %v6385 = vmul.f32 %v4851, %v6248
    %v6386 = vmul.f32 %v4866, %v6250
    %v6387 = vmul.f32 %v4881, %v6252
    %v6388 = vmul.f32 %v4896, %v6254
    %v6389 = vmul.f32 %v4911, %v6256
    %v6390 = vmul.f32 %v4926, %v6258
    %v6391 = vmul.f32 %v4941, %v6260
    %v6392 = vmul.f32 %v4956, %v6262
    %v6393 = vmul.f32 %v4971, %v6264
    %v6394 = vmul.f32 %v4986, %v6266
    %6459 = vrot.lane.b32.xlu0 %v5947, 96
    %v6460 = vpop.permute.xlu0 %6459
    %6461 = vrot.lane.b32.xlu0 %v5948, 96
    %v6462 = vpop.permute.xlu0 %6461
    %6463 = vrot.lane.b32.xlu0 %v5949, 96
    %v6464 = vpop.permute.xlu0 %6463
    %6465 = vrot.lane.b32.xlu0 %v5950, 96
    %v6466 = vpop.permute.xlu0 %6465
    %6467 = vrot.lane.b32.xlu0 %v5951, 96
    %v6468 = vpop.permute.xlu0 %6467
    %6469 = vrot.lane.b32.xlu0 %v5952, 96
    %v6470 = vpop.permute.xlu0 %6469
    %6471 = vrot.lane.b32.xlu0 %v5953, 96
    %v6472 = vpop.permute.xlu0 %6471
    %6473 = vrot.lane.b32.xlu0 %v5954, 96
    %v6474 = vpop.permute.xlu0 %6473
    %6475 = vrot.lane.b32.xlu0 %v5955, 96
    %v6476 = vpop.permute.xlu0 %6475
    %6477 = vrot.lane.b32.xlu0 %v5956, 96
    %v6478 = vpop.permute.xlu0 %6477
    %6479 = vrot.lane.b32.xlu0 %v5957, 96
    %v6480 = vpop.permute.xlu0 %6479
    %6481 = vrot.lane.b32.xlu0 %v5958, 96
    %v6482 = vpop.permute.xlu0 %6481
    %6483 = vrot.lane.b32.xlu0 %v5959, 96
    %v6484 = vpop.permute.xlu0 %6483
    %6485 = vrot.lane.b32.xlu0 %v5960, 96
    %v6486 = vpop.permute.xlu0 %6485
    %6487 = vrot.lane.b32.xlu0 %v5961, 96
    %v6488 = vpop.permute.xlu0 %6487
    %6489 = vrot.lane.b32.xlu0 %v5962, 96
    %v6490 = vpop.permute.xlu0 %6489
    %6491 = vrot.lane.b32.xlu0 %v5963, 96
    %v6492 = vpop.permute.xlu0 %6491
    %6493 = vrot.lane.b32.xlu0 %v5964, 96
    %v6494 = vpop.permute.xlu0 %6493
    %6495 = vrot.lane.b32.xlu0 %v5965, 96
    %v6496 = vpop.permute.xlu0 %6495
    %6497 = vrot.lane.b32.xlu0 %v5966, 96
    %v6498 = vpop.permute.xlu0 %6497
    %6499 = vrot.lane.b32.xlu0 %v5967, 96
    %v6500 = vpop.permute.xlu0 %6499
    %6501 = vrot.lane.b32.xlu0 %v5968, 96
    %v6502 = vpop.permute.xlu0 %6501
    %6503 = vrot.lane.b32.xlu0 %v5969, 96
    %v6504 = vpop.permute.xlu0 %6503
    %6505 = vrot.lane.b32.xlu0 %v5970, 96
    %v6506 = vpop.permute.xlu0 %6505
    %6507 = vrot.lane.b32.xlu0 %v5971, 96
    %v6508 = vpop.permute.xlu0 %6507
    %6509 = vrot.lane.b32.xlu0 %v5972, 96
    %v6510 = vpop.permute.xlu0 %6509
    %6511 = vrot.lane.b32.xlu0 %v5973, 96
    %v6512 = vpop.permute.xlu0 %6511
    %6513 = vrot.lane.b32.xlu0 %v5974, 96
    %v6514 = vpop.permute.xlu0 %6513
    %6515 = vrot.lane.b32.xlu0 %v5975, 96
    %v6516 = vpop.permute.xlu0 %6515
    %6517 = vrot.lane.b32.xlu0 %v5976, 96
    %v6518 = vpop.permute.xlu0 %6517
    %6519 = vrot.lane.b32.xlu0 %v5977, 96
    %v6520 = vpop.permute.xlu0 %6519
    %6521 = vrot.lane.b32.xlu0 %v5978, 96
    %v6522 = vpop.permute.xlu0 %6521
    %6523 = vrot.lane.b32.xlu0 %v5979, 96
    %v6524 = vpop.permute.xlu0 %6523
    %6525 = vrot.lane.b32.xlu0 %v5980, 96
    %v6526 = vpop.permute.xlu0 %6525
    %6527 = vrot.lane.b32.xlu0 %v5981, 96
    %v6528 = vpop.permute.xlu0 %6527
    %6529 = vrot.lane.b32.xlu0 %v5982, 96
    %v6530 = vpop.permute.xlu0 %6529
    %6531 = vrot.lane.b32.xlu0 %v5983, 96
    %v6532 = vpop.permute.xlu0 %6531
    %6533 = vrot.lane.b32.xlu0 %v5984, 96
    %v6534 = vpop.permute.xlu0 %6533
    %6535 = vrot.lane.b32.xlu0 %v5985, 96
    %v6536 = vpop.permute.xlu0 %6535
    %6537 = vrot.lane.b32.xlu0 %v5986, 96
    %v6538 = vpop.permute.xlu0 %6537
    %6539 = vrot.lane.b32.xlu0 %v5987, 96
    %v6540 = vpop.permute.xlu0 %6539
    %6541 = vrot.lane.b32.xlu0 %v5988, 96
    %v6542 = vpop.permute.xlu0 %6541
    %6543 = vrot.lane.b32.xlu0 %v5989, 96
    %v6544 = vpop.permute.xlu0 %6543
    %6545 = vrot.lane.b32.xlu0 %v5990, 96
    %v6546 = vpop.permute.xlu0 %6545
    %6547 = vrot.lane.b32.xlu0 %v5991, 96
    %v6548 = vpop.permute.xlu0 %6547
    %6549 = vrot.lane.b32.xlu0 %v5992, 96
    %v6550 = vpop.permute.xlu0 %6549
    %6551 = vrot.lane.b32.xlu0 %v5993, 96
    %v6552 = vpop.permute.xlu0 %6551
    %6553 = vrot.lane.b32.xlu0 %v5994, 96
    %v6554 = vpop.permute.xlu0 %6553
    %6555 = vrot.lane.b32.xlu0 %v5995, 96
    %v6556 = vpop.permute.xlu0 %6555
    %6557 = vrot.lane.b32.xlu0 %v5996, 96
    %v6558 = vpop.permute.xlu0 %6557
    %6559 = vrot.lane.b32.xlu0 %v5997, 96
    %v6560 = vpop.permute.xlu0 %6559
    %6561 = vrot.lane.b32.xlu0 %v5998, 96
    %v6562 = vpop.permute.xlu0 %6561
    %6563 = vrot.lane.b32.xlu0 %v5999, 96
    %v6564 = vpop.permute.xlu0 %6563
    %6565 = vrot.lane.b32.xlu0 %v6000, 96
    %v6566 = vpop.permute.xlu0 %6565
    %6567 = vrot.lane.b32.xlu0 %v6001, 96
    %v6568 = vpop.permute.xlu0 %6567
    %6569 = vrot.lane.b32.xlu0 %v6002, 96
    %v6570 = vpop.permute.xlu0 %6569
    %6571 = vrot.lane.b32.xlu0 %v6003, 96
    %v6572 = vpop.permute.xlu0 %6571
    %6573 = vrot.lane.b32.xlu0 %v6004, 96
    %v6574 = vpop.permute.xlu0 %6573
    %6575 = vrot.lane.b32.xlu0 %v6005, 96
    %v6576 = vpop.permute.xlu0 %6575
    %6577 = vrot.lane.b32.xlu0 %v6006, 96
    %v6578 = vpop.permute.xlu0 %6577
    %6579 = vrot.lane.b32.xlu0 %v6007, 96
    %v6580 = vpop.permute.xlu0 %6579
    %6581 = vrot.lane.b32.xlu0 %v6008, 96
    %v6582 = vpop.permute.xlu0 %6581
    %6583 = vrot.lane.b32.xlu0 %v6009, 96
    %v6584 = vpop.permute.xlu0 %6583
    %6585 = vrot.lane.b32.xlu0 %v6010, 96
    %v6586 = vpop.permute.xlu0 %6585
    %6651 = vst.msk [vmem:[#allocation3] sm:$0xff] %vm18, %v6460
    %6652 = vst.msk [vmem:[#allocation3 + $0x8] sm:$0xff] %vm18, %v6462
    %6653 = vst.msk [vmem:[#allocation3 + $0x10] sm:$0xff] %vm18, %v6464
    %6654 = vst.msk [vmem:[#allocation3 + $0x18] sm:$0xff] %vm18, %v6466
    %6655 = vst.msk [vmem:[#allocation3 + $0x20] sm:$0xff] %vm18, %v6468
    %6656 = vst.msk [vmem:[#allocation3 + $0x28] sm:$0xff] %vm18, %v6470
    %6657 = vst.msk [vmem:[#allocation3 + $0x30] sm:$0xff] %vm18, %v6472
    %6658 = vst.msk [vmem:[#allocation3 + $0x38] sm:$0xff] %vm18, %v6474
    %6659 = vst.msk [vmem:[#allocation3 + $0x40] sm:$0xff] %vm18, %v6476
    %6660 = vst.msk [vmem:[#allocation3 + $0x48] sm:$0xff] %vm18, %v6478
    %6661 = vst.msk [vmem:[#allocation3 + $0x50] sm:$0xff] %vm18, %v6480
    %6662 = vst.msk [vmem:[#allocation3 + $0x58] sm:$0xff] %vm18, %v6482
    %6663 = vst.msk [vmem:[#allocation3 + $0x60] sm:$0xff] %vm18, %v6484
    %6664 = vst.msk [vmem:[#allocation3 + $0x68] sm:$0xff] %vm18, %v6486
    %6665 = vst.msk [vmem:[#allocation3 + $0x70] sm:$0xff] %vm18, %v6488
    %6666 = vst.msk [vmem:[#allocation3 + $0x78] sm:$0xff] %vm18, %v6490
    %6667 = vst.msk [vmem:[#allocation3 + $0x80] sm:$0xff] %vm18, %v6492
    %6668 = vst.msk [vmem:[#allocation3 + $0x88] sm:$0xff] %vm18, %v6494
    %6669 = vst.msk [vmem:[#allocation3 + $0x90] sm:$0xff] %vm18, %v6496
    %6670 = vst.msk [vmem:[#allocation3 + $0x98] sm:$0xff] %vm18, %v6498
    %6671 = vst.msk [vmem:[#allocation3 + $0xa0] sm:$0xff] %vm18, %v6500
    %6672 = vst.msk [vmem:[#allocation3 + $0xa8] sm:$0xff] %vm18, %v6502
    %6673 = vst.msk [vmem:[#allocation3 + $0xb0] sm:$0xff] %vm18, %v6504
    %6674 = vst.msk [vmem:[#allocation3 + $0xb8] sm:$0xff] %vm18, %v6506
    %6675 = vst.msk [vmem:[#allocation3 + $0xc0] sm:$0xff] %vm18, %v6508
    %6676 = vst.msk [vmem:[#allocation3 + $0xc8] sm:$0xff] %vm18, %v6510
    %6677 = vst.msk [vmem:[#allocation3 + $0xd0] sm:$0xff] %vm18, %v6512
    %6678 = vst.msk [vmem:[#allocation3 + $0xd8] sm:$0xff] %vm18, %v6514
    %6679 = vst.msk [vmem:[#allocation3 + $0xe0] sm:$0xff] %vm18, %v6516
    %6680 = vst.msk [vmem:[#allocation3 + $0xe8] sm:$0xff] %vm18, %v6518
    %6681 = vst.msk [vmem:[#allocation3 + $0xf0] sm:$0xff] %vm18, %v6520
    %6682 = vst.msk [vmem:[#allocation3 + $0xf8] sm:$0xff] %vm18, %v6522
    %6683 = vst.msk [vmem:[#allocation3 + $0x100] sm:$0xff] %vm18, %v6524
    %6684 = vst.msk [vmem:[#allocation3 + $0x108] sm:$0xff] %vm18, %v6526
    %6685 = vst.msk [vmem:[#allocation3 + $0x110] sm:$0xff] %vm18, %v6528
    %6686 = vst.msk [vmem:[#allocation3 + $0x118] sm:$0xff] %vm18, %v6530
    %6687 = vst.msk [vmem:[#allocation3 + $0x120] sm:$0xff] %vm18, %v6532
    %6688 = vst.msk [vmem:[#allocation3 + $0x128] sm:$0xff] %vm18, %v6534
    %6689 = vst.msk [vmem:[#allocation3 + $0x130] sm:$0xff] %vm18, %v6536
    %6690 = vst.msk [vmem:[#allocation3 + $0x138] sm:$0xff] %vm18, %v6538
    %6691 = vst.msk [vmem:[#allocation3 + $0x140] sm:$0xff] %vm18, %v6540
    %6692 = vst.msk [vmem:[#allocation3 + $0x148] sm:$0xff] %vm18, %v6542
    %6693 = vst.msk [vmem:[#allocation3 + $0x150] sm:$0xff] %vm18, %v6544
    %6694 = vst.msk [vmem:[#allocation3 + $0x158] sm:$0xff] %vm18, %v6546
    %6695 = vst.msk [vmem:[#allocation3 + $0x160] sm:$0xff] %vm18, %v6548
    %6696 = vst.msk [vmem:[#allocation3 + $0x168] sm:$0xff] %vm18, %v6550
    %6697 = vst.msk [vmem:[#allocation3 + $0x170] sm:$0xff] %vm18, %v6552
    %6698 = vst.msk [vmem:[#allocation3 + $0x178] sm:$0xff] %vm18, %v6554
    %6699 = vst.msk [vmem:[#allocation3 + $0x180] sm:$0xff] %vm18, %v6556
    %6700 = vst.msk [vmem:[#allocation3 + $0x188] sm:$0xff] %vm18, %v6558
    %6701 = vst.msk [vmem:[#allocation3 + $0x190] sm:$0xff] %vm18, %v6560
    %6702 = vst.msk [vmem:[#allocation3 + $0x198] sm:$0xff] %vm18, %v6562
    %6703 = vst.msk [vmem:[#allocation3 + $0x1a0] sm:$0xff] %vm18, %v6564
    %6704 = vst.msk [vmem:[#allocation3 + $0x1a8] sm:$0xff] %vm18, %v6566
    %6705 = vst.msk [vmem:[#allocation3 + $0x1b0] sm:$0xff] %vm18, %v6568
    %6706 = vst.msk [vmem:[#allocation3 + $0x1b8] sm:$0xff] %vm18, %v6570
    %6707 = vst.msk [vmem:[#allocation3 + $0x1c0] sm:$0xff] %vm18, %v6572
    %6708 = vst.msk [vmem:[#allocation3 + $0x1c8] sm:$0xff] %vm18, %v6574
    %6709 = vst.msk [vmem:[#allocation3 + $0x1d0] sm:$0xff] %vm18, %v6576
    %6710 = vst.msk [vmem:[#allocation3 + $0x1d8] sm:$0xff] %vm18, %v6578
    %6711 = vst.msk [vmem:[#allocation3 + $0x1e0] sm:$0xff] %vm18, %v6580
    %6712 = vst.msk [vmem:[#allocation3 + $0x1e8] sm:$0xff] %vm18, %v6582
    %6713 = vst.msk [vmem:[#allocation3 + $0x1f0] sm:$0xff] %vm18, %v6584
    %6714 = vst.msk [vmem:[#allocation3 + $0x1f8] sm:$0xff] %vm18, %v6586
    %6779 = vrot.lane.b32.xlu0 %v6331, 32
    %v6780 = vpop.permute.xlu0 %6779
    %6781 = vrot.lane.b32.xlu0 %v6332, 32
    %v6782 = vpop.permute.xlu0 %6781
    %6783 = vrot.lane.b32.xlu0 %v6333, 32
    %v6784 = vpop.permute.xlu0 %6783
    %6785 = vrot.lane.b32.xlu0 %v6334, 32
    %v6786 = vpop.permute.xlu0 %6785
    %6787 = vrot.lane.b32.xlu0 %v6335, 32
    %v6788 = vpop.permute.xlu0 %6787
    %6789 = vrot.lane.b32.xlu0 %v6336, 32
    %v6790 = vpop.permute.xlu0 %6789
    %6791 = vrot.lane.b32.xlu0 %v6337, 32
    %v6792 = vpop.permute.xlu0 %6791
    %6793 = vrot.lane.b32.xlu0 %v6338, 32
    %v6794 = vpop.permute.xlu0 %6793
    %6795 = vrot.lane.b32.xlu0 %v6339, 32
    %v6796 = vpop.permute.xlu0 %6795
    %6797 = vrot.lane.b32.xlu0 %v6340, 32
    %v6798 = vpop.permute.xlu0 %6797
    %6799 = vrot.lane.b32.xlu0 %v6341, 32
    %v6800 = vpop.permute.xlu0 %6799
    %6801 = vrot.lane.b32.xlu0 %v6342, 32
    %v6802 = vpop.permute.xlu0 %6801
    %6803 = vrot.lane.b32.xlu0 %v6343, 32
    %v6804 = vpop.permute.xlu0 %6803
    %6805 = vrot.lane.b32.xlu0 %v6344, 32
    %v6806 = vpop.permute.xlu0 %6805
    %6807 = vrot.lane.b32.xlu0 %v6345, 32
    %v6808 = vpop.permute.xlu0 %6807
    %6809 = vrot.lane.b32.xlu0 %v6346, 32
    %v6810 = vpop.permute.xlu0 %6809
    %6811 = vrot.lane.b32.xlu0 %v6347, 32
    %v6812 = vpop.permute.xlu0 %6811
    %6813 = vrot.lane.b32.xlu0 %v6348, 32
    %v6814 = vpop.permute.xlu0 %6813
    %6815 = vrot.lane.b32.xlu0 %v6349, 32
    %v6816 = vpop.permute.xlu0 %6815
    %6817 = vrot.lane.b32.xlu0 %v6350, 32
    %v6818 = vpop.permute.xlu0 %6817
    %6819 = vrot.lane.b32.xlu0 %v6351, 32
    %v6820 = vpop.permute.xlu0 %6819
    %6821 = vrot.lane.b32.xlu0 %v6352, 32
    %v6822 = vpop.permute.xlu0 %6821
    %6823 = vrot.lane.b32.xlu0 %v6353, 32
    %v6824 = vpop.permute.xlu0 %6823
    %6825 = vrot.lane.b32.xlu0 %v6354, 32
    %v6826 = vpop.permute.xlu0 %6825
    %6827 = vrot.lane.b32.xlu0 %v6355, 32
    %v6828 = vpop.permute.xlu0 %6827
    %6829 = vrot.lane.b32.xlu0 %v6356, 32
    %v6830 = vpop.permute.xlu0 %6829
    %6831 = vrot.lane.b32.xlu0 %v6357, 32
    %v6832 = vpop.permute.xlu0 %6831
    %6833 = vrot.lane.b32.xlu0 %v6358, 32
    %v6834 = vpop.permute.xlu0 %6833
    %6835 = vrot.lane.b32.xlu0 %v6359, 32
    %v6836 = vpop.permute.xlu0 %6835
    %6837 = vrot.lane.b32.xlu0 %v6360, 32
    %v6838 = vpop.permute.xlu0 %6837
    %6839 = vrot.lane.b32.xlu0 %v6361, 32
    %v6840 = vpop.permute.xlu0 %6839
    %6841 = vrot.lane.b32.xlu0 %v6362, 32
    %v6842 = vpop.permute.xlu0 %6841
    %6843 = vrot.lane.b32.xlu0 %v6363, 32
    %v6844 = vpop.permute.xlu0 %6843
    %6845 = vrot.lane.b32.xlu0 %v6364, 32
    %v6846 = vpop.permute.xlu0 %6845
    %6847 = vrot.lane.b32.xlu0 %v6365, 32
    %v6848 = vpop.permute.xlu0 %6847
    %6849 = vrot.lane.b32.xlu0 %v6366, 32
    %v6850 = vpop.permute.xlu0 %6849
    %6851 = vrot.lane.b32.xlu0 %v6367, 32
    %v6852 = vpop.permute.xlu0 %6851
    %6853 = vrot.lane.b32.xlu0 %v6368, 32
    %v6854 = vpop.permute.xlu0 %6853
    %6855 = vrot.lane.b32.xlu0 %v6369, 32
    %v6856 = vpop.permute.xlu0 %6855
    %6857 = vrot.lane.b32.xlu0 %v6370, 32
    %v6858 = vpop.permute.xlu0 %6857
    %6859 = vrot.lane.b32.xlu0 %v6371, 32
    %v6860 = vpop.permute.xlu0 %6859
    %6861 = vrot.lane.b32.xlu0 %v6372, 32
    %v6862 = vpop.permute.xlu0 %6861
    %6863 = vrot.lane.b32.xlu0 %v6373, 32
    %v6864 = vpop.permute.xlu0 %6863
    %6865 = vrot.lane.b32.xlu0 %v6374, 32
    %v6866 = vpop.permute.xlu0 %6865
    %6867 = vrot.lane.b32.xlu0 %v6375, 32
    %v6868 = vpop.permute.xlu0 %6867
    %6869 = vrot.lane.b32.xlu0 %v6376, 32
    %v6870 = vpop.permute.xlu0 %6869
    %6871 = vrot.lane.b32.xlu0 %v6377, 32
    %v6872 = vpop.permute.xlu0 %6871
    %6873 = vrot.lane.b32.xlu0 %v6378, 32
    %v6874 = vpop.permute.xlu0 %6873
    %6875 = vrot.lane.b32.xlu0 %v6379, 32
    %v6876 = vpop.permute.xlu0 %6875
    %6877 = vrot.lane.b32.xlu0 %v6380, 32
    %v6878 = vpop.permute.xlu0 %6877
    %6879 = vrot.lane.b32.xlu0 %v6381, 32
    %v6880 = vpop.permute.xlu0 %6879
    %6881 = vrot.lane.b32.xlu0 %v6382, 32
    %v6882 = vpop.permute.xlu0 %6881
    %6883 = vrot.lane.b32.xlu0 %v6383, 32
    %v6884 = vpop.permute.xlu0 %6883
    %6885 = vrot.lane.b32.xlu0 %v6384, 32
    %v6886 = vpop.permute.xlu0 %6885
    %6887 = vrot.lane.b32.xlu0 %v6385, 32
    %v6888 = vpop.permute.xlu0 %6887
    %6889 = vrot.lane.b32.xlu0 %v6386, 32
    %v6890 = vpop.permute.xlu0 %6889
    %6891 = vrot.lane.b32.xlu0 %v6387, 32
    %v6892 = vpop.permute.xlu0 %6891
    %6893 = vrot.lane.b32.xlu0 %v6388, 32
    %v6894 = vpop.permute.xlu0 %6893
    %6895 = vrot.lane.b32.xlu0 %v6389, 32
    %v6896 = vpop.permute.xlu0 %6895
    %6897 = vrot.lane.b32.xlu0 %v6390, 32
    %v6898 = vpop.permute.xlu0 %6897
    %6899 = vrot.lane.b32.xlu0 %v6391, 32
    %v6900 = vpop.permute.xlu0 %6899
    %6901 = vrot.lane.b32.xlu0 %v6392, 32
    %v6902 = vpop.permute.xlu0 %6901
    %6903 = vrot.lane.b32.xlu0 %v6393, 32
    %v6904 = vpop.permute.xlu0 %6903
    %6905 = vrot.lane.b32.xlu0 %v6394, 32
    %v6906 = vpop.permute.xlu0 %6905
    %s6971 = scalar_lea.vmem [#allocation2], 24
    %6972 = vst.msk [vmem:[%s6971 + $0x1] sm:$0xff] %vm18, %v6780
    %6973 = vst.msk [vmem:[%s6971 + $0x9] sm:$0xff] %vm18, %v6782
    %6974 = vst.msk [vmem:[%s6971 + $0x19] sm:$0xff] %vm18, %v6784
    %6975 = vst.msk [vmem:[%s6971 + $0x21] sm:$0xff] %vm18, %v6786
    %6976 = vst.msk [vmem:[%s6971 + $0x31] sm:$0xff] %vm18, %v6788
    %6977 = vst.msk [vmem:[%s6971 + $0x39] sm:$0xff] %vm18, %v6790
    %6978 = vst.msk [vmem:[%s6971 + $0x49] sm:$0xff] %vm18, %v6792
    %6979 = vst.msk [vmem:[%s6971 + $0x51] sm:$0xff] %vm18, %v6794
    %6980 = vst.msk [vmem:[%s6971 + $0x61] sm:$0xff] %vm18, %v6796
    %6981 = vst.msk [vmem:[%s6971 + $0x69] sm:$0xff] %vm18, %v6798
    %6982 = vst.msk [vmem:[%s6971 + $0x79] sm:$0xff] %vm18, %v6800
    %6983 = vst.msk [vmem:[%s6971 + $0x81] sm:$0xff] %vm18, %v6802
    %6984 = vst.msk [vmem:[%s6971 + $0x91] sm:$0xff] %vm18, %v6804
    %6985 = vst.msk [vmem:[%s6971 + $0x99] sm:$0xff] %vm18, %v6806
    %6986 = vst.msk [vmem:[%s6971 + $0xa9] sm:$0xff] %vm18, %v6808
    %6987 = vst.msk [vmem:[%s6971 + $0xb1] sm:$0xff] %vm18, %v6810
    %6988 = vst.msk [vmem:[%s6971 + $0xc1] sm:$0xff] %vm18, %v6812
    %6989 = vst.msk [vmem:[%s6971 + $0xc9] sm:$0xff] %vm18, %v6814
    %6990 = vst.msk [vmem:[%s6971 + $0xd9] sm:$0xff] %vm18, %v6816
    %6991 = vst.msk [vmem:[%s6971 + $0xe1] sm:$0xff] %vm18, %v6818
    %6992 = vst.msk [vmem:[%s6971 + $0xf1] sm:$0xff] %vm18, %v6820
    %6993 = vst.msk [vmem:[%s6971 + $0xf9] sm:$0xff] %vm18, %v6822
    %6994 = vst.msk [vmem:[%s6971 + $0x109] sm:$0xff] %vm18, %v6824
    %6995 = vst.msk [vmem:[%s6971 + $0x111] sm:$0xff] %vm18, %v6826
    %6996 = vst.msk [vmem:[%s6971 + $0x121] sm:$0xff] %vm18, %v6828
    %6997 = vst.msk [vmem:[%s6971 + $0x129] sm:$0xff] %vm18, %v6830
    %6998 = vst.msk [vmem:[%s6971 + $0x139] sm:$0xff] %vm18, %v6832
    %6999 = vst.msk [vmem:[%s6971 + $0x141] sm:$0xff] %vm18, %v6834
    %7000 = vst.msk [vmem:[%s6971 + $0x151] sm:$0xff] %vm18, %v6836
    %7001 = vst.msk [vmem:[%s6971 + $0x159] sm:$0xff] %vm18, %v6838
    %7002 = vst.msk [vmem:[%s6971 + $0x169] sm:$0xff] %vm18, %v6840
    %7003 = vst.msk [vmem:[%s6971 + $0x171] sm:$0xff] %vm18, %v6842
    %7004 = vst.msk [vmem:[%s6971 + $0x1b1] sm:$0xff] %vm18, %v6844
    %7005 = vst.msk [vmem:[%s6971 + $0x1b9] sm:$0xff] %vm18, %v6846
    %7006 = vst.msk [vmem:[%s6971 + $0x1c9] sm:$0xff] %vm18, %v6848
    %7007 = vst.msk [vmem:[%s6971 + $0x1d1] sm:$0xff] %vm18, %v6850
    %7008 = vst.msk [vmem:[%s6971 + $0x1e1] sm:$0xff] %vm18, %v6852
    %7009 = vst.msk [vmem:[%s6971 + $0x1e9] sm:$0xff] %vm18, %v6854
    %7010 = vst.msk [vmem:[%s6971 + $0x1f9] sm:$0xff] %vm18, %v6856
    %7011 = vst.msk [vmem:[%s6971 + $0x201] sm:$0xff] %vm18, %v6858
    %7012 = vst.msk [vmem:[%s6971 + $0x211] sm:$0xff] %vm18, %v6860
    %7013 = vst.msk [vmem:[%s6971 + $0x219] sm:$0xff] %vm18, %v6862
    %7014 = vst.msk [vmem:[%s6971 + $0x229] sm:$0xff] %vm18, %v6864
    %7015 = vst.msk [vmem:[%s6971 + $0x231] sm:$0xff] %vm18, %v6866
    %7016 = vst.msk [vmem:[%s6971 + $0x241] sm:$0xff] %vm18, %v6868
    %7017 = vst.msk [vmem:[%s6971 + $0x249] sm:$0xff] %vm18, %v6870
    %7018 = vst.msk [vmem:[%s6971 + $0x259] sm:$0xff] %vm18, %v6872
    %7019 = vst.msk [vmem:[%s6971 + $0x261] sm:$0xff] %vm18, %v6874
    %7020 = vst.msk [vmem:[%s6971 + $0x271] sm:$0xff] %vm18, %v6876
    %7021 = vst.msk [vmem:[%s6971 + $0x279] sm:$0xff] %vm18, %v6878
    %7022 = vst.msk [vmem:[%s6971 + $0x289] sm:$0xff] %vm18, %v6880
    %7023 = vst.msk [vmem:[%s6971 + $0x291] sm:$0xff] %vm18, %v6882
    %7024 = vst.msk [vmem:[%s6971 + $0x2a1] sm:$0xff] %vm18, %v6884
    %7025 = vst.msk [vmem:[%s6971 + $0x2a9] sm:$0xff] %vm18, %v6886
    %7026 = vst.msk [vmem:[%s6971 + $0x2b9] sm:$0xff] %vm18, %v6888
    %7027 = vst.msk [vmem:[%s6971 + $0x2c1] sm:$0xff] %vm18, %v6890
    %7028 = vst.msk [vmem:[%s6971 + $0x2d1] sm:$0xff] %vm18, %v6892
    %7029 = vst.msk [vmem:[%s6971 + $0x2d9] sm:$0xff] %vm18, %v6894
    %7030 = vst.msk [vmem:[%s6971 + $0x2e9] sm:$0xff] %vm18, %v6896
    %7031 = vst.msk [vmem:[%s6971 + $0x2f1] sm:$0xff] %vm18, %v6898
    %7032 = vst.msk [vmem:[%s6971 + $0x301] sm:$0xff] %vm18, %v6900
    %7033 = vst.msk [vmem:[%s6971 + $0x309] sm:$0xff] %vm18, %v6902
    %7034 = vst.msk [vmem:[%s6971 + $0x319] sm:$0xff] %vm18, %v6904
    %7035 = vst.msk [vmem:[%s6971 + $0x321] sm:$0xff] %vm18, %v6906
    %v7036 = vrot.slane %v6788, 4
    %vm7037 = vcmask 1047556
    %v7038 = vsel %vm7037, %v7036, %v6780
    %v7039 = vrot.slane %v6780, 4
    %v7040 = vsel %vm7037, %v6788, %v7039
    %v7042 = vunpack.c.l.s4 1983009808
    %v7043 = vunpack.c.0.s8 %v7042
    %v7044 = vperm.slane %v7038, %v7043
    %v7046 = vunpack.c.l.s4 1983009808
    %v7047 = vunpack.c.0.s8 %v7046
    %v7048 = vperm.slane %v7040, %v7047
    %v7049 = vrot.slane %v6792, 4
    %v7050 = vsel %vm7037, %v7049, %v6784
    %v7051 = vrot.slane %v6784, 4
    %v7052 = vsel %vm7037, %v6792, %v7051
    %v7054 = vunpack.c.l.s4 1983009808
    %v7055 = vunpack.c.0.s8 %v7054
    %v7056 = vperm.slane %v7050, %v7055
    %v7058 = vunpack.c.l.s4 1983009808
    %v7059 = vunpack.c.0.s8 %v7058
    %v7060 = vperm.slane %v7052, %v7059
    %v7061 = vrot.slane %v6804, 4
    %v7062 = vsel %vm7037, %v7061, %v6796
    %v7063 = vrot.slane %v6796, 4
    %v7064 = vsel %vm7037, %v6804, %v7063
    %v7066 = vunpack.c.l.s4 1983009808
    %v7067 = vunpack.c.0.s8 %v7066
    %v7068 = vperm.slane %v7062, %v7067
    %v7070 = vunpack.c.l.s4 1983009808
    %v7071 = vunpack.c.0.s8 %v7070
    %v7072 = vperm.slane %v7064, %v7071
    %v7073 = vrot.slane %v6808, 4
    %v7074 = vsel %vm7037, %v7073, %v6800
    %v7075 = vrot.slane %v6800, 4
    %v7076 = vsel %vm7037, %v6808, %v7075
    %v7078 = vunpack.c.l.s4 1983009808
    %v7079 = vunpack.c.0.s8 %v7078
    %v7080 = vperm.slane %v7074, %v7079
    %v7082 = vunpack.c.l.s4 1983009808
    %v7083 = vunpack.c.0.s8 %v7082
    %v7084 = vperm.slane %v7076, %v7083
    %v7085 = vrot.slane %v7056, 4
    %v7086 = vsel %vm7037, %v7085, %v7044
    %v7087 = vrot.slane %v7044, 4
    %v7088 = vsel %vm7037, %v7056, %v7087
    %v7090 = vunpack.c.l.s4 1934713408
    %v7091 = vunpack.c.0.s8 %v7090
    %v7092 = vperm.slane %v7086, %v7091
    %v7094 = vunpack.c.l.s4 1934713408
    %v7095 = vunpack.c.0.s8 %v7094
    %v7096 = vperm.slane %v7088, %v7095
    %v7097 = vrot.slane %v7060, 4
    %v7098 = vsel %vm7037, %v7097, %v7048
    %v7099 = vrot.slane %v7048, 4
    %v7100 = vsel %vm7037, %v7060, %v7099
    %v7102 = vunpack.c.l.s4 1934713408
    %v7103 = vunpack.c.0.s8 %v7102
    %v7104 = vperm.slane %v7098, %v7103
    %v7106 = vunpack.c.l.s4 1934713408
    %v7107 = vunpack.c.0.s8 %v7106
    %v7108 = vperm.slane %v7100, %v7107
    %v7109 = vrot.slane %v7080, 4
    %v7110 = vsel %vm7037, %v7109, %v7068
    %v7111 = vrot.slane %v7068, 4
    %v7112 = vsel %vm7037, %v7080, %v7111
    %v7114 = vunpack.c.l.s4 1934713408
    %v7115 = vunpack.c.0.s8 %v7114
    %v7116 = vperm.slane %v7110, %v7115
    %v7118 = vunpack.c.l.s4 1934713408
    %v7119 = vunpack.c.0.s8 %v7118
    %v7120 = vperm.slane %v7112, %v7119
    %v7121 = vrot.slane %v7084, 4
    %v7122 = vsel %vm7037, %v7121, %v7072
    %v7123 = vrot.slane %v7072, 4
    %v7124 = vsel %vm7037, %v7084, %v7123
    %v7126 = vunpack.c.l.s4 1934713408
    %v7127 = vunpack.c.0.s8 %v7126
    %v7128 = vperm.slane %v7122, %v7127
    %v7130 = vunpack.c.l.s4 1934713408
    %v7131 = vunpack.c.0.s8 %v7130
    %v7132 = vperm.slane %v7124, %v7131
    %v7133 = vrot.slane %v7116, 4
    %v7134 = vsel %vm7037, %v7133, %v7092
    %v7135 = vrot.slane %v7092, 4
    %v7136 = vsel %vm7037, %v7116, %v7135
    %v7137 = vrot.slane %v7120, 4
    %v7138 = vsel %vm7037, %v7137, %v7096
    %v7139 = vrot.slane %v7096, 4
    %v7140 = vsel %vm7037, %v7120, %v7139
    %v7141 = vrot.slane %v7128, 4
    %v7142 = vsel %vm7037, %v7141, %v7104
    %v7143 = vrot.slane %v7104, 4
    %v7144 = vsel %vm7037, %v7128, %v7143
    %v7145 = vrot.slane %v7132, 4
    %v7146 = vsel %vm7037, %v7145, %v7108
    %v7147 = vrot.slane %v7108, 4
    %v7148 = vsel %vm7037, %v7132, %v7147
    %v7149 = vrot.slane %v6820, 4
    %v7150 = vsel %vm7037, %v7149, %v6812
    %v7151 = vrot.slane %v6812, 4
    %v7152 = vsel %vm7037, %v6820, %v7151
    %v7154 = vunpack.c.l.s4 1983009808
    %v7155 = vunpack.c.0.s8 %v7154
    %v7156 = vperm.slane %v7150, %v7155
    %v7158 = vunpack.c.l.s4 1983009808
    %v7159 = vunpack.c.0.s8 %v7158
    %v7160 = vperm.slane %v7152, %v7159
    %v7161 = vrot.slane %v6824, 4
    %v7162 = vsel %vm7037, %v7161, %v6816
    %v7163 = vrot.slane %v6816, 4
    %v7164 = vsel %vm7037, %v6824, %v7163
    %v7166 = vunpack.c.l.s4 1983009808
    %v7167 = vunpack.c.0.s8 %v7166
    %v7168 = vperm.slane %v7162, %v7167
    %v7170 = vunpack.c.l.s4 1983009808
    %v7171 = vunpack.c.0.s8 %v7170
    %v7172 = vperm.slane %v7164, %v7171
    %v7173 = vrot.slane %v6836, 4
    %v7174 = vsel %vm7037, %v7173, %v6828
    %v7175 = vrot.slane %v6828, 4
    %v7176 = vsel %vm7037, %v6836, %v7175
    %v7178 = vunpack.c.l.s4 1983009808
    %v7179 = vunpack.c.0.s8 %v7178
    %v7180 = vperm.slane %v7174, %v7179
    %v7182 = vunpack.c.l.s4 1983009808
    %v7183 = vunpack.c.0.s8 %v7182
    %v7184 = vperm.slane %v7176, %v7183
    %v7185 = vrot.slane %v6840, 4
    %v7186 = vsel %vm7037, %v7185, %v6832
    %v7187 = vrot.slane %v6832, 4
    %v7188 = vsel %vm7037, %v6840, %v7187
    %v7190 = vunpack.c.l.s4 1983009808
    %v7191 = vunpack.c.0.s8 %v7190
    %v7192 = vperm.slane %v7186, %v7191
    %v7194 = vunpack.c.l.s4 1983009808
    %v7195 = vunpack.c.0.s8 %v7194
    %v7196 = vperm.slane %v7188, %v7195
    %v7197 = vrot.slane %v7168, 4
    %v7198 = vsel %vm7037, %v7197, %v7156
    %v7199 = vrot.slane %v7156, 4
    %v7200 = vsel %vm7037, %v7168, %v7199
    %v7202 = vunpack.c.l.s4 1934713408
    %v7203 = vunpack.c.0.s8 %v7202
    %v7204 = vperm.slane %v7198, %v7203
    %v7206 = vunpack.c.l.s4 1934713408
    %v7207 = vunpack.c.0.s8 %v7206
    %v7208 = vperm.slane %v7200, %v7207
    %v7209 = vrot.slane %v7172, 4
    %v7210 = vsel %vm7037, %v7209, %v7160
    %v7211 = vrot.slane %v7160, 4
    %v7212 = vsel %vm7037, %v7172, %v7211
    %v7214 = vunpack.c.l.s4 1934713408
    %v7215 = vunpack.c.0.s8 %v7214
    %v7216 = vperm.slane %v7210, %v7215
    %v7218 = vunpack.c.l.s4 1934713408
    %v7219 = vunpack.c.0.s8 %v7218
    %v7220 = vperm.slane %v7212, %v7219
    %v7221 = vrot.slane %v7192, 4
    %v7222 = vsel %vm7037, %v7221, %v7180
    %v7223 = vrot.slane %v7180, 4
    %v7224 = vsel %vm7037, %v7192, %v7223
    %v7226 = vunpack.c.l.s4 1934713408
    %v7227 = vunpack.c.0.s8 %v7226
    %v7228 = vperm.slane %v7222, %v7227
    %v7230 = vunpack.c.l.s4 1934713408
    %v7231 = vunpack.c.0.s8 %v7230
    %v7232 = vperm.slane %v7224, %v7231
    %v7233 = vrot.slane %v7196, 4
    %v7234 = vsel %vm7037, %v7233, %v7184
    %v7235 = vrot.slane %v7184, 4
    %v7236 = vsel %vm7037, %v7196, %v7235
    %v7238 = vunpack.c.l.s4 1934713408
    %v7239 = vunpack.c.0.s8 %v7238
    %v7240 = vperm.slane %v7234, %v7239
    %v7242 = vunpack.c.l.s4 1934713408
    %v7243 = vunpack.c.0.s8 %v7242
    %v7244 = vperm.slane %v7236, %v7243
    %v7245 = vrot.slane %v7228, 4
    %v7246 = vsel %vm7037, %v7245, %v7204
    %v7247 = vrot.slane %v7204, 4
    %v7248 = vsel %vm7037, %v7228, %v7247
    %v7249 = vrot.slane %v7232, 4
    %v7250 = vsel %vm7037, %v7249, %v7208
    %v7251 = vrot.slane %v7208, 4
    %v7252 = vsel %vm7037, %v7232, %v7251
    %v7253 = vrot.slane %v7240, 4
    %v7254 = vsel %vm7037, %v7253, %v7216
    %v7255 = vrot.slane %v7216, 4
    %v7256 = vsel %vm7037, %v7240, %v7255
    %v7257 = vrot.slane %v7244, 4
    %v7258 = vsel %vm7037, %v7257, %v7220
    %v7259 = vrot.slane %v7220, 4
    %v7260 = vsel %vm7037, %v7244, %v7259
    %v7261 = vrot.slane %v6790, 4
    %v7262 = vsel %vm7037, %v7261, %v6782
    %v7263 = vrot.slane %v6782, 4
    %v7264 = vsel %vm7037, %v6790, %v7263
    %v7266 = vunpack.c.l.s4 1983009808
    %v7267 = vunpack.c.0.s8 %v7266
    %v7268 = vperm.slane %v7262, %v7267
    %v7270 = vunpack.c.l.s4 1983009808
    %v7271 = vunpack.c.0.s8 %v7270
    %v7272 = vperm.slane %v7264, %v7271
    %v7273 = vrot.slane %v6794, 4
    %v7274 = vsel %vm7037, %v7273, %v6786
    %v7275 = vrot.slane %v6786, 4
    %v7276 = vsel %vm7037, %v6794, %v7275
    %v7278 = vunpack.c.l.s4 1983009808
    %v7279 = vunpack.c.0.s8 %v7278
    %v7280 = vperm.slane %v7274, %v7279
    %v7282 = vunpack.c.l.s4 1983009808
    %v7283 = vunpack.c.0.s8 %v7282
    %v7284 = vperm.slane %v7276, %v7283
    %v7285 = vrot.slane %v6806, 4
    %v7286 = vsel %vm7037, %v7285, %v6798
    %v7287 = vrot.slane %v6798, 4
    %v7288 = vsel %vm7037, %v6806, %v7287
    %v7290 = vunpack.c.l.s4 1983009808
    %v7291 = vunpack.c.0.s8 %v7290
    %v7292 = vperm.slane %v7286, %v7291
    %v7294 = vunpack.c.l.s4 1983009808
    %v7295 = vunpack.c.0.s8 %v7294
    %v7296 = vperm.slane %v7288, %v7295
    %v7297 = vrot.slane %v6810, 4
    %v7298 = vsel %vm7037, %v7297, %v6802
    %v7299 = vrot.slane %v6802, 4
    %v7300 = vsel %vm7037, %v6810, %v7299
    %v7302 = vunpack.c.l.s4 1983009808
    %v7303 = vunpack.c.0.s8 %v7302
    %v7304 = vperm.slane %v7298, %v7303
    %v7306 = vunpack.c.l.s4 1983009808
    %v7307 = vunpack.c.0.s8 %v7306
    %v7308 = vperm.slane %v7300, %v7307
    %v7309 = vrot.slane %v7280, 4
    %v7310 = vsel %vm7037, %v7309, %v7268
    %v7311 = vrot.slane %v7268, 4
    %v7312 = vsel %vm7037, %v7280, %v7311
    %v7314 = vunpack.c.l.s4 1934713408
    %v7315 = vunpack.c.0.s8 %v7314
    %v7316 = vperm.slane %v7310, %v7315
    %v7318 = vunpack.c.l.s4 1934713408
    %v7319 = vunpack.c.0.s8 %v7318
    %v7320 = vperm.slane %v7312, %v7319
    %v7321 = vrot.slane %v7284, 4
    %v7322 = vsel %vm7037, %v7321, %v7272
    %v7323 = vrot.slane %v7272, 4
    %v7324 = vsel %vm7037, %v7284, %v7323
    %v7326 = vunpack.c.l.s4 1934713408
    %v7327 = vunpack.c.0.s8 %v7326
    %v7328 = vperm.slane %v7322, %v7327
    %v7330 = vunpack.c.l.s4 1934713408
    %v7331 = vunpack.c.0.s8 %v7330
    %v7332 = vperm.slane %v7324, %v7331
    %v7333 = vrot.slane %v7304, 4
    %v7334 = vsel %vm7037, %v7333, %v7292
    %v7335 = vrot.slane %v7292, 4
    %v7336 = vsel %vm7037, %v7304, %v7335
    %v7338 = vunpack.c.l.s4 1934713408
    %v7339 = vunpack.c.0.s8 %v7338
    %v7340 = vperm.slane %v7334, %v7339
    %v7342 = vunpack.c.l.s4 1934713408
    %v7343 = vunpack.c.0.s8 %v7342
    %v7344 = vperm.slane %v7336, %v7343
    %v7345 = vrot.slane %v7308, 4
    %v7346 = vsel %vm7037, %v7345, %v7296
    %v7347 = vrot.slane %v7296, 4
    %v7348 = vsel %vm7037, %v7308, %v7347
    %v7350 = vunpack.c.l.s4 1934713408
    %v7351 = vunpack.c.0.s8 %v7350
    %v7352 = vperm.slane %v7346, %v7351
    %v7354 = vunpack.c.l.s4 1934713408
    %v7355 = vunpack.c.0.s8 %v7354
    %v7356 = vperm.slane %v7348, %v7355
    %v7357 = vrot.slane %v7340, 4
    %v7358 = vsel %vm7037, %v7357, %v7316
    %v7359 = vrot.slane %v7316, 4
    %v7360 = vsel %vm7037, %v7340, %v7359
    %v7361 = vrot.slane %v7344, 4
    %v7362 = vsel %vm7037, %v7361, %v7320
    %v7363 = vrot.slane %v7320, 4
    %v7364 = vsel %vm7037, %v7344, %v7363
    %v7365 = vrot.slane %v7352, 4
    %v7366 = vsel %vm7037, %v7365, %v7328
    %v7367 = vrot.slane %v7328, 4
    %v7368 = vsel %vm7037, %v7352, %v7367
    %v7369 = vrot.slane %v7356, 4
    %v7370 = vsel %vm7037, %v7369, %v7332
    %v7371 = vrot.slane %v7332, 4
    %v7372 = vsel %vm7037, %v7356, %v7371
    %v7373 = vrot.slane %v6822, 4
    %v7374 = vsel %vm7037, %v7373, %v6814
    %v7375 = vrot.slane %v6814, 4
    %v7376 = vsel %vm7037, %v6822, %v7375
    %v7378 = vunpack.c.l.s4 1983009808
    %v7379 = vunpack.c.0.s8 %v7378
    %v7380 = vperm.slane %v7374, %v7379
    %v7382 = vunpack.c.l.s4 1983009808
    %v7383 = vunpack.c.0.s8 %v7382
    %v7384 = vperm.slane %v7376, %v7383
    %v7385 = vrot.slane %v6826, 4
    %v7386 = vsel %vm7037, %v7385, %v6818
    %v7387 = vrot.slane %v6818, 4
    %v7388 = vsel %vm7037, %v6826, %v7387
    %v7390 = vunpack.c.l.s4 1983009808
    %v7391 = vunpack.c.0.s8 %v7390
    %v7392 = vperm.slane %v7386, %v7391
    %v7394 = vunpack.c.l.s4 1983009808
    %v7395 = vunpack.c.0.s8 %v7394
    %v7396 = vperm.slane %v7388, %v7395
    %v7397 = vrot.slane %v6838, 4
    %v7398 = vsel %vm7037, %v7397, %v6830
    %v7399 = vrot.slane %v6830, 4
    %v7400 = vsel %vm7037, %v6838, %v7399
    %v7402 = vunpack.c.l.s4 1983009808
    %v7403 = vunpack.c.0.s8 %v7402
    %v7404 = vperm.slane %v7398, %v7403
    %v7406 = vunpack.c.l.s4 1983009808
    %v7407 = vunpack.c.0.s8 %v7406
    %v7408 = vperm.slane %v7400, %v7407
    %v7409 = vrot.slane %v6842, 4
    %v7410 = vsel %vm7037, %v7409, %v6834
    %v7411 = vrot.slane %v6834, 4
    %v7412 = vsel %vm7037, %v6842, %v7411
    %v7414 = vunpack.c.l.s4 1983009808
    %v7415 = vunpack.c.0.s8 %v7414
    %v7416 = vperm.slane %v7410, %v7415
    %v7418 = vunpack.c.l.s4 1983009808
    %v7419 = vunpack.c.0.s8 %v7418
    %v7420 = vperm.slane %v7412, %v7419
    %v7421 = vrot.slane %v7392, 4
    %v7422 = vsel %vm7037, %v7421, %v7380
    %v7423 = vrot.slane %v7380, 4
    %v7424 = vsel %vm7037, %v7392, %v7423
    %v7426 = vunpack.c.l.s4 1934713408
    %v7427 = vunpack.c.0.s8 %v7426
    %v7428 = vperm.slane %v7422, %v7427
    %v7430 = vunpack.c.l.s4 1934713408
    %v7431 = vunpack.c.0.s8 %v7430
    %v7432 = vperm.slane %v7424, %v7431
    %v7433 = vrot.slane %v7396, 4
    %v7434 = vsel %vm7037, %v7433, %v7384
    %v7435 = vrot.slane %v7384, 4
    %v7436 = vsel %vm7037, %v7396, %v7435
    %v7438 = vunpack.c.l.s4 1934713408
    %v7439 = vunpack.c.0.s8 %v7438
    %v7440 = vperm.slane %v7434, %v7439
    %v7442 = vunpack.c.l.s4 1934713408
    %v7443 = vunpack.c.0.s8 %v7442
    %v7444 = vperm.slane %v7436, %v7443
    %v7445 = vrot.slane %v7416, 4
    %v7446 = vsel %vm7037, %v7445, %v7404
    %v7447 = vrot.slane %v7404, 4
    %v7448 = vsel %vm7037, %v7416, %v7447
    %v7450 = vunpack.c.l.s4 1934713408
    %v7451 = vunpack.c.0.s8 %v7450
    %v7452 = vperm.slane %v7446, %v7451
    %v7454 = vunpack.c.l.s4 1934713408
    %v7455 = vunpack.c.0.s8 %v7454
    %v7456 = vperm.slane %v7448, %v7455
    %v7457 = vrot.slane %v7420, 4
    %v7458 = vsel %vm7037, %v7457, %v7408
    %v7459 = vrot.slane %v7408, 4
    %v7460 = vsel %vm7037, %v7420, %v7459
    %v7462 = vunpack.c.l.s4 1934713408
    %v7463 = vunpack.c.0.s8 %v7462
    %v7464 = vperm.slane %v7458, %v7463
    %v7466 = vunpack.c.l.s4 1934713408
    %v7467 = vunpack.c.0.s8 %v7466
    %v7468 = vperm.slane %v7460, %v7467
    %v7469 = vrot.slane %v7452, 4
    %v7470 = vsel %vm7037, %v7469, %v7428
    %v7471 = vrot.slane %v7428, 4
    %v7472 = vsel %vm7037, %v7452, %v7471
    %v7473 = vrot.slane %v7456, 4
    %v7474 = vsel %vm7037, %v7473, %v7432
    %v7475 = vrot.slane %v7432, 4
    %v7476 = vsel %vm7037, %v7456, %v7475
    %v7477 = vrot.slane %v7464, 4
    %v7478 = vsel %vm7037, %v7477, %v7440
    %v7479 = vrot.slane %v7440, 4
    %v7480 = vsel %vm7037, %v7464, %v7479
    %v7481 = vrot.slane %v7468, 4
    %v7482 = vsel %vm7037, %v7481, %v7444
    %v7483 = vrot.slane %v7444, 4
    %v7484 = vsel %vm7037, %v7468, %v7483
    %v7485 = vrot.slane %v6852, 4
    %v7486 = vsel %vm7037, %v7485, %v6844
    %v7487 = vrot.slane %v6844, 4
    %v7488 = vsel %vm7037, %v6852, %v7487
    %v7490 = vunpack.c.l.s4 1983009808
    %v7491 = vunpack.c.0.s8 %v7490
    %v7492 = vperm.slane %v7486, %v7491
    %v7494 = vunpack.c.l.s4 1983009808
    %v7495 = vunpack.c.0.s8 %v7494
    %v7496 = vperm.slane %v7488, %v7495
    %v7497 = vrot.slane %v6856, 4
    %v7498 = vsel %vm7037, %v7497, %v6848
    %v7499 = vrot.slane %v6848, 4
    %v7500 = vsel %vm7037, %v6856, %v7499
    %v7502 = vunpack.c.l.s4 1983009808
    %v7503 = vunpack.c.0.s8 %v7502
    %v7504 = vperm.slane %v7498, %v7503
    %v7506 = vunpack.c.l.s4 1983009808
    %v7507 = vunpack.c.0.s8 %v7506
    %v7508 = vperm.slane %v7500, %v7507
    %v7509 = vrot.slane %v6868, 4
    %v7510 = vsel %vm7037, %v7509, %v6860
    %v7511 = vrot.slane %v6860, 4
    %v7512 = vsel %vm7037, %v6868, %v7511
    %v7514 = vunpack.c.l.s4 1983009808
    %v7515 = vunpack.c.0.s8 %v7514
    %v7516 = vperm.slane %v7510, %v7515
    %v7518 = vunpack.c.l.s4 1983009808
    %v7519 = vunpack.c.0.s8 %v7518
    %v7520 = vperm.slane %v7512, %v7519
    %v7521 = vrot.slane %v6872, 4
    %v7522 = vsel %vm7037, %v7521, %v6864
    %v7523 = vrot.slane %v6864, 4
    %v7524 = vsel %vm7037, %v6872, %v7523
    %v7526 = vunpack.c.l.s4 1983009808
    %v7527 = vunpack.c.0.s8 %v7526
    %v7528 = vperm.slane %v7522, %v7527
    %v7530 = vunpack.c.l.s4 1983009808
    %v7531 = vunpack.c.0.s8 %v7530
    %v7532 = vperm.slane %v7524, %v7531
    %v7533 = vrot.slane %v7504, 4
    %v7534 = vsel %vm7037, %v7533, %v7492
    %v7535 = vrot.slane %v7492, 4
    %v7536 = vsel %vm7037, %v7504, %v7535
    %v7538 = vunpack.c.l.s4 1934713408
    %v7539 = vunpack.c.0.s8 %v7538
    %v7540 = vperm.slane %v7534, %v7539
    %v7542 = vunpack.c.l.s4 1934713408
    %v7543 = vunpack.c.0.s8 %v7542
    %v7544 = vperm.slane %v7536, %v7543
    %v7545 = vrot.slane %v7508, 4
    %v7546 = vsel %vm7037, %v7545, %v7496
    %v7547 = vrot.slane %v7496, 4
    %v7548 = vsel %vm7037, %v7508, %v7547
    %v7550 = vunpack.c.l.s4 1934713408
    %v7551 = vunpack.c.0.s8 %v7550
    %v7552 = vperm.slane %v7546, %v7551
    %v7554 = vunpack.c.l.s4 1934713408
    %v7555 = vunpack.c.0.s8 %v7554
    %v7556 = vperm.slane %v7548, %v7555
    %v7557 = vrot.slane %v7528, 4
    %v7558 = vsel %vm7037, %v7557, %v7516
    %v7559 = vrot.slane %v7516, 4
    %v7560 = vsel %vm7037, %v7528, %v7559
    %v7562 = vunpack.c.l.s4 1934713408
    %v7563 = vunpack.c.0.s8 %v7562
    %v7564 = vperm.slane %v7558, %v7563
    %v7566 = vunpack.c.l.s4 1934713408
    %v7567 = vunpack.c.0.s8 %v7566
    %v7568 = vperm.slane %v7560, %v7567
    %v7569 = vrot.slane %v7532, 4
    %v7570 = vsel %vm7037, %v7569, %v7520
    %v7571 = vrot.slane %v7520, 4
    %v7572 = vsel %vm7037, %v7532, %v7571
    %v7574 = vunpack.c.l.s4 1934713408
    %v7575 = vunpack.c.0.s8 %v7574
    %v7576 = vperm.slane %v7570, %v7575
    %v7578 = vunpack.c.l.s4 1934713408
    %v7579 = vunpack.c.0.s8 %v7578
    %v7580 = vperm.slane %v7572, %v7579
    %v7581 = vrot.slane %v7564, 4
    %v7582 = vsel %vm7037, %v7581, %v7540
    %v7583 = vrot.slane %v7540, 4
    %v7584 = vsel %vm7037, %v7564, %v7583
    %v7585 = vrot.slane %v7568, 4
    %v7586 = vsel %vm7037, %v7585, %v7544
    %v7587 = vrot.slane %v7544, 4
    %v7588 = vsel %vm7037, %v7568, %v7587
    %v7589 = vrot.slane %v7576, 4
    %v7590 = vsel %vm7037, %v7589, %v7552
    %v7591 = vrot.slane %v7552, 4
    %v7592 = vsel %vm7037, %v7576, %v7591
    %v7593 = vrot.slane %v7580, 4
    %v7594 = vsel %vm7037, %v7593, %v7556
    %v7595 = vrot.slane %v7556, 4
    %v7596 = vsel %vm7037, %v7580, %v7595
    %v7597 = vrot.slane %v6884, 4
    %v7598 = vsel %vm7037, %v7597, %v6876
    %v7599 = vrot.slane %v6876, 4
    %v7600 = vsel %vm7037, %v6884, %v7599
    %v7602 = vunpack.c.l.s4 1983009808
    %v7603 = vunpack.c.0.s8 %v7602
    %v7604 = vperm.slane %v7598, %v7603
    %v7606 = vunpack.c.l.s4 1983009808
    %v7607 = vunpack.c.0.s8 %v7606
    %v7608 = vperm.slane %v7600, %v7607
    %v7609 = vrot.slane %v6888, 4
    %v7610 = vsel %vm7037, %v7609, %v6880
    %v7611 = vrot.slane %v6880, 4
    %v7612 = vsel %vm7037, %v6888, %v7611
    %v7614 = vunpack.c.l.s4 1983009808
    %v7615 = vunpack.c.0.s8 %v7614
    %v7616 = vperm.slane %v7610, %v7615
    %v7618 = vunpack.c.l.s4 1983009808
    %v7619 = vunpack.c.0.s8 %v7618
    %v7620 = vperm.slane %v7612, %v7619
    %v7621 = vrot.slane %v6900, 4
    %v7622 = vsel %vm7037, %v7621, %v6892
    %v7623 = vrot.slane %v6892, 4
    %v7624 = vsel %vm7037, %v6900, %v7623
    %v7626 = vunpack.c.l.s4 1983009808
    %v7627 = vunpack.c.0.s8 %v7626
    %v7628 = vperm.slane %v7622, %v7627
    %v7630 = vunpack.c.l.s4 1983009808
    %v7631 = vunpack.c.0.s8 %v7630
    %v7632 = vperm.slane %v7624, %v7631
    %v7633 = vrot.slane %v6904, 4
    %v7634 = vsel %vm7037, %v7633, %v6896
    %v7635 = vrot.slane %v6896, 4
    %v7636 = vsel %vm7037, %v6904, %v7635
    %v7638 = vunpack.c.l.s4 1983009808
    %v7639 = vunpack.c.0.s8 %v7638
    %v7640 = vperm.slane %v7634, %v7639
    %v7642 = vunpack.c.l.s4 1983009808
    %v7643 = vunpack.c.0.s8 %v7642
    %v7644 = vperm.slane %v7636, %v7643
    %v7645 = vrot.slane %v7616, 4
    %v7646 = vsel %vm7037, %v7645, %v7604
    %v7647 = vrot.slane %v7604, 4
    %v7648 = vsel %vm7037, %v7616, %v7647
    %v7650 = vunpack.c.l.s4 1934713408
    %v7651 = vunpack.c.0.s8 %v7650
    %v7652 = vperm.slane %v7646, %v7651
    %v7654 = vunpack.c.l.s4 1934713408
    %v7655 = vunpack.c.0.s8 %v7654
    %v7656 = vperm.slane %v7648, %v7655
    %v7657 = vrot.slane %v7620, 4
    %v7658 = vsel %vm7037, %v7657, %v7608
    %v7659 = vrot.slane %v7608, 4
    %v7660 = vsel %vm7037, %v7620, %v7659
    %v7662 = vunpack.c.l.s4 1934713408
    %v7663 = vunpack.c.0.s8 %v7662
    %v7664 = vperm.slane %v7658, %v7663
    %v7666 = vunpack.c.l.s4 1934713408
    %v7667 = vunpack.c.0.s8 %v7666
    %v7668 = vperm.slane %v7660, %v7667
    %v7669 = vrot.slane %v7640, 4
    %v7670 = vsel %vm7037, %v7669, %v7628
    %v7671 = vrot.slane %v7628, 4
    %v7672 = vsel %vm7037, %v7640, %v7671
    %v7674 = vunpack.c.l.s4 1934713408
    %v7675 = vunpack.c.0.s8 %v7674
    %v7676 = vperm.slane %v7670, %v7675
    %v7678 = vunpack.c.l.s4 1934713408
    %v7679 = vunpack.c.0.s8 %v7678
    %v7680 = vperm.slane %v7672, %v7679
    %v7681 = vrot.slane %v7644, 4
    %v7682 = vsel %vm7037, %v7681, %v7632
    %v7683 = vrot.slane %v7632, 4
    %v7684 = vsel %vm7037, %v7644, %v7683
    %v7686 = vunpack.c.l.s4 1934713408
    %v7687 = vunpack.c.0.s8 %v7686
    %v7688 = vperm.slane %v7682, %v7687
    %v7690 = vunpack.c.l.s4 1934713408
    %v7691 = vunpack.c.0.s8 %v7690
    %v7692 = vperm.slane %v7684, %v7691
    %v7693 = vrot.slane %v7676, 4
    %v7694 = vsel %vm7037, %v7693, %v7652
    %v7695 = vrot.slane %v7652, 4
    %v7696 = vsel %vm7037, %v7676, %v7695
    %v7697 = vrot.slane %v7680, 4
    %v7698 = vsel %vm7037, %v7697, %v7656
    %v7699 = vrot.slane %v7656, 4
    %v7700 = vsel %vm7037, %v7680, %v7699
    %v7701 = vrot.slane %v7688, 4
    %v7702 = vsel %vm7037, %v7701, %v7664
    %v7703 = vrot.slane %v7664, 4
    %v7704 = vsel %vm7037, %v7688, %v7703
    %v7705 = vrot.slane %v7692, 4
    %v7706 = vsel %vm7037, %v7705, %v7668
    %v7707 = vrot.slane %v7668, 4
    %v7708 = vsel %vm7037, %v7692, %v7707
    %v7709 = vrot.slane %v6854, 4
    %v7710 = vsel %vm7037, %v7709, %v6846
    %v7711 = vrot.slane %v6846, 4
    %v7712 = vsel %vm7037, %v6854, %v7711
    %v7714 = vunpack.c.l.s4 1983009808
    %v7715 = vunpack.c.0.s8 %v7714
    %v7716 = vperm.slane %v7710, %v7715
    %v7718 = vunpack.c.l.s4 1983009808
    %v7719 = vunpack.c.0.s8 %v7718
    %v7720 = vperm.slane %v7712, %v7719
    %v7721 = vrot.slane %v6858, 4
    %v7722 = vsel %vm7037, %v7721, %v6850
    %v7723 = vrot.slane %v6850, 4
    %v7724 = vsel %vm7037, %v6858, %v7723
    %v7726 = vunpack.c.l.s4 1983009808
    %v7727 = vunpack.c.0.s8 %v7726
    %v7728 = vperm.slane %v7722, %v7727
    %v7730 = vunpack.c.l.s4 1983009808
    %v7731 = vunpack.c.0.s8 %v7730
    %v7732 = vperm.slane %v7724, %v7731
    %v7733 = vrot.slane %v6870, 4
    %v7734 = vsel %vm7037, %v7733, %v6862
    %v7735 = vrot.slane %v6862, 4
    %v7736 = vsel %vm7037, %v6870, %v7735
    %v7738 = vunpack.c.l.s4 1983009808
    %v7739 = vunpack.c.0.s8 %v7738
    %v7740 = vperm.slane %v7734, %v7739
    %v7742 = vunpack.c.l.s4 1983009808
    %v7743 = vunpack.c.0.s8 %v7742
    %v7744 = vperm.slane %v7736, %v7743
    %v7745 = vrot.slane %v6874, 4
    %v7746 = vsel %vm7037, %v7745, %v6866
    %v7747 = vrot.slane %v6866, 4
    %v7748 = vsel %vm7037, %v6874, %v7747
    %v7750 = vunpack.c.l.s4 1983009808
    %v7751 = vunpack.c.0.s8 %v7750
    %v7752 = vperm.slane %v7746, %v7751
    %v7754 = vunpack.c.l.s4 1983009808
    %v7755 = vunpack.c.0.s8 %v7754
    %v7756 = vperm.slane %v7748, %v7755
    %v7757 = vrot.slane %v7728, 4
    %v7758 = vsel %vm7037, %v7757, %v7716
    %v7759 = vrot.slane %v7716, 4
    %v7760 = vsel %vm7037, %v7728, %v7759
    %v7762 = vunpack.c.l.s4 1934713408
    %v7763 = vunpack.c.0.s8 %v7762
    %v7764 = vperm.slane %v7758, %v7763
    %v7766 = vunpack.c.l.s4 1934713408
    %v7767 = vunpack.c.0.s8 %v7766
    %v7768 = vperm.slane %v7760, %v7767
    %v7769 = vrot.slane %v7732, 4
    %v7770 = vsel %vm7037, %v7769, %v7720
    %v7771 = vrot.slane %v7720, 4
    %v7772 = vsel %vm7037, %v7732, %v7771
    %v7774 = vunpack.c.l.s4 1934713408
    %v7775 = vunpack.c.0.s8 %v7774
    %v7776 = vperm.slane %v7770, %v7775
    %v7778 = vunpack.c.l.s4 1934713408
    %v7779 = vunpack.c.0.s8 %v7778
    %v7780 = vperm.slane %v7772, %v7779
    %v7781 = vrot.slane %v7752, 4
    %v7782 = vsel %vm7037, %v7781, %v7740
    %v7783 = vrot.slane %v7740, 4
    %v7784 = vsel %vm7037, %v7752, %v7783
    %v7786 = vunpack.c.l.s4 1934713408
    %v7787 = vunpack.c.0.s8 %v7786
    %v7788 = vperm.slane %v7782, %v7787
    %v7790 = vunpack.c.l.s4 1934713408
    %v7791 = vunpack.c.0.s8 %v7790
    %v7792 = vperm.slane %v7784, %v7791
    %v7793 = vrot.slane %v7756, 4
    %v7794 = vsel %vm7037, %v7793, %v7744
    %v7795 = vrot.slane %v7744, 4
    %v7796 = vsel %vm7037, %v7756, %v7795
    %v7798 = vunpack.c.l.s4 1934713408
    %v7799 = vunpack.c.0.s8 %v7798
    %v7800 = vperm.slane %v7794, %v7799
    %v7802 = vunpack.c.l.s4 1934713408
    %v7803 = vunpack.c.0.s8 %v7802
    %v7804 = vperm.slane %v7796, %v7803
    %v7805 = vrot.slane %v7788, 4
    %v7806 = vsel %vm7037, %v7805, %v7764
    %v7807 = vrot.slane %v7764, 4
    %v7808 = vsel %vm7037, %v7788, %v7807
    %v7809 = vrot.slane %v7792, 4
    %v7810 = vsel %vm7037, %v7809, %v7768
    %v7811 = vrot.slane %v7768, 4
    %v7812 = vsel %vm7037, %v7792, %v7811
    %v7813 = vrot.slane %v7800, 4
    %v7814 = vsel %vm7037, %v7813, %v7776
    %v7815 = vrot.slane %v7776, 4
    %v7816 = vsel %vm7037, %v7800, %v7815
    %v7817 = vrot.slane %v7804, 4
    %v7818 = vsel %vm7037, %v7817, %v7780
    %v7819 = vrot.slane %v7780, 4
    %v7820 = vsel %vm7037, %v7804, %v7819
    %v7821 = vrot.slane %v6886, 4
    %v7822 = vsel %vm7037, %v7821, %v6878
    %v7823 = vrot.slane %v6878, 4
    %v7824 = vsel %vm7037, %v6886, %v7823
    %v7826 = vunpack.c.l.s4 1983009808
    %v7827 = vunpack.c.0.s8 %v7826
    %v7828 = vperm.slane %v7822, %v7827
    %v7830 = vunpack.c.l.s4 1983009808
    %v7831 = vunpack.c.0.s8 %v7830
    %v7832 = vperm.slane %v7824, %v7831
    %v7833 = vrot.slane %v6890, 4
    %v7834 = vsel %vm7037, %v7833, %v6882
    %v7835 = vrot.slane %v6882, 4
    %v7836 = vsel %vm7037, %v6890, %v7835
    %v7838 = vunpack.c.l.s4 1983009808
    %v7839 = vunpack.c.0.s8 %v7838
    %v7840 = vperm.slane %v7834, %v7839
    %v7842 = vunpack.c.l.s4 1983009808
    %v7843 = vunpack.c.0.s8 %v7842
    %v7844 = vperm.slane %v7836, %v7843
    %v7845 = vrot.slane %v6902, 4
    %v7846 = vsel %vm7037, %v7845, %v6894
    %v7847 = vrot.slane %v6894, 4
    %v7848 = vsel %vm7037, %v6902, %v7847
    %v7850 = vunpack.c.l.s4 1983009808
    %v7851 = vunpack.c.0.s8 %v7850
    %v7852 = vperm.slane %v7846, %v7851
    %v7854 = vunpack.c.l.s4 1983009808
    %v7855 = vunpack.c.0.s8 %v7854
    %v7856 = vperm.slane %v7848, %v7855
    %v7857 = vrot.slane %v6906, 4
    %v7858 = vsel %vm7037, %v7857, %v6898
    %v7859 = vrot.slane %v6898, 4
    %v7860 = vsel %vm7037, %v6906, %v7859
    %v7862 = vunpack.c.l.s4 1983009808
    %v7863 = vunpack.c.0.s8 %v7862
    %v7864 = vperm.slane %v7858, %v7863
    %v7866 = vunpack.c.l.s4 1983009808
    %v7867 = vunpack.c.0.s8 %v7866
    %v7868 = vperm.slane %v7860, %v7867
    %v7869 = vrot.slane %v7840, 4
    %v7870 = vsel %vm7037, %v7869, %v7828
    %v7871 = vrot.slane %v7828, 4
    %v7872 = vsel %vm7037, %v7840, %v7871
    %v7874 = vunpack.c.l.s4 1934713408
    %v7875 = vunpack.c.0.s8 %v7874
    %v7876 = vperm.slane %v7870, %v7875
    %v7878 = vunpack.c.l.s4 1934713408
    %v7879 = vunpack.c.0.s8 %v7878
    %v7880 = vperm.slane %v7872, %v7879
    %v7881 = vrot.slane %v7844, 4
    %v7882 = vsel %vm7037, %v7881, %v7832
    %v7883 = vrot.slane %v7832, 4
    %v7884 = vsel %vm7037, %v7844, %v7883
    %v7886 = vunpack.c.l.s4 1934713408
    %v7887 = vunpack.c.0.s8 %v7886
    %v7888 = vperm.slane %v7882, %v7887
    %v7890 = vunpack.c.l.s4 1934713408
    %v7891 = vunpack.c.0.s8 %v7890
    %v7892 = vperm.slane %v7884, %v7891
    %v7893 = vrot.slane %v7864, 4
    %v7894 = vsel %vm7037, %v7893, %v7852
    %v7895 = vrot.slane %v7852, 4
    %v7896 = vsel %vm7037, %v7864, %v7895
    %v7898 = vunpack.c.l.s4 1934713408
    %v7899 = vunpack.c.0.s8 %v7898
    %v7900 = vperm.slane %v7894, %v7899
    %v7902 = vunpack.c.l.s4 1934713408
    %v7903 = vunpack.c.0.s8 %v7902
    %v7904 = vperm.slane %v7896, %v7903
    %v7905 = vrot.slane %v7868, 4
    %v7906 = vsel %vm7037, %v7905, %v7856
    %v7907 = vrot.slane %v7856, 4
    %v7908 = vsel %vm7037, %v7868, %v7907
    %v7910 = vunpack.c.l.s4 1934713408
    %v7911 = vunpack.c.0.s8 %v7910
    %v7912 = vperm.slane %v7906, %v7911
    %v7914 = vunpack.c.l.s4 1934713408
    %v7915 = vunpack.c.0.s8 %v7914
    %v7916 = vperm.slane %v7908, %v7915
    %v7917 = vrot.slane %v7900, 4
    %v7918 = vsel %vm7037, %v7917, %v7876
    %v7919 = vrot.slane %v7876, 4
    %v7920 = vsel %vm7037, %v7900, %v7919
    %v7921 = vrot.slane %v7904, 4
    %v7922 = vsel %vm7037, %v7921, %v7880
    %v7923 = vrot.slane %v7880, 4
    %v7924 = vsel %vm7037, %v7904, %v7923
    %v7925 = vrot.slane %v7912, 4
    %v7926 = vsel %vm7037, %v7925, %v7888
    %v7927 = vrot.slane %v7888, 4
    %v7928 = vsel %vm7037, %v7912, %v7927
    %v7929 = vrot.slane %v7916, 4
    %v7930 = vsel %vm7037, %v7929, %v7892
    %v7931 = vrot.slane %v7892, 4
    %v7932 = vsel %vm7037, %v7916, %v7931
    %7937 = vrot.lane.b32.xlu0 %v7136, 32
    %v7938 = vpop.permute.xlu0 %7937
    %7939 = vrot.lane.b32.xlu0 %v7248, 32
    %v7940 = vpop.permute.xlu0 %7939
    %7941 = vrot.lane.b32.xlu0 %v7584, 32
    %v7942 = vpop.permute.xlu0 %7941
    %7943 = vrot.lane.b32.xlu0 %v7696, 32
    %v7944 = vpop.permute.xlu0 %7943
    %7953 = vrot.lane.b32.xlu0 %v7138, 64
    %v7954 = vpop.permute.xlu0 %7953
    %7955 = vrot.lane.b32.xlu0 %v7250, 64
    %v7956 = vpop.permute.xlu0 %7955
    %7957 = vrot.lane.b32.xlu0 %v7586, 64
    %v7958 = vpop.permute.xlu0 %7957
    %7959 = vrot.lane.b32.xlu0 %v7698, 64
    %v7960 = vpop.permute.xlu0 %7959
    %7969 = vrot.lane.b32.xlu0 %v7140, 96
    %v7970 = vpop.permute.xlu0 %7969
    %7971 = vrot.lane.b32.xlu0 %v7252, 96
    %v7972 = vpop.permute.xlu0 %7971
    %7973 = vrot.lane.b32.xlu0 %v7588, 96
    %v7974 = vpop.permute.xlu0 %7973
    %7975 = vrot.lane.b32.xlu0 %v7700, 96
    %v7976 = vpop.permute.xlu0 %7975
    %7985 = vrot.lane.b32.xlu0 %v7144, 32
    %v7986 = vpop.permute.xlu0 %7985
    %7987 = vrot.lane.b32.xlu0 %v7256, 32
    %v7988 = vpop.permute.xlu0 %7987
    %7989 = vrot.lane.b32.xlu0 %v7592, 32
    %v7990 = vpop.permute.xlu0 %7989
    %7991 = vrot.lane.b32.xlu0 %v7704, 32
    %v7992 = vpop.permute.xlu0 %7991
    %8001 = vrot.lane.b32.xlu0 %v7146, 64
    %v8002 = vpop.permute.xlu0 %8001
    %8003 = vrot.lane.b32.xlu0 %v7258, 64
    %v8004 = vpop.permute.xlu0 %8003
    %8005 = vrot.lane.b32.xlu0 %v7594, 64
    %v8006 = vpop.permute.xlu0 %8005
    %8007 = vrot.lane.b32.xlu0 %v7706, 64
    %v8008 = vpop.permute.xlu0 %8007
    %8017 = vrot.lane.b32.xlu0 %v7148, 96
    %v8018 = vpop.permute.xlu0 %8017
    %8019 = vrot.lane.b32.xlu0 %v7260, 96
    %v8020 = vpop.permute.xlu0 %8019
    %8021 = vrot.lane.b32.xlu0 %v7596, 96
    %v8022 = vpop.permute.xlu0 %8021
    %8023 = vrot.lane.b32.xlu0 %v7708, 96
    %v8024 = vpop.permute.xlu0 %8023
    %8033 = vrot.lane.b32.xlu0 %v7360, 32
    %v8034 = vpop.permute.xlu0 %8033
    %8035 = vrot.lane.b32.xlu0 %v7472, 32
    %v8036 = vpop.permute.xlu0 %8035
    %8037 = vrot.lane.b32.xlu0 %v7808, 32
    %v8038 = vpop.permute.xlu0 %8037
    %8039 = vrot.lane.b32.xlu0 %v7920, 32
    %v8040 = vpop.permute.xlu0 %8039
    %8049 = vrot.lane.b32.xlu0 %v7362, 64
    %v8050 = vpop.permute.xlu0 %8049
    %8051 = vrot.lane.b32.xlu0 %v7474, 64
    %v8052 = vpop.permute.xlu0 %8051
    %8053 = vrot.lane.b32.xlu0 %v7810, 64
    %v8054 = vpop.permute.xlu0 %8053
    %8055 = vrot.lane.b32.xlu0 %v7922, 64
    %v8056 = vpop.permute.xlu0 %8055
    %8065 = vrot.lane.b32.xlu0 %v7364, 96
    %v8066 = vpop.permute.xlu0 %8065
    %8067 = vrot.lane.b32.xlu0 %v7476, 96
    %v8068 = vpop.permute.xlu0 %8067
    %8069 = vrot.lane.b32.xlu0 %v7812, 96
    %v8070 = vpop.permute.xlu0 %8069
    %8071 = vrot.lane.b32.xlu0 %v7924, 96
    %v8072 = vpop.permute.xlu0 %8071
    %8081 = vrot.lane.b32.xlu0 %v7368, 32
    %v8082 = vpop.permute.xlu0 %8081
    %8083 = vrot.lane.b32.xlu0 %v7480, 32
    %v8084 = vpop.permute.xlu0 %8083
    %8085 = vrot.lane.b32.xlu0 %v7816, 32
    %v8086 = vpop.permute.xlu0 %8085
    %8087 = vrot.lane.b32.xlu0 %v7928, 32
    %v8088 = vpop.permute.xlu0 %8087
    %8097 = vrot.lane.b32.xlu0 %v7370, 64
    %v8098 = vpop.permute.xlu0 %8097
    %8099 = vrot.lane.b32.xlu0 %v7482, 64
    %v8100 = vpop.permute.xlu0 %8099
    %8101 = vrot.lane.b32.xlu0 %v7818, 64
    %v8102 = vpop.permute.xlu0 %8101
    %8103 = vrot.lane.b32.xlu0 %v7930, 64
    %v8104 = vpop.permute.xlu0 %8103
    %8113 = vrot.lane.b32.xlu0 %v7372, 96
    %v8114 = vpop.permute.xlu0 %8113
    %8115 = vrot.lane.b32.xlu0 %v7484, 96
    %v8116 = vpop.permute.xlu0 %8115
    %8117 = vrot.lane.b32.xlu0 %v7820, 96
    %v8118 = vpop.permute.xlu0 %8117
    %8119 = vrot.lane.b32.xlu0 %v7932, 96
    %v8120 = vpop.permute.xlu0 %8119
    %v8125 = vsel %vm18, %v7134, %v7938
    %v8126 = vsel %vm18, %v7246, %v7940
    %v8127 = vsel %vm18, %v7582, %v7942
    %v8128 = vsel %vm18, %v7694, %v7944
    %v8129 = vsel %vm2158, %v8125, %v7954
    %v8130 = vsel %vm2158, %v8126, %v7956
    %v8131 = vsel %vm2158, %v8127, %v7958
    %v8132 = vsel %vm2158, %v8128, %v7960
    %v8133 = vsel %vm2223, %v8129, %v7970
    %v8134 = vsel %vm2223, %v8130, %v7972
    %v8135 = vsel %vm2223, %v8131, %v7974
    %v8136 = vsel %vm2223, %v8132, %v7976
    %v8137 = vsel %vm18, %v7142, %v7986
    %v8138 = vsel %vm18, %v7254, %v7988
    %v8139 = vsel %vm18, %v7590, %v7990
    %v8140 = vsel %vm18, %v7702, %v7992
    %v8141 = vsel %vm2158, %v8137, %v8002
    %v8142 = vsel %vm2158, %v8138, %v8004
    %v8143 = vsel %vm2158, %v8139, %v8006
    %v8144 = vsel %vm2158, %v8140, %v8008
    %v8145 = vsel %vm2223, %v8141, %v8018
    %v8146 = vsel %vm2223, %v8142, %v8020
    %v8147 = vsel %vm2223, %v8143, %v8022
    %v8148 = vsel %vm2223, %v8144, %v8024
    %v8149 = vsel %vm18, %v7358, %v8034
    %v8150 = vsel %vm18, %v7470, %v8036
    %v8151 = vsel %vm18, %v7806, %v8038
    %v8152 = vsel %vm18, %v7918, %v8040
    %v8153 = vsel %vm2158, %v8149, %v8050
    %v8154 = vsel %vm2158, %v8150, %v8052
    %v8155 = vsel %vm2158, %v8151, %v8054
    %v8156 = vsel %vm2158, %v8152, %v8056
    %v8157 = vsel %vm2223, %v8153, %v8066
    %v8158 = vsel %vm2223, %v8154, %v8068
    %v8159 = vsel %vm2223, %v8155, %v8070
    %v8160 = vsel %vm2223, %v8156, %v8072
    %v8161 = vsel %vm18, %v7366, %v8082
    %v8162 = vsel %vm18, %v7478, %v8084
    %v8163 = vsel %vm18, %v7814, %v8086
    %v8164 = vsel %vm18, %v7926, %v8088
    %v8165 = vsel %vm2158, %v8161, %v8098
    %v8166 = vsel %vm2158, %v8162, %v8100
    %v8167 = vsel %vm2158, %v8163, %v8102
    %v8168 = vsel %vm2158, %v8164, %v8104
    %v8169 = vsel %vm2223, %v8165, %v8114
    %v8170 = vsel %vm2223, %v8166, %v8116
    %v8171 = vsel %vm2223, %v8167, %v8118
    %v8172 = vsel %vm2223, %v8168, %v8120
    %s8173 = smul.u32 %s231, 16
    %s8174 = smul.addr %s8173, 8
    %s8175 = scalar_lea.vmem %s4, %s8174
    %8176 = vst [vmem:[%s8175] sm:$0xff] %v8133
    %8177 = vst [vmem:[%s8175 + $0x8] sm:$0xff] %v8145
    %8178 = vst [vmem:[%s8175 + $0x10] sm:$0xff] %v8157
    %8179 = vst [vmem:[%s8175 + $0x18] sm:$0xff] %v8169
    %8180 = vst [vmem:[%s8175 + $0x20] sm:$0xff] %v8134
    %8181 = vst [vmem:[%s8175 + $0x28] sm:$0xff] %v8146
    %8182 = vst [vmem:[%s8175 + $0x30] sm:$0xff] %v8158
    %8183 = vst [vmem:[%s8175 + $0x38] sm:$0xff] %v8170
    %8184 = vst [vmem:[%s8175 + $0x40] sm:$0xff] %v8135
    %8185 = vst [vmem:[%s8175 + $0x48] sm:$0xff] %v8147
    %8186 = vst [vmem:[%s8175 + $0x50] sm:$0xff] %v8159
    %8187 = vst [vmem:[%s8175 + $0x58] sm:$0xff] %v8171
    %8188 = vst [vmem:[%s8175 + $0x60] sm:$0xff] %v8136
    %8189 = vst [vmem:[%s8175 + $0x68] sm:$0xff] %v8148
    %8190 = vst [vmem:[%s8175 + $0x70] sm:$0xff] %v8160
    %8191 = vst [vmem:[%s8175 + $0x78] sm:$0xff] %v8172
  $region22: #{conv_lstm_block.1} parent=0 // loop_footer
    %s235 = sadd.s32 1, %s231
  $region23: #{conv_lstm_block.1} parent=0 // loop_footer_branch
    %230 = sbr.rel target = $region19
  $region24: #{conv_lstm_block.1} parent=0 // loop_exit
    _
  // Predicated region
  $region25: #{conv_lstm_block.1} parent=0 // pred_check
    _
  $region26: #{conv_lstm_block.1} parent=0 // pred_check_branch
    %8193 = sbr.rel (0) target = $region28
  $region27: #{conv_lstm_block.1} parent=0 // pred_region
    _
  $region28: #{conv_lstm_block.1} parent=0 // pred_fallthru
    _
  // Predicated region
  $region29: #{conv_lstm_block.1} parent=0 // pred_check
    _
  $region30: #{conv_lstm_block.1} parent=0 // pred_check_branch
    %8195 = sbr.rel (0) target = $region32
  $region31: #{conv_lstm_block.1} parent=0 // pred_region
    _
  $region32: #{conv_lstm_block.1} parent=0 // pred_fallthru
    _

</llo_original>
